<compile_context>
chip_gen: v7x
topology: tpu7x:2x2x1
jax: 0.10.0
libtpu: 0.0.40
codegen_flags: <defaults>
</compile_context>

<pallas_src>
import jax
import jax.numpy as jnp
from jax import lax
from jax.experimental import pallas as pl
from jax.experimental.pallas import tpu as pltpu

EPS = 1e-6  # LayerNorm2d epsilon (FasterViT convention)

# tap -> (phase parity, offset inside the halo-padded tile), for rows (kh) and cols (kw)
_ROW_SEL = ((1, 0), (0, 1), (1, 1))
_COL_SEL = ((1, 0), (0, 1), (1, 1))


def _make_kernel(*, H, W, TR, TRp, Wo, Wp, Cout):
    """Fused LayerNorm2d + 3x3/stride-2 conv kernel for one (batch, row-tile) step."""

    def kernel(ph_ref, g_ref, b_ref, w_ref, o_ref, xn_ref):
        # ph_ref : (4*TRp, C, Wp)  raw input phases, row tile with +1 halo row
        # g_ref  : (C, 1) f32      LayerNorm2d weight
        # b_ref  : (C, 1) f32      LayerNorm2d bias
        # w_ref  : (9, Cout, C)    conv taps (compute dtype)
        # o_ref  : (Cout, TR, Wo)  channels-first output tile
        # xn_ref : (4*TRp, C, Wp)  VMEM scratch: normalized phases (compute dtype)
        t = pl.program_id(1)
        gamma = g_ref[...]           # (C, 1) broadcasts against (TRp, C, Wp)
        beta = b_ref[...]

        # ---- LayerNorm2d over channels (sublane reduce), per phase slab -------------
        # The conv's zero padding must stay zero *after* LN, so mask the halo/invalid
        # positions (they would otherwise become `beta`).
        for p in range(4):
            rp, cp = p // 2, p % 2
            nr = (H - rp + 1) // 2                      # valid rows of this phase
            nc = (W - cp + 1) // 2                      # valid cols of this phase
            xs = ph_ref[p * TRp:(p + 1) * TRp].astype(jnp.float32)   # (TRp, C, Wp)
            mu = jnp.mean(xs, axis=1, keepdims=True)
            xc = xs - mu
            var = jnp.mean(xc * xc, axis=1, keepdims=True)
            y = xc * lax.rsqrt(var + EPS) * gamma + beta
            grow = lax.broadcasted_iota(jnp.int32, (TRp, 1, Wp), 0) + t * TR
            gcol = lax.broadcasted_iota(jnp.int32, (TRp, 1, Wp), 2)
            valid = (grow >= 1) & (grow <= nr) & (gcol >= 1) & (gcol <= nc)
            xn_ref[p * TRp:(p + 1) * TRp] = jnp.where(valid, y, 0.0).astype(xn_ref.dtype)

        # ---- 3x3 stride-2 conv: 9 accumulating MXU dots per output row --------------
        w_taps = [w_ref[k] for k in range(9)]           # hoist weight loads
        for r in range(TR):                             # static unroll (TR <= 32)
            acc = jnp.zeros((Cout, Wo), jnp.float32)
            for kh in range(3):
                rp, dh = _ROW_SEL[kh]
                for kw in range(3):
                    cp, dw = _COL_SEL[kw]
                    p = 2 * rp + cp
                    xk = xn_ref[p * TRp + r + dh, :, dw:dw + Wo]     # (C, Wo)
                    acc = acc + jnp.dot(w_taps[kh * 3 + kw], xk,
                                        preferred_element_type=jnp.float32)
            o_ref[:, r, :] = acc.astype(o_ref.dtype)

    return kernel


def _pick_row_tile(Ho, Wo, C, Cout, elt_bytes, vmem_budget=20 * 2**20):
    """Largest row tile (<=32, mult of 8 if tiled) fitting a conservative VMEM budget."""
    Wp = Wo + 1

    def est(tr):
        trp = tr + 1
        phase_blk = 4 * trp * C * Wp * elt_bytes        # double-buffered input block
        out_blk = Cout * tr * Wo * 4                    # double-buffered f32 output
        return 2 * phase_blk + phase_blk + 2 * out_blk  # + normalized scratch

    if Ho <= 32 and est(Ho) <= vmem_budget:
        return Ho
    for tr in (32, 16, 8):
        if est(tr) <= vmem_budget:
            return tr
    return 8


def early_conv_ds_forward(x_nchw, gamma, beta, w_oihw, *,
                          compute_dtype=jnp.bfloat16, row_tile=None):
    """EarlyConvDS(dim).forward(x); x is NCHW (like PyTorch), output is NCHW."""
    N, C, H, W = x_nchw.shape
    Cout = w_oihw.shape[0]
    Ho = (H - 1) // 2 + 1
    Wo = (W - 1) // 2 + 1
    Wp = Wo + 1
    elt = jnp.dtype(compute_dtype).itemsize

    TR = row_tile if row_tile is not None else _pick_row_tile(Ho, Wo, C, Cout, elt)
    T = pl.cdiv(Ho, TR)
    TRp = TR + 1
    rows_pad = T * TR + 1

    # ---- layout glue (one fused XLA copy over the input; no im2col, no big pads) ----
    # stride-2 phases with a zero halo, channels next to the lane (width) axis:
    #   phases[n, p, 1+i, c, 1+j] = x[n, c, 2i + p//2, 2j + p%2]
    phases = jnp.zeros((N, 4, rows_pad, C, Wp), compute_dtype)
    for rp in (0, 1):
        for cp in (0, 1):
            p = 2 * rp + cp
            slab = x_nchw[:, :, rp::2, cp::2]                        # (N, C, nr, nc)
            nr, nc = slab.shape[2], slab.shape[3]
            slab = jnp.transpose(slab, (0, 2, 1, 3)).astype(compute_dtype)
            phases = phases.at[:, p, 1:1 + nr, :, 1:1 + nc].set(slab)
    # row tiles with a +1 halo row (non-overlapping blocks for the BlockSpec)
    tiles = jnp.stack([phases[:, :, t * TR:t * TR + TRp] for t in range(T)], axis=1)
    tiles = tiles.reshape(N, T, 4 * TRp, C, Wp)

    g = gamma.reshape(C, 1).astype(jnp.float32)
    b = beta.reshape(C, 1).astype(jnp.float32)
    # conv taps reorganized for the flipped (channels-first) GEMM: (kh*3+kw, Cout, C)
    w9 = jnp.transpose(w_oihw, (2, 3, 0, 1)).reshape(9, Cout, C).astype(compute_dtype)

    kernel = _make_kernel(H=H, W=W, TR=TR, TRp=TRp, Wo=Wo, Wp=Wp, Cout=Cout)
    out = pl.pallas_call(
        kernel,
        out_shape=jax.ShapeDtypeStruct((N, Cout, T * TR, Wo), jnp.float32),
        grid=(N, T),
        in_specs=[
            pl.BlockSpec((None, None, 4 * TRp, C, Wp), lambda n, t: (n, t, 0, 0, 0)),
            pl.BlockSpec((C, 1), lambda n, t: (0, 0)),
            pl.BlockSpec((C, 1), lambda n, t: (0, 0)),
            pl.BlockSpec((9, Cout, C), lambda n, t: (0, 0, 0)),
        ],
        out_specs=pl.BlockSpec((None, Cout, TR, Wo), lambda n, t: (n, 0, t, 0)),
        scratch_shapes=[pltpu.VMEM((4 * TRp, C, Wp), compute_dtype)],
        compiler_params=pltpu.CompilerParams(
            dimension_semantics=("parallel", "parallel")),
    )(tiles, g, b, w9)

    return out[:, :, :Ho, :]                            # already NCHW; trim row padding


# --------------------------------------------------------------------------------------
# Pure-JAX reference (mirrors the PyTorch module semantics exactly).
# --------------------------------------------------------------------------------------
def reference_forward(x_nchw, gamma, beta, w_oihw):
    mean = jnp.mean(x_nchw, axis=1, keepdims=True)
    var = jnp.mean((x_nchw - mean) ** 2, axis=1, keepdims=True)
    xn = (x_nchw - mean) * lax.rsqrt(var + EPS)
    xn = xn * gamma[None, :, None, None] + beta[None, :, None, None]
    return lax.conv_general_dilated(
        xn, w_oihw, window_strides=(2, 2), padding=((1, 1), (1, 1)),
        dimension_numbers=("NCHW", "OIHW", "NCHW"))


if __name__ == "__main__":
    key = jax.random.PRNGKey(0)
    k_x, k_g, k_b, k_w = jax.random.split(key, 4)

    N, dim, H, W = 2, 8, 16, 16
    dim_out = 2 * dim

    x = jax.random.normal(k_x, (N, dim, H, W), jnp.float32)
    gamma = 1.0 + 0.1 * jax.random.normal(k_g, (dim,), jnp.float32)   # LayerNorm2d weight
    beta = 0.1 * jax.random.normal(k_b, (dim,), jnp.float32)          # LayerNorm2d bias
    fan_in = dim * 3 * 3
    bound = 1.0 / (fan_in ** 0.5)
    w = jax.random.uniform(k_w, (dim_out, dim, 3, 3), jnp.float32, -bound, bound)

    fwd = jax.jit(early_conv_ds_forward, static_argnames=("compute_dtype", "row_tile"))
    ref = reference_forward(x, gamma, beta, w)

    # fast path: bf16 MXU operands / HBM streams, f32 LayerNorm + accumulation
    out_bf16 = jax.block_until_ready(fwd(x, gamma, beta, w))
    assert out_bf16.shape == (N, dim_out, H // 2, W // 2), out_bf16.shape
    err_bf16 = float(jnp.max(jnp.abs(out_bf16 - ref)))
    assert err_bf16 < 2.5e-2, f"bf16 path max abs error vs reference: {err_bf16}"

    # f32-operand path: tight numerical check of the fused kernel
    out_f32 = jax.block_until_ready(fwd(x, gamma, beta, w, compute_dtype=jnp.float32))
    err_f32 = float(jnp.max(jnp.abs(out_f32 - ref)))
    assert err_f32 < 2e-3, f"f32 path max abs error vs reference: {err_f32}"

    print("KERNEL_OK")
</pallas_src>

<mosaic_0001>
module attributes {stable_mosaic.version = 11 : i64} {
  func.func @kernel(%arg0: i32, %arg1: i32, %arg2: memref<1x1x36x8x9xbf16, #tpu.memory_space<vmem>>, %arg3: memref<8x1xf32, #tpu.memory_space<vmem>>, %arg4: memref<8x1xf32, #tpu.memory_space<vmem>>, %arg5: memref<9x16x8xbf16, #tpu.memory_space<vmem>>, %arg6: memref<1x16x8x8xf32, #tpu.memory_space<vmem>>, %arg7: memref<36x8x9xbf16, #tpu.memory_space<vmem>>) attributes {dimension_semantics = [#tpu.dimension_semantics<parallel>, #tpu.dimension_semantics<parallel>], iteration_bounds = array<i64: 2, 1>, scalar_prefetch = 0 : i64, scratch_operands = 1 : i64, tpu.core_type = #tpu.core_type<tc>, window_params = [{transform_indices = @transform_0, window_bounds = array<i64: 1, 1, 36, 8, 9>}, {pipeline_mode = #tpu.pipeline_mode<synchronous>, transform_indices = @transform_1, window_bounds = array<i64: 8, 1>}, {pipeline_mode = #tpu.pipeline_mode<synchronous>, transform_indices = @transform_2, window_bounds = array<i64: 8, 1>}, {pipeline_mode = #tpu.pipeline_mode<synchronous>, transform_indices = @transform_3, window_bounds = array<i64: 9, 16, 8>}, {transform_indices = @transform_4, window_bounds = array<i64: 1, 16, 8, 8>}]} {
    %c0 = arith.constant 0 : index
    %c0_0 = arith.constant 0 : index
    %0 = vector.load %arg3[%c0, %c0_0] : memref<8x1xf32, #tpu.memory_space<vmem>>, vector<8x1xf32>
    %c0_1 = arith.constant 0 : index
    %c0_2 = arith.constant 0 : index
    %1 = vector.load %arg4[%c0_1, %c0_2] : memref<8x1xf32, #tpu.memory_space<vmem>>, vector<8x1xf32>
    %c0_3 = arith.constant 0 : index
    %c0_4 = arith.constant 0 : index
    %c0_5 = arith.constant 0 : index
    %c0_6 = arith.constant 0 : index
    %c0_7 = arith.constant 0 : index
    %2 = vector.load %arg2[%c0_3, %c0_4, %c0_5, %c0_6, %c0_7] : memref<1x1x36x8x9xbf16, #tpu.memory_space<vmem>>, vector<1x1x9x8x9xbf16>
    %3 = vector.shape_cast %2 : vector<1x1x9x8x9xbf16> to vector<9x8x9xbf16>
    %4 = arith.extf %3 : vector<9x8x9xbf16> to vector<9x8x9xf32>
    %cst = arith.constant dense<0.000000e+00> : vector<9x9xf32>
    %5 = vector.multi_reduction <add>, %4, %cst [1] : vector<9x8x9xf32> to vector<9x9xf32>
    %6 = vector.shape_cast %5 : vector<9x9xf32> to vector<9x1x9xf32>
    %cst_8 = arith.constant 8.000000e+00 : f32
    %7 = vector.broadcast %cst_8 : f32 to vector<9x1x9xf32>
    %8 = arith.divf %6, %7 : vector<9x1x9xf32>
    %9 = vector.broadcast %8 : vector<9x1x9xf32> to vector<9x8x9xf32>
    %10 = arith.subf %4, %9 : vector<9x8x9xf32>
    %11 = arith.mulf %10, %10 : vector<9x8x9xf32>
    %cst_9 = arith.constant dense<0.000000e+00> : vector<9x9xf32>
    %12 = vector.multi_reduction <add>, %11, %cst_9 [1] : vector<9x8x9xf32> to vector<9x9xf32>
    %13 = vector.shape_cast %12 : vector<9x9xf32> to vector<9x1x9xf32>
    %cst_10 = arith.constant 8.000000e+00 : f32
    %14 = vector.broadcast %cst_10 : f32 to vector<9x1x9xf32>
    %15 = arith.divf %13, %14 : vector<9x1x9xf32>
    %cst_11 = arith.constant 9.99999997E-7 : f32
    %16 = vector.broadcast %cst_11 : f32 to vector<9x1x9xf32>
    %17 = arith.addf %15, %16 : vector<9x1x9xf32>
    %18 = math.rsqrt %17 : vector<9x1x9xf32>
    %19 = vector.broadcast %18 : vector<9x1x9xf32> to vector<9x8x9xf32>
    %20 = arith.mulf %10, %19 : vector<9x8x9xf32>
    %21 = vector.shape_cast %0 : vector<8x1xf32> to vector<1x8x1xf32>
    %22 = vector.broadcast %21 : vector<1x8x1xf32> to vector<9x8x9xf32>
    %23 = arith.mulf %20, %22 : vector<9x8x9xf32>
    %24 = vector.shape_cast %1 : vector<8x1xf32> to vector<1x8x1xf32>
    %25 = vector.broadcast %24 : vector<1x8x1xf32> to vector<9x8x9xf32>
    %26 = arith.addf %23, %25 : vector<9x8x9xf32>
    %27 = tpu.iota {dimensions = array<i32: 0>} : vector<9x1x9xi32>
    %c8_i32 = arith.constant 8 : i32
    %28 = arith.muli %arg1, %c8_i32 : i32
    %29 = vector.broadcast %28 : i32 to vector<9x1x9xi32>
    %30 = arith.addi %27, %29 : vector<9x1x9xi32>
    %31 = tpu.iota {dimensions = array<i32: 2>} : vector<9x1x9xi32>
    %c1_i32 = arith.constant 1 : i32
    %32 = vector.broadcast %c1_i32 : i32 to vector<9x1x9xi32>
    %33 = arith.cmpi sge, %30, %32 : vector<9x1x9xi32>
    %c8_i32_12 = arith.constant 8 : i32
    %34 = vector.broadcast %c8_i32_12 : i32 to vector<9x1x9xi32>
    %35 = arith.cmpi sle, %30, %34 : vector<9x1x9xi32>
    %36 = arith.andi %33, %35 : vector<9x1x9xi1>
    %c1_i32_13 = arith.constant 1 : i32
    %37 = vector.broadcast %c1_i32_13 : i32 to vector<9x1x9xi32>
    %38 = arith.cmpi sge, %31, %37 : vector<9x1x9xi32>
    %39 = arith.andi %36, %38 : vector<9x1x9xi1>
    %c8_i32_14 = arith.constant 8 : i32
    %40 = vector.broadcast %c8_i32_14 : i32 to vector<9x1x9xi32>
    %41 = arith.cmpi sle, %31, %40 : vector<9x1x9xi32>
    %42 = arith.andi %39, %41 : vector<9x1x9xi1>
    %cst_15 = arith.constant 0.000000e+00 : f32
    %43 = vector.shape_cast %42 : vector<9x1x9xi1> to vector<9x1x9xi1>
    %44 = vector.broadcast %43 : vector<9x1x9xi1> to vector<9x8x9xi1>
    %45 = vector.broadcast %cst_15 : f32 to vector<9x8x9xf32>
    %46 = arith.select %44, %26, %45 : vector<9x8x9xi1>, vector<9x8x9xf32>
    %47 = arith.truncf %46 : vector<9x8x9xf32> to vector<9x8x9xbf16>
    %c0_16 = arith.constant 0 : index
    %c0_17 = arith.constant 0 : index
    %c0_18 = arith.constant 0 : index
    %48 = vector.load %arg7[%c0_16, %c0_17, %c0_18] : memref<36x8x9xbf16, #tpu.memory_space<vmem>>, vector<9x8x9xbf16>
    tpu.vector_store %arg7[%c0_16, %c0_17, %c0_18], %47 {strides = array<i32>} : memref<36x8x9xbf16, #tpu.memory_space<vmem>>, vector<9x8x9xbf16>,
    %c0_19 = arith.constant 0 : index
    %c0_20 = arith.constant 0 : index
    %c9 = arith.constant 9 : index
    %c0_21 = arith.constant 0 : index
    %c0_22 = arith.constant 0 : index
    %49 = vector.load %arg2[%c0_19, %c0_20, %c9, %c0_21, %c0_22] : memref<1x1x36x8x9xbf16, #tpu.memory_space<vmem>>, vector<1x1x9x8x9xbf16>
    %50 = vector.shape_cast %49 : vector<1x1x9x8x9xbf16> to vector<9x8x9xbf16>
    %51 = arith.extf %50 : vector<9x8x9xbf16> to vector<9x8x9xf32>
    %cst_23 = arith.constant dense<0.000000e+00> : vector<9x9xf32>
    %52 = vector.multi_reduction <add>, %51, %cst_23 [1] : vector<9x8x9xf32> to vector<9x9xf32>
    %53 = vector.shape_cast %52 : vector<9x9xf32> to vector<9x1x9xf32>
    %cst_24 = arith.constant 8.000000e+00 : f32
    %54 = vector.broadcast %cst_24 : f32 to vector<9x1x9xf32>
    %55 = arith.divf %53, %54 : vector<9x1x9xf32>
    %56 = vector.broadcast %55 : vector<9x1x9xf32> to vector<9x8x9xf32>
    %57 = arith.subf %51, %56 : vector<9x8x9xf32>
    %58 = arith.mulf %57, %57 : vector<9x8x9xf32>
    %cst_25 = arith.constant dense<0.000000e+00> : vector<9x9xf32>
    %59 = vector.multi_reduction <add>, %58, %cst_25 [1] : vector<9x8x9xf32> to vector<9x9xf32>
    %60 = vector.shape_cast %59 : vector<9x9xf32> to vector<9x1x9xf32>
    %cst_26 = arith.constant 8.000000e+00 : f32
    %61 = vector.broadcast %cst_26 : f32 to vector<9x1x9xf32>
    %62 = arith.divf %60, %61 : vector<9x1x9xf32>
    %cst_27 = arith.constant 9.99999997E-7 : f32
    %63 = vector.broadcast %cst_27 : f32 to vector<9x1x9xf32>
    %64 = arith.addf %62, %63 : vector<9x1x9xf32>
    %65 = math.rsqrt %64 : vector<9x1x9xf32>
    %66 = vector.broadcast %65 : vector<9x1x9xf32> to vector<9x8x9xf32>
    %67 = arith.mulf %57, %66 : vector<9x8x9xf32>
    %68 = vector.shape_cast %0 : vector<8x1xf32> to vector<1x8x1xf32>
    %69 = vector.broadcast %68 : vector<1x8x1xf32> to vector<9x8x9xf32>
    %70 = arith.mulf %67, %69 : vector<9x8x9xf32>
    %71 = vector.shape_cast %1 : vector<8x1xf32> to vector<1x8x1xf32>
    %72 = vector.broadcast %71 : vector<1x8x1xf32> to vector<9x8x9xf32>
    %73 = arith.addf %70, %72 : vector<9x8x9xf32>
    %74 = tpu.iota {dimensions = array<i32: 0>} : vector<9x1x9xi32>
    %c8_i32_28 = arith.constant 8 : i32
    %75 = arith.muli %arg1, %c8_i32_28 : i32
    %76 = vector.broadcast %75 : i32 to vector<9x1x9xi32>
    %77 = arith.addi %74, %76 : vector<9x1x9xi32>
    %78 = tpu.iota {dimensions = array<i32: 2>} : vector<9x1x9xi32>
    %c1_i32_29 = arith.constant 1 : i32
    %79 = vector.broadcast %c1_i32_29 : i32 to vector<9x1x9xi32>
    %80 = arith.cmpi sge, %77, %79 : vector<9x1x9xi32>
    %c8_i32_30 = arith.constant 8 : i32
    %81 = vector.broadcast %c8_i32_30 : i32 to vector<9x1x9xi32>
    %82 = arith.cmpi sle, %77, %81 : vector<9x1x9xi32>
    %83 = arith.andi %80, %82 : vector<9x1x9xi1>
    %c1_i32_31 = arith.constant 1 : i32
    %84 = vector.broadcast %c1_i32_31 : i32 to vector<9x1x9xi32>
    %85 = arith.cmpi sge, %78, %84 : vector<9x1x9xi32>
    %86 = arith.andi %83, %85 : vector<9x1x9xi1>
    %c8_i32_32 = arith.constant 8 : i32
    %87 = vector.broadcast %c8_i32_32 : i32 to vector<9x1x9xi32>
    %88 = arith.cmpi sle, %78, %87 : vector<9x1x9xi32>
    %89 = arith.andi %86, %88 : vector<9x1x9xi1>
    %cst_33 = arith.constant 0.000000e+00 : f32
    %90 = vector.shape_cast %89 : vector<9x1x9xi1> to vector<9x1x9xi1>
    %91 = vector.broadcast %90 : vector<9x1x9xi1> to vector<9x8x9xi1>
    %92 = vector.broadcast %cst_33 : f32 to vector<9x8x9xf32>
    %93 = arith.select %91, %73, %92 : vector<9x8x9xi1>, vector<9x8x9xf32>
    %94 = arith.truncf %93 : vector<9x8x9xf32> to vector<9x8x9xbf16>
    %c9_34 = arith.constant 9 : index
    %c0_35 = arith.constant 0 : index
    %c0_36 = arith.constant 0 : index
    %95 = vector.load %arg7[%c9_34, %c0_35, %c0_36] : memref<36x8x9xbf16, #tpu.memory_space<vmem>>, vector<9x8x9xbf16>
    tpu.vector_store %arg7[%c9_34, %c0_35, %c0_36], %94 {strides = array<i32>} : memref<36x8x9xbf16, #tpu.memory_space<vmem>>, vector<9x8x9xbf16>,
    %c0_37 = arith.constant 0 : index
    %c0_38 = arith.constant 0 : index
    %c18 = arith.constant 18 : index
    %c0_39 = arith.constant 0 : index
    %c0_40 = arith.constant 0 : index
    %96 = vector.load %arg2[%c0_37, %c0_38, %c18, %c0_39, %c0_40] : memref<1x1x36x8x9xbf16, #tpu.memory_space<vmem>>, vector<1x1x9x8x9xbf16>
    %97 = vector.shape_cast %96 : vector<1x1x9x8x9xbf16> to vector<9x8x9xbf16>
    %98 = arith.extf %97 : vector<9x8x9xbf16> to vector<9x8x9xf32>
    %cst_41 = arith.constant dense<0.000000e+00> : vector<9x9xf32>
    %99 = vector.multi_reduction <add>, %98, %cst_41 [1] : vector<9x8x9xf32> to vector<9x9xf32>
    %100 = vector.shape_cast %99 : vector<9x9xf32> to vector<9x1x9xf32>
    %cst_42 = arith.constant 8.000000e+00 : f32
    %101 = vector.broadcast %cst_42 : f32 to vector<9x1x9xf32>
    %102 = arith.divf %100, %101 : vector<9x1x9xf32>
    %103 = vector.broadcast %102 : vector<9x1x9xf32> to vector<9x8x9xf32>
    %104 = arith.subf %98, %103 : vector<9x8x9xf32>
    %105 = arith.mulf %104, %104 : vector<9x8x9xf32>
    %cst_43 = arith.constant dense<0.000000e+00> : vector<9x9xf32>
    %106 = vector.multi_reduction <add>, %105, %cst_43 [1] : vector<9x8x9xf32> to vector<9x9xf32>
    %107 = vector.shape_cast %106 : vector<9x9xf32> to vector<9x1x9xf32>
    %cst_44 = arith.constant 8.000000e+00 : f32
    %108 = vector.broadcast %cst_44 : f32 to vector<9x1x9xf32>
    %109 = arith.divf %107, %108 : vector<9x1x9xf32>
    %cst_45 = arith.constant 9.99999997E-7 : f32
    %110 = vector.broadcast %cst_45 : f32 to vector<9x1x9xf32>
    %111 = arith.addf %109, %110 : vector<9x1x9xf32>
    %112 = math.rsqrt %111 : vector<9x1x9xf32>
    %113 = vector.broadcast %112 : vector<9x1x9xf32> to vector<9x8x9xf32>
    %114 = arith.mulf %104, %113 : vector<9x8x9xf32>
    %115 = vector.shape_cast %0 : vector<8x1xf32> to vector<1x8x1xf32>
    %116 = vector.broadcast %115 : vector<1x8x1xf32> to vector<9x8x9xf32>
    %117 = arith.mulf %114, %116 : vector<9x8x9xf32>
    %118 = vector.shape_cast %1 : vector<8x1xf32> to vector<1x8x1xf32>
    %119 = vector.broadcast %118 : vector<1x8x1xf32> to vector<9x8x9xf32>
    %120 = arith.addf %117, %119 : vector<9x8x9xf32>
    %121 = tpu.iota {dimensions = array<i32: 0>} : vector<9x1x9xi32>
    %c8_i32_46 = arith.constant 8 : i32
    %122 = arith.muli %arg1, %c8_i32_46 : i32
    %123 = vector.broadcast %122 : i32 to vector<9x1x9xi32>
    %124 = arith.addi %121, %123 : vector<9x1x9xi32>
    %125 = tpu.iota {dimensions = array<i32: 2>} : vector<9x1x9xi32>
    %c1_i32_47 = arith.constant 1 : i32
    %126 = vector.broadcast %c1_i32_47 : i32 to vector<9x1x9xi32>
    %127 = arith.cmpi sge, %124, %126 : vector<9x1x9xi32>
    %c8_i32_48 = arith.constant 8 : i32
    %128 = vector.broadcast %c8_i32_48 : i32 to vector<9x1x9xi32>
    %129 = arith.cmpi sle, %124, %128 : vector<9x1x9xi32>
    %130 = arith.andi %127, %129 : vector<9x1x9xi1>
    %c1_i32_49 = arith.constant 1 : i32
    %131 = vector.broadcast %c1_i32_49 : i32 to vector<9x1x9xi32>
    %132 = arith.cmpi sge, %125, %131 : vector<9x1x9xi32>
    %133 = arith.andi %130, %132 : vector<9x1x9xi1>
    %c8_i32_50 = arith.constant 8 : i32
    %134 = vector.broadcast %c8_i32_50 : i32 to vector<9x1x9xi32>
    %135 = arith.cmpi sle, %125, %134 : vector<9x1x9xi32>
    %136 = arith.andi %133, %135 : vector<9x1x9xi1>
    %cst_51 = arith.constant 0.000000e+00 : f32
    %137 = vector.shape_cast %136 : vector<9x1x9xi1> to vector<9x1x9xi1>
    %138 = vector.broadcast %137 : vector<9x1x9xi1> to vector<9x8x9xi1>
    %139 = vector.broadcast %cst_51 : f32 to vector<9x8x9xf32>
    %140 = arith.select %138, %120, %139 : vector<9x8x9xi1>, vector<9x8x9xf32>
    %141 = arith.truncf %140 : vector<9x8x9xf32> to vector<9x8x9xbf16>
    %c18_52 = arith.constant 18 : index
    %c0_53 = arith.constant 0 : index
    %c0_54 = arith.constant 0 : index
    %142 = vector.load %arg7[%c18_52, %c0_53, %c0_54] : memref<36x8x9xbf16, #tpu.memory_space<vmem>>, vector<9x8x9xbf16>
    tpu.vector_store %arg7[%c18_52, %c0_53, %c0_54], %141 {strides = array<i32>} : memref<36x8x9xbf16, #tpu.memory_space<vmem>>, vector<9x8x9xbf16>,
    %c0_55 = arith.constant 0 : index
    %c0_56 = arith.constant 0 : index
    %c27 = arith.constant 27 : index
    %c0_57 = arith.constant 0 : index
    %c0_58 = arith.constant 0 : index
    %143 = vector.load %arg2[%c0_55, %c0_56, %c27, %c0_57, %c0_58] : memref<1x1x36x8x9xbf16, #tpu.memory_space<vmem>>, vector<1x1x9x8x9xbf16>
    %144 = vector.shape_cast %143 : vector<1x1x9x8x9xbf16> to vector<9x8x9xbf16>
    %145 = arith.extf %144 : vector<9x8x9xbf16> to vector<9x8x9xf32>
    %cst_59 = arith.constant dense<0.000000e+00> : vector<9x9xf32>
    %146 = vector.multi_reduction <add>, %145, %cst_59 [1] : vector<9x8x9xf32> to vector<9x9xf32>
    %147 = vector.shape_cast %146 : vector<9x9xf32> to vector<9x1x9xf32>
    %cst_60 = arith.constant 8.000000e+00 : f32
    %148 = vector.broadcast %cst_60 : f32 to vector<9x1x9xf32>
    %149 = arith.divf %147, %148 : vector<9x1x9xf32>
    %150 = vector.broadcast %149 : vector<9x1x9xf32> to vector<9x8x9xf32>
    %151 = arith.subf %145, %150 : vector<9x8x9xf32>
    %152 = arith.mulf %151, %151 : vector<9x8x9xf32>
    %cst_61 = arith.constant dense<0.000000e+00> : vector<9x9xf32>
    %153 = vector.multi_reduction <add>, %152, %cst_61 [1] : vector<9x8x9xf32> to vector<9x9xf32>
    %154 = vector.shape_cast %153 : vector<9x9xf32> to vector<9x1x9xf32>
    %cst_62 = arith.constant 8.000000e+00 : f32
    %155 = vector.broadcast %cst_62 : f32 to vector<9x1x9xf32>
    %156 = arith.divf %154, %155 : vector<9x1x9xf32>
    %cst_63 = arith.constant 9.99999997E-7 : f32
    %157 = vector.broadcast %cst_63 : f32 to vector<9x1x9xf32>
    %158 = arith.addf %156, %157 : vector<9x1x9xf32>
    %159 = math.rsqrt %158 : vector<9x1x9xf32>
    %160 = vector.broadcast %159 : vector<9x1x9xf32> to vector<9x8x9xf32>
    %161 = arith.mulf %151, %160 : vector<9x8x9xf32>
    %162 = vector.shape_cast %0 : vector<8x1xf32> to vector<1x8x1xf32>
    %163 = vector.broadcast %162 : vector<1x8x1xf32> to vector<9x8x9xf32>
    %164 = arith.mulf %161, %163 : vector<9x8x9xf32>
    %165 = vector.shape_cast %1 : vector<8x1xf32> to vector<1x8x1xf32>
    %166 = vector.broadcast %165 : vector<1x8x1xf32> to vector<9x8x9xf32>
    %167 = arith.addf %164, %166 : vector<9x8x9xf32>
    %168 = tpu.iota {dimensions = array<i32: 0>} : vector<9x1x9xi32>
    %c8_i32_64 = arith.constant 8 : i32
    %169 = arith.muli %arg1, %c8_i32_64 : i32
    %170 = vector.broadcast %169 : i32 to vector<9x1x9xi32>
    %171 = arith.addi %168, %170 : vector<9x1x9xi32>
    %172 = tpu.iota {dimensions = array<i32: 2>} : vector<9x1x9xi32>
    %c1_i32_65 = arith.constant 1 : i32
    %173 = vector.broadcast %c1_i32_65 : i32 to vector<9x1x9xi32>
    %174 = arith.cmpi sge, %171, %173 : vector<9x1x9xi32>
    %c8_i32_66 = arith.constant 8 : i32
    %175 = vector.broadcast %c8_i32_66 : i32 to vector<9x1x9xi32>
    %176 = arith.cmpi sle, %171, %175 : vector<9x1x9xi32>
    %177 = arith.andi %174, %176 : vector<9x1x9xi1>
    %c1_i32_67 = arith.constant 1 : i32
    %178 = vector.broadcast %c1_i32_67 : i32 to vector<9x1x9xi32>
    %179 = arith.cmpi sge, %172, %178 : vector<9x1x9xi32>
    %180 = arith.andi %177, %179 : vector<9x1x9xi1>
    %c8_i32_68 = arith.constant 8 : i32
    %181 = vector.broadcast %c8_i32_68 : i32 to vector<9x1x9xi32>
    %182 = arith.cmpi sle, %172, %181 : vector<9x1x9xi32>
    %183 = arith.andi %180, %182 : vector<9x1x9xi1>
    %cst_69 = arith.constant 0.000000e+00 : f32
    %184 = vector.shape_cast %183 : vector<9x1x9xi1> to vector<9x1x9xi1>
    %185 = vector.broadcast %184 : vector<9x1x9xi1> to vector<9x8x9xi1>
    %186 = vector.broadcast %cst_69 : f32 to vector<9x8x9xf32>
    %187 = arith.select %185, %167, %186 : vector<9x8x9xi1>, vector<9x8x9xf32>
    %188 = arith.truncf %187 : vector<9x8x9xf32> to vector<9x8x9xbf16>
    %c27_70 = arith.constant 27 : index
    %c0_71 = arith.constant 0 : index
    %c0_72 = arith.constant 0 : index
    %189 = vector.load %arg7[%c27_70, %c0_71, %c0_72] : memref<36x8x9xbf16, #tpu.memory_space<vmem>>, vector<9x8x9xbf16>
    tpu.vector_store %arg7[%c27_70, %c0_71, %c0_72], %188 {strides = array<i32>} : memref<36x8x9xbf16, #tpu.memory_space<vmem>>, vector<9x8x9xbf16>,
    %c0_73 = arith.constant 0 : index
    %c0_74 = arith.constant 0 : index
    %c0_75 = arith.constant 0 : index
    %190 = vector.load %arg5[%c0_73, %c0_74, %c0_75] : memref<9x16x8xbf16, #tpu.memory_space<vmem>>, vector<1x16x8xbf16>
    %191 = vector.shape_cast %190 : vector<1x16x8xbf16> to vector<16x8xbf16>
    %c1 = arith.constant 1 : index
    %c0_76 = arith.constant 0 : index
    %c0_77 = arith.constant 0 : index
    %192 = vector.load %arg5[%c1, %c0_76, %c0_77] : memref<9x16x8xbf16, #tpu.memory_space<vmem>>, vector<1x16x8xbf16>
    %193 = vector.shape_cast %192 : vector<1x16x8xbf16> to vector<16x8xbf16>
    %c2 = arith.constant 2 : index
    %c0_78 = arith.constant 0 : index
    %c0_79 = arith.constant 0 : index
    %194 = vector.load %arg5[%c2, %c0_78, %c0_79] : memref<9x16x8xbf16, #tpu.memory_space<vmem>>, vector<1x16x8xbf16>
    %195 = vector.shape_cast %194 : vector<1x16x8xbf16> to vector<16x8xbf16>
    %c3 = arith.constant 3 : index
    %c0_80 = arith.constant 0 : index
    %c0_81 = arith.constant 0 : index
    %196 = vector.load %arg5[%c3, %c0_80, %c0_81] : memref<9x16x8xbf16, #tpu.memory_space<vmem>>, vector<1x16x8xbf16>
    %197 = vector.shape_cast %196 : vector<1x16x8xbf16> to vector<16x8xbf16>
    %c4 = arith.constant 4 : index
    %c0_82 = arith.constant 0 : index
    %c0_83 = arith.constant 0 : index
    %198 = vector.load %arg5[%c4, %c0_82, %c0_83] : memref<9x16x8xbf16, #tpu.memory_space<vmem>>, vector<1x16x8xbf16>
    %199 = vector.shape_cast %198 : vector<1x16x8xbf16> to vector<16x8xbf16>
    %c5 = arith.constant 5 : index
    %c0_84 = arith.constant 0 : index
    %c0_85 = arith.constant 0 : index
    %200 = vector.load %arg5[%c5, %c0_84, %c0_85] : memref<9x16x8xbf16, #tpu.memory_space<vmem>>, vector<1x16x8xbf16>
    %201 = vector.shape_cast %200 : vector<1x16x8xbf16> to vector<16x8xbf16>
    %c6 = arith.constant 6 : index
    %c0_86 = arith.constant 0 : index
    %c0_87 = arith.constant 0 : index
    %202 = vector.load %arg5[%c6, %c0_86, %c0_87] : memref<9x16x8xbf16, #tpu.memory_space<vmem>>, vector<1x16x8xbf16>
    %203 = vector.shape_cast %202 : vector<1x16x8xbf16> to vector<16x8xbf16>
    %c7 = arith.constant 7 : index
    %c0_88 = arith.constant 0 : index
    %c0_89 = arith.constant 0 : index
    %204 = vector.load %arg5[%c7, %c0_88, %c0_89] : memref<9x16x8xbf16, #tpu.memory_space<vmem>>, vector<1x16x8xbf16>
    %205 = vector.shape_cast %204 : vector<1x16x8xbf16> to vector<16x8xbf16>
    %c8 = arith.constant 8 : index
    %c0_90 = arith.constant 0 : index
    %c0_91 = arith.constant 0 : index
    %206 = vector.load %arg5[%c8, %c0_90, %c0_91] : memref<9x16x8xbf16, #tpu.memory_space<vmem>>, vector<1x16x8xbf16>
    %207 = vector.shape_cast %206 : vector<1x16x8xbf16> to vector<16x8xbf16>
    %cst_92 = arith.constant 0.000000e+00 : f32
    %208 = vector.broadcast %cst_92 : f32 to vector<16x8xf32>
    %c27_93 = arith.constant 27 : index
    %c0_94 = arith.constant 0 : index
    %c0_95 = arith.constant 0 : index
    %209 = vector.load %arg7[%c27_93, %c0_94, %c0_95] : memref<36x8x9xbf16, #tpu.memory_space<vmem>>, vector<1x8x8xbf16>
    %210 = vector.shape_cast %209 : vector<1x8x8xbf16> to vector<8x8xbf16>
    %cst_96 = arith.constant dense<0.000000e+00> : vector<16x8xf32>
    %211 = tpu.matmul %191, %210, %cst_96 {dimension_numbers = #tpu.dot_dimension_numbers<[1], [0], [0], [1], [0, 0, 1, 1], [], []>} : vector<16x8xbf16>, vector<8x8xbf16>, vector<16x8xf32> -> vector<16x8xf32>
    %212 = arith.addf %208, %211 : vector<16x8xf32>
    %c18_97 = arith.constant 18 : index
    %c0_98 = arith.constant 0 : index
    %c1_99 = arith.constant 1 : index
    %213 = vector.load %arg7[%c18_97, %c0_98, %c1_99] : memref<36x8x9xbf16, #tpu.memory_space<vmem>>, vector<1x8x8xbf16>
    %214 = vector.shape_cast %213 : vector<1x8x8xbf16> to vector<8x8xbf16>
    %cst_100 = arith.constant dense<0.000000e+00> : vector<16x8xf32>
    %215 = tpu.matmul %193, %214, %cst_100 {dimension_numbers = #tpu.dot_dimension_numbers<[1], [0], [0], [1], [0, 0, 1, 1], [], []>} : vector<16x8xbf16>, vector<8x8xbf16>, vector<16x8xf32> -> vector<16x8xf32>
    %216 = arith.addf %212, %215 : vector<16x8xf32>
    %c27_101 = arith.constant 27 : index
    %c0_102 = arith.constant 0 : index
    %c1_103 = arith.constant 1 : index
    %217 = vector.load %arg7[%c27_101, %c0_102, %c1_103] : memref<36x8x9xbf16, #tpu.memory_space<vmem>>, vector<1x8x8xbf16>
    %218 = vector.shape_cast %217 : vector<1x8x8xbf16> to vector<8x8xbf16>
    %cst_104 = arith.constant dense<0.000000e+00> : vector<16x8xf32>
    %219 = tpu.matmul %195, %218, %cst_104 {dimension_numbers = #tpu.dot_dimension_numbers<[1], [0], [0], [1], [0, 0, 1, 1], [], []>} : vector<16x8xbf16>, vector<8x8xbf16>, vector<16x8xf32> -> vector<16x8xf32>
    %220 = arith.addf %216, %219 : vector<16x8xf32>
    %c10 = arith.constant 10 : index
    %c0_105 = arith.constant 0 : index
    %c0_106 = arith.constant 0 : index
    %221 = vector.load %arg7[%c10, %c0_105, %c0_106] : memref<36x8x9xbf16, #tpu.memory_space<vmem>>, vector<1x8x8xbf16>
    %222 = vector.shape_cast %221 : vector<1x8x8xbf16> to vector<8x8xbf16>
    %cst_107 = arith.constant dense<0.000000e+00> : vector<16x8xf32>
    %223 = tpu.matmul %197, %222, %cst_107 {dimension_numbers = #tpu.dot_dimension_numbers<[1], [0], [0], [1], [0, 0, 1, 1], [], []>} : vector<16x8xbf16>, vector<8x8xbf16>, vector<16x8xf32> -> vector<16x8xf32>
    %224 = arith.addf %220, %223 : vector<16x8xf32>
    %c1_108 = arith.constant 1 : index
    %c0_109 = arith.constant 0 : index
    %c1_110 = arith.constant 1 : index
    %225 = vector.load %arg7[%c1_108, %c0_109, %c1_110] : memref<36x8x9xbf16, #tpu.memory_space<vmem>>, vector<1x8x8xbf16>
    %226 = vector.shape_cast %225 : vector<1x8x8xbf16> to vector<8x8xbf16>
    %cst_111 = arith.constant dense<0.000000e+00> : vector<16x8xf32>
    %227 = tpu.matmul %199, %226, %cst_111 {dimension_numbers = #tpu.dot_dimension_numbers<[1], [0], [0], [1], [0, 0, 1, 1], [], []>} : vector<16x8xbf16>, vector<8x8xbf16>, vector<16x8xf32> -> vector<16x8xf32>
    %228 = arith.addf %224, %227 : vector<16x8xf32>
    %c10_112 = arith.constant 10 : index
    %c0_113 = arith.constant 0 : index
    %c1_114 = arith.constant 1 : index
    %229 = vector.load %arg7[%c10_112, %c0_113, %c1_114] : memref<36x8x9xbf16, #tpu.memory_space<vmem>>, vector<1x8x8xbf16>
    %230 = vector.shape_cast %229 : vector<1x8x8xbf16> to vector<8x8xbf16>
    %cst_115 = arith.constant dense<0.000000e+00> : vector<16x8xf32>
    %231 = tpu.matmul %201, %230, %cst_115 {dimension_numbers = #tpu.dot_dimension_numbers<[1], [0], [0], [1], [0, 0, 1, 1], [], []>} : vector<16x8xbf16>, vector<8x8xbf16>, vector<16x8xf32> -> vector<16x8xf32>
    %232 = arith.addf %228, %231 : vector<16x8xf32>
    %c28 = arith.constant 28 : index
    %c0_116 = arith.constant 0 : index
    %c0_117 = arith.constant 0 : index
    %233 = vector.load %arg7[%c28, %c0_116, %c0_117] : memref<36x8x9xbf16, #tpu.memory_space<vmem>>, vector<1x8x8xbf16>
    %234 = vector.shape_cast %233 : vector<1x8x8xbf16> to vector<8x8xbf16>
    %cst_118 = arith.constant dense<0.000000e+00> : vector<16x8xf32>
    %235 = tpu.matmul %203, %234, %cst_118 {dimension_numbers = #tpu.dot_dimension_numbers<[1], [0], [0], [1], [0, 0, 1, 1], [], []>} : vector<16x8xbf16>, vector<8x8xbf16>, vector<16x8xf32> -> vector<16x8xf32>
    %236 = arith.addf %232, %235 : vector<16x8xf32>
    %c19 = arith.constant 19 : index
    %c0_119 = arith.constant 0 : index
    %c1_120 = arith.constant 1 : index
    %237 = vector.load %arg7[%c19, %c0_119, %c1_120] : memref<36x8x9xbf16, #tpu.memory_space<vmem>>, vector<1x8x8xbf16>
    %238 = vector.shape_cast %237 : vector<1x8x8xbf16> to vector<8x8xbf16>
    %cst_121 = arith.constant dense<0.000000e+00> : vector<16x8xf32>
    %239 = tpu.matmul %205, %238, %cst_121 {dimension_numbers = #tpu.dot_dimension_numbers<[1], [0], [0], [1], [0, 0, 1, 1], [], []>} : vector<16x8xbf16>, vector<8x8xbf16>, vector<16x8xf32> -> vector<16x8xf32>
    %240 = arith.addf %236, %239 : vector<16x8xf32>
    %c28_122 = arith.constant 28 : index
    %c0_123 = arith.constant 0 : index
    %c1_124 = arith.constant 1 : index
    %241 = vector.load %arg7[%c28_122, %c0_123, %c1_124] : memref<36x8x9xbf16, #tpu.memory_space<vmem>>, vector<1x8x8xbf16>
    %242 = vector.shape_cast %241 : vector<1x8x8xbf16> to vector<8x8xbf16>
    %cst_125 = arith.constant dense<0.000000e+00> : vector<16x8xf32>
    %243 = tpu.matmul %207, %242, %cst_125 {dimension_numbers = #tpu.dot_dimension_numbers<[1], [0], [0], [1], [0, 0, 1, 1], [], []>} : vector<16x8xbf16>, vector<8x8xbf16>, vector<16x8xf32> -> vector<16x8xf32>
    %244 = arith.addf %240, %243 : vector<16x8xf32>
    %c0_126 = arith.constant 0 : index
    %c0_127 = arith.constant 0 : index
    %c0_128 = arith.constant 0 : index
    %c0_129 = arith.constant 0 : index
    %245 = vector.load %arg6[%c0_126, %c0_127, %c0_128, %c0_129] : memref<1x16x8x8xf32, #tpu.memory_space<vmem>>, vector<1x16x1x8xf32>
    %246 = vector.shape_cast %245 : vector<1x16x1x8xf32> to vector<16x8xf32>
    %247 = vector.shape_cast %244 : vector<16x8xf32> to vector<1x16x1x8xf32>
    tpu.vector_store %arg6[%c0_126, %c0_127, %c0_128, %c0_129], %247 {strides = array<i32>} : memref<1x16x8x8xf32, #tpu.memory_space<vmem>>, vector<1x16x1x8xf32>,
    %cst_130 = arith.constant 0.000000e+00 : f32
    %248 = vector.broadcast %cst_130 : f32 to vector<16x8xf32>
    %c28_131 = arith.constant 28 : index
    %c0_132 = arith.constant 0 : index
    %c0_133 = arith.constant 0 : index
    %249 = vector.load %arg7[%c28_131, %c0_132, %c0_133] : memref<36x8x9xbf16, #tpu.memory_space<vmem>>, vector<1x8x8xbf16>
    %250 = vector.shape_cast %249 : vector<1x8x8xbf16> to vector<8x8xbf16>
    %cst_134 = arith.constant dense<0.000000e+00> : vector<16x8xf32>
    %251 = tpu.matmul %191, %250, %cst_134 {dimension_numbers = #tpu.dot_dimension_numbers<[1], [0], [0], [1], [0, 0, 1, 1], [], []>} : vector<16x8xbf16>, vector<8x8xbf16>, vector<16x8xf32> -> vector<16x8xf32>
    %252 = arith.addf %248, %251 : vector<16x8xf32>
    %c19_135 = arith.constant 19 : index
    %c0_136 = arith.constant 0 : index
    %c1_137 = arith.constant 1 : index
    %253 = vector.load %arg7[%c19_135, %c0_136, %c1_137] : memref<36x8x9xbf16, #tpu.memory_space<vmem>>, vector<1x8x8xbf16>
    %254 = vector.shape_cast %253 : vector<1x8x8xbf16> to vector<8x8xbf16>
    %cst_138 = arith.constant dense<0.000000e+00> : vector<16x8xf32>
    %255 = tpu.matmul %193, %254, %cst_138 {dimension_numbers = #tpu.dot_dimension_numbers<[1], [0], [0], [1], [0, 0, 1, 1], [], []>} : vector<16x8xbf16>, vector<8x8xbf16>, vector<16x8xf32> -> vector<16x8xf32>
    %256 = arith.addf %252, %255 : vector<16x8xf32>
    %c28_139 = arith.constant 28 : index
    %c0_140 = arith.constant 0 : index
    %c1_141 = arith.constant 1 : index
    %257 = vector.load %arg7[%c28_139, %c0_140, %c1_141] : memref<36x8x9xbf16, #tpu.memory_space<vmem>>, vector<1x8x8xbf16>
    %258 = vector.shape_cast %257 : vector<1x8x8xbf16> to vector<8x8xbf16>
    %cst_142 = arith.constant dense<0.000000e+00> : vector<16x8xf32>
    %259 = tpu.matmul %195, %258, %cst_142 {dimension_numbers = #tpu.dot_dimension_numbers<[1], [0], [0], [1], [0, 0, 1, 1], [], []>} : vector<16x8xbf16>, vector<8x8xbf16>, vector<16x8xf32> -> vector<16x8xf32>
    %260 = arith.addf %256, %259 : vector<16x8xf32>
    %c11 = arith.constant 11 : index
    %c0_143 = arith.constant 0 : index
    %c0_144 = arith.constant 0 : index
    %261 = vector.load %arg7[%c11, %c0_143, %c0_144] : memref<36x8x9xbf16, #tpu.memory_space<vmem>>, vector<1x8x8xbf16>
    %262 = vector.shape_cast %261 : vector<1x8x8xbf16> to vector<8x8xbf16>
    %cst_145 = arith.constant dense<0.000000e+00> : vector<16x8xf32>
    %263 = tpu.matmul %197, %262, %cst_145 {dimension_numbers = #tpu.dot_dimension_numbers<[1], [0], [0], [1], [0, 0, 1, 1], [], []>} : vector<16x8xbf16>, vector<8x8xbf16>, vector<16x8xf32> -> vector<16x8xf32>
    %264 = arith.addf %260, %263 : vector<16x8xf32>
    %c2_146 = arith.constant 2 : index
    %c0_147 = arith.constant 0 : index
    %c1_148 = arith.constant 1 : index
    %265 = vector.load %arg7[%c2_146, %c0_147, %c1_148] : memref<36x8x9xbf16, #tpu.memory_space<vmem>>, vector<1x8x8xbf16>
    %266 = vector.shape_cast %265 : vector<1x8x8xbf16> to vector<8x8xbf16>
    %cst_149 = arith.constant dense<0.000000e+00> : vector<16x8xf32>
    %267 = tpu.matmul %199, %266, %cst_149 {dimension_numbers = #tpu.dot_dimension_numbers<[1], [0], [0], [1], [0, 0, 1, 1], [], []>} : vector<16x8xbf16>, vector<8x8xbf16>, vector<16x8xf32> -> vector<16x8xf32>
    %268 = arith.addf %264, %267 : vector<16x8xf32>
    %c11_150 = arith.constant 11 : index
    %c0_151 = arith.constant 0 : index
    %c1_152 = arith.constant 1 : index
    %269 = vector.load %arg7[%c11_150, %c0_151, %c1_152] : memref<36x8x9xbf16, #tpu.memory_space<vmem>>, vector<1x8x8xbf16>
    %270 = vector.shape_cast %269 : vector<1x8x8xbf16> to vector<8x8xbf16>
    %cst_153 = arith.constant dense<0.000000e+00> : vector<16x8xf32>
    %271 = tpu.matmul %201, %270, %cst_153 {dimension_numbers = #tpu.dot_dimension_numbers<[1], [0], [0], [1], [0, 0, 1, 1], [], []>} : vector<16x8xbf16>, vector<8x8xbf16>, vector<16x8xf32> -> vector<16x8xf32>
    %272 = arith.addf %268, %271 : vector<16x8xf32>
    %c29 = arith.constant 29 : index
    %c0_154 = arith.constant 0 : index
    %c0_155 = arith.constant 0 : index
    %273 = vector.load %arg7[%c29, %c0_154, %c0_155] : memref<36x8x9xbf16, #tpu.memory_space<vmem>>, vector<1x8x8xbf16>
    %274 = vector.shape_cast %273 : vector<1x8x8xbf16> to vector<8x8xbf16>
    %cst_156 = arith.constant dense<0.000000e+00> : vector<16x8xf32>
    %275 = tpu.matmul %203, %274, %cst_156 {dimension_numbers = #tpu.dot_dimension_numbers<[1], [0], [0], [1], [0, 0, 1, 1], [], []>} : vector<16x8xbf16>, vector<8x8xbf16>, vector<16x8xf32> -> vector<16x8xf32>
    %276 = arith.addf %272, %275 : vector<16x8xf32>
    %c20 = arith.constant 20 : index
    %c0_157 = arith.constant 0 : index
    %c1_158 = arith.constant 1 : index
    %277 = vector.load %arg7[%c20, %c0_157, %c1_158] : memref<36x8x9xbf16, #tpu.memory_space<vmem>>, vector<1x8x8xbf16>
    %278 = vector.shape_cast %277 : vector<1x8x8xbf16> to vector<8x8xbf16>
    %cst_159 = arith.constant dense<0.000000e+00> : vector<16x8xf32>
    %279 = tpu.matmul %205, %278, %cst_159 {dimension_numbers = #tpu.dot_dimension_numbers<[1], [0], [0], [1], [0, 0, 1, 1], [], []>} : vector<16x8xbf16>, vector<8x8xbf16>, vector<16x8xf32> -> vector<16x8xf32>
    %280 = arith.addf %276, %279 : vector<16x8xf32>
    %c29_160 = arith.constant 29 : index
    %c0_161 = arith.constant 0 : index
    %c1_162 = arith.constant 1 : index
    %281 = vector.load %arg7[%c29_160, %c0_161, %c1_162] : memref<36x8x9xbf16, #tpu.memory_space<vmem>>, vector<1x8x8xbf16>
    %282 = vector.shape_cast %281 : vector<1x8x8xbf16> to vector<8x8xbf16>
    %cst_163 = arith.constant dense<0.000000e+00> : vector<16x8xf32>
    %283 = tpu.matmul %207, %282, %cst_163 {dimension_numbers = #tpu.dot_dimension_numbers<[1], [0], [0], [1], [0, 0, 1, 1], [], []>} : vector<16x8xbf16>, vector<8x8xbf16>, vector<16x8xf32> -> vector<16x8xf32>
    %284 = arith.addf %280, %283 : vector<16x8xf32>
    %c0_164 = arith.constant 0 : index
    %c0_165 = arith.constant 0 : index
    %c1_166 = arith.constant 1 : index
    %c0_167 = arith.constant 0 : index
    %285 = vector.load %arg6[%c0_164, %c0_165, %c1_166, %c0_167] : memref<1x16x8x8xf32, #tpu.memory_space<vmem>>, vector<1x16x1x8xf32>
    %286 = vector.shape_cast %285 : vector<1x16x1x8xf32> to vector<16x8xf32>
    %287 = vector.shape_cast %284 : vector<16x8xf32> to vector<1x16x1x8xf32>
    tpu.vector_store %arg6[%c0_164, %c0_165, %c1_166, %c0_167], %287 {strides = array<i32>} : memref<1x16x8x8xf32, #tpu.memory_space<vmem>>, vector<1x16x1x8xf32>,
    %cst_168 = arith.constant 0.000000e+00 : f32
    %288 = vector.broadcast %cst_168 : f32 to vector<16x8xf32>
    %c29_169 = arith.constant 29 : index
    %c0_170 = arith.constant 0 : index
    %c0_171 = arith.constant 0 : index
    %289 = vector.load %arg7[%c29_169, %c0_170, %c0_171] : memref<36x8x9xbf16, #tpu.memory_space<vmem>>, vector<1x8x8xbf16>
    %290 = vector.shape_cast %289 : vector<1x8x8xbf16> to vector<8x8xbf16>
    %cst_172 = arith.constant dense<0.000000e+00> : vector<16x8xf32>
    %291 = tpu.matmul %191, %290, %cst_172 {dimension_numbers = #tpu.dot_dimension_numbers<[1], [0], [0], [1], [0, 0, 1, 1], [], []>} : vector<16x8xbf16>, vector<8x8xbf16>, vector<16x8xf32> -> vector<16x8xf32>
    %292 = arith.addf %288, %291 : vector<16x8xf32>
    %c20_173 = arith.constant 20 : index
    %c0_174 = arith.constant 0 : index
    %c1_175 = arith.constant 1 : index
    %293 = vector.load %arg7[%c20_173, %c0_174, %c1_175] : memref<36x8x9xbf16, #tpu.memory_space<vmem>>, vector<1x8x8xbf16>
    %294 = vector.shape_cast %293 : vector<1x8x8xbf16> to vector<8x8xbf16>
    %cst_176 = arith.constant dense<0.000000e+00> : vector<16x8xf32>
    %295 = tpu.matmul %193, %294, %cst_176 {dimension_numbers = #tpu.dot_dimension_numbers<[1], [0], [0], [1], [0, 0, 1, 1], [], []>} : vector<16x8xbf16>, vector<8x8xbf16>, vector<16x8xf32> -> vector<16x8xf32>
    %296 = arith.addf %292, %295 : vector<16x8xf32>
    %c29_177 = arith.constant 29 : index
    %c0_178 = arith.constant 0 : index
    %c1_179 = arith.constant 1 : index
    %297 = vector.load %arg7[%c29_177, %c0_178, %c1_179] : memref<36x8x9xbf16, #tpu.memory_space<vmem>>, vector<1x8x8xbf16>
    %298 = vector.shape_cast %297 : vector<1x8x8xbf16> to vector<8x8xbf16>
    %cst_180 = arith.constant dense<0.000000e+00> : vector<16x8xf32>
    %299 = tpu.matmul %195, %298, %cst_180 {dimension_numbers = #tpu.dot_dimension_numbers<[1], [0], [0], [1], [0, 0, 1, 1], [], []>} : vector<16x8xbf16>, vector<8x8xbf16>, vector<16x8xf32> -> vector<16x8xf32>
    %300 = arith.addf %296, %299 : vector<16x8xf32>
    %c12 = arith.constant 12 : index
    %c0_181 = arith.constant 0 : index
    %c0_182 = arith.constant 0 : index
    %301 = vector.load %arg7[%c12, %c0_181, %c0_182] : memref<36x8x9xbf16, #tpu.memory_space<vmem>>, vector<1x8x8xbf16>
    %302 = vector.shape_cast %301 : vector<1x8x8xbf16> to vector<8x8xbf16>
    %cst_183 = arith.constant dense<0.000000e+00> : vector<16x8xf32>
    %303 = tpu.matmul %197, %302, %cst_183 {dimension_numbers = #tpu.dot_dimension_numbers<[1], [0], [0], [1], [0, 0, 1, 1], [], []>} : vector<16x8xbf16>, vector<8x8xbf16>, vector<16x8xf32> -> vector<16x8xf32>
    %304 = arith.addf %300, %303 : vector<16x8xf32>
    %c3_184 = arith.constant 3 : index
    %c0_185 = arith.constant 0 : index
    %c1_186 = arith.constant 1 : index
    %305 = vector.load %arg7[%c3_184, %c0_185, %c1_186] : memref<36x8x9xbf16, #tpu.memory_space<vmem>>, vector<1x8x8xbf16>
    %306 = vector.shape_cast %305 : vector<1x8x8xbf16> to vector<8x8xbf16>
    %cst_187 = arith.constant dense<0.000000e+00> : vector<16x8xf32>
    %307 = tpu.matmul %199, %306, %cst_187 {dimension_numbers = #tpu.dot_dimension_numbers<[1], [0], [0], [1], [0, 0, 1, 1], [], []>} : vector<16x8xbf16>, vector<8x8xbf16>, vector<16x8xf32> -> vector<16x8xf32>
    %308 = arith.addf %304, %307 : vector<16x8xf32>
    %c12_188 = arith.constant 12 : index
    %c0_189 = arith.constant 0 : index
    %c1_190 = arith.constant 1 : index
    %309 = vector.load %arg7[%c12_188, %c0_189, %c1_190] : memref<36x8x9xbf16, #tpu.memory_space<vmem>>, vector<1x8x8xbf16>
    %310 = vector.shape_cast %309 : vector<1x8x8xbf16> to vector<8x8xbf16>
    %cst_191 = arith.constant dense<0.000000e+00> : vector<16x8xf32>
    %311 = tpu.matmul %201, %310, %cst_191 {dimension_numbers = #tpu.dot_dimension_numbers<[1], [0], [0], [1], [0, 0, 1, 1], [], []>} : vector<16x8xbf16>, vector<8x8xbf16>, vector<16x8xf32> -> vector<16x8xf32>
    %312 = arith.addf %308, %311 : vector<16x8xf32>
    %c30 = arith.constant 30 : index
    %c0_192 = arith.constant 0 : index
    %c0_193 = arith.constant 0 : index
    %313 = vector.load %arg7[%c30, %c0_192, %c0_193] : memref<36x8x9xbf16, #tpu.memory_space<vmem>>, vector<1x8x8xbf16>
    %314 = vector.shape_cast %313 : vector<1x8x8xbf16> to vector<8x8xbf16>
    %cst_194 = arith.constant dense<0.000000e+00> : vector<16x8xf32>
    %315 = tpu.matmul %203, %314, %cst_194 {dimension_numbers = #tpu.dot_dimension_numbers<[1], [0], [0], [1], [0, 0, 1, 1], [], []>} : vector<16x8xbf16>, vector<8x8xbf16>, vector<16x8xf32> -> vector<16x8xf32>
    %316 = arith.addf %312, %315 : vector<16x8xf32>
    %c21 = arith.constant 21 : index
    %c0_195 = arith.constant 0 : index
    %c1_196 = arith.constant 1 : index
    %317 = vector.load %arg7[%c21, %c0_195, %c1_196] : memref<36x8x9xbf16, #tpu.memory_space<vmem>>, vector<1x8x8xbf16>
    %318 = vector.shape_cast %317 : vector<1x8x8xbf16> to vector<8x8xbf16>
    %cst_197 = arith.constant dense<0.000000e+00> : vector<16x8xf32>
    %319 = tpu.matmul %205, %318, %cst_197 {dimension_numbers = #tpu.dot_dimension_numbers<[1], [0], [0], [1], [0, 0, 1, 1], [], []>} : vector<16x8xbf16>, vector<8x8xbf16>, vector<16x8xf32> -> vector<16x8xf32>
    %320 = arith.addf %316, %319 : vector<16x8xf32>
    %c30_198 = arith.constant 30 : index
    %c0_199 = arith.constant 0 : index
    %c1_200 = arith.constant 1 : index
    %321 = vector.load %arg7[%c30_198, %c0_199, %c1_200] : memref<36x8x9xbf16, #tpu.memory_space<vmem>>, vector<1x8x8xbf16>
    %322 = vector.shape_cast %321 : vector<1x8x8xbf16> to vector<8x8xbf16>
    %cst_201 = arith.constant dense<0.000000e+00> : vector<16x8xf32>
    %323 = tpu.matmul %207, %322, %cst_201 {dimension_numbers = #tpu.dot_dimension_numbers<[1], [0], [0], [1], [0, 0, 1, 1], [], []>} : vector<16x8xbf16>, vector<8x8xbf16>, vector<16x8xf32> -> vector<16x8xf32>
    %324 = arith.addf %320, %323 : vector<16x8xf32>
    %c0_202 = arith.constant 0 : index
    %c0_203 = arith.constant 0 : index
    %c2_204 = arith.constant 2 : index
    %c0_205 = arith.constant 0 : index
    %325 = vector.load %arg6[%c0_202, %c0_203, %c2_204, %c0_205] : memref<1x16x8x8xf32, #tpu.memory_space<vmem>>, vector<1x16x1x8xf32>
    %326 = vector.shape_cast %325 : vector<1x16x1x8xf32> to vector<16x8xf32>
    %327 = vector.shape_cast %324 : vector<16x8xf32> to vector<1x16x1x8xf32>
    tpu.vector_store %arg6[%c0_202, %c0_203, %c2_204, %c0_205], %327 {strides = array<i32>} : memref<1x16x8x8xf32, #tpu.memory_space<vmem>>, vector<1x16x1x8xf32>,
    %cst_206 = arith.constant 0.000000e+00 : f32
    %328 = vector.broadcast %cst_206 : f32 to vector<16x8xf32>
    %c30_207 = arith.constant 30 : index
    %c0_208 = arith.constant 0 : index
    %c0_209 = arith.constant 0 : index
    %329 = vector.load %arg7[%c30_207, %c0_208, %c0_209] : memref<36x8x9xbf16, #tpu.memory_space<vmem>>, vector<1x8x8xbf16>
    %330 = vector.shape_cast %329 : vector<1x8x8xbf16> to vector<8x8xbf16>
    %cst_210 = arith.constant dense<0.000000e+00> : vector<16x8xf32>
    %331 = tpu.matmul %191, %330, %cst_210 {dimension_numbers = #tpu.dot_dimension_numbers<[1], [0], [0], [1], [0, 0, 1, 1], [], []>} : vector<16x8xbf16>, vector<8x8xbf16>, vector<16x8xf32> -> vector<16x8xf32>
    %332 = arith.addf %328, %331 : vector<16x8xf32>
    %c21_211 = arith.constant 21 : index
    %c0_212 = arith.constant 0 : index
    %c1_213 = arith.constant 1 : index
    %333 = vector.load %arg7[%c21_211, %c0_212, %c1_213] : memref<36x8x9xbf16, #tpu.memory_space<vmem>>, vector<1x8x8xbf16>
    %334 = vector.shape_cast %333 : vector<1x8x8xbf16> to vector<8x8xbf16>
    %cst_214 = arith.constant dense<0.000000e+00> : vector<16x8xf32>
    %335 = tpu.matmul %193, %334, %cst_214 {dimension_numbers = #tpu.dot_dimension_numbers<[1], [0], [0], [1], [0, 0, 1, 1], [], []>} : vector<16x8xbf16>, vector<8x8xbf16>, vector<16x8xf32> -> vector<16x8xf32>
    %336 = arith.addf %332, %335 : vector<16x8xf32>
    %c30_215 = arith.constant 30 : index
    %c0_216 = arith.constant 0 : index
    %c1_217 = arith.constant 1 : index
    %337 = vector.load %arg7[%c30_215, %c0_216, %c1_217] : memref<36x8x9xbf16, #tpu.memory_space<vmem>>, vector<1x8x8xbf16>
    %338 = vector.shape_cast %337 : vector<1x8x8xbf16> to vector<8x8xbf16>
    %cst_218 = arith.constant dense<0.000000e+00> : vector<16x8xf32>
    %339 = tpu.matmul %195, %338, %cst_218 {dimension_numbers = #tpu.dot_dimension_numbers<[1], [0], [0], [1], [0, 0, 1, 1], [], []>} : vector<16x8xbf16>, vector<8x8xbf16>, vector<16x8xf32> -> vector<16x8xf32>
    %340 = arith.addf %336, %339 : vector<16x8xf32>
    %c13 = arith.constant 13 : index
    %c0_219 = arith.constant 0 : index
    %c0_220 = arith.constant 0 : index
    %341 = vector.load %arg7[%c13, %c0_219, %c0_220] : memref<36x8x9xbf16, #tpu.memory_space<vmem>>, vector<1x8x8xbf16>
    %342 = vector.shape_cast %341 : vector<1x8x8xbf16> to vector<8x8xbf16>
    %cst_221 = arith.constant dense<0.000000e+00> : vector<16x8xf32>
    %343 = tpu.matmul %197, %342, %cst_221 {dimension_numbers = #tpu.dot_dimension_numbers<[1], [0], [0], [1], [0, 0, 1, 1], [], []>} : vector<16x8xbf16>, vector<8x8xbf16>, vector<16x8xf32> -> vector<16x8xf32>
    %344 = arith.addf %340, %343 : vector<16x8xf32>
    %c4_222 = arith.constant 4 : index
    %c0_223 = arith.constant 0 : index
    %c1_224 = arith.constant 1 : index
    %345 = vector.load %arg7[%c4_222, %c0_223, %c1_224] : memref<36x8x9xbf16, #tpu.memory_space<vmem>>, vector<1x8x8xbf16>
    %346 = vector.shape_cast %345 : vector<1x8x8xbf16> to vector<8x8xbf16>
    %cst_225 = arith.constant dense<0.000000e+00> : vector<16x8xf32>
    %347 = tpu.matmul %199, %346, %cst_225 {dimension_numbers = #tpu.dot_dimension_numbers<[1], [0], [0], [1], [0, 0, 1, 1], [], []>} : vector<16x8xbf16>, vector<8x8xbf16>, vector<16x8xf32> -> vector<16x8xf32>
    %348 = arith.addf %344, %347 : vector<16x8xf32>
    %c13_226 = arith.constant 13 : index
    %c0_227 = arith.constant 0 : index
    %c1_228 = arith.constant 1 : index
    %349 = vector.load %arg7[%c13_226, %c0_227, %c1_228] : memref<36x8x9xbf16, #tpu.memory_space<vmem>>, vector<1x8x8xbf16>
    %350 = vector.shape_cast %349 : vector<1x8x8xbf16> to vector<8x8xbf16>
    %cst_229 = arith.constant dense<0.000000e+00> : vector<16x8xf32>
    %351 = tpu.matmul %201, %350, %cst_229 {dimension_numbers = #tpu.dot_dimension_numbers<[1], [0], [0], [1], [0, 0, 1, 1], [], []>} : vector<16x8xbf16>, vector<8x8xbf16>, vector<16x8xf32> -> vector<16x8xf32>
    %352 = arith.addf %348, %351 : vector<16x8xf32>
    %c31 = arith.constant 31 : index
    %c0_230 = arith.constant 0 : index
    %c0_231 = arith.constant 0 : index
    %353 = vector.load %arg7[%c31, %c0_230, %c0_231] : memref<36x8x9xbf16, #tpu.memory_space<vmem>>, vector<1x8x8xbf16>
    %354 = vector.shape_cast %353 : vector<1x8x8xbf16> to vector<8x8xbf16>
    %cst_232 = arith.constant dense<0.000000e+00> : vector<16x8xf32>
    %355 = tpu.matmul %203, %354, %cst_232 {dimension_numbers = #tpu.dot_dimension_numbers<[1], [0], [0], [1], [0, 0, 1, 1], [], []>} : vector<16x8xbf16>, vector<8x8xbf16>, vector<16x8xf32> -> vector<16x8xf32>
    %356 = arith.addf %352, %355 : vector<16x8xf32>
    %c22 = arith.constant 22 : index
    %c0_233 = arith.constant 0 : index
    %c1_234 = arith.constant 1 : index
    %357 = vector.load %arg7[%c22, %c0_233, %c1_234] : memref<36x8x9xbf16, #tpu.memory_space<vmem>>, vector<1x8x8xbf16>
    %358 = vector.shape_cast %357 : vector<1x8x8xbf16> to vector<8x8xbf16>
    %cst_235 = arith.constant dense<0.000000e+00> : vector<16x8xf32>
    %359 = tpu.matmul %205, %358, %cst_235 {dimension_numbers = #tpu.dot_dimension_numbers<[1], [0], [0], [1], [0, 0, 1, 1], [], []>} : vector<16x8xbf16>, vector<8x8xbf16>, vector<16x8xf32> -> vector<16x8xf32>
    %360 = arith.addf %356, %359 : vector<16x8xf32>
    %c31_236 = arith.constant 31 : index
    %c0_237 = arith.constant 0 : index
    %c1_238 = arith.constant 1 : index
    %361 = vector.load %arg7[%c31_236, %c0_237, %c1_238] : memref<36x8x9xbf16, #tpu.memory_space<vmem>>, vector<1x8x8xbf16>
    %362 = vector.shape_cast %361 : vector<1x8x8xbf16> to vector<8x8xbf16>
    %cst_239 = arith.constant dense<0.000000e+00> : vector<16x8xf32>
    %363 = tpu.matmul %207, %362, %cst_239 {dimension_numbers = #tpu.dot_dimension_numbers<[1], [0], [0], [1], [0, 0, 1, 1], [], []>} : vector<16x8xbf16>, vector<8x8xbf16>, vector<16x8xf32> -> vector<16x8xf32>
    %364 = arith.addf %360, %363 : vector<16x8xf32>
    %c0_240 = arith.constant 0 : index
    %c0_241 = arith.constant 0 : index
    %c3_242 = arith.constant 3 : index
    %c0_243 = arith.constant 0 : index
    %365 = vector.load %arg6[%c0_240, %c0_241, %c3_242, %c0_243] : memref<1x16x8x8xf32, #tpu.memory_space<vmem>>, vector<1x16x1x8xf32>
    %366 = vector.shape_cast %365 : vector<1x16x1x8xf32> to vector<16x8xf32>
    %367 = vector.shape_cast %364 : vector<16x8xf32> to vector<1x16x1x8xf32>
    tpu.vector_store %arg6[%c0_240, %c0_241, %c3_242, %c0_243], %367 {strides = array<i32>} : memref<1x16x8x8xf32, #tpu.memory_space<vmem>>, vector<1x16x1x8xf32>,
    %cst_244 = arith.constant 0.000000e+00 : f32
    %368 = vector.broadcast %cst_244 : f32 to vector<16x8xf32>
    %c31_245 = arith.constant 31 : index
    %c0_246 = arith.constant 0 : index
    %c0_247 = arith.constant 0 : index
    %369 = vector.load %arg7[%c31_245, %c0_246, %c0_247] : memref<36x8x9xbf16, #tpu.memory_space<vmem>>, vector<1x8x8xbf16>
    %370 = vector.shape_cast %369 : vector<1x8x8xbf16> to vector<8x8xbf16>
    %cst_248 = arith.constant dense<0.000000e+00> : vector<16x8xf32>
    %371 = tpu.matmul %191, %370, %cst_248 {dimension_numbers = #tpu.dot_dimension_numbers<[1], [0], [0], [1], [0, 0, 1, 1], [], []>} : vector<16x8xbf16>, vector<8x8xbf16>, vector<16x8xf32> -> vector<16x8xf32>
    %372 = arith.addf %368, %371 : vector<16x8xf32>
    %c22_249 = arith.constant 22 : index
    %c0_250 = arith.constant 0 : index
    %c1_251 = arith.constant 1 : index
    %373 = vector.load %arg7[%c22_249, %c0_250, %c1_251] : memref<36x8x9xbf16, #tpu.memory_space<vmem>>, vector<1x8x8xbf16>
    %374 = vector.shape_cast %373 : vector<1x8x8xbf16> to vector<8x8xbf16>
    %cst_252 = arith.constant dense<0.000000e+00> : vector<16x8xf32>
    %375 = tpu.matmul %193, %374, %cst_252 {dimension_numbers = #tpu.dot_dimension_numbers<[1], [0], [0], [1], [0, 0, 1, 1], [], []>} : vector<16x8xbf16>, vector<8x8xbf16>, vector<16x8xf32> -> vector<16x8xf32>
    %376 = arith.addf %372, %375 : vector<16x8xf32>
    %c31_253 = arith.constant 31 : index
    %c0_254 = arith.constant 0 : index
    %c1_255 = arith.constant 1 : index
    %377 = vector.load %arg7[%c31_253, %c0_254, %c1_255] : memref<36x8x9xbf16, #tpu.memory_space<vmem>>, vector<1x8x8xbf16>
    %378 = vector.shape_cast %377 : vector<1x8x8xbf16> to vector<8x8xbf16>
    %cst_256 = arith.constant dense<0.000000e+00> : vector<16x8xf32>
    %379 = tpu.matmul %195, %378, %cst_256 {dimension_numbers = #tpu.dot_dimension_numbers<[1], [0], [0], [1], [0, 0, 1, 1], [], []>} : vector<16x8xbf16>, vector<8x8xbf16>, vector<16x8xf32> -> vector<16x8xf32>
    %380 = arith.addf %376, %379 : vector<16x8xf32>
    %c14 = arith.constant 14 : index
    %c0_257 = arith.constant 0 : index
    %c0_258 = arith.constant 0 : index
    %381 = vector.load %arg7[%c14, %c0_257, %c0_258] : memref<36x8x9xbf16, #tpu.memory_space<vmem>>, vector<1x8x8xbf16>
    %382 = vector.shape_cast %381 : vector<1x8x8xbf16> to vector<8x8xbf16>
    %cst_259 = arith.constant dense<0.000000e+00> : vector<16x8xf32>
    %383 = tpu.matmul %197, %382, %cst_259 {dimension_numbers = #tpu.dot_dimension_numbers<[1], [0], [0], [1], [0, 0, 1, 1], [], []>} : vector<16x8xbf16>, vector<8x8xbf16>, vector<16x8xf32> -> vector<16x8xf32>
    %384 = arith.addf %380, %383 : vector<16x8xf32>
    %c5_260 = arith.constant 5 : index
    %c0_261 = arith.constant 0 : index
    %c1_262 = arith.constant 1 : index
    %385 = vector.load %arg7[%c5_260, %c0_261, %c1_262] : memref<36x8x9xbf16, #tpu.memory_space<vmem>>, vector<1x8x8xbf16>
    %386 = vector.shape_cast %385 : vector<1x8x8xbf16> to vector<8x8xbf16>
    %cst_263 = arith.constant dense<0.000000e+00> : vector<16x8xf32>
    %387 = tpu.matmul %199, %386, %cst_263 {dimension_numbers = #tpu.dot_dimension_numbers<[1], [0], [0], [1], [0, 0, 1, 1], [], []>} : vector<16x8xbf16>, vector<8x8xbf16>, vector<16x8xf32> -> vector<16x8xf32>
    %388 = arith.addf %384, %387 : vector<16x8xf32>
    %c14_264 = arith.constant 14 : index
    %c0_265 = arith.constant 0 : index
    %c1_266 = arith.constant 1 : index
    %389 = vector.load %arg7[%c14_264, %c0_265, %c1_266] : memref<36x8x9xbf16, #tpu.memory_space<vmem>>, vector<1x8x8xbf16>
    %390 = vector.shape_cast %389 : vector<1x8x8xbf16> to vector<8x8xbf16>
    %cst_267 = arith.constant dense<0.000000e+00> : vector<16x8xf32>
    %391 = tpu.matmul %201, %390, %cst_267 {dimension_numbers = #tpu.dot_dimension_numbers<[1], [0], [0], [1], [0, 0, 1, 1], [], []>} : vector<16x8xbf16>, vector<8x8xbf16>, vector<16x8xf32> -> vector<16x8xf32>
    %392 = arith.addf %388, %391 : vector<16x8xf32>
    %c32 = arith.constant 32 : index
    %c0_268 = arith.constant 0 : index
    %c0_269 = arith.constant 0 : index
    %393 = vector.load %arg7[%c32, %c0_268, %c0_269] : memref<36x8x9xbf16, #tpu.memory_space<vmem>>, vector<1x8x8xbf16>
    %394 = vector.shape_cast %393 : vector<1x8x8xbf16> to vector<8x8xbf16>
    %cst_270 = arith.constant dense<0.000000e+00> : vector<16x8xf32>
    %395 = tpu.matmul %203, %394, %cst_270 {dimension_numbers = #tpu.dot_dimension_numbers<[1], [0], [0], [1], [0, 0, 1, 1], [], []>} : vector<16x8xbf16>, vector<8x8xbf16>, vector<16x8xf32> -> vector<16x8xf32>
    %396 = arith.addf %392, %395 : vector<16x8xf32>
    %c23 = arith.constant 23 : index
    %c0_271 = arith.constant 0 : index
    %c1_272 = arith.constant 1 : index
    %397 = vector.load %arg7[%c23, %c0_271, %c1_272] : memref<36x8x9xbf16, #tpu.memory_space<vmem>>, vector<1x8x8xbf16>
    %398 = vector.shape_cast %397 : vector<1x8x8xbf16> to vector<8x8xbf16>
    %cst_273 = arith.constant dense<0.000000e+00> : vector<16x8xf32>
    %399 = tpu.matmul %205, %398, %cst_273 {dimension_numbers = #tpu.dot_dimension_numbers<[1], [0], [0], [1], [0, 0, 1, 1], [], []>} : vector<16x8xbf16>, vector<8x8xbf16>, vector<16x8xf32> -> vector<16x8xf32>
    %400 = arith.addf %396, %399 : vector<16x8xf32>
    %c32_274 = arith.constant 32 : index
    %c0_275 = arith.constant 0 : index
    %c1_276 = arith.constant 1 : index
    %401 = vector.load %arg7[%c32_274, %c0_275, %c1_276] : memref<36x8x9xbf16, #tpu.memory_space<vmem>>, vector<1x8x8xbf16>
    %402 = vector.shape_cast %401 : vector<1x8x8xbf16> to vector<8x8xbf16>
    %cst_277 = arith.constant dense<0.000000e+00> : vector<16x8xf32>
    %403 = tpu.matmul %207, %402, %cst_277 {dimension_numbers = #tpu.dot_dimension_numbers<[1], [0], [0], [1], [0, 0, 1, 1], [], []>} : vector<16x8xbf16>, vector<8x8xbf16>, vector<16x8xf32> -> vector<16x8xf32>
    %404 = arith.addf %400, %403 : vector<16x8xf32>
    %c0_278 = arith.constant 0 : index
    %c0_279 = arith.constant 0 : index
    %c4_280 = arith.constant 4 : index
    %c0_281 = arith.constant 0 : index
    %405 = vector.load %arg6[%c0_278, %c0_279, %c4_280, %c0_281] : memref<1x16x8x8xf32, #tpu.memory_space<vmem>>, vector<1x16x1x8xf32>
    %406 = vector.shape_cast %405 : vector<1x16x1x8xf32> to vector<16x8xf32>
    %407 = vector.shape_cast %404 : vector<16x8xf32> to vector<1x16x1x8xf32>
    tpu.vector_store %arg6[%c0_278, %c0_279, %c4_280, %c0_281], %407 {strides = array<i32>} : memref<1x16x8x8xf32, #tpu.memory_space<vmem>>, vector<1x16x1x8xf32>,
    %cst_282 = arith.constant 0.000000e+00 : f32
    %408 = vector.broadcast %cst_282 : f32 to vector<16x8xf32>
    %c32_283 = arith.constant 32 : index
    %c0_284 = arith.constant 0 : index
    %c0_285 = arith.constant 0 : index
    %409 = vector.load %arg7[%c32_283, %c0_284, %c0_285] : memref<36x8x9xbf16, #tpu.memory_space<vmem>>, vector<1x8x8xbf16>
    %410 = vector.shape_cast %409 : vector<1x8x8xbf16> to vector<8x8xbf16>
    %cst_286 = arith.constant dense<0.000000e+00> : vector<16x8xf32>
    %411 = tpu.matmul %191, %410, %cst_286 {dimension_numbers = #tpu.dot_dimension_numbers<[1], [0], [0], [1], [0, 0, 1, 1], [], []>} : vector<16x8xbf16>, vector<8x8xbf16>, vector<16x8xf32> -> vector<16x8xf32>
    %412 = arith.addf %408, %411 : vector<16x8xf32>
    %c23_287 = arith.constant 23 : index
    %c0_288 = arith.constant 0 : index
    %c1_289 = arith.constant 1 : index
    %413 = vector.load %arg7[%c23_287, %c0_288, %c1_289] : memref<36x8x9xbf16, #tpu.memory_space<vmem>>, vector<1x8x8xbf16>
    %414 = vector.shape_cast %413 : vector<1x8x8xbf16> to vector<8x8xbf16>
    %cst_290 = arith.constant dense<0.000000e+00> : vector<16x8xf32>
    %415 = tpu.matmul %193, %414, %cst_290 {dimension_numbers = #tpu.dot_dimension_numbers<[1], [0], [0], [1], [0, 0, 1, 1], [], []>} : vector<16x8xbf16>, vector<8x8xbf16>, vector<16x8xf32> -> vector<16x8xf32>
    %416 = arith.addf %412, %415 : vector<16x8xf32>
    %c32_291 = arith.constant 32 : index
    %c0_292 = arith.constant 0 : index
    %c1_293 = arith.constant 1 : index
    %417 = vector.load %arg7[%c32_291, %c0_292, %c1_293] : memref<36x8x9xbf16, #tpu.memory_space<vmem>>, vector<1x8x8xbf16>
    %418 = vector.shape_cast %417 : vector<1x8x8xbf16> to vector<8x8xbf16>
    %cst_294 = arith.constant dense<0.000000e+00> : vector<16x8xf32>
    %419 = tpu.matmul %195, %418, %cst_294 {dimension_numbers = #tpu.dot_dimension_numbers<[1], [0], [0], [1], [0, 0, 1, 1], [], []>} : vector<16x8xbf16>, vector<8x8xbf16>, vector<16x8xf32> -> vector<16x8xf32>
    %420 = arith.addf %416, %419 : vector<16x8xf32>
    %c15 = arith.constant 15 : index
    %c0_295 = arith.constant 0 : index
    %c0_296 = arith.constant 0 : index
    %421 = vector.load %arg7[%c15, %c0_295, %c0_296] : memref<36x8x9xbf16, #tpu.memory_space<vmem>>, vector<1x8x8xbf16>
    %422 = vector.shape_cast %421 : vector<1x8x8xbf16> to vector<8x8xbf16>
    %cst_297 = arith.constant dense<0.000000e+00> : vector<16x8xf32>
    %423 = tpu.matmul %197, %422, %cst_297 {dimension_numbers = #tpu.dot_dimension_numbers<[1], [0], [0], [1], [0, 0, 1, 1], [], []>} : vector<16x8xbf16>, vector<8x8xbf16>, vector<16x8xf32> -> vector<16x8xf32>
    %424 = arith.addf %420, %423 : vector<16x8xf32>
    %c6_298 = arith.constant 6 : index
    %c0_299 = arith.constant 0 : index
    %c1_300 = arith.constant 1 : index
    %425 = vector.load %arg7[%c6_298, %c0_299, %c1_300] : memref<36x8x9xbf16, #tpu.memory_space<vmem>>, vector<1x8x8xbf16>
    %426 = vector.shape_cast %425 : vector<1x8x8xbf16> to vector<8x8xbf16>
    %cst_301 = arith.constant dense<0.000000e+00> : vector<16x8xf32>
    %427 = tpu.matmul %199, %426, %cst_301 {dimension_numbers = #tpu.dot_dimension_numbers<[1], [0], [0], [1], [0, 0, 1, 1], [], []>} : vector<16x8xbf16>, vector<8x8xbf16>, vector<16x8xf32> -> vector<16x8xf32>
    %428 = arith.addf %424, %427 : vector<16x8xf32>
    %c15_302 = arith.constant 15 : index
    %c0_303 = arith.constant 0 : index
    %c1_304 = arith.constant 1 : index
    %429 = vector.load %arg7[%c15_302, %c0_303, %c1_304] : memref<36x8x9xbf16, #tpu.memory_space<vmem>>, vector<1x8x8xbf16>
    %430 = vector.shape_cast %429 : vector<1x8x8xbf16> to vector<8x8xbf16>
    %cst_305 = arith.constant dense<0.000000e+00> : vector<16x8xf32>
    %431 = tpu.matmul %201, %430, %cst_305 {dimension_numbers = #tpu.dot_dimension_numbers<[1], [0], [0], [1], [0, 0, 1, 1], [], []>} : vector<16x8xbf16>, vector<8x8xbf16>, vector<16x8xf32> -> vector<16x8xf32>
    %432 = arith.addf %428, %431 : vector<16x8xf32>
    %c33 = arith.constant 33 : index
    %c0_306 = arith.constant 0 : index
    %c0_307 = arith.constant 0 : index
    %433 = vector.load %arg7[%c33, %c0_306, %c0_307] : memref<36x8x9xbf16, #tpu.memory_space<vmem>>, vector<1x8x8xbf16>
    %434 = vector.shape_cast %433 : vector<1x8x8xbf16> to vector<8x8xbf16>
    %cst_308 = arith.constant dense<0.000000e+00> : vector<16x8xf32>
    %435 = tpu.matmul %203, %434, %cst_308 {dimension_numbers = #tpu.dot_dimension_numbers<[1], [0], [0], [1], [0, 0, 1, 1], [], []>} : vector<16x8xbf16>, vector<8x8xbf16>, vector<16x8xf32> -> vector<16x8xf32>
    %436 = arith.addf %432, %435 : vector<16x8xf32>
    %c24 = arith.constant 24 : index
    %c0_309 = arith.constant 0 : index
    %c1_310 = arith.constant 1 : index
    %437 = vector.load %arg7[%c24, %c0_309, %c1_310] : memref<36x8x9xbf16, #tpu.memory_space<vmem>>, vector<1x8x8xbf16>
    %438 = vector.shape_cast %437 : vector<1x8x8xbf16> to vector<8x8xbf16>
    %cst_311 = arith.constant dense<0.000000e+00> : vector<16x8xf32>
    %439 = tpu.matmul %205, %438, %cst_311 {dimension_numbers = #tpu.dot_dimension_numbers<[1], [0], [0], [1], [0, 0, 1, 1], [], []>} : vector<16x8xbf16>, vector<8x8xbf16>, vector<16x8xf32> -> vector<16x8xf32>
    %440 = arith.addf %436, %439 : vector<16x8xf32>
    %c33_312 = arith.constant 33 : index
    %c0_313 = arith.constant 0 : index
    %c1_314 = arith.constant 1 : index
    %441 = vector.load %arg7[%c33_312, %c0_313, %c1_314] : memref<36x8x9xbf16, #tpu.memory_space<vmem>>, vector<1x8x8xbf16>
    %442 = vector.shape_cast %441 : vector<1x8x8xbf16> to vector<8x8xbf16>
    %cst_315 = arith.constant dense<0.000000e+00> : vector<16x8xf32>
    %443 = tpu.matmul %207, %442, %cst_315 {dimension_numbers = #tpu.dot_dimension_numbers<[1], [0], [0], [1], [0, 0, 1, 1], [], []>} : vector<16x8xbf16>, vector<8x8xbf16>, vector<16x8xf32> -> vector<16x8xf32>
    %444 = arith.addf %440, %443 : vector<16x8xf32>
    %c0_316 = arith.constant 0 : index
    %c0_317 = arith.constant 0 : index
    %c5_318 = arith.constant 5 : index
    %c0_319 = arith.constant 0 : index
    %445 = vector.load %arg6[%c0_316, %c0_317, %c5_318, %c0_319] : memref<1x16x8x8xf32, #tpu.memory_space<vmem>>, vector<1x16x1x8xf32>
    %446 = vector.shape_cast %445 : vector<1x16x1x8xf32> to vector<16x8xf32>
    %447 = vector.shape_cast %444 : vector<16x8xf32> to vector<1x16x1x8xf32>
    tpu.vector_store %arg6[%c0_316, %c0_317, %c5_318, %c0_319], %447 {strides = array<i32>} : memref<1x16x8x8xf32, #tpu.memory_space<vmem>>, vector<1x16x1x8xf32>,
    %cst_320 = arith.constant 0.000000e+00 : f32
    %448 = vector.broadcast %cst_320 : f32 to vector<16x8xf32>
    %c33_321 = arith.constant 33 : index
    %c0_322 = arith.constant 0 : index
    %c0_323 = arith.constant 0 : index
    %449 = vector.load %arg7[%c33_321, %c0_322, %c0_323] : memref<36x8x9xbf16, #tpu.memory_space<vmem>>, vector<1x8x8xbf16>
    %450 = vector.shape_cast %449 : vector<1x8x8xbf16> to vector<8x8xbf16>
    %cst_324 = arith.constant dense<0.000000e+00> : vector<16x8xf32>
    %451 = tpu.matmul %191, %450, %cst_324 {dimension_numbers = #tpu.dot_dimension_numbers<[1], [0], [0], [1], [0, 0, 1, 1], [], []>} : vector<16x8xbf16>, vector<8x8xbf16>, vector<16x8xf32> -> vector<16x8xf32>
    %452 = arith.addf %448, %451 : vector<16x8xf32>
    %c24_325 = arith.constant 24 : index
    %c0_326 = arith.constant 0 : index
    %c1_327 = arith.constant 1 : index
    %453 = vector.load %arg7[%c24_325, %c0_326, %c1_327] : memref<36x8x9xbf16, #tpu.memory_space<vmem>>, vector<1x8x8xbf16>
    %454 = vector.shape_cast %453 : vector<1x8x8xbf16> to vector<8x8xbf16>
    %cst_328 = arith.constant dense<0.000000e+00> : vector<16x8xf32>
    %455 = tpu.matmul %193, %454, %cst_328 {dimension_numbers = #tpu.dot_dimension_numbers<[1], [0], [0], [1], [0, 0, 1, 1], [], []>} : vector<16x8xbf16>, vector<8x8xbf16>, vector<16x8xf32> -> vector<16x8xf32>
    %456 = arith.addf %452, %455 : vector<16x8xf32>
    %c33_329 = arith.constant 33 : index
    %c0_330 = arith.constant 0 : index
    %c1_331 = arith.constant 1 : index
    %457 = vector.load %arg7[%c33_329, %c0_330, %c1_331] : memref<36x8x9xbf16, #tpu.memory_space<vmem>>, vector<1x8x8xbf16>
    %458 = vector.shape_cast %457 : vector<1x8x8xbf16> to vector<8x8xbf16>
    %cst_332 = arith.constant dense<0.000000e+00> : vector<16x8xf32>
    %459 = tpu.matmul %195, %458, %cst_332 {dimension_numbers = #tpu.dot_dimension_numbers<[1], [0], [0], [1], [0, 0, 1, 1], [], []>} : vector<16x8xbf16>, vector<8x8xbf16>, vector<16x8xf32> -> vector<16x8xf32>
    %460 = arith.addf %456, %459 : vector<16x8xf32>
    %c16 = arith.constant 16 : index
    %c0_333 = arith.constant 0 : index
    %c0_334 = arith.constant 0 : index
    %461 = vector.load %arg7[%c16, %c0_333, %c0_334] : memref<36x8x9xbf16, #tpu.memory_space<vmem>>, vector<1x8x8xbf16>
    %462 = vector.shape_cast %461 : vector<1x8x8xbf16> to vector<8x8xbf16>
    %cst_335 = arith.constant dense<0.000000e+00> : vector<16x8xf32>
    %463 = tpu.matmul %197, %462, %cst_335 {dimension_numbers = #tpu.dot_dimension_numbers<[1], [0], [0], [1], [0, 0, 1, 1], [], []>} : vector<16x8xbf16>, vector<8x8xbf16>, vector<16x8xf32> -> vector<16x8xf32>
    %464 = arith.addf %460, %463 : vector<16x8xf32>
    %c7_336 = arith.constant 7 : index
    %c0_337 = arith.constant 0 : index
    %c1_338 = arith.constant 1 : index
    %465 = vector.load %arg7[%c7_336, %c0_337, %c1_338] : memref<36x8x9xbf16, #tpu.memory_space<vmem>>, vector<1x8x8xbf16>
    %466 = vector.shape_cast %465 : vector<1x8x8xbf16> to vector<8x8xbf16>
    %cst_339 = arith.constant dense<0.000000e+00> : vector<16x8xf32>
    %467 = tpu.matmul %199, %466, %cst_339 {dimension_numbers = #tpu.dot_dimension_numbers<[1], [0], [0], [1], [0, 0, 1, 1], [], []>} : vector<16x8xbf16>, vector<8x8xbf16>, vector<16x8xf32> -> vector<16x8xf32>
    %468 = arith.addf %464, %467 : vector<16x8xf32>
    %c16_340 = arith.constant 16 : index
    %c0_341 = arith.constant 0 : index
    %c1_342 = arith.constant 1 : index
    %469 = vector.load %arg7[%c16_340, %c0_341, %c1_342] : memref<36x8x9xbf16, #tpu.memory_space<vmem>>, vector<1x8x8xbf16>
    %470 = vector.shape_cast %469 : vector<1x8x8xbf16> to vector<8x8xbf16>
    %cst_343 = arith.constant dense<0.000000e+00> : vector<16x8xf32>
    %471 = tpu.matmul %201, %470, %cst_343 {dimension_numbers = #tpu.dot_dimension_numbers<[1], [0], [0], [1], [0, 0, 1, 1], [], []>} : vector<16x8xbf16>, vector<8x8xbf16>, vector<16x8xf32> -> vector<16x8xf32>
    %472 = arith.addf %468, %471 : vector<16x8xf32>
    %c34 = arith.constant 34 : index
    %c0_344 = arith.constant 0 : index
    %c0_345 = arith.constant 0 : index
    %473 = vector.load %arg7[%c34, %c0_344, %c0_345] : memref<36x8x9xbf16, #tpu.memory_space<vmem>>, vector<1x8x8xbf16>
    %474 = vector.shape_cast %473 : vector<1x8x8xbf16> to vector<8x8xbf16>
    %cst_346 = arith.constant dense<0.000000e+00> : vector<16x8xf32>
    %475 = tpu.matmul %203, %474, %cst_346 {dimension_numbers = #tpu.dot_dimension_numbers<[1], [0], [0], [1], [0, 0, 1, 1], [], []>} : vector<16x8xbf16>, vector<8x8xbf16>, vector<16x8xf32> -> vector<16x8xf32>
    %476 = arith.addf %472, %475 : vector<16x8xf32>
    %c25 = arith.constant 25 : index
    %c0_347 = arith.constant 0 : index
    %c1_348 = arith.constant 1 : index
    %477 = vector.load %arg7[%c25, %c0_347, %c1_348] : memref<36x8x9xbf16, #tpu.memory_space<vmem>>, vector<1x8x8xbf16>
    %478 = vector.shape_cast %477 : vector<1x8x8xbf16> to vector<8x8xbf16>
    %cst_349 = arith.constant dense<0.000000e+00> : vector<16x8xf32>
    %479 = tpu.matmul %205, %478, %cst_349 {dimension_numbers = #tpu.dot_dimension_numbers<[1], [0], [0], [1], [0, 0, 1, 1], [], []>} : vector<16x8xbf16>, vector<8x8xbf16>, vector<16x8xf32> -> vector<16x8xf32>
    %480 = arith.addf %476, %479 : vector<16x8xf32>
    %c34_350 = arith.constant 34 : index
    %c0_351 = arith.constant 0 : index
    %c1_352 = arith.constant 1 : index
    %481 = vector.load %arg7[%c34_350, %c0_351, %c1_352] : memref<36x8x9xbf16, #tpu.memory_space<vmem>>, vector<1x8x8xbf16>
    %482 = vector.shape_cast %481 : vector<1x8x8xbf16> to vector<8x8xbf16>
    %cst_353 = arith.constant dense<0.000000e+00> : vector<16x8xf32>
    %483 = tpu.matmul %207, %482, %cst_353 {dimension_numbers = #tpu.dot_dimension_numbers<[1], [0], [0], [1], [0, 0, 1, 1], [], []>} : vector<16x8xbf16>, vector<8x8xbf16>, vector<16x8xf32> -> vector<16x8xf32>
    %484 = arith.addf %480, %483 : vector<16x8xf32>
    %c0_354 = arith.constant 0 : index
    %c0_355 = arith.constant 0 : index
    %c6_356 = arith.constant 6 : index
    %c0_357 = arith.constant 0 : index
    %485 = vector.load %arg6[%c0_354, %c0_355, %c6_356, %c0_357] : memref<1x16x8x8xf32, #tpu.memory_space<vmem>>, vector<1x16x1x8xf32>
    %486 = vector.shape_cast %485 : vector<1x16x1x8xf32> to vector<16x8xf32>
    %487 = vector.shape_cast %484 : vector<16x8xf32> to vector<1x16x1x8xf32>
    tpu.vector_store %arg6[%c0_354, %c0_355, %c6_356, %c0_357], %487 {strides = array<i32>} : memref<1x16x8x8xf32, #tpu.memory_space<vmem>>, vector<1x16x1x8xf32>,
    %cst_358 = arith.constant 0.000000e+00 : f32
    %488 = vector.broadcast %cst_358 : f32 to vector<16x8xf32>
    %c34_359 = arith.constant 34 : index
    %c0_360 = arith.constant 0 : index
    %c0_361 = arith.constant 0 : index
    %489 = vector.load %arg7[%c34_359, %c0_360, %c0_361] : memref<36x8x9xbf16, #tpu.memory_space<vmem>>, vector<1x8x8xbf16>
    %490 = vector.shape_cast %489 : vector<1x8x8xbf16> to vector<8x8xbf16>
    %cst_362 = arith.constant dense<0.000000e+00> : vector<16x8xf32>
    %491 = tpu.matmul %191, %490, %cst_362 {dimension_numbers = #tpu.dot_dimension_numbers<[1], [0], [0], [1], [0, 0, 1, 1], [], []>} : vector<16x8xbf16>, vector<8x8xbf16>, vector<16x8xf32> -> vector<16x8xf32>
    %492 = arith.addf %488, %491 : vector<16x8xf32>
    %c25_363 = arith.constant 25 : index
    %c0_364 = arith.constant 0 : index
    %c1_365 = arith.constant 1 : index
    %493 = vector.load %arg7[%c25_363, %c0_364, %c1_365] : memref<36x8x9xbf16, #tpu.memory_space<vmem>>, vector<1x8x8xbf16>
    %494 = vector.shape_cast %493 : vector<1x8x8xbf16> to vector<8x8xbf16>
    %cst_366 = arith.constant dense<0.000000e+00> : vector<16x8xf32>
    %495 = tpu.matmul %193, %494, %cst_366 {dimension_numbers = #tpu.dot_dimension_numbers<[1], [0], [0], [1], [0, 0, 1, 1], [], []>} : vector<16x8xbf16>, vector<8x8xbf16>, vector<16x8xf32> -> vector<16x8xf32>
    %496 = arith.addf %492, %495 : vector<16x8xf32>
    %c34_367 = arith.constant 34 : index
    %c0_368 = arith.constant 0 : index
    %c1_369 = arith.constant 1 : index
    %497 = vector.load %arg7[%c34_367, %c0_368, %c1_369] : memref<36x8x9xbf16, #tpu.memory_space<vmem>>, vector<1x8x8xbf16>
    %498 = vector.shape_cast %497 : vector<1x8x8xbf16> to vector<8x8xbf16>
    %cst_370 = arith.constant dense<0.000000e+00> : vector<16x8xf32>
    %499 = tpu.matmul %195, %498, %cst_370 {dimension_numbers = #tpu.dot_dimension_numbers<[1], [0], [0], [1], [0, 0, 1, 1], [], []>} : vector<16x8xbf16>, vector<8x8xbf16>, vector<16x8xf32> -> vector<16x8xf32>
    %500 = arith.addf %496, %499 : vector<16x8xf32>
    %c17 = arith.constant 17 : index
    %c0_371 = arith.constant 0 : index
    %c0_372 = arith.constant 0 : index
    %501 = vector.load %arg7[%c17, %c0_371, %c0_372] : memref<36x8x9xbf16, #tpu.memory_space<vmem>>, vector<1x8x8xbf16>
    %502 = vector.shape_cast %501 : vector<1x8x8xbf16> to vector<8x8xbf16>
    %cst_373 = arith.constant dense<0.000000e+00> : vector<16x8xf32>
    %503 = tpu.matmul %197, %502, %cst_373 {dimension_numbers = #tpu.dot_dimension_numbers<[1], [0], [0], [1], [0, 0, 1, 1], [], []>} : vector<16x8xbf16>, vector<8x8xbf16>, vector<16x8xf32> -> vector<16x8xf32>
    %504 = arith.addf %500, %503 : vector<16x8xf32>
    %c8_374 = arith.constant 8 : index
    %c0_375 = arith.constant 0 : index
    %c1_376 = arith.constant 1 : index
    %505 = vector.load %arg7[%c8_374, %c0_375, %c1_376] : memref<36x8x9xbf16, #tpu.memory_space<vmem>>, vector<1x8x8xbf16>
    %506 = vector.shape_cast %505 : vector<1x8x8xbf16> to vector<8x8xbf16>
    %cst_377 = arith.constant dense<0.000000e+00> : vector<16x8xf32>
    %507 = tpu.matmul %199, %506, %cst_377 {dimension_numbers = #tpu.dot_dimension_numbers<[1], [0], [0], [1], [0, 0, 1, 1], [], []>} : vector<16x8xbf16>, vector<8x8xbf16>, vector<16x8xf32> -> vector<16x8xf32>
    %508 = arith.addf %504, %507 : vector<16x8xf32>
    %c17_378 = arith.constant 17 : index
    %c0_379 = arith.constant 0 : index
    %c1_380 = arith.constant 1 : index
    %509 = vector.load %arg7[%c17_378, %c0_379, %c1_380] : memref<36x8x9xbf16, #tpu.memory_space<vmem>>, vector<1x8x8xbf16>
    %510 = vector.shape_cast %509 : vector<1x8x8xbf16> to vector<8x8xbf16>
    %cst_381 = arith.constant dense<0.000000e+00> : vector<16x8xf32>
    %511 = tpu.matmul %201, %510, %cst_381 {dimension_numbers = #tpu.dot_dimension_numbers<[1], [0], [0], [1], [0, 0, 1, 1], [], []>} : vector<16x8xbf16>, vector<8x8xbf16>, vector<16x8xf32> -> vector<16x8xf32>
    %512 = arith.addf %508, %511 : vector<16x8xf32>
    %c35 = arith.constant 35 : index
    %c0_382 = arith.constant 0 : index
    %c0_383 = arith.constant 0 : index
    %513 = vector.load %arg7[%c35, %c0_382, %c0_383] : memref<36x8x9xbf16, #tpu.memory_space<vmem>>, vector<1x8x8xbf16>
    %514 = vector.shape_cast %513 : vector<1x8x8xbf16> to vector<8x8xbf16>
    %cst_384 = arith.constant dense<0.000000e+00> : vector<16x8xf32>
    %515 = tpu.matmul %203, %514, %cst_384 {dimension_numbers = #tpu.dot_dimension_numbers<[1], [0], [0], [1], [0, 0, 1, 1], [], []>} : vector<16x8xbf16>, vector<8x8xbf16>, vector<16x8xf32> -> vector<16x8xf32>
    %516 = arith.addf %512, %515 : vector<16x8xf32>
    %c26 = arith.constant 26 : index
    %c0_385 = arith.constant 0 : index
    %c1_386 = arith.constant 1 : index
    %517 = vector.load %arg7[%c26, %c0_385, %c1_386] : memref<36x8x9xbf16, #tpu.memory_space<vmem>>, vector<1x8x8xbf16>
    %518 = vector.shape_cast %517 : vector<1x8x8xbf16> to vector<8x8xbf16>
    %cst_387 = arith.constant dense<0.000000e+00> : vector<16x8xf32>
    %519 = tpu.matmul %205, %518, %cst_387 {dimension_numbers = #tpu.dot_dimension_numbers<[1], [0], [0], [1], [0, 0, 1, 1], [], []>} : vector<16x8xbf16>, vector<8x8xbf16>, vector<16x8xf32> -> vector<16x8xf32>
    %520 = arith.addf %516, %519 : vector<16x8xf32>
    %c35_388 = arith.constant 35 : index
    %c0_389 = arith.constant 0 : index
    %c1_390 = arith.constant 1 : index
    %521 = vector.load %arg7[%c35_388, %c0_389, %c1_390] : memref<36x8x9xbf16, #tpu.memory_space<vmem>>, vector<1x8x8xbf16>
    %522 = vector.shape_cast %521 : vector<1x8x8xbf16> to vector<8x8xbf16>
    %cst_391 = arith.constant dense<0.000000e+00> : vector<16x8xf32>
    %523 = tpu.matmul %207, %522, %cst_391 {dimension_numbers = #tpu.dot_dimension_numbers<[1], [0], [0], [1], [0, 0, 1, 1], [], []>} : vector<16x8xbf16>, vector<8x8xbf16>, vector<16x8xf32> -> vector<16x8xf32>
    %524 = arith.addf %520, %523 : vector<16x8xf32>
    %c0_392 = arith.constant 0 : index
    %c0_393 = arith.constant 0 : index
    %c7_394 = arith.constant 7 : index
    %c0_395 = arith.constant 0 : index
    %525 = vector.load %arg6[%c0_392, %c0_393, %c7_394, %c0_395] : memref<1x16x8x8xf32, #tpu.memory_space<vmem>>, vector<1x16x1x8xf32>
    %526 = vector.shape_cast %525 : vector<1x16x1x8xf32> to vector<16x8xf32>
    %527 = vector.shape_cast %524 : vector<16x8xf32> to vector<1x16x1x8xf32>
    tpu.vector_store %arg6[%c0_392, %c0_393, %c7_394, %c0_395], %527 {strides = array<i32>} : memref<1x16x8x8xf32, #tpu.memory_space<vmem>>, vector<1x16x1x8xf32>,
    return
  }
  func.func @transform_0(%arg0: i32, %arg1: i32) -> (i32, i32, i32, i32, i32) {
    %c0_i32 = arith.constant 0 : i32
    %c0_i32_0 = arith.constant 0 : i32
    %c0_i32_1 = arith.constant 0 : i32
    %c0_i32_2 = arith.constant 0 : i32
    return %arg0, %arg1, %c0_i32, %c0_i32_0, %c0_i32_1 : i32, i32, i32, i32, i32
  }
  func.func @transform_1(%arg0: i32, %arg1: i32) -> (i32, i32) {
    %c0_i32 = arith.constant 0 : i32
    %c0_i32_0 = arith.constant 0 : i32
    %c0_i32_1 = arith.constant 0 : i32
    return %c0_i32, %c0_i32_0 : i32, i32
  }
  func.func @transform_2(%arg0: i32, %arg1: i32) -> (i32, i32) {
    %c0_i32 = arith.constant 0 : i32
    %c0_i32_0 = arith.constant 0 : i32
    %c0_i32_1 = arith.constant 0 : i32
    return %c0_i32, %c0_i32_0 : i32, i32
  }
  func.func @transform_3(%arg0: i32, %arg1: i32) -> (i32, i32, i32) {
    %c0_i32 = arith.constant 0 : i32
    %c0_i32_0 = arith.constant 0 : i32
    %c0_i32_1 = arith.constant 0 : i32
    %c0_i32_2 = arith.constant 0 : i32
    return %c0_i32, %c0_i32_0, %c0_i32_1 : i32, i32, i32
  }
  func.func @transform_4(%arg0: i32, %arg1: i32) -> (i32, i32, i32, i32) {
    %c0_i32 = arith.constant 0 : i32
    %c0_i32_0 = arith.constant 0 : i32
    %c0_i32_1 = arith.constant 0 : i32
    return %arg0, %c0_i32, %arg1, %c0_i32_0 : i32, i32, i32, i32
  }
}

</mosaic_0001>

<llo_original>
// kernel: early_conv_ds_forward.1
$region0: #{early_conv_ds_forward.1}
  #allocation0 [shape = 'u32[]', space=smem, size = 0x4, offset = 0x4, fixed_abs, tag = 'smem constant byte address 0x4 - core index']
  #allocation1 [shape = 'u32[144,128]{1,0:T(1,128)}', space=vmem, size = 0x12000, scoped, tag = 'internal scratch']
  #allocation2 [shape = 'bf16[36,8,9]{2,1,0:T(8,128)(2,1)}', space=vmem, size = 0x12000, scoped, tag = 'scratch operand']
  %s0 = inlined_call_operand.vmem [shape: bf16[2,1,36,8,9], index: 0, kind: input, shape index: {}]
  %s1 = inlined_call_operand.vmem [shape: f32[8,1], index: 1, kind: input, shape index: {}]
  %s2 = inlined_call_operand.vmem [shape: f32[8,1], index: 2, kind: input, shape index: {}]
  %s3 = inlined_call_operand.vmem [shape: bf16[9,16,8], index: 3, kind: input, shape index: {}]
  %s4 = inlined_call_operand.vmem [shape: f32[2,16,8,8], index: 4, kind: output, shape index: {}]
  %s5 = sld [smem:[#allocation0]]
  $region49: #{early_conv_ds_forward.1} parent=0
    _
  %s7 = ssub.s32 1, %s5
  %s8 = scalar_select 0, %s7, %s5
  loop: start=0, step=1, limit=4
  $region2: #{early_conv_ds_forward.1} parent=0 // loop_pre_header
    _
  $region3: #{early_conv_ds_forward.1} parent=0 // loop_header
    %s10 = sphi 0, %s14
    %p11 = scmp.ge.s32.totalorder %s10, 4
    %s17 = sphi 0, %s29
    %s18 = sphi 0, %s25
    %s19 = sphi 0, %s17
    %s20 = sphi 0, %s18
    %s21 = sphi 0, %s19
    %s22 = sphi 0, %s20
    %s34 = sphi 0, %s36
    %s37 = sphi 0, %s34
    %s38 = sphi 0, %s37
    %s54 = sphi 0, %s38
    %s58 = sphi 0, %s58
    %s60 = sphi 0, %s58
    %s61 = sphi 0, %s60
    %s75 = sphi 0, %s61
    %s79 = sphi 0, %s79
    %s81 = sphi 0, %s79
    %s82 = sphi 0, %s81
    %s96 = sphi 0, %s82
    %s100 = sphi 0, %s100
    %s102 = sphi 0, %s100
    %s103 = sphi 0, %s102
    %s117 = sphi 0, %s103
    %s125 = sphi 0, %s127
    %s128 = sphi 0, %s125
    %s129 = sphi 0, %s128
    %s145 = sphi 0, %s129
  $region4: #{early_conv_ds_forward.1} parent=0 // loop_header_branch
    %13 = sbr.rel (%p11) target = $region8
  $region5: #{early_conv_ds_forward.1} parent=0 // loop_body
    %s15 = ssub.s32 %s10, 1
    %s16 = ssub.s32 %s10, 2
    %s23 = sadd.s32 1, %s18
    %p24 = scmp.ge.s32.totalorder %s23, 1
    %s25 = scalar_select %p24, 0, %s23
    %s26 = sadd.s32 1, %s17
    %s27 = scalar_select %p24, %s26, %s17
    %p28 = scmp.ge.s32.totalorder %s27, 2
    %s29 = scalar_select %p28, 0, %s27
    %s30 = ssub.s32 %s17, %s29
    %s31 = ssub.s32 %s18, %s25
    %s32 = sor.u32 %s30, %s31
    %p33 = scmp.eq.s32.totalorder %s32, 0
    %s35 = sadd.s32 %s34, 1
    %s36 = scalar_select %p33, %s34, %s35
    %p39 = pneg %p33
    %p40 = scmp.eq.s32.totalorder %s10, 1
    %p41 = por %p39, %p40
    %p42 = scmp.ne.s32.totalorder %s34, %s37
    %p43 = scmp.eq.s32.totalorder %s10, 0
    %p44 = por %p42, %p43
    %p45 = scmp.ne.s32.totalorder %s34, %s37
    %p46 = scmp.eq.s32.totalorder %s15, 1
    %p47 = por %p45, %p46
    %p48 = scmp.ne.s32.totalorder %s37, %s38
    %p49 = scmp.eq.s32.totalorder %s15, 0
    %p50 = por %p48, %p49
    %p51 = scmp.ne.s32.totalorder %s37, %s38
    %p52 = scmp.eq.s32.totalorder %s16, 1
    %p53 = por %p51, %p52
    %p55 = scmp.ne.s32.totalorder %s38, %s54
    %p56 = scmp.eq.s32.totalorder %s16, 0
    %p57 = por %p55, %p56
    %s59 = sadd.s32 %s58, 1
    %p62 = scmp.eq.s32.totalorder %s10, 1
    %p63 = scmp.ne.s32.totalorder %s58, %s60
    %p64 = scmp.eq.s32.totalorder %s10, 0
    %p65 = por %p63, %p64
    %p66 = scmp.ne.s32.totalorder %s58, %s60
    %p67 = scmp.eq.s32.totalorder %s15, 1
    %p68 = por %p66, %p67
    %p69 = scmp.ne.s32.totalorder %s60, %s61
    %p70 = scmp.eq.s32.totalorder %s15, 0
    %p71 = por %p69, %p70
    %p72 = scmp.ne.s32.totalorder %s60, %s61
    %p73 = scmp.eq.s32.totalorder %s16, 1
    %p74 = por %p72, %p73
    %p76 = scmp.ne.s32.totalorder %s61, %s75
    %p77 = scmp.eq.s32.totalorder %s16, 0
    %p78 = por %p76, %p77
    %s80 = sadd.s32 %s79, 1
    %p83 = scmp.eq.s32.totalorder %s10, 1
    %p84 = scmp.ne.s32.totalorder %s79, %s81
    %p85 = scmp.eq.s32.totalorder %s10, 0
    %p86 = por %p84, %p85
    %p87 = scmp.ne.s32.totalorder %s79, %s81
    %p88 = scmp.eq.s32.totalorder %s15, 1
    %p89 = por %p87, %p88
    %p90 = scmp.ne.s32.totalorder %s81, %s82
    %p91 = scmp.eq.s32.totalorder %s15, 0
    %p92 = por %p90, %p91
    %p93 = scmp.ne.s32.totalorder %s81, %s82
    %p94 = scmp.eq.s32.totalorder %s16, 1
    %p95 = por %p93, %p94
    %p97 = scmp.ne.s32.totalorder %s82, %s96
    %p98 = scmp.eq.s32.totalorder %s16, 0
    %p99 = por %p97, %p98
    %s101 = sadd.s32 %s100, 1
    %p104 = scmp.eq.s32.totalorder %s10, 1
    %p105 = scmp.ne.s32.totalorder %s100, %s102
    %p106 = scmp.eq.s32.totalorder %s10, 0
    %p107 = por %p105, %p106
    %p108 = scmp.ne.s32.totalorder %s100, %s102
    %p109 = scmp.eq.s32.totalorder %s15, 1
    %p110 = por %p108, %p109
    %p111 = scmp.ne.s32.totalorder %s102, %s103
    %p112 = scmp.eq.s32.totalorder %s15, 0
    %p113 = por %p111, %p112
    %p114 = scmp.ne.s32.totalorder %s102, %s103
    %p115 = scmp.eq.s32.totalorder %s16, 1
    %p116 = por %p114, %p115
    %p118 = scmp.ne.s32.totalorder %s103, %s117
    %p119 = scmp.eq.s32.totalorder %s16, 0
    %p120 = por %p118, %p119
    %s121 = ssub.s32 %s17, %s29
    %s122 = ssub.s32 %s18, %s25
    %s123 = sor.u32 %s121, %s122
    %p124 = scmp.eq.s32.totalorder %s123, 0
    %s126 = sadd.s32 %s125, 1
    %s127 = scalar_select %p124, %s125, %s126
    %p130 = pneg %p124
    %p131 = scmp.eq.s32.totalorder %s10, 1
    %p132 = por %p130, %p131
    %p133 = scmp.ne.s32.totalorder %s125, %s128
    %p134 = scmp.eq.s32.totalorder %s10, 0
    %p135 = por %p133, %p134
    %p136 = scmp.ne.s32.totalorder %s125, %s128
    %p137 = scmp.eq.s32.totalorder %s15, 1
    %p138 = por %p136, %p137
    %p139 = scmp.ne.s32.totalorder %s128, %s129
    %p140 = scmp.eq.s32.totalorder %s15, 0
    %p141 = por %p139, %p140
    %p142 = scmp.ne.s32.totalorder %s128, %s129
    %p143 = scmp.eq.s32.totalorder %s16, 1
    %p144 = por %p142, %p143
    %p146 = scmp.ne.s32.totalorder %s129, %s145
    %p147 = scmp.eq.s32.totalorder %s16, 0
    %p148 = por %p146, %p147
    %p149 = scmp.le.s32.totalorder 1, %s10
    %p150 = scmp.lt.s32.totalorder %s10, 3
    %p151 = pnand %p149, %p150
    %p152 = pneg %p151
    // Predicated region
    $region9: #{early_conv_ds_forward.1} parent=5 // pred_check
      _
    $region10: #{early_conv_ds_forward.1} parent=5 // pred_check_branch
      %154 = sbr.rel (%p151) target = $region12
    $region11: #{early_conv_ds_forward.1} parent=5 // pred_region
      %s155 = ssub.s32 %s10, 1
      // Predicated region
      $region13: #{early_conv_ds_forward.1} parent=11 // pred_check
        %p156 = pneg %p71
      $region14: #{early_conv_ds_forward.1} parent=11 // pred_check_branch
        %158 = sbr.rel (%p156) target = $region16
      $region15: #{early_conv_ds_forward.1} parent=11 // pred_region
        _
      $region16: #{early_conv_ds_forward.1} parent=11 // pred_fallthru
        _
      // Predicated region
      $region17: #{early_conv_ds_forward.1} parent=11 // pred_check
        %p159 = pneg %p92
      $region18: #{early_conv_ds_forward.1} parent=11 // pred_check_branch
        %161 = sbr.rel (%p159) target = $region20
      $region19: #{early_conv_ds_forward.1} parent=11 // pred_region
        _
      $region20: #{early_conv_ds_forward.1} parent=11 // pred_fallthru
        _
      // Predicated region
      $region21: #{early_conv_ds_forward.1} parent=11 // pred_check
        %p162 = pneg %p113
      $region22: #{early_conv_ds_forward.1} parent=11 // pred_check_branch
        %164 = sbr.rel (%p162) target = $region24
      $region23: #{early_conv_ds_forward.1} parent=11 // pred_region
        _
      $region24: #{early_conv_ds_forward.1} parent=11 // pred_fallthru
        _
    $region12: #{early_conv_ds_forward.1} parent=5 // pred_fallthru
      _
    %p165 = scmp.lt.s32.totalorder %s10, 2
    // Predicated region
    $region25: #{early_conv_ds_forward.1} parent=5 // pred_check
      %p166 = pneg %p165
    $region26: #{early_conv_ds_forward.1} parent=5 // pred_check_branch
      %168 = sbr.rel (%p166) target = $region28
    $region27: #{early_conv_ds_forward.1} parent=5 // pred_region
      // Predicated region
      $region29: #{early_conv_ds_forward.1} parent=27 // pred_check
        %p169 = pneg %p44
      $region30: #{early_conv_ds_forward.1} parent=27 // pred_check_branch
        %171 = sbr.rel (%p169) target = $region32
      $region31: #{early_conv_ds_forward.1} parent=27 // pred_region
        %p172 = scmp.lt.s32.totalorder %s17, 1
        %s173 = scalar_select %p172, %s17, 1
        %p174 = scmp.lt.s32.totalorder %s18, 0
        %s175 = scalar_select %p174, %s18, 0
        %s176 = smul.addr %s175, 36
        %s177 = smul.addr %s173, 36
        %s178 = sadd.s32 %s176, %s177
        %s179 = smul.addr %s178, 4
        %s180 = scalar_lea.vmem %s0, %s179
      $region32: #{early_conv_ds_forward.1} parent=27 // pred_fallthru
        _
    $region28: #{early_conv_ds_forward.1} parent=5 // pred_fallthru
      _
    %p181 = scmp.le.s32.totalorder 1, %s10
    %p182 = scmp.lt.s32.totalorder %s10, 3
    %p183 = pnand %p181, %p182
    %p184 = pneg %p183
    // Predicated region
    $region33: #{early_conv_ds_forward.1} parent=5 // pred_check
      _
    $region34: #{early_conv_ds_forward.1} parent=5 // pred_check_branch
      %186 = sbr.rel (%p183) target = $region36
    $region35: #{early_conv_ds_forward.1} parent=5 // pred_region
      %s187 = ssub.s32 %s10, 1
      %p188 = scmp.lt.s32.totalorder %s19, 1
      %s189 = scalar_select %p188, %s19, 1
      %p190 = scmp.lt.s32.totalorder %s20, 0
      %s191 = scalar_select %p190, %s20, 0
      %s192 = smul.addr %s191, 36
      %s193 = smul.addr %s189, 36
      %s194 = sadd.s32 %s192, %s193
      %s195 = smul.addr %s194, 4
      %s196 = scalar_lea.vmem %s0, %s195
      %p197 = pneg %p50
      %p198 = pneg %p47
      %p199 = pneg %p71
      %p200 = pneg %p68
      %p201 = pneg %p92
      %p202 = pneg %p89
      %p203 = pneg %p113
      %p204 = pneg %p110
      %p205 = pneg %p141
      %p206 = pneg %p138
      %p207 = scmp.lt.s32.totalorder %s19, 1
      %s208 = scalar_select %p207, %s19, 1
      %p209 = scmp.lt.s32.totalorder %s20, 0
      %s210 = scalar_select %p209, %s20, 0
      %s211 = smul.addr %s208, 16
      %s212 = sadd.s32 %s210, %s211
      %s213 = smul.addr %s212, 8
      %s214 = scalar_lea.vmem %s4, %s213
      %p215 = scmp.lt.s32.totalorder %s19, 1
      %s216 = scalar_select %p215, %s19, 1
      %p217 = scmp.lt.s32.totalorder %s20, 0
      %s218 = scalar_select %p217, %s20, 0
      %s219 = smul.addr %s218, 36
      %s220 = smul.addr %s216, 36
      %s221 = sadd.s32 %s219, %s220
      %s222 = smul.addr %s221, 4
      %s223 = scalar_lea.vmem %s0, %s222
      %p224 = scmp.lt.s32.totalorder %s19, 1
      %s225 = scalar_select %p224, %s19, 1
      %p226 = scmp.lt.s32.totalorder %s20, 0
      %s227 = scalar_select %p226, %s20, 0
      %s228 = smul.addr %s225, 16
      %s229 = sadd.s32 %s227, %s228
      %s230 = smul.addr %s229, 8
      %s231 = scalar_lea.vmem %s4, %s230
      %v233 = vld [vmem:[%s1] sm:$0xff]
      %v234 = vld [vmem:[%s2] sm:$0xff]
      %v235 = vld [vmem:[%s223] sm:$0xf]
      %v236 = vld [vmem:[%s223 + $0x4] sm:$0xf]
      %v237 = vld [vmem:[%s223 + $0x8] sm:$0xf]
      %v238 = vld [vmem:[%s223 + $0xc] sm:$0xf]
      %v239 = vld [vmem:[%s223 + $0x10] sm:$0xf]
      %v240 = vld [vmem:[%s223 + $0x14] sm:$0xf]
      %v241 = vld [vmem:[%s223 + $0x18] sm:$0xf]
      %v242 = vld [vmem:[%s223 + $0x1c] sm:$0xf]
      %v243 = vld [vmem:[%s223 + $0x20] sm:$0xf]
      %v244 = vunpack.c.l.bf16 %v235
      %v245 = vunpack.c.l.bf16 %v236
      %v246 = vunpack.c.l.bf16 %v237
      %v247 = vunpack.c.l.bf16 %v238
      %v248 = vunpack.c.l.bf16 %v239
      %v249 = vunpack.c.l.bf16 %v240
      %v250 = vunpack.c.l.bf16 %v241
      %v251 = vunpack.c.l.bf16 %v242
      %v252 = vunpack.c.l.bf16 %v243
      %vm253 = vcmask 72704
      %v254 = vsel %vm253, %v244, 0.0
      %v255 = vrot.slane %v254, 4
      %v256 = vadd.f32 %v254, %v255
      %v257 = vrot.slane %v256, 2
      %v258 = vadd.f32 %v256, %v257
      %v259 = vrot.slane %v258, 1
      %v260 = vadd.f32 %v258, %v259
      %v261 = vsel %vm253, %v245, 0.0
      %v262 = vrot.slane %v261, 4
      %v263 = vadd.f32 %v261, %v262
      %v264 = vrot.slane %v263, 2
      %v265 = vadd.f32 %v263, %v264
      %v266 = vrot.slane %v265, 1
      %v267 = vadd.f32 %v265, %v266
      %v268 = vsel %vm253, %v246, 0.0
      %v269 = vrot.slane %v268, 4
      %v270 = vadd.f32 %v268, %v269
      %v271 = vrot.slane %v270, 2
      %v272 = vadd.f32 %v270, %v271
      %v273 = vrot.slane %v272, 1
      %v274 = vadd.f32 %v272, %v273
      %v275 = vsel %vm253, %v247, 0.0
      %v276 = vrot.slane %v275, 4
      %v277 = vadd.f32 %v275, %v276
      %v278 = vrot.slane %v277, 2
      %v279 = vadd.f32 %v277, %v278
      %v280 = vrot.slane %v279, 1
      %v281 = vadd.f32 %v279, %v280
      %v282 = vsel %vm253, %v248, 0.0
      %v283 = vrot.slane %v282, 4
      %v284 = vadd.f32 %v282, %v283
      %v285 = vrot.slane %v284, 2
      %v286 = vadd.f32 %v284, %v285
      %v287 = vrot.slane %v286, 1
      %v288 = vadd.f32 %v286, %v287
      %v289 = vsel %vm253, %v249, 0.0
      %v290 = vrot.slane %v289, 4
      %v291 = vadd.f32 %v289, %v290
      %v292 = vrot.slane %v291, 2
      %v293 = vadd.f32 %v291, %v292
      %v294 = vrot.slane %v293, 1
      %v295 = vadd.f32 %v293, %v294
      %v296 = vsel %vm253, %v250, 0.0
      %v297 = vrot.slane %v296, 4
      %v298 = vadd.f32 %v296, %v297
      %v299 = vrot.slane %v298, 2
      %v300 = vadd.f32 %v298, %v299
      %v301 = vrot.slane %v300, 1
      %v302 = vadd.f32 %v300, %v301
      %v303 = vsel %vm253, %v251, 0.0
      %v304 = vrot.slane %v303, 4
      %v305 = vadd.f32 %v303, %v304
      %v306 = vrot.slane %v305, 2
      %v307 = vadd.f32 %v305, %v306
      %v308 = vrot.slane %v307, 1
      %v309 = vadd.f32 %v307, %v308
      %v310 = vsel %vm253, %v252, 0.0
      %v311 = vrot.slane %v310, 4
      %v312 = vadd.f32 %v310, %v311
      %v313 = vrot.slane %v312, 2
      %v314 = vadd.f32 %v312, %v313
      %v315 = vrot.slane %v314, 1
      %v316 = vadd.f32 %v314, %v315
      %v317 = vrcp.pop 8.0
      %v318 = vmul.f32 %v260, %v317
      %v319 = vmul.f32 %v267, %v317
      %v320 = vmul.f32 %v274, %v317
      %v321 = vmul.f32 %v281, %v317
      %v322 = vmul.f32 %v288, %v317
      %v323 = vmul.f32 %v295, %v317
      %v324 = vmul.f32 %v302, %v317
      %v325 = vmul.f32 %v309, %v317
      %v326 = vmul.f32 %v316, %v317
      %v327 = vsub.f32 %v244, %v318
      %v328 = vsub.f32 %v245, %v319
      %v329 = vsub.f32 %v246, %v320
      %v330 = vsub.f32 %v247, %v321
      %v331 = vsub.f32 %v248, %v322
      %v332 = vsub.f32 %v249, %v323
      %v333 = vsub.f32 %v250, %v324
      %v334 = vsub.f32 %v251, %v325
      %v335 = vsub.f32 %v252, %v326
      %v336 = vmul.f32 %v327, %v327
      %v337 = vmul.f32 %v328, %v328
      %v338 = vmul.f32 %v329, %v329
      %v339 = vmul.f32 %v330, %v330
      %v340 = vmul.f32 %v331, %v331
      %v341 = vmul.f32 %v332, %v332
      %v342 = vmul.f32 %v333, %v333
      %v343 = vmul.f32 %v334, %v334
      %v344 = vmul.f32 %v335, %v335
      %v345 = vsel %vm253, %v336, 0.0
      %v346 = vrot.slane %v345, 4
      %v347 = vadd.f32 %v345, %v346
      %v348 = vrot.slane %v347, 2
      %v349 = vadd.f32 %v347, %v348
      %v350 = vrot.slane %v349, 1
      %v351 = vadd.f32 %v349, %v350
      %v352 = vsel %vm253, %v337, 0.0
      %v353 = vrot.slane %v352, 4
      %v354 = vadd.f32 %v352, %v353
      %v355 = vrot.slane %v354, 2
      %v356 = vadd.f32 %v354, %v355
      %v357 = vrot.slane %v356, 1
      %v358 = vadd.f32 %v356, %v357
      %v359 = vsel %vm253, %v338, 0.0
      %v360 = vrot.slane %v359, 4
      %v361 = vadd.f32 %v359, %v360
      %v362 = vrot.slane %v361, 2
      %v363 = vadd.f32 %v361, %v362
      %v364 = vrot.slane %v363, 1
      %v365 = vadd.f32 %v363, %v364
      %v366 = vsel %vm253, %v339, 0.0
      %v367 = vrot.slane %v366, 4
      %v368 = vadd.f32 %v366, %v367
      %v369 = vrot.slane %v368, 2
      %v370 = vadd.f32 %v368, %v369
      %v371 = vrot.slane %v370, 1
      %v372 = vadd.f32 %v370, %v371
      %v373 = vsel %vm253, %v340, 0.0
      %v374 = vrot.slane %v373, 4
      %v375 = vadd.f32 %v373, %v374
      %v376 = vrot.slane %v375, 2
      %v377 = vadd.f32 %v375, %v376
      %v378 = vrot.slane %v377, 1
      %v379 = vadd.f32 %v377, %v378
      %v380 = vsel %vm253, %v341, 0.0
      %v381 = vrot.slane %v380, 4
      %v382 = vadd.f32 %v380, %v381
      %v383 = vrot.slane %v382, 2
      %v384 = vadd.f32 %v382, %v383
      %v385 = vrot.slane %v384, 1
      %v386 = vadd.f32 %v384, %v385
      %v387 = vsel %vm253, %v342, 0.0
      %v388 = vrot.slane %v387, 4
      %v389 = vadd.f32 %v387, %v388
      %v390 = vrot.slane %v389, 2
      %v391 = vadd.f32 %v389, %v390
      %v392 = vrot.slane %v391, 1
      %v393 = vadd.f32 %v391, %v392
      %v394 = vsel %vm253, %v343, 0.0
      %v395 = vrot.slane %v394, 4
      %v396 = vadd.f32 %v394, %v395
      %v397 = vrot.slane %v396, 2
      %v398 = vadd.f32 %v396, %v397
      %v399 = vrot.slane %v398, 1
      %v400 = vadd.f32 %v398, %v399
      %v401 = vsel %vm253, %v344, 0.0
      %v402 = vrot.slane %v401, 4
      %v403 = vadd.f32 %v401, %v402
      %v404 = vrot.slane %v403, 2
      %v405 = vadd.f32 %v403, %v404
      %v406 = vrot.slane %v405, 1
      %v407 = vadd.f32 %v405, %v406
      %v408 = vmul.f32 %v351, %v317
      %v409 = vmul.f32 %v358, %v317
      %v410 = vmul.f32 %v365, %v317
      %v411 = vmul.f32 %v372, %v317
      %v412 = vmul.f32 %v379, %v317
      %v413 = vmul.f32 %v386, %v317
      %v414 = vmul.f32 %v393, %v317
      %v415 = vmul.f32 %v400, %v317
      %v416 = vmul.f32 %v407, %v317
      %v417 = vadd.f32 %v408, 1e-06
      %v418 = vadd.f32 %v409, 1e-06
      %v419 = vadd.f32 %v410, 1e-06
      %v420 = vadd.f32 %v411, 1e-06
      %v421 = vadd.f32 %v412, 1e-06
      %v422 = vadd.f32 %v413, 1e-06
      %v423 = vadd.f32 %v414, 1e-06
      %v424 = vadd.f32 %v415, 1e-06
      %v425 = vadd.f32 %v416, 1e-06
      %v426 = vrsqrt.pop %v417
      %v427 = vrsqrt.pop %v418
      %v428 = vrsqrt.pop %v419
      %v429 = vrsqrt.pop %v420
      %v430 = vrsqrt.pop %v421
      %v431 = vrsqrt.pop %v422
      %v432 = vrsqrt.pop %v423
      %v433 = vrsqrt.pop %v424
      %v434 = vrsqrt.pop %v425
      %v435 = vmul.f32 %v327, %v426
      %v436 = vmul.f32 %v328, %v427
      %v437 = vmul.f32 %v329, %v428
      %v438 = vmul.f32 %v330, %v429
      %v439 = vmul.f32 %v331, %v430
      %v440 = vmul.f32 %v332, %v431
      %v441 = vmul.f32 %v333, %v432
      %v442 = vmul.f32 %v334, %v433
      %v443 = vmul.f32 %v335, %v434
      %445 = vset.pattern.permute.xlu0 0
      %446 = vperm.xlu0 %445, %v233
      %v447 = vpop.permute.xlu0 %446
      %v449 = vmul.f32 %v435, %v447
      %v450 = vmul.f32 %v436, %v447
      %v451 = vmul.f32 %v437, %v447
      %v452 = vmul.f32 %v438, %v447
      %v453 = vmul.f32 %v439, %v447
      %v454 = vmul.f32 %v440, %v447
      %v455 = vmul.f32 %v441, %v447
      %v456 = vmul.f32 %v442, %v447
      %v457 = vmul.f32 %v443, %v447
      %459 = vset.pattern.permute.xlu0 0
      %460 = vperm.xlu0 %459, %v234
      %v461 = vpop.permute.xlu0 %460
      %v463 = vadd.f32 %v449, %v461
      %v464 = vadd.f32 %v450, %v461
      %v465 = vadd.f32 %v451, %v461
      %v466 = vadd.f32 %v452, %v461
      %v467 = vadd.f32 %v453, %v461
      %v468 = vadd.f32 %v454, %v461
      %v469 = vadd.f32 %v455, %v461
      %v470 = vadd.f32 %v456, %v461
      %v471 = vadd.f32 %v457, %v461
      %s472 = smul.u32 %s20, 8
      %v473 = vstv %s472
      %v474 = vadd.s32 %v473, 1
      %v475 = vadd.s32 %v473, 2
      %v476 = vadd.s32 %v473, 3
      %v477 = vadd.s32 %v473, 4
      %v478 = vadd.s32 %v473, 5
      %v479 = vadd.s32 %v473, 6
      %v480 = vadd.s32 %v473, 7
      %v481 = vadd.s32 %v473, 8
      %v482 = vlaneseq
      %v483 = vand.u32 %v482, 127
      %vm484 = vcmp.ge.s32.totalorder %v473, 1
      %vm485 = vcmp.ge.s32.totalorder %v474, 1
      %vm486 = vcmp.ge.s32.totalorder %v475, 1
      %vm487 = vcmp.ge.s32.totalorder %v476, 1
      %vm488 = vcmp.ge.s32.totalorder %v477, 1
      %vm489 = vcmp.ge.s32.totalorder %v478, 1
      %vm490 = vcmp.ge.s32.totalorder %v479, 1
      %vm491 = vcmp.ge.s32.totalorder %v480, 1
      %vm492 = vcmp.ge.s32.totalorder %v481, 1
      %vm493 = vcmp.le.s32.totalorder %v473, 8
      %vm494 = vcmp.le.s32.totalorder %v474, 8
      %vm495 = vcmp.le.s32.totalorder %v475, 8
      %vm496 = vcmp.le.s32.totalorder %v476, 8
      %vm497 = vcmp.le.s32.totalorder %v477, 8
      %vm498 = vcmp.le.s32.totalorder %v478, 8
      %vm499 = vcmp.le.s32.totalorder %v479, 8
      %vm500 = vcmp.le.s32.totalorder %v480, 8
      %vm501 = vcmp.le.s32.totalorder %v481, 8
      %vm502 = vmand %vm484, %vm493
      %vm503 = vmand %vm485, %vm494
      %vm504 = vmand %vm486, %vm495
      %vm505 = vmand %vm487, %vm496
      %vm506 = vmand %vm488, %vm497
      %vm507 = vmand %vm489, %vm498
      %vm508 = vmand %vm490, %vm499
      %vm509 = vmand %vm491, %vm500
      %vm510 = vmand %vm492, %vm501
      %vm511 = vcmp.ge.s32.totalorder %v483, 1
      %vm512 = vmand %vm502, %vm511
      %vm513 = vmand %vm503, %vm511
      %vm514 = vmand %vm504, %vm511
      %vm515 = vmand %vm505, %vm511
      %vm516 = vmand %vm506, %vm511
      %vm517 = vmand %vm507, %vm511
      %vm518 = vmand %vm508, %vm511
      %vm519 = vmand %vm509, %vm511
      %vm520 = vmand %vm510, %vm511
      %vm521 = vcmp.le.s32.totalorder %v483, 8
      %vm522 = vmand %vm512, %vm521
      %vm523 = vmand %vm513, %vm521
      %vm524 = vmand %vm514, %vm521
      %vm525 = vmand %vm515, %vm521
      %vm526 = vmand %vm516, %vm521
      %vm527 = vmand %vm517, %vm521
      %vm528 = vmand %vm518, %vm521
      %vm529 = vmand %vm519, %vm521
      %vm530 = vmand %vm520, %vm521
      %v531 = vsel %vm522, 1, 0
      %v532 = vsel %vm523, 1, 0
      %v533 = vsel %vm524, 1, 0
      %v534 = vsel %vm525, 1, 0
      %v535 = vsel %vm526, 1, 0
      %v536 = vsel %vm527, 1, 0
      %v537 = vsel %vm528, 1, 0
      %v538 = vsel %vm529, 1, 0
      %v539 = vsel %vm530, 1, 0
      %vm540 = vcmp.eq.s32.totalorder %v531, 1
      %vm541 = vcmp.eq.s32.totalorder %v532, 1
      %vm542 = vcmp.eq.s32.totalorder %v533, 1
      %vm543 = vcmp.eq.s32.totalorder %v534, 1
      %vm544 = vcmp.eq.s32.totalorder %v535, 1
      %vm545 = vcmp.eq.s32.totalorder %v536, 1
      %vm546 = vcmp.eq.s32.totalorder %v537, 1
      %vm547 = vcmp.eq.s32.totalorder %v538, 1
      %vm548 = vcmp.eq.s32.totalorder %v539, 1
      %v549 = vsel %vm540, %v463, 0.0
      %v550 = vsel %vm541, %v464, 0.0
      %v551 = vsel %vm542, %v465, 0.0
      %v552 = vsel %vm543, %v466, 0.0
      %v553 = vsel %vm544, %v467, 0.0
      %v554 = vsel %vm545, %v468, 0.0
      %v555 = vsel %vm546, %v469, 0.0
      %v556 = vsel %vm547, %v470, 0.0
      %v557 = vsel %vm548, %v471, 0.0
      %v558 = vpack.c.bf16 %v549, %v549
      %v559 = vpack.c.bf16 %v550, %v550
      %v560 = vpack.c.bf16 %v551, %v551
      %v561 = vpack.c.bf16 %v552, %v552
      %v562 = vpack.c.bf16 %v553, %v553
      %v563 = vpack.c.bf16 %v554, %v554
      %v564 = vpack.c.bf16 %v555, %v555
      %v565 = vpack.c.bf16 %v556, %v556
      %v566 = vpack.c.bf16 %v557, %v557
      %vm567 = vcmask 68608
      %568 = vst.msk [vmem:[#allocation2] sm:$0xf] %vm567, %v558
      %569 = vst.msk [vmem:[#allocation2 + $0x4] sm:$0xf] %vm567, %v559
      %570 = vst.msk [vmem:[#allocation2 + $0x8] sm:$0xf] %vm567, %v560
      %571 = vst.msk [vmem:[#allocation2 + $0xc] sm:$0xf] %vm567, %v561
      %572 = vst.msk [vmem:[#allocation2 + $0x10] sm:$0xf] %vm567, %v562
      %573 = vst.msk [vmem:[#allocation2 + $0x14] sm:$0xf] %vm567, %v563
      %574 = vst.msk [vmem:[#allocation2 + $0x18] sm:$0xf] %vm567, %v564
      %575 = vst.msk [vmem:[#allocation2 + $0x1c] sm:$0xf] %vm567, %v565
      %576 = vst.msk [vmem:[#allocation2 + $0x20] sm:$0xf] %vm567, %v566
      %s577 = scalar_lea.vmem %s223, 36
      %v578 = vld [vmem:[%s577] sm:$0xf]
      %v579 = vld [vmem:[%s577 + $0x4] sm:$0xf]
      %v580 = vld [vmem:[%s577 + $0x8] sm:$0xf]
      %v581 = vld [vmem:[%s577 + $0xc] sm:$0xf]
      %v582 = vld [vmem:[%s577 + $0x10] sm:$0xf]
      %v583 = vld [vmem:[%s577 + $0x14] sm:$0xf]
      %v584 = vld [vmem:[%s577 + $0x18] sm:$0xf]
      %v585 = vld [vmem:[%s577 + $0x1c] sm:$0xf]
      %v586 = vld [vmem:[%s577 + $0x20] sm:$0xf]
      %v587 = vunpack.c.l.bf16 %v578
      %v588 = vunpack.c.l.bf16 %v579
      %v589 = vunpack.c.l.bf16 %v580
      %v590 = vunpack.c.l.bf16 %v581
      %v591 = vunpack.c.l.bf16 %v582
      %v592 = vunpack.c.l.bf16 %v583
      %v593 = vunpack.c.l.bf16 %v584
      %v594 = vunpack.c.l.bf16 %v585
      %v595 = vunpack.c.l.bf16 %v586
      %v596 = vsel %vm253, %v587, 0.0
      %v597 = vrot.slane %v596, 4
      %v598 = vadd.f32 %v596, %v597
      %v599 = vrot.slane %v598, 2
      %v600 = vadd.f32 %v598, %v599
      %v601 = vrot.slane %v600, 1
      %v602 = vadd.f32 %v600, %v601
      %v603 = vsel %vm253, %v588, 0.0
      %v604 = vrot.slane %v603, 4
      %v605 = vadd.f32 %v603, %v604
      %v606 = vrot.slane %v605, 2
      %v607 = vadd.f32 %v605, %v606
      %v608 = vrot.slane %v607, 1
      %v609 = vadd.f32 %v607, %v608
      %v610 = vsel %vm253, %v589, 0.0
      %v611 = vrot.slane %v610, 4
      %v612 = vadd.f32 %v610, %v611
      %v613 = vrot.slane %v612, 2
      %v614 = vadd.f32 %v612, %v613
      %v615 = vrot.slane %v614, 1
      %v616 = vadd.f32 %v614, %v615
      %v617 = vsel %vm253, %v590, 0.0
      %v618 = vrot.slane %v617, 4
      %v619 = vadd.f32 %v617, %v618
      %v620 = vrot.slane %v619, 2
      %v621 = vadd.f32 %v619, %v620
      %v622 = vrot.slane %v621, 1
      %v623 = vadd.f32 %v621, %v622
      %v624 = vsel %vm253, %v591, 0.0
      %v625 = vrot.slane %v624, 4
      %v626 = vadd.f32 %v624, %v625
      %v627 = vrot.slane %v626, 2
      %v628 = vadd.f32 %v626, %v627
      %v629 = vrot.slane %v628, 1
      %v630 = vadd.f32 %v628, %v629
      %v631 = vsel %vm253, %v592, 0.0
      %v632 = vrot.slane %v631, 4
      %v633 = vadd.f32 %v631, %v632
      %v634 = vrot.slane %v633, 2
      %v635 = vadd.f32 %v633, %v634
      %v636 = vrot.slane %v635, 1
      %v637 = vadd.f32 %v635, %v636
      %v638 = vsel %vm253, %v593, 0.0
      %v639 = vrot.slane %v638, 4
      %v640 = vadd.f32 %v638, %v639
      %v641 = vrot.slane %v640, 2
      %v642 = vadd.f32 %v640, %v641
      %v643 = vrot.slane %v642, 1
      %v644 = vadd.f32 %v642, %v643
      %v645 = vsel %vm253, %v594, 0.0
      %v646 = vrot.slane %v645, 4
      %v647 = vadd.f32 %v645, %v646
      %v648 = vrot.slane %v647, 2
      %v649 = vadd.f32 %v647, %v648
      %v650 = vrot.slane %v649, 1
      %v651 = vadd.f32 %v649, %v650
      %v652 = vsel %vm253, %v595, 0.0
      %v653 = vrot.slane %v652, 4
      %v654 = vadd.f32 %v652, %v653
      %v655 = vrot.slane %v654, 2
      %v656 = vadd.f32 %v654, %v655
      %v657 = vrot.slane %v656, 1
      %v658 = vadd.f32 %v656, %v657
      %v659 = vmul.f32 %v602, %v317
      %v660 = vmul.f32 %v609, %v317
      %v661 = vmul.f32 %v616, %v317
      %v662 = vmul.f32 %v623, %v317
      %v663 = vmul.f32 %v630, %v317
      %v664 = vmul.f32 %v637, %v317
      %v665 = vmul.f32 %v644, %v317
      %v666 = vmul.f32 %v651, %v317
      %v667 = vmul.f32 %v658, %v317
      %v668 = vsub.f32 %v587, %v659
      %v669 = vsub.f32 %v588, %v660
      %v670 = vsub.f32 %v589, %v661
      %v671 = vsub.f32 %v590, %v662
      %v672 = vsub.f32 %v591, %v663
      %v673 = vsub.f32 %v592, %v664
      %v674 = vsub.f32 %v593, %v665
      %v675 = vsub.f32 %v594, %v666
      %v676 = vsub.f32 %v595, %v667
      %v677 = vmul.f32 %v668, %v668
      %v678 = vmul.f32 %v669, %v669
      %v679 = vmul.f32 %v670, %v670
      %v680 = vmul.f32 %v671, %v671
      %v681 = vmul.f32 %v672, %v672
      %v682 = vmul.f32 %v673, %v673
      %v683 = vmul.f32 %v674, %v674
      %v684 = vmul.f32 %v675, %v675
      %v685 = vmul.f32 %v676, %v676
      %v686 = vsel %vm253, %v677, 0.0
      %v687 = vrot.slane %v686, 4
      %v688 = vadd.f32 %v686, %v687
      %v689 = vrot.slane %v688, 2
      %v690 = vadd.f32 %v688, %v689
      %v691 = vrot.slane %v690, 1
      %v692 = vadd.f32 %v690, %v691
      %v693 = vsel %vm253, %v678, 0.0
      %v694 = vrot.slane %v693, 4
      %v695 = vadd.f32 %v693, %v694
      %v696 = vrot.slane %v695, 2
      %v697 = vadd.f32 %v695, %v696
      %v698 = vrot.slane %v697, 1
      %v699 = vadd.f32 %v697, %v698
      %v700 = vsel %vm253, %v679, 0.0
      %v701 = vrot.slane %v700, 4
      %v702 = vadd.f32 %v700, %v701
      %v703 = vrot.slane %v702, 2
      %v704 = vadd.f32 %v702, %v703
      %v705 = vrot.slane %v704, 1
      %v706 = vadd.f32 %v704, %v705
      %v707 = vsel %vm253, %v680, 0.0
      %v708 = vrot.slane %v707, 4
      %v709 = vadd.f32 %v707, %v708
      %v710 = vrot.slane %v709, 2
      %v711 = vadd.f32 %v709, %v710
      %v712 = vrot.slane %v711, 1
      %v713 = vadd.f32 %v711, %v712
      %v714 = vsel %vm253, %v681, 0.0
      %v715 = vrot.slane %v714, 4
      %v716 = vadd.f32 %v714, %v715
      %v717 = vrot.slane %v716, 2
      %v718 = vadd.f32 %v716, %v717
      %v719 = vrot.slane %v718, 1
      %v720 = vadd.f32 %v718, %v719
      %v721 = vsel %vm253, %v682, 0.0
      %v722 = vrot.slane %v721, 4
      %v723 = vadd.f32 %v721, %v722
      %v724 = vrot.slane %v723, 2
      %v725 = vadd.f32 %v723, %v724
      %v726 = vrot.slane %v725, 1
      %v727 = vadd.f32 %v725, %v726
      %v728 = vsel %vm253, %v683, 0.0
      %v729 = vrot.slane %v728, 4
      %v730 = vadd.f32 %v728, %v729
      %v731 = vrot.slane %v730, 2
      %v732 = vadd.f32 %v730, %v731
      %v733 = vrot.slane %v732, 1
      %v734 = vadd.f32 %v732, %v733
      %v735 = vsel %vm253, %v684, 0.0
      %v736 = vrot.slane %v735, 4
      %v737 = vadd.f32 %v735, %v736
      %v738 = vrot.slane %v737, 2
      %v739 = vadd.f32 %v737, %v738
      %v740 = vrot.slane %v739, 1
      %v741 = vadd.f32 %v739, %v740
      %v742 = vsel %vm253, %v685, 0.0
      %v743 = vrot.slane %v742, 4
      %v744 = vadd.f32 %v742, %v743
      %v745 = vrot.slane %v744, 2
      %v746 = vadd.f32 %v744, %v745
      %v747 = vrot.slane %v746, 1
      %v748 = vadd.f32 %v746, %v747
      %v749 = vmul.f32 %v692, %v317
      %v750 = vmul.f32 %v699, %v317
      %v751 = vmul.f32 %v706, %v317
      %v752 = vmul.f32 %v713, %v317
      %v753 = vmul.f32 %v720, %v317
      %v754 = vmul.f32 %v727, %v317
      %v755 = vmul.f32 %v734, %v317
      %v756 = vmul.f32 %v741, %v317
      %v757 = vmul.f32 %v748, %v317
      %v758 = vadd.f32 %v749, 1e-06
      %v759 = vadd.f32 %v750, 1e-06
      %v760 = vadd.f32 %v751, 1e-06
      %v761 = vadd.f32 %v752, 1e-06
      %v762 = vadd.f32 %v753, 1e-06
      %v763 = vadd.f32 %v754, 1e-06
      %v764 = vadd.f32 %v755, 1e-06
      %v765 = vadd.f32 %v756, 1e-06
      %v766 = vadd.f32 %v757, 1e-06
      %v767 = vrsqrt.pop %v758
      %v768 = vrsqrt.pop %v759
      %v769 = vrsqrt.pop %v760
      %v770 = vrsqrt.pop %v761
      %v771 = vrsqrt.pop %v762
      %v772 = vrsqrt.pop %v763
      %v773 = vrsqrt.pop %v764
      %v774 = vrsqrt.pop %v765
      %v775 = vrsqrt.pop %v766
      %v776 = vmul.f32 %v668, %v767
      %v777 = vmul.f32 %v669, %v768
      %v778 = vmul.f32 %v670, %v769
      %v779 = vmul.f32 %v671, %v770
      %v780 = vmul.f32 %v672, %v771
      %v781 = vmul.f32 %v673, %v772
      %v782 = vmul.f32 %v674, %v773
      %v783 = vmul.f32 %v675, %v774
      %v784 = vmul.f32 %v676, %v775
      %v785 = vmul.f32 %v776, %v447
      %v786 = vmul.f32 %v777, %v447
      %v787 = vmul.f32 %v778, %v447
      %v788 = vmul.f32 %v779, %v447
      %v789 = vmul.f32 %v780, %v447
      %v790 = vmul.f32 %v781, %v447
      %v791 = vmul.f32 %v782, %v447
      %v792 = vmul.f32 %v783, %v447
      %v793 = vmul.f32 %v784, %v447
      %v794 = vadd.f32 %v785, %v461
      %v795 = vadd.f32 %v786, %v461
      %v796 = vadd.f32 %v787, %v461
      %v797 = vadd.f32 %v788, %v461
      %v798 = vadd.f32 %v789, %v461
      %v799 = vadd.f32 %v790, %v461
      %v800 = vadd.f32 %v791, %v461
      %v801 = vadd.f32 %v792, %v461
      %v802 = vadd.f32 %v793, %v461
      %v803 = vsel %vm540, %v794, 0.0
      %v804 = vsel %vm541, %v795, 0.0
      %v805 = vsel %vm542, %v796, 0.0
      %v806 = vsel %vm543, %v797, 0.0
      %v807 = vsel %vm544, %v798, 0.0
      %v808 = vsel %vm545, %v799, 0.0
      %v809 = vsel %vm546, %v800, 0.0
      %v810 = vsel %vm547, %v801, 0.0
      %v811 = vsel %vm548, %v802, 0.0
      %v812 = vpack.c.bf16 %v803, %v803
      %v813 = vpack.c.bf16 %v804, %v804
      %v814 = vpack.c.bf16 %v805, %v805
      %v815 = vpack.c.bf16 %v806, %v806
      %v816 = vpack.c.bf16 %v807, %v807
      %v817 = vpack.c.bf16 %v808, %v808
      %v818 = vpack.c.bf16 %v809, %v809
      %v819 = vpack.c.bf16 %v810, %v810
      %v820 = vpack.c.bf16 %v811, %v811
      %s821 = scalar_lea.vmem [#allocation2], 36
      %822 = vst.msk [vmem:[%s821] sm:$0xf] %vm567, %v812
      %823 = vst.msk [vmem:[%s821 + $0x4] sm:$0xf] %vm567, %v813
      %824 = vst.msk [vmem:[%s821 + $0x8] sm:$0xf] %vm567, %v814
      %825 = vst.msk [vmem:[%s821 + $0xc] sm:$0xf] %vm567, %v815
      %826 = vst.msk [vmem:[%s821 + $0x10] sm:$0xf] %vm567, %v816
      %827 = vst.msk [vmem:[%s821 + $0x14] sm:$0xf] %vm567, %v817
      %828 = vst.msk [vmem:[%s821 + $0x18] sm:$0xf] %vm567, %v818
      %829 = vst.msk [vmem:[%s821 + $0x1c] sm:$0xf] %vm567, %v819
      %830 = vst.msk [vmem:[%s821 + $0x20] sm:$0xf] %vm567, %v820
      %s831 = scalar_lea.vmem %s223, 72
      %v832 = vld [vmem:[%s831] sm:$0xf]
      %v833 = vld [vmem:[%s831 + $0x4] sm:$0xf]
      %v834 = vld [vmem:[%s831 + $0x8] sm:$0xf]
      %v835 = vld [vmem:[%s831 + $0xc] sm:$0xf]
      %v836 = vld [vmem:[%s831 + $0x10] sm:$0xf]
      %v837 = vld [vmem:[%s831 + $0x14] sm:$0xf]
      %v838 = vld [vmem:[%s831 + $0x18] sm:$0xf]
      %v839 = vld [vmem:[%s831 + $0x1c] sm:$0xf]
      %v840 = vld [vmem:[%s831 + $0x20] sm:$0xf]
      %v841 = vunpack.c.l.bf16 %v832
      %v842 = vunpack.c.l.bf16 %v833
      %v843 = vunpack.c.l.bf16 %v834
      %v844 = vunpack.c.l.bf16 %v835
      %v845 = vunpack.c.l.bf16 %v836
      %v846 = vunpack.c.l.bf16 %v837
      %v847 = vunpack.c.l.bf16 %v838
      %v848 = vunpack.c.l.bf16 %v839
      %v849 = vunpack.c.l.bf16 %v840
      %v850 = vsel %vm253, %v841, 0.0
      %v851 = vrot.slane %v850, 4
      %v852 = vadd.f32 %v850, %v851
      %v853 = vrot.slane %v852, 2
      %v854 = vadd.f32 %v852, %v853
      %v855 = vrot.slane %v854, 1
      %v856 = vadd.f32 %v854, %v855
      %v857 = vsel %vm253, %v842, 0.0
      %v858 = vrot.slane %v857, 4
      %v859 = vadd.f32 %v857, %v858
      %v860 = vrot.slane %v859, 2
      %v861 = vadd.f32 %v859, %v860
      %v862 = vrot.slane %v861, 1
      %v863 = vadd.f32 %v861, %v862
      %v864 = vsel %vm253, %v843, 0.0
      %v865 = vrot.slane %v864, 4
      %v866 = vadd.f32 %v864, %v865
      %v867 = vrot.slane %v866, 2
      %v868 = vadd.f32 %v866, %v867
      %v869 = vrot.slane %v868, 1
      %v870 = vadd.f32 %v868, %v869
      %v871 = vsel %vm253, %v844, 0.0
      %v872 = vrot.slane %v871, 4
      %v873 = vadd.f32 %v871, %v872
      %v874 = vrot.slane %v873, 2
      %v875 = vadd.f32 %v873, %v874
      %v876 = vrot.slane %v875, 1
      %v877 = vadd.f32 %v875, %v876
      %v878 = vsel %vm253, %v845, 0.0
      %v879 = vrot.slane %v878, 4
      %v880 = vadd.f32 %v878, %v879
      %v881 = vrot.slane %v880, 2
      %v882 = vadd.f32 %v880, %v881
      %v883 = vrot.slane %v882, 1
      %v884 = vadd.f32 %v882, %v883
      %v885 = vsel %vm253, %v846, 0.0
      %v886 = vrot.slane %v885, 4
      %v887 = vadd.f32 %v885, %v886
      %v888 = vrot.slane %v887, 2
      %v889 = vadd.f32 %v887, %v888
      %v890 = vrot.slane %v889, 1
      %v891 = vadd.f32 %v889, %v890
      %v892 = vsel %vm253, %v847, 0.0
      %v893 = vrot.slane %v892, 4
      %v894 = vadd.f32 %v892, %v893
      %v895 = vrot.slane %v894, 2
      %v896 = vadd.f32 %v894, %v895
      %v897 = vrot.slane %v896, 1
      %v898 = vadd.f32 %v896, %v897
      %v899 = vsel %vm253, %v848, 0.0
      %v900 = vrot.slane %v899, 4
      %v901 = vadd.f32 %v899, %v900
      %v902 = vrot.slane %v901, 2
      %v903 = vadd.f32 %v901, %v902
      %v904 = vrot.slane %v903, 1
      %v905 = vadd.f32 %v903, %v904
      %v906 = vsel %vm253, %v849, 0.0
      %v907 = vrot.slane %v906, 4
      %v908 = vadd.f32 %v906, %v907
      %v909 = vrot.slane %v908, 2
      %v910 = vadd.f32 %v908, %v909
      %v911 = vrot.slane %v910, 1
      %v912 = vadd.f32 %v910, %v911
      %v913 = vmul.f32 %v856, %v317
      %v914 = vmul.f32 %v863, %v317
      %v915 = vmul.f32 %v870, %v317
      %v916 = vmul.f32 %v877, %v317
      %v917 = vmul.f32 %v884, %v317
      %v918 = vmul.f32 %v891, %v317
      %v919 = vmul.f32 %v898, %v317
      %v920 = vmul.f32 %v905, %v317
      %v921 = vmul.f32 %v912, %v317
      %v922 = vsub.f32 %v841, %v913
      %v923 = vsub.f32 %v842, %v914
      %v924 = vsub.f32 %v843, %v915
      %v925 = vsub.f32 %v844, %v916
      %v926 = vsub.f32 %v845, %v917
      %v927 = vsub.f32 %v846, %v918
      %v928 = vsub.f32 %v847, %v919
      %v929 = vsub.f32 %v848, %v920
      %v930 = vsub.f32 %v849, %v921
      %v931 = vmul.f32 %v922, %v922
      %v932 = vmul.f32 %v923, %v923
      %v933 = vmul.f32 %v924, %v924
      %v934 = vmul.f32 %v925, %v925
      %v935 = vmul.f32 %v926, %v926
      %v936 = vmul.f32 %v927, %v927
      %v937 = vmul.f32 %v928, %v928
      %v938 = vmul.f32 %v929, %v929
      %v939 = vmul.f32 %v930, %v930
      %v940 = vsel %vm253, %v931, 0.0
      %v941 = vrot.slane %v940, 4
      %v942 = vadd.f32 %v940, %v941
      %v943 = vrot.slane %v942, 2
      %v944 = vadd.f32 %v942, %v943
      %v945 = vrot.slane %v944, 1
      %v946 = vadd.f32 %v944, %v945
      %v947 = vsel %vm253, %v932, 0.0
      %v948 = vrot.slane %v947, 4
      %v949 = vadd.f32 %v947, %v948
      %v950 = vrot.slane %v949, 2
      %v951 = vadd.f32 %v949, %v950
      %v952 = vrot.slane %v951, 1
      %v953 = vadd.f32 %v951, %v952
      %v954 = vsel %vm253, %v933, 0.0
      %v955 = vrot.slane %v954, 4
      %v956 = vadd.f32 %v954, %v955
      %v957 = vrot.slane %v956, 2
      %v958 = vadd.f32 %v956, %v957
      %v959 = vrot.slane %v958, 1
      %v960 = vadd.f32 %v958, %v959
      %v961 = vsel %vm253, %v934, 0.0
      %v962 = vrot.slane %v961, 4
      %v963 = vadd.f32 %v961, %v962
      %v964 = vrot.slane %v963, 2
      %v965 = vadd.f32 %v963, %v964
      %v966 = vrot.slane %v965, 1
      %v967 = vadd.f32 %v965, %v966
      %v968 = vsel %vm253, %v935, 0.0
      %v969 = vrot.slane %v968, 4
      %v970 = vadd.f32 %v968, %v969
      %v971 = vrot.slane %v970, 2
      %v972 = vadd.f32 %v970, %v971
      %v973 = vrot.slane %v972, 1
      %v974 = vadd.f32 %v972, %v973
      %v975 = vsel %vm253, %v936, 0.0
      %v976 = vrot.slane %v975, 4
      %v977 = vadd.f32 %v975, %v976
      %v978 = vrot.slane %v977, 2
      %v979 = vadd.f32 %v977, %v978
      %v980 = vrot.slane %v979, 1
      %v981 = vadd.f32 %v979, %v980
      %v982 = vsel %vm253, %v937, 0.0
      %v983 = vrot.slane %v982, 4
      %v984 = vadd.f32 %v982, %v983
      %v985 = vrot.slane %v984, 2
      %v986 = vadd.f32 %v984, %v985
      %v987 = vrot.slane %v986, 1
      %v988 = vadd.f32 %v986, %v987
      %v989 = vsel %vm253, %v938, 0.0
      %v990 = vrot.slane %v989, 4
      %v991 = vadd.f32 %v989, %v990
      %v992 = vrot.slane %v991, 2
      %v993 = vadd.f32 %v991, %v992
      %v994 = vrot.slane %v993, 1
      %v995 = vadd.f32 %v993, %v994
      %v996 = vsel %vm253, %v939, 0.0
      %v997 = vrot.slane %v996, 4
      %v998 = vadd.f32 %v996, %v997
      %v999 = vrot.slane %v998, 2
      %v1000 = vadd.f32 %v998, %v999
      %v1001 = vrot.slane %v1000, 1
      %v1002 = vadd.f32 %v1000, %v1001
      %v1003 = vmul.f32 %v946, %v317
      %v1004 = vmul.f32 %v953, %v317
      %v1005 = vmul.f32 %v960, %v317
      %v1006 = vmul.f32 %v967, %v317
      %v1007 = vmul.f32 %v974, %v317
      %v1008 = vmul.f32 %v981, %v317
      %v1009 = vmul.f32 %v988, %v317
      %v1010 = vmul.f32 %v995, %v317
      %v1011 = vmul.f32 %v1002, %v317
      %v1012 = vadd.f32 %v1003, 1e-06
      %v1013 = vadd.f32 %v1004, 1e-06
      %v1014 = vadd.f32 %v1005, 1e-06
      %v1015 = vadd.f32 %v1006, 1e-06
      %v1016 = vadd.f32 %v1007, 1e-06
      %v1017 = vadd.f32 %v1008, 1e-06
      %v1018 = vadd.f32 %v1009, 1e-06
      %v1019 = vadd.f32 %v1010, 1e-06
      %v1020 = vadd.f32 %v1011, 1e-06
      %v1021 = vrsqrt.pop %v1012
      %v1022 = vrsqrt.pop %v1013
      %v1023 = vrsqrt.pop %v1014
      %v1024 = vrsqrt.pop %v1015
      %v1025 = vrsqrt.pop %v1016
      %v1026 = vrsqrt.pop %v1017
      %v1027 = vrsqrt.pop %v1018
      %v1028 = vrsqrt.pop %v1019
      %v1029 = vrsqrt.pop %v1020
      %v1030 = vmul.f32 %v922, %v1021
      %v1031 = vmul.f32 %v923, %v1022
      %v1032 = vmul.f32 %v924, %v1023
      %v1033 = vmul.f32 %v925, %v1024
      %v1034 = vmul.f32 %v926, %v1025
      %v1035 = vmul.f32 %v927, %v1026
      %v1036 = vmul.f32 %v928, %v1027
      %v1037 = vmul.f32 %v929, %v1028
      %v1038 = vmul.f32 %v930, %v1029
      %v1039 = vmul.f32 %v1030, %v447
      %v1040 = vmul.f32 %v1031, %v447
      %v1041 = vmul.f32 %v1032, %v447
      %v1042 = vmul.f32 %v1033, %v447
      %v1043 = vmul.f32 %v1034, %v447
      %v1044 = vmul.f32 %v1035, %v447
      %v1045 = vmul.f32 %v1036, %v447
      %v1046 = vmul.f32 %v1037, %v447
      %v1047 = vmul.f32 %v1038, %v447
      %v1048 = vadd.f32 %v1039, %v461
      %v1049 = vadd.f32 %v1040, %v461
      %v1050 = vadd.f32 %v1041, %v461
      %v1051 = vadd.f32 %v1042, %v461
      %v1052 = vadd.f32 %v1043, %v461
      %v1053 = vadd.f32 %v1044, %v461
      %v1054 = vadd.f32 %v1045, %v461
      %v1055 = vadd.f32 %v1046, %v461
      %v1056 = vadd.f32 %v1047, %v461
      %v1057 = vsel %vm540, %v1048, 0.0
      %v1058 = vsel %vm541, %v1049, 0.0
      %v1059 = vsel %vm542, %v1050, 0.0
      %v1060 = vsel %vm543, %v1051, 0.0
      %v1061 = vsel %vm544, %v1052, 0.0
      %v1062 = vsel %vm545, %v1053, 0.0
      %v1063 = vsel %vm546, %v1054, 0.0
      %v1064 = vsel %vm547, %v1055, 0.0
      %v1065 = vsel %vm548, %v1056, 0.0
      %v1066 = vpack.c.bf16 %v1057, %v1057
      %v1067 = vpack.c.bf16 %v1058, %v1058
      %v1068 = vpack.c.bf16 %v1059, %v1059
      %v1069 = vpack.c.bf16 %v1060, %v1060
      %v1070 = vpack.c.bf16 %v1061, %v1061
      %v1071 = vpack.c.bf16 %v1062, %v1062
      %v1072 = vpack.c.bf16 %v1063, %v1063
      %v1073 = vpack.c.bf16 %v1064, %v1064
      %v1074 = vpack.c.bf16 %v1065, %v1065
      %s1075 = scalar_lea.vmem [#allocation2], 72
      %1076 = vst.msk [vmem:[%s1075] sm:$0xf] %vm567, %v1066
      %1077 = vst.msk [vmem:[%s1075 + $0x4] sm:$0xf] %vm567, %v1067
      %1078 = vst.msk [vmem:[%s1075 + $0x8] sm:$0xf] %vm567, %v1068
      %1079 = vst.msk [vmem:[%s1075 + $0xc] sm:$0xf] %vm567, %v1069
      %1080 = vst.msk [vmem:[%s1075 + $0x10] sm:$0xf] %vm567, %v1070
      %1081 = vst.msk [vmem:[%s1075 + $0x14] sm:$0xf] %vm567, %v1071
      %1082 = vst.msk [vmem:[%s1075 + $0x18] sm:$0xf] %vm567, %v1072
      %1083 = vst.msk [vmem:[%s1075 + $0x1c] sm:$0xf] %vm567, %v1073
      %1084 = vst.msk [vmem:[%s1075 + $0x20] sm:$0xf] %vm567, %v1074
      %s1085 = scalar_lea.vmem %s223, 108
      %v1086 = vld [vmem:[%s1085] sm:$0xf]
      %v1087 = vld [vmem:[%s1085 + $0x4] sm:$0xf]
      %v1088 = vld [vmem:[%s1085 + $0x8] sm:$0xf]
      %v1089 = vld [vmem:[%s1085 + $0xc] sm:$0xf]
      %v1090 = vld [vmem:[%s1085 + $0x10] sm:$0xf]
      %v1091 = vld [vmem:[%s1085 + $0x14] sm:$0xf]
      %v1092 = vld [vmem:[%s1085 + $0x18] sm:$0xf]
      %v1093 = vld [vmem:[%s1085 + $0x1c] sm:$0xf]
      %v1094 = vld [vmem:[%s1085 + $0x20] sm:$0xf]
      %v1095 = vunpack.c.l.bf16 %v1086
      %v1096 = vunpack.c.l.bf16 %v1087
      %v1097 = vunpack.c.l.bf16 %v1088
      %v1098 = vunpack.c.l.bf16 %v1089
      %v1099 = vunpack.c.l.bf16 %v1090
      %v1100 = vunpack.c.l.bf16 %v1091
      %v1101 = vunpack.c.l.bf16 %v1092
      %v1102 = vunpack.c.l.bf16 %v1093
      %v1103 = vunpack.c.l.bf16 %v1094
      %v1104 = vsel %vm253, %v1095, 0.0
      %v1105 = vrot.slane %v1104, 4
      %v1106 = vadd.f32 %v1104, %v1105
      %v1107 = vrot.slane %v1106, 2
      %v1108 = vadd.f32 %v1106, %v1107
      %v1109 = vrot.slane %v1108, 1
      %v1110 = vadd.f32 %v1108, %v1109
      %v1111 = vsel %vm253, %v1096, 0.0
      %v1112 = vrot.slane %v1111, 4
      %v1113 = vadd.f32 %v1111, %v1112
      %v1114 = vrot.slane %v1113, 2
      %v1115 = vadd.f32 %v1113, %v1114
      %v1116 = vrot.slane %v1115, 1
      %v1117 = vadd.f32 %v1115, %v1116
      %v1118 = vsel %vm253, %v1097, 0.0
      %v1119 = vrot.slane %v1118, 4
      %v1120 = vadd.f32 %v1118, %v1119
      %v1121 = vrot.slane %v1120, 2
      %v1122 = vadd.f32 %v1120, %v1121
      %v1123 = vrot.slane %v1122, 1
      %v1124 = vadd.f32 %v1122, %v1123
      %v1125 = vsel %vm253, %v1098, 0.0
      %v1126 = vrot.slane %v1125, 4
      %v1127 = vadd.f32 %v1125, %v1126
      %v1128 = vrot.slane %v1127, 2
      %v1129 = vadd.f32 %v1127, %v1128
      %v1130 = vrot.slane %v1129, 1
      %v1131 = vadd.f32 %v1129, %v1130
      %v1132 = vsel %vm253, %v1099, 0.0
      %v1133 = vrot.slane %v1132, 4
      %v1134 = vadd.f32 %v1132, %v1133
      %v1135 = vrot.slane %v1134, 2
      %v1136 = vadd.f32 %v1134, %v1135
      %v1137 = vrot.slane %v1136, 1
      %v1138 = vadd.f32 %v1136, %v1137
      %v1139 = vsel %vm253, %v1100, 0.0
      %v1140 = vrot.slane %v1139, 4
      %v1141 = vadd.f32 %v1139, %v1140
      %v1142 = vrot.slane %v1141, 2
      %v1143 = vadd.f32 %v1141, %v1142
      %v1144 = vrot.slane %v1143, 1
      %v1145 = vadd.f32 %v1143, %v1144
      %v1146 = vsel %vm253, %v1101, 0.0
      %v1147 = vrot.slane %v1146, 4
      %v1148 = vadd.f32 %v1146, %v1147
      %v1149 = vrot.slane %v1148, 2
      %v1150 = vadd.f32 %v1148, %v1149
      %v1151 = vrot.slane %v1150, 1
      %v1152 = vadd.f32 %v1150, %v1151
      %v1153 = vsel %vm253, %v1102, 0.0
      %v1154 = vrot.slane %v1153, 4
      %v1155 = vadd.f32 %v1153, %v1154
      %v1156 = vrot.slane %v1155, 2
      %v1157 = vadd.f32 %v1155, %v1156
      %v1158 = vrot.slane %v1157, 1
      %v1159 = vadd.f32 %v1157, %v1158
      %v1160 = vsel %vm253, %v1103, 0.0
      %v1161 = vrot.slane %v1160, 4
      %v1162 = vadd.f32 %v1160, %v1161
      %v1163 = vrot.slane %v1162, 2
      %v1164 = vadd.f32 %v1162, %v1163
      %v1165 = vrot.slane %v1164, 1
      %v1166 = vadd.f32 %v1164, %v1165
      %v1167 = vmul.f32 %v1110, %v317
      %v1168 = vmul.f32 %v1117, %v317
      %v1169 = vmul.f32 %v1124, %v317
      %v1170 = vmul.f32 %v1131, %v317
      %v1171 = vmul.f32 %v1138, %v317
      %v1172 = vmul.f32 %v1145, %v317
      %v1173 = vmul.f32 %v1152, %v317
      %v1174 = vmul.f32 %v1159, %v317
      %v1175 = vmul.f32 %v1166, %v317
      %v1176 = vsub.f32 %v1095, %v1167
      %v1177 = vsub.f32 %v1096, %v1168
      %v1178 = vsub.f32 %v1097, %v1169
      %v1179 = vsub.f32 %v1098, %v1170
      %v1180 = vsub.f32 %v1099, %v1171
      %v1181 = vsub.f32 %v1100, %v1172
      %v1182 = vsub.f32 %v1101, %v1173
      %v1183 = vsub.f32 %v1102, %v1174
      %v1184 = vsub.f32 %v1103, %v1175
      %v1185 = vmul.f32 %v1176, %v1176
      %v1186 = vmul.f32 %v1177, %v1177
      %v1187 = vmul.f32 %v1178, %v1178
      %v1188 = vmul.f32 %v1179, %v1179
      %v1189 = vmul.f32 %v1180, %v1180
      %v1190 = vmul.f32 %v1181, %v1181
      %v1191 = vmul.f32 %v1182, %v1182
      %v1192 = vmul.f32 %v1183, %v1183
      %v1193 = vmul.f32 %v1184, %v1184
      %v1194 = vsel %vm253, %v1185, 0.0
      %v1195 = vrot.slane %v1194, 4
      %v1196 = vadd.f32 %v1194, %v1195
      %v1197 = vrot.slane %v1196, 2
      %v1198 = vadd.f32 %v1196, %v1197
      %v1199 = vrot.slane %v1198, 1
      %v1200 = vadd.f32 %v1198, %v1199
      %v1201 = vsel %vm253, %v1186, 0.0
      %v1202 = vrot.slane %v1201, 4
      %v1203 = vadd.f32 %v1201, %v1202
      %v1204 = vrot.slane %v1203, 2
      %v1205 = vadd.f32 %v1203, %v1204
      %v1206 = vrot.slane %v1205, 1
      %v1207 = vadd.f32 %v1205, %v1206
      %v1208 = vsel %vm253, %v1187, 0.0
      %v1209 = vrot.slane %v1208, 4
      %v1210 = vadd.f32 %v1208, %v1209
      %v1211 = vrot.slane %v1210, 2
      %v1212 = vadd.f32 %v1210, %v1211
      %v1213 = vrot.slane %v1212, 1
      %v1214 = vadd.f32 %v1212, %v1213
      %v1215 = vsel %vm253, %v1188, 0.0
      %v1216 = vrot.slane %v1215, 4
      %v1217 = vadd.f32 %v1215, %v1216
      %v1218 = vrot.slane %v1217, 2
      %v1219 = vadd.f32 %v1217, %v1218
      %v1220 = vrot.slane %v1219, 1
      %v1221 = vadd.f32 %v1219, %v1220
      %v1222 = vsel %vm253, %v1189, 0.0
      %v1223 = vrot.slane %v1222, 4
      %v1224 = vadd.f32 %v1222, %v1223
      %v1225 = vrot.slane %v1224, 2
      %v1226 = vadd.f32 %v1224, %v1225
      %v1227 = vrot.slane %v1226, 1
      %v1228 = vadd.f32 %v1226, %v1227
      %v1229 = vsel %vm253, %v1190, 0.0
      %v1230 = vrot.slane %v1229, 4
      %v1231 = vadd.f32 %v1229, %v1230
      %v1232 = vrot.slane %v1231, 2
      %v1233 = vadd.f32 %v1231, %v1232
      %v1234 = vrot.slane %v1233, 1
      %v1235 = vadd.f32 %v1233, %v1234
      %v1236 = vsel %vm253, %v1191, 0.0
      %v1237 = vrot.slane %v1236, 4
      %v1238 = vadd.f32 %v1236, %v1237
      %v1239 = vrot.slane %v1238, 2
      %v1240 = vadd.f32 %v1238, %v1239
      %v1241 = vrot.slane %v1240, 1
      %v1242 = vadd.f32 %v1240, %v1241
      %v1243 = vsel %vm253, %v1192, 0.0
      %v1244 = vrot.slane %v1243, 4
      %v1245 = vadd.f32 %v1243, %v1244
      %v1246 = vrot.slane %v1245, 2
      %v1247 = vadd.f32 %v1245, %v1246
      %v1248 = vrot.slane %v1247, 1
      %v1249 = vadd.f32 %v1247, %v1248
      %v1250 = vsel %vm253, %v1193, 0.0
      %v1251 = vrot.slane %v1250, 4
      %v1252 = vadd.f32 %v1250, %v1251
      %v1253 = vrot.slane %v1252, 2
      %v1254 = vadd.f32 %v1252, %v1253
      %v1255 = vrot.slane %v1254, 1
      %v1256 = vadd.f32 %v1254, %v1255
      %v1257 = vmul.f32 %v1200, %v317
      %v1258 = vmul.f32 %v1207, %v317
      %v1259 = vmul.f32 %v1214, %v317
      %v1260 = vmul.f32 %v1221, %v317
      %v1261 = vmul.f32 %v1228, %v317
      %v1262 = vmul.f32 %v1235, %v317
      %v1263 = vmul.f32 %v1242, %v317
      %v1264 = vmul.f32 %v1249, %v317
      %v1265 = vmul.f32 %v1256, %v317
      %v1266 = vadd.f32 %v1257, 1e-06
      %v1267 = vadd.f32 %v1258, 1e-06
      %v1268 = vadd.f32 %v1259, 1e-06
      %v1269 = vadd.f32 %v1260, 1e-06
      %v1270 = vadd.f32 %v1261, 1e-06
      %v1271 = vadd.f32 %v1262, 1e-06
      %v1272 = vadd.f32 %v1263, 1e-06
      %v1273 = vadd.f32 %v1264, 1e-06
      %v1274 = vadd.f32 %v1265, 1e-06
      %v1275 = vrsqrt.pop %v1266
      %v1276 = vrsqrt.pop %v1267
      %v1277 = vrsqrt.pop %v1268
      %v1278 = vrsqrt.pop %v1269
      %v1279 = vrsqrt.pop %v1270
      %v1280 = vrsqrt.pop %v1271
      %v1281 = vrsqrt.pop %v1272
      %v1282 = vrsqrt.pop %v1273
      %v1283 = vrsqrt.pop %v1274
      %v1284 = vmul.f32 %v1176, %v1275
      %v1285 = vmul.f32 %v1177, %v1276
      %v1286 = vmul.f32 %v1178, %v1277
      %v1287 = vmul.f32 %v1179, %v1278
      %v1288 = vmul.f32 %v1180, %v1279
      %v1289 = vmul.f32 %v1181, %v1280
      %v1290 = vmul.f32 %v1182, %v1281
      %v1291 = vmul.f32 %v1183, %v1282
      %v1292 = vmul.f32 %v1184, %v1283
      %v1293 = vmul.f32 %v1284, %v447
      %v1294 = vmul.f32 %v1285, %v447
      %v1295 = vmul.f32 %v1286, %v447
      %v1296 = vmul.f32 %v1287, %v447
      %v1297 = vmul.f32 %v1288, %v447
      %v1298 = vmul.f32 %v1289, %v447
      %v1299 = vmul.f32 %v1290, %v447
      %v1300 = vmul.f32 %v1291, %v447
      %v1301 = vmul.f32 %v1292, %v447
      %v1302 = vadd.f32 %v1293, %v461
      %v1303 = vadd.f32 %v1294, %v461
      %v1304 = vadd.f32 %v1295, %v461
      %v1305 = vadd.f32 %v1296, %v461
      %v1306 = vadd.f32 %v1297, %v461
      %v1307 = vadd.f32 %v1298, %v461
      %v1308 = vadd.f32 %v1299, %v461
      %v1309 = vadd.f32 %v1300, %v461
      %v1310 = vadd.f32 %v1301, %v461
      %v1311 = vsel %vm540, %v1302, 0.0
      %v1312 = vsel %vm541, %v1303, 0.0
      %v1313 = vsel %vm542, %v1304, 0.0
      %v1314 = vsel %vm543, %v1305, 0.0
      %v1315 = vsel %vm544, %v1306, 0.0
      %v1316 = vsel %vm545, %v1307, 0.0
      %v1317 = vsel %vm546, %v1308, 0.0
      %v1318 = vsel %vm547, %v1309, 0.0
      %v1319 = vsel %vm548, %v1310, 0.0
      %v1320 = vpack.c.bf16 %v1311, %v1311
      %v1321 = vpack.c.bf16 %v1312, %v1312
      %v1322 = vpack.c.bf16 %v1313, %v1313
      %v1323 = vpack.c.bf16 %v1314, %v1314
      %v1324 = vpack.c.bf16 %v1315, %v1315
      %v1325 = vpack.c.bf16 %v1316, %v1316
      %v1326 = vpack.c.bf16 %v1317, %v1317
      %v1327 = vpack.c.bf16 %v1318, %v1318
      %v1328 = vpack.c.bf16 %v1319, %v1319
      %s1329 = scalar_lea.vmem [#allocation2], 108
      %1330 = vst.msk [vmem:[%s1329] sm:$0xf] %vm567, %v1320
      %1331 = vst.msk [vmem:[%s1329 + $0x4] sm:$0xf] %vm567, %v1321
      %1332 = vst.msk [vmem:[%s1329 + $0x8] sm:$0xf] %vm567, %v1322
      %1333 = vst.msk [vmem:[%s1329 + $0xc] sm:$0xf] %vm567, %v1323
      %1334 = vst.msk [vmem:[%s1329 + $0x10] sm:$0xf] %vm567, %v1324
      %1335 = vst.msk [vmem:[%s1329 + $0x14] sm:$0xf] %vm567, %v1325
      %1336 = vst.msk [vmem:[%s1329 + $0x18] sm:$0xf] %vm567, %v1326
      %1337 = vst.msk [vmem:[%s1329 + $0x1c] sm:$0xf] %vm567, %v1327
      %1338 = vst.msk [vmem:[%s1329 + $0x20] sm:$0xf] %vm567, %v1328
      %v1339 = vld [vmem:[%s3] sm:$0xf]
      %v1340 = vld [vmem:[%s3 + $0x4] sm:$0xf]
      %s1341 = scalar_lea.vmem %s3, 8
      %v1342 = vld [vmem:[%s1341] sm:$0xf]
      %v1343 = vld [vmem:[%s1341 + $0x4] sm:$0xf]
      %s1344 = scalar_lea.vmem %s3, 16
      %v1345 = vld [vmem:[%s1344] sm:$0xf]
      %v1346 = vld [vmem:[%s1344 + $0x4] sm:$0xf]
      %s1347 = scalar_lea.vmem %s3, 24
      %v1348 = vld [vmem:[%s1347] sm:$0xf]
      %v1349 = vld [vmem:[%s1347 + $0x4] sm:$0xf]
      %s1350 = scalar_lea.vmem %s3, 32
      %v1351 = vld [vmem:[%s1350] sm:$0xf]
      %v1352 = vld [vmem:[%s1350 + $0x4] sm:$0xf]
      %s1353 = scalar_lea.vmem %s3, 40
      %v1354 = vld [vmem:[%s1353] sm:$0xf]
      %v1355 = vld [vmem:[%s1353 + $0x4] sm:$0xf]
      %s1356 = scalar_lea.vmem %s3, 48
      %v1357 = vld [vmem:[%s1356] sm:$0xf]
      %v1358 = vld [vmem:[%s1356 + $0x4] sm:$0xf]
      %s1359 = scalar_lea.vmem %s3, 56
      %v1360 = vld [vmem:[%s1359] sm:$0xf]
      %v1361 = vld [vmem:[%s1359 + $0x4] sm:$0xf]
      %s1362 = scalar_lea.vmem %s3, 64
      %v1363 = vld [vmem:[%s1362] sm:$0xf]
      %v1364 = vld [vmem:[%s1362 + $0x4] sm:$0xf]
      %v1365 = vld [vmem:[%s1329] sm:$0xf]
      %v1366 = vld [vmem:[%s1075] sm:$0xf]
      %v1369 = vunpack.c.l.b16 %v1342
      %v1370 = vunpack.c.l.b16 %v1343
      %v1371 = vpack.c.b16 %v1370, %v1369
      %v1373 = vunpack.c.l.b16 %v1366
      %v1374 = vpack.c.b16 %v1373, %v1373
      %1375 = vrot.lane.b32.xlu0 %v1374, 127
      %v1376 = vpop.permute.xlu0 %1375
      %vm1377 = vcmask 64512
      %v1379 = vsel %vm1377, %v1371, 0
      %vm1381 = vcmask 1043456
      %v1383 = vsel %vm1381, %v1376, 0
      %1385 = vmatprep.subr.bf16.mxu0 0
      %1386 = vmatpush1.bf16.msra.mxu0 %v1383
      %1387 = vmatprep.subr.bf16.mxu0 0
      %1388 = vmatpush1.bf16.msra.mxu0 0
      %1389 = vmatprep.subr.bf16.mxu0 0
      %1390 = vmatpush1.bf16.msra.mxu0 0
      %1391 = vmatprep.subr.bf16.mxu0 0
      %1392 = vmatpush1.bf16.msra.mxu0 0
      %1393 = vmatprep.subr.bf16.mxu0 0
      %1394 = vmatpush1.bf16.msra.mxu0 0
      %1395 = vmatprep.subr.bf16.mxu0 0
      %1396 = vmatpush1.bf16.msra.mxu0 0
      %1397 = vmatprep.subr.bf16.mxu0 0
      %1398 = vmatpush1.bf16.msra.mxu0 0
      %1399 = vmatprep.subr.bf16.mxu0 0
      %1400 = vmatpush1.bf16.msra.mxu0 0
      %1401 = vmatprep.subr.bf16.mxu0 0
      %1402 = vmatpush1.bf16.msra.mxu0 0
      %1403 = vmatprep.subr.bf16.mxu0 0
      %1404 = vmatpush1.bf16.msra.mxu0 0
      %1405 = vmatprep.subr.bf16.mxu0 0
      %1406 = vmatpush1.bf16.msra.mxu0 0
      %1407 = vmatprep.subr.bf16.mxu0 0
      %1408 = vmatpush1.bf16.msra.mxu0 0
      %1409 = vmatprep.subr.bf16.mxu0 0
      %1410 = vmatpush1.bf16.msra.mxu0 0
      %1411 = vmatprep.subr.bf16.mxu0 0
      %1412 = vmatpush1.bf16.msra.mxu0 0
      %1413 = vmatprep.subr.bf16.mxu0 0
      %1414 = vmatpush1.bf16.msra.mxu0 0
      %1415 = vmatprep.subr.bf16.mxu0 0
      %1416 = vmatpush1.bf16.msra.mxu0 0
      %1417 = vmatprep.mubr.bf16.mxu0 0
      %1418 = vmatmul.mubr.bf16.gmra.mrb[0].mxu0 %v1379
      %v1419 = vpop.f32.mrb[0].mxu0
      %v1420 = vadd.f32 0.0, %v1419
      %v1421 = vpop.f32.mrb[0].mxu0
      %v1422 = vpop.f32.mrb[0].mxu0
      %v1423 = vadd.f32 0.0, %v1422
      %v1424 = vpop.f32.mrb[0].mxu0
      %1425 = vdwg.mxu0
      %v1428 = vunpack.c.l.b16 %v1339
      %v1429 = vunpack.c.l.b16 %v1340
      %v1430 = vpack.c.b16 %v1429, %v1428
      %v1432 = vsel %vm1377, %v1430, 0
      %v1435 = vsel %vm1381, %v1365, 0
      %1437 = vmatprep.subr.bf16.mxu0 0
      %1438 = vmatpush1.bf16.msra.mxu0 %v1435
      %1439 = vmatprep.subr.bf16.mxu0 0
      %1440 = vmatpush1.bf16.msra.mxu0 0
      %1441 = vmatprep.subr.bf16.mxu0 0
      %1442 = vmatpush1.bf16.msra.mxu0 0
      %1443 = vmatprep.subr.bf16.mxu0 0
      %1444 = vmatpush1.bf16.msra.mxu0 0
      %1445 = vmatprep.subr.bf16.mxu0 0
      %1446 = vmatpush1.bf16.msra.mxu0 0
      %1447 = vmatprep.subr.bf16.mxu0 0
      %1448 = vmatpush1.bf16.msra.mxu0 0
      %1449 = vmatprep.subr.bf16.mxu0 0
      %1450 = vmatpush1.bf16.msra.mxu0 0
      %1451 = vmatprep.subr.bf16.mxu0 0
      %1452 = vmatpush1.bf16.msra.mxu0 0
      %1453 = vmatprep.subr.bf16.mxu0 0
      %1454 = vmatpush1.bf16.msra.mxu0 0
      %1455 = vmatprep.subr.bf16.mxu0 0
      %1456 = vmatpush1.bf16.msra.mxu0 0
      %1457 = vmatprep.subr.bf16.mxu0 0
      %1458 = vmatpush1.bf16.msra.mxu0 0
      %1459 = vmatprep.subr.bf16.mxu0 0
      %1460 = vmatpush1.bf16.msra.mxu0 0
      %1461 = vmatprep.subr.bf16.mxu0 0
      %1462 = vmatpush1.bf16.msra.mxu0 0
      %1463 = vmatprep.subr.bf16.mxu0 0
      %1464 = vmatpush1.bf16.msra.mxu0 0
      %1465 = vmatprep.subr.bf16.mxu0 0
      %1466 = vmatpush1.bf16.msra.mxu0 0
      %1467 = vmatprep.subr.bf16.mxu0 0
      %1468 = vmatpush1.bf16.msra.mxu0 0
      %1469 = vmatprep.mubr.bf16.mxu0 0
      %1470 = vmatmul.mubr.bf16.gmra.mrb[0].mxu0 %v1432
      %v1471 = vpop.f32.mrb[0].mxu0
      %v1472 = vadd.f32 %v1420, %v1471
      %v1473 = vpop.f32.mrb[0].mxu0
      %v1474 = vpop.f32.mrb[0].mxu0
      %v1475 = vadd.f32 %v1423, %v1474
      %v1476 = vpop.f32.mrb[0].mxu0
      %1477 = vdwg.mxu0
      %v1480 = vunpack.c.l.b16 %v1345
      %v1481 = vunpack.c.l.b16 %v1346
      %v1482 = vpack.c.b16 %v1481, %v1480
      %v1484 = vunpack.c.l.b16 %v1365
      %v1485 = vpack.c.b16 %v1484, %v1484
      %1486 = vrot.lane.b32.xlu0 %v1485, 127
      %v1487 = vpop.permute.xlu0 %1486
      %v1489 = vsel %vm1377, %v1482, 0
      %v1492 = vsel %vm1381, %v1487, 0
      %1494 = vmatprep.subr.bf16.mxu0 0
      %1495 = vmatpush1.bf16.msra.mxu0 %v1492
      %1496 = vmatprep.subr.bf16.mxu0 0
      %1497 = vmatpush1.bf16.msra.mxu0 0
      %1498 = vmatprep.subr.bf16.mxu0 0
      %1499 = vmatpush1.bf16.msra.mxu0 0
      %1500 = vmatprep.subr.bf16.mxu0 0
      %1501 = vmatpush1.bf16.msra.mxu0 0
      %1502 = vmatprep.subr.bf16.mxu0 0
      %1503 = vmatpush1.bf16.msra.mxu0 0
      %1504 = vmatprep.subr.bf16.mxu0 0
      %1505 = vmatpush1.bf16.msra.mxu0 0
      %1506 = vmatprep.subr.bf16.mxu0 0
      %1507 = vmatpush1.bf16.msra.mxu0 0
      %1508 = vmatprep.subr.bf16.mxu0 0
      %1509 = vmatpush1.bf16.msra.mxu0 0
      %1510 = vmatprep.subr.bf16.mxu0 0
      %1511 = vmatpush1.bf16.msra.mxu0 0
      %1512 = vmatprep.subr.bf16.mxu0 0
      %1513 = vmatpush1.bf16.msra.mxu0 0
      %1514 = vmatprep.subr.bf16.mxu0 0
      %1515 = vmatpush1.bf16.msra.mxu0 0
      %1516 = vmatprep.subr.bf16.mxu0 0
      %1517 = vmatpush1.bf16.msra.mxu0 0
      %1518 = vmatprep.subr.bf16.mxu0 0
      %1519 = vmatpush1.bf16.msra.mxu0 0
      %1520 = vmatprep.subr.bf16.mxu0 0
      %1521 = vmatpush1.bf16.msra.mxu0 0
      %1522 = vmatprep.subr.bf16.mxu0 0
      %1523 = vmatpush1.bf16.msra.mxu0 0
      %1524 = vmatprep.subr.bf16.mxu0 0
      %1525 = vmatpush1.bf16.msra.mxu0 0
      %1526 = vmatprep.mubr.bf16.mxu0 0
      %1527 = vmatmul.mubr.bf16.gmra.mrb[0].mxu0 %v1489
      %v1528 = vpop.f32.mrb[0].mxu0
      %v1529 = vadd.f32 0.0, %v1528
      %v1530 = vpop.f32.mrb[0].mxu0
      %v1531 = vpop.f32.mrb[0].mxu0
      %v1532 = vadd.f32 0.0, %v1531
      %v1533 = vpop.f32.mrb[0].mxu0
      %1534 = vdwg.mxu0
      %v1535 = vadd.f32 %v1472, %v1529
      %v1536 = vadd.f32 %v1475, %v1532
      %s1537 = scalar_lea.vmem [#allocation2], 40
      %v1538 = vld [vmem:[%s1537] sm:$0xf]
      %v1541 = vunpack.c.l.b16 %v1348
      %v1542 = vunpack.c.l.b16 %v1349
      %v1543 = vpack.c.b16 %v1542, %v1541
      %v1545 = vsel %vm1377, %v1543, 0
      %v1548 = vsel %vm1381, %v1538, 0
      %1550 = vmatprep.subr.bf16.mxu0 0
      %1551 = vmatpush1.bf16.msra.mxu0 %v1548
      %1552 = vmatprep.subr.bf16.mxu0 0
      %1553 = vmatpush1.bf16.msra.mxu0 0
      %1554 = vmatprep.subr.bf16.mxu0 0
      %1555 = vmatpush1.bf16.msra.mxu0 0
      %1556 = vmatprep.subr.bf16.mxu0 0
      %1557 = vmatpush1.bf16.msra.mxu0 0
      %1558 = vmatprep.subr.bf16.mxu0 0
      %1559 = vmatpush1.bf16.msra.mxu0 0
      %1560 = vmatprep.subr.bf16.mxu0 0
      %1561 = vmatpush1.bf16.msra.mxu0 0
      %1562 = vmatprep.subr.bf16.mxu0 0
      %1563 = vmatpush1.bf16.msra.mxu0 0
      %1564 = vmatprep.subr.bf16.mxu0 0
      %1565 = vmatpush1.bf16.msra.mxu0 0
      %1566 = vmatprep.subr.bf16.mxu0 0
      %1567 = vmatpush1.bf16.msra.mxu0 0
      %1568 = vmatprep.subr.bf16.mxu0 0
      %1569 = vmatpush1.bf16.msra.mxu0 0
      %1570 = vmatprep.subr.bf16.mxu0 0
      %1571 = vmatpush1.bf16.msra.mxu0 0
      %1572 = vmatprep.subr.bf16.mxu0 0
      %1573 = vmatpush1.bf16.msra.mxu0 0
      %1574 = vmatprep.subr.bf16.mxu0 0
      %1575 = vmatpush1.bf16.msra.mxu0 0
      %1576 = vmatprep.subr.bf16.mxu0 0
      %1577 = vmatpush1.bf16.msra.mxu0 0
      %1578 = vmatprep.subr.bf16.mxu0 0
      %1579 = vmatpush1.bf16.msra.mxu0 0
      %1580 = vmatprep.subr.bf16.mxu0 0
      %1581 = vmatpush1.bf16.msra.mxu0 0
      %1582 = vmatprep.mubr.bf16.mxu0 0
      %1583 = vmatmul.mubr.bf16.gmra.mrb[0].mxu0 %v1545
      %v1584 = vpop.f32.mrb[0].mxu0
      %v1585 = vadd.f32 0.0, %v1584
      %v1586 = vpop.f32.mrb[0].mxu0
      %v1587 = vpop.f32.mrb[0].mxu0
      %v1588 = vadd.f32 0.0, %v1587
      %v1589 = vpop.f32.mrb[0].mxu0
      %1590 = vdwg.mxu0
      %v1591 = vadd.f32 %v1535, %v1585
      %v1592 = vadd.f32 %v1536, %v1588
      %s1593 = scalar_lea.vmem [#allocation2], 4
      %v1594 = vld [vmem:[%s1593] sm:$0xf]
      %v1597 = vunpack.c.l.b16 %v1351
      %v1598 = vunpack.c.l.b16 %v1352
      %v1599 = vpack.c.b16 %v1598, %v1597
      %v1601 = vunpack.c.l.b16 %v1594
      %v1602 = vpack.c.b16 %v1601, %v1601
      %1603 = vrot.lane.b32.xlu0 %v1602, 127
      %v1604 = vpop.permute.xlu0 %1603
      %v1606 = vsel %vm1377, %v1599, 0
      %v1609 = vsel %vm1381, %v1604, 0
      %1611 = vmatprep.subr.bf16.mxu0 0
      %1612 = vmatpush1.bf16.msra.mxu0 %v1609
      %1613 = vmatprep.subr.bf16.mxu0 0
      %1614 = vmatpush1.bf16.msra.mxu0 0
      %1615 = vmatprep.subr.bf16.mxu0 0
      %1616 = vmatpush1.bf16.msra.mxu0 0
      %1617 = vmatprep.subr.bf16.mxu0 0
      %1618 = vmatpush1.bf16.msra.mxu0 0
      %1619 = vmatprep.subr.bf16.mxu0 0
      %1620 = vmatpush1.bf16.msra.mxu0 0
      %1621 = vmatprep.subr.bf16.mxu0 0
      %1622 = vmatpush1.bf16.msra.mxu0 0
      %1623 = vmatprep.subr.bf16.mxu0 0
      %1624 = vmatpush1.bf16.msra.mxu0 0
      %1625 = vmatprep.subr.bf16.mxu0 0
      %1626 = vmatpush1.bf16.msra.mxu0 0
      %1627 = vmatprep.subr.bf16.mxu0 0
      %1628 = vmatpush1.bf16.msra.mxu0 0
      %1629 = vmatprep.subr.bf16.mxu0 0
      %1630 = vmatpush1.bf16.msra.mxu0 0
      %1631 = vmatprep.subr.bf16.mxu0 0
      %1632 = vmatpush1.bf16.msra.mxu0 0
      %1633 = vmatprep.subr.bf16.mxu0 0
      %1634 = vmatpush1.bf16.msra.mxu0 0
      %1635 = vmatprep.subr.bf16.mxu0 0
      %1636 = vmatpush1.bf16.msra.mxu0 0
      %1637 = vmatprep.subr.bf16.mxu0 0
      %1638 = vmatpush1.bf16.msra.mxu0 0
      %1639 = vmatprep.subr.bf16.mxu0 0
      %1640 = vmatpush1.bf16.msra.mxu0 0
      %1641 = vmatprep.subr.bf16.mxu0 0
      %1642 = vmatpush1.bf16.msra.mxu0 0
      %1643 = vmatprep.mubr.bf16.mxu0 0
      %1644 = vmatmul.mubr.bf16.gmra.mrb[0].mxu0 %v1606
      %v1645 = vpop.f32.mrb[0].mxu0
      %v1646 = vadd.f32 0.0, %v1645
      %v1647 = vpop.f32.mrb[0].mxu0
      %v1648 = vpop.f32.mrb[0].mxu0
      %v1649 = vadd.f32 0.0, %v1648
      %v1650 = vpop.f32.mrb[0].mxu0
      %1651 = vdwg.mxu0
      %v1652 = vadd.f32 %v1591, %v1646
      %v1653 = vadd.f32 %v1592, %v1649
      %v1656 = vunpack.c.l.b16 %v1354
      %v1657 = vunpack.c.l.b16 %v1355
      %v1658 = vpack.c.b16 %v1657, %v1656
      %v1660 = vunpack.c.l.b16 %v1538
      %v1661 = vpack.c.b16 %v1660, %v1660
      %1662 = vrot.lane.b32.xlu0 %v1661, 127
      %v1663 = vpop.permute.xlu0 %1662
      %v1665 = vsel %vm1377, %v1658, 0
      %v1668 = vsel %vm1381, %v1663, 0
      %1670 = vmatprep.subr.bf16.mxu0 0
      %1671 = vmatpush1.bf16.msra.mxu0 %v1668
      %1672 = vmatprep.subr.bf16.mxu0 0
      %1673 = vmatpush1.bf16.msra.mxu0 0
      %1674 = vmatprep.subr.bf16.mxu0 0
      %1675 = vmatpush1.bf16.msra.mxu0 0
      %1676 = vmatprep.subr.bf16.mxu0 0
      %1677 = vmatpush1.bf16.msra.mxu0 0
      %1678 = vmatprep.subr.bf16.mxu0 0
      %1679 = vmatpush1.bf16.msra.mxu0 0
      %1680 = vmatprep.subr.bf16.mxu0 0
      %1681 = vmatpush1.bf16.msra.mxu0 0
      %1682 = vmatprep.subr.bf16.mxu0 0
      %1683 = vmatpush1.bf16.msra.mxu0 0
      %1684 = vmatprep.subr.bf16.mxu0 0
      %1685 = vmatpush1.bf16.msra.mxu0 0
      %1686 = vmatprep.subr.bf16.mxu0 0
      %1687 = vmatpush1.bf16.msra.mxu0 0
      %1688 = vmatprep.subr.bf16.mxu0 0
      %1689 = vmatpush1.bf16.msra.mxu0 0
      %1690 = vmatprep.subr.bf16.mxu0 0
      %1691 = vmatpush1.bf16.msra.mxu0 0
      %1692 = vmatprep.subr.bf16.mxu0 0
      %1693 = vmatpush1.bf16.msra.mxu0 0
      %1694 = vmatprep.subr.bf16.mxu0 0
      %1695 = vmatpush1.bf16.msra.mxu0 0
      %1696 = vmatprep.subr.bf16.mxu0 0
      %1697 = vmatpush1.bf16.msra.mxu0 0
      %1698 = vmatprep.subr.bf16.mxu0 0
      %1699 = vmatpush1.bf16.msra.mxu0 0
      %1700 = vmatprep.subr.bf16.mxu0 0
      %1701 = vmatpush1.bf16.msra.mxu0 0
      %1702 = vmatprep.mubr.bf16.mxu0 0
      %1703 = vmatmul.mubr.bf16.gmra.mrb[0].mxu0 %v1665
      %v1704 = vpop.f32.mrb[0].mxu0
      %v1705 = vadd.f32 0.0, %v1704
      %v1706 = vpop.f32.mrb[0].mxu0
      %v1707 = vpop.f32.mrb[0].mxu0
      %v1708 = vadd.f32 0.0, %v1707
      %v1709 = vpop.f32.mrb[0].mxu0
      %1710 = vdwg.mxu0
      %v1711 = vadd.f32 %v1652, %v1705
      %v1712 = vadd.f32 %v1653, %v1708
      %s1713 = scalar_lea.vmem [#allocation2], 112
      %v1714 = vld [vmem:[%s1713] sm:$0xf]
      %v1717 = vunpack.c.l.b16 %v1357
      %v1718 = vunpack.c.l.b16 %v1358
      %v1719 = vpack.c.b16 %v1718, %v1717
      %v1721 = vsel %vm1377, %v1719, 0
      %v1724 = vsel %vm1381, %v1714, 0
      %1726 = vmatprep.subr.bf16.mxu0 0
      %1727 = vmatpush1.bf16.msra.mxu0 %v1724
      %1728 = vmatprep.subr.bf16.mxu0 0
      %1729 = vmatpush1.bf16.msra.mxu0 0
      %1730 = vmatprep.subr.bf16.mxu0 0
      %1731 = vmatpush1.bf16.msra.mxu0 0
      %1732 = vmatprep.subr.bf16.mxu0 0
      %1733 = vmatpush1.bf16.msra.mxu0 0
      %1734 = vmatprep.subr.bf16.mxu0 0
      %1735 = vmatpush1.bf16.msra.mxu0 0
      %1736 = vmatprep.subr.bf16.mxu0 0
      %1737 = vmatpush1.bf16.msra.mxu0 0
      %1738 = vmatprep.subr.bf16.mxu0 0
      %1739 = vmatpush1.bf16.msra.mxu0 0
      %1740 = vmatprep.subr.bf16.mxu0 0
      %1741 = vmatpush1.bf16.msra.mxu0 0
      %1742 = vmatprep.subr.bf16.mxu0 0
      %1743 = vmatpush1.bf16.msra.mxu0 0
      %1744 = vmatprep.subr.bf16.mxu0 0
      %1745 = vmatpush1.bf16.msra.mxu0 0
      %1746 = vmatprep.subr.bf16.mxu0 0
      %1747 = vmatpush1.bf16.msra.mxu0 0
      %1748 = vmatprep.subr.bf16.mxu0 0
      %1749 = vmatpush1.bf16.msra.mxu0 0
      %1750 = vmatprep.subr.bf16.mxu0 0
      %1751 = vmatpush1.bf16.msra.mxu0 0
      %1752 = vmatprep.subr.bf16.mxu0 0
      %1753 = vmatpush1.bf16.msra.mxu0 0
      %1754 = vmatprep.subr.bf16.mxu0 0
      %1755 = vmatpush1.bf16.msra.mxu0 0
      %1756 = vmatprep.subr.bf16.mxu0 0
      %1757 = vmatpush1.bf16.msra.mxu0 0
      %1758 = vmatprep.mubr.bf16.mxu0 0
      %1759 = vmatmul.mubr.bf16.gmra.mrb[0].mxu0 %v1721
      %v1760 = vpop.f32.mrb[0].mxu0
      %v1761 = vadd.f32 0.0, %v1760
      %v1762 = vpop.f32.mrb[0].mxu0
      %v1763 = vpop.f32.mrb[0].mxu0
      %v1764 = vadd.f32 0.0, %v1763
      %v1765 = vpop.f32.mrb[0].mxu0
      %1766 = vdwg.mxu0
      %v1767 = vadd.f32 %v1711, %v1761
      %v1768 = vadd.f32 %v1712, %v1764
      %s1769 = scalar_lea.vmem [#allocation2], 76
      %v1770 = vld [vmem:[%s1769] sm:$0xf]
      %v1773 = vunpack.c.l.b16 %v1360
      %v1774 = vunpack.c.l.b16 %v1361
      %v1775 = vpack.c.b16 %v1774, %v1773
      %v1777 = vunpack.c.l.b16 %v1770
      %v1778 = vpack.c.b16 %v1777, %v1777
      %1779 = vrot.lane.b32.xlu0 %v1778, 127
      %v1780 = vpop.permute.xlu0 %1779
      %v1782 = vsel %vm1377, %v1775, 0
      %v1785 = vsel %vm1381, %v1780, 0
      %1787 = vmatprep.subr.bf16.mxu0 0
      %1788 = vmatpush1.bf16.msra.mxu0 %v1785
      %1789 = vmatprep.subr.bf16.mxu0 0
      %1790 = vmatpush1.bf16.msra.mxu0 0
      %1791 = vmatprep.subr.bf16.mxu0 0
      %1792 = vmatpush1.bf16.msra.mxu0 0
      %1793 = vmatprep.subr.bf16.mxu0 0
      %1794 = vmatpush1.bf16.msra.mxu0 0
      %1795 = vmatprep.subr.bf16.mxu0 0
      %1796 = vmatpush1.bf16.msra.mxu0 0
      %1797 = vmatprep.subr.bf16.mxu0 0
      %1798 = vmatpush1.bf16.msra.mxu0 0
      %1799 = vmatprep.subr.bf16.mxu0 0
      %1800 = vmatpush1.bf16.msra.mxu0 0
      %1801 = vmatprep.subr.bf16.mxu0 0
      %1802 = vmatpush1.bf16.msra.mxu0 0
      %1803 = vmatprep.subr.bf16.mxu0 0
      %1804 = vmatpush1.bf16.msra.mxu0 0
      %1805 = vmatprep.subr.bf16.mxu0 0
      %1806 = vmatpush1.bf16.msra.mxu0 0
      %1807 = vmatprep.subr.bf16.mxu0 0
      %1808 = vmatpush1.bf16.msra.mxu0 0
      %1809 = vmatprep.subr.bf16.mxu0 0
      %1810 = vmatpush1.bf16.msra.mxu0 0
      %1811 = vmatprep.subr.bf16.mxu0 0
      %1812 = vmatpush1.bf16.msra.mxu0 0
      %1813 = vmatprep.subr.bf16.mxu0 0
      %1814 = vmatpush1.bf16.msra.mxu0 0
      %1815 = vmatprep.subr.bf16.mxu0 0
      %1816 = vmatpush1.bf16.msra.mxu0 0
      %1817 = vmatprep.subr.bf16.mxu0 0
      %1818 = vmatpush1.bf16.msra.mxu0 0
      %1819 = vmatprep.mubr.bf16.mxu0 0
      %1820 = vmatmul.mubr.bf16.gmra.mrb[0].mxu0 %v1782
      %v1821 = vpop.f32.mrb[0].mxu0
      %v1822 = vadd.f32 0.0, %v1821
      %v1823 = vpop.f32.mrb[0].mxu0
      %v1824 = vpop.f32.mrb[0].mxu0
      %v1825 = vadd.f32 0.0, %v1824
      %v1826 = vpop.f32.mrb[0].mxu0
      %1827 = vdwg.mxu0
      %v1828 = vadd.f32 %v1767, %v1822
      %v1829 = vadd.f32 %v1768, %v1825
      %v1832 = vunpack.c.l.b16 %v1363
      %v1833 = vunpack.c.l.b16 %v1364
      %v1834 = vpack.c.b16 %v1833, %v1832
      %v1836 = vunpack.c.l.b16 %v1714
      %v1837 = vpack.c.b16 %v1836, %v1836
      %1838 = vrot.lane.b32.xlu0 %v1837, 127
      %v1839 = vpop.permute.xlu0 %1838
      %v1841 = vsel %vm1377, %v1834, 0
      %v1844 = vsel %vm1381, %v1839, 0
      %1846 = vmatprep.subr.bf16.mxu0 0
      %1847 = vmatpush1.bf16.msra.mxu0 %v1844
      %1848 = vmatprep.subr.bf16.mxu0 0
      %1849 = vmatpush1.bf16.msra.mxu0 0
      %1850 = vmatprep.subr.bf16.mxu0 0
      %1851 = vmatpush1.bf16.msra.mxu0 0
      %1852 = vmatprep.subr.bf16.mxu0 0
      %1853 = vmatpush1.bf16.msra.mxu0 0
      %1854 = vmatprep.subr.bf16.mxu0 0
      %1855 = vmatpush1.bf16.msra.mxu0 0
      %1856 = vmatprep.subr.bf16.mxu0 0
      %1857 = vmatpush1.bf16.msra.mxu0 0
      %1858 = vmatprep.subr.bf16.mxu0 0
      %1859 = vmatpush1.bf16.msra.mxu0 0
      %1860 = vmatprep.subr.bf16.mxu0 0
      %1861 = vmatpush1.bf16.msra.mxu0 0
      %1862 = vmatprep.subr.bf16.mxu0 0
      %1863 = vmatpush1.bf16.msra.mxu0 0
      %1864 = vmatprep.subr.bf16.mxu0 0
      %1865 = vmatpush1.bf16.msra.mxu0 0
      %1866 = vmatprep.subr.bf16.mxu0 0
      %1867 = vmatpush1.bf16.msra.mxu0 0
      %1868 = vmatprep.subr.bf16.mxu0 0
      %1869 = vmatpush1.bf16.msra.mxu0 0
      %1870 = vmatprep.subr.bf16.mxu0 0
      %1871 = vmatpush1.bf16.msra.mxu0 0
      %1872 = vmatprep.subr.bf16.mxu0 0
      %1873 = vmatpush1.bf16.msra.mxu0 0
      %1874 = vmatprep.subr.bf16.mxu0 0
      %1875 = vmatpush1.bf16.msra.mxu0 0
      %1876 = vmatprep.subr.bf16.mxu0 0
      %1877 = vmatpush1.bf16.msra.mxu0 0
      %1878 = vmatprep.mubr.bf16.mxu0 0
      %1879 = vmatmul.mubr.bf16.gmra.mrb[0].mxu0 %v1841
      %v1880 = vpop.f32.mrb[0].mxu0
      %v1881 = vadd.f32 0.0, %v1880
      %v1882 = vpop.f32.mrb[0].mxu0
      %v1883 = vpop.f32.mrb[0].mxu0
      %v1884 = vadd.f32 0.0, %v1883
      %v1885 = vpop.f32.mrb[0].mxu0
      %1886 = vdwg.mxu0
      %v1887 = vadd.f32 %v1828, %v1881
      %v1888 = vadd.f32 %v1829, %v1884
      %v1891 = vcombine.high %v1887, %v1887
      %v1893 = vunpack.c.l.s4 1966171168
      %v1894 = vunpack.c.0.s8 %v1893
      %v1895 = vlaneseq
      %v1896 = vshrl.u32 %v1895, 7
      %v1897 = vsub.s32 %v1894, %v1896
      %v1898 = vrot.slane %v1887, %v1897
      %v1900 = vunpack.c.l.s4 1966171168
      %v1901 = vunpack.c.0.s8 %v1900
      %v1902 = vlaneseq
      %v1903 = vshrl.u32 %v1902, 7
      %v1904 = vsub.s32 %v1901, %v1903
      %v1905 = vrot.slane %v1891, %v1904
      %v1906 = vcombine.high %v1898, %v1898
      %v1907 = vcombine.high %v1905, %v1905
      %v1909 = vunpack.c.l.s4 1966171168
      %v1910 = vunpack.c.0.s8 %v1909
      %v1911 = vlaneseq
      %v1912 = vshrl.u32 %v1911, 7
      %v1913 = vsub.s32 %v1910, %v1912
      %v1914 = vrot.slane %v1898, %v1913
      %v1916 = vunpack.c.l.s4 1966171168
      %v1917 = vunpack.c.0.s8 %v1916
      %v1918 = vlaneseq
      %v1919 = vshrl.u32 %v1918, 7
      %v1920 = vsub.s32 %v1917, %v1919
      %v1921 = vrot.slane %v1905, %v1920
      %v1923 = vunpack.c.l.s4 1966171168
      %v1924 = vunpack.c.0.s8 %v1923
      %v1925 = vlaneseq
      %v1926 = vshrl.u32 %v1925, 7
      %v1927 = vsub.s32 %v1924, %v1926
      %v1928 = vrot.slane %v1906, %v1927
      %v1930 = vunpack.c.l.s4 1966171168
      %v1931 = vunpack.c.0.s8 %v1930
      %v1932 = vlaneseq
      %v1933 = vshrl.u32 %v1932, 7
      %v1934 = vsub.s32 %v1931, %v1933
      %v1935 = vrot.slane %v1907, %v1934
      %v1936 = vcombine.high %v1914, %v1914
      %v1937 = vcombine.high %v1921, %v1921
      %v1938 = vcombine.high %v1928, %v1928
      %v1939 = vcombine.high %v1935, %v1935
      %v1940 = vcombine.high %v1888, %v1888
      %v1942 = vunpack.c.l.s4 1966171168
      %v1943 = vunpack.c.0.s8 %v1942
      %v1944 = vlaneseq
      %v1945 = vshrl.u32 %v1944, 7
      %v1946 = vsub.s32 %v1943, %v1945
      %v1947 = vrot.slane %v1888, %v1946
      %v1949 = vunpack.c.l.s4 1966171168
      %v1950 = vunpack.c.0.s8 %v1949
      %v1951 = vlaneseq
      %v1952 = vshrl.u32 %v1951, 7
      %v1953 = vsub.s32 %v1950, %v1952
      %v1954 = vrot.slane %v1940, %v1953
      %v1955 = vcombine.high %v1947, %v1947
      %v1956 = vcombine.high %v1954, %v1954
      %v1958 = vunpack.c.l.s4 1966171168
      %v1959 = vunpack.c.0.s8 %v1958
      %v1960 = vlaneseq
      %v1961 = vshrl.u32 %v1960, 7
      %v1962 = vsub.s32 %v1959, %v1961
      %v1963 = vrot.slane %v1947, %v1962
      %v1965 = vunpack.c.l.s4 1966171168
      %v1966 = vunpack.c.0.s8 %v1965
      %v1967 = vlaneseq
      %v1968 = vshrl.u32 %v1967, 7
      %v1969 = vsub.s32 %v1966, %v1968
      %v1970 = vrot.slane %v1954, %v1969
      %v1972 = vunpack.c.l.s4 1966171168
      %v1973 = vunpack.c.0.s8 %v1972
      %v1974 = vlaneseq
      %v1975 = vshrl.u32 %v1974, 7
      %v1976 = vsub.s32 %v1973, %v1975
      %v1977 = vrot.slane %v1955, %v1976
      %v1979 = vunpack.c.l.s4 1966171168
      %v1980 = vunpack.c.0.s8 %v1979
      %v1981 = vlaneseq
      %v1982 = vshrl.u32 %v1981, 7
      %v1983 = vsub.s32 %v1980, %v1982
      %v1984 = vrot.slane %v1956, %v1983
      %v1985 = vcombine.high %v1963, %v1963
      %v1986 = vcombine.high %v1970, %v1970
      %v1987 = vcombine.high %v1977, %v1977
      %v1988 = vcombine.high %v1984, %v1984
      %vm2005 = vcmask 57344
      %2006 = vst.msk [vmem:[%s231] sm:$0x1] %vm2005, %v1914
      %2007 = vst.msk [vmem:[%s231 + $0x8] sm:$0x1] %vm2005, %v1928
      %2008 = vst.msk [vmem:[%s231 + $0x10] sm:$0x1] %vm2005, %v1936
      %2009 = vst.msk [vmem:[%s231 + $0x18] sm:$0x1] %vm2005, %v1938
      %2010 = vst.msk [vmem:[%s231 + $0x20] sm:$0x1] %vm2005, %v1921
      %2011 = vst.msk [vmem:[%s231 + $0x28] sm:$0x1] %vm2005, %v1935
      %2012 = vst.msk [vmem:[%s231 + $0x30] sm:$0x1] %vm2005, %v1937
      %2013 = vst.msk [vmem:[%s231 + $0x38] sm:$0x1] %vm2005, %v1939
      %2014 = vst.msk [vmem:[%s231 + $0x40] sm:$0x1] %vm2005, %v1963
      %2015 = vst.msk [vmem:[%s231 + $0x48] sm:$0x1] %vm2005, %v1977
      %2016 = vst.msk [vmem:[%s231 + $0x50] sm:$0x1] %vm2005, %v1985
      %2017 = vst.msk [vmem:[%s231 + $0x58] sm:$0x1] %vm2005, %v1987
      %2018 = vst.msk [vmem:[%s231 + $0x60] sm:$0x1] %vm2005, %v1970
      %2019 = vst.msk [vmem:[%s231 + $0x68] sm:$0x1] %vm2005, %v1984
      %2020 = vst.msk [vmem:[%s231 + $0x70] sm:$0x1] %vm2005, %v1986
      %2021 = vst.msk [vmem:[%s231 + $0x78] sm:$0x1] %vm2005, %v1988
      %v2022 = vld [vmem:[%s1713] sm:$0xf]
      %v2023 = vld [vmem:[%s1769] sm:$0xf]
      %v2025 = vunpack.c.l.b16 %v2023
      %v2026 = vpack.c.b16 %v2025, %v2025
      %2027 = vrot.lane.b32.xlu0 %v2026, 127
      %v2028 = vpop.permute.xlu0 %2027
      %v2030 = vsel %vm1381, %v2028, 0
      %2032 = vmatprep.subr.bf16.mxu0 0
      %2033 = vmatpush1.bf16.msra.mxu0 %v2030
      %2034 = vmatprep.subr.bf16.mxu0 0
      %2035 = vmatpush1.bf16.msra.mxu0 0
      %2036 = vmatprep.subr.bf16.mxu0 0
      %2037 = vmatpush1.bf16.msra.mxu0 0
      %2038 = vmatprep.subr.bf16.mxu0 0
      %2039 = vmatpush1.bf16.msra.mxu0 0
      %2040 = vmatprep.subr.bf16.mxu0 0
      %2041 = vmatpush1.bf16.msra.mxu0 0
      %2042 = vmatprep.subr.bf16.mxu0 0
      %2043 = vmatpush1.bf16.msra.mxu0 0
      %2044 = vmatprep.subr.bf16.mxu0 0
      %2045 = vmatpush1.bf16.msra.mxu0 0
      %2046 = vmatprep.subr.bf16.mxu0 0
      %2047 = vmatpush1.bf16.msra.mxu0 0
      %2048 = vmatprep.subr.bf16.mxu0 0
      %2049 = vmatpush1.bf16.msra.mxu0 0
      %2050 = vmatprep.subr.bf16.mxu0 0
      %2051 = vmatpush1.bf16.msra.mxu0 0
      %2052 = vmatprep.subr.bf16.mxu0 0
      %2053 = vmatpush1.bf16.msra.mxu0 0
      %2054 = vmatprep.subr.bf16.mxu0 0
      %2055 = vmatpush1.bf16.msra.mxu0 0
      %2056 = vmatprep.subr.bf16.mxu0 0
      %2057 = vmatpush1.bf16.msra.mxu0 0
      %2058 = vmatprep.subr.bf16.mxu0 0
      %2059 = vmatpush1.bf16.msra.mxu0 0
      %2060 = vmatprep.subr.bf16.mxu0 0
      %2061 = vmatpush1.bf16.msra.mxu0 0
      %2062 = vmatprep.subr.bf16.mxu0 0
      %2063 = vmatpush1.bf16.msra.mxu0 0
      %2064 = vmatprep.mubr.bf16.mxu0 0
      %2065 = vmatmul.mubr.bf16.gmra.mrb[0].mxu0 %v1379
      %v2066 = vpop.f32.mrb[0].mxu0
      %v2067 = vadd.f32 0.0, %v2066
      %v2068 = vpop.f32.mrb[0].mxu0
      %v2069 = vpop.f32.mrb[0].mxu0
      %v2070 = vadd.f32 0.0, %v2069
      %v2071 = vpop.f32.mrb[0].mxu0
      %2072 = vdwg.mxu0
      %v2074 = vsel %vm1381, %v2022, 0
      %2076 = vmatprep.subr.bf16.mxu0 0
      %2077 = vmatpush1.bf16.msra.mxu0 %v2074
      %2078 = vmatprep.subr.bf16.mxu0 0
      %2079 = vmatpush1.bf16.msra.mxu0 0
      %2080 = vmatprep.subr.bf16.mxu0 0
      %2081 = vmatpush1.bf16.msra.mxu0 0
      %2082 = vmatprep.subr.bf16.mxu0 0
      %2083 = vmatpush1.bf16.msra.mxu0 0
      %2084 = vmatprep.subr.bf16.mxu0 0
      %2085 = vmatpush1.bf16.msra.mxu0 0
      %2086 = vmatprep.subr.bf16.mxu0 0
      %2087 = vmatpush1.bf16.msra.mxu0 0
      %2088 = vmatprep.subr.bf16.mxu0 0
      %2089 = vmatpush1.bf16.msra.mxu0 0
      %2090 = vmatprep.subr.bf16.mxu0 0
      %2091 = vmatpush1.bf16.msra.mxu0 0
      %2092 = vmatprep.subr.bf16.mxu0 0
      %2093 = vmatpush1.bf16.msra.mxu0 0
      %2094 = vmatprep.subr.bf16.mxu0 0
      %2095 = vmatpush1.bf16.msra.mxu0 0
      %2096 = vmatprep.subr.bf16.mxu0 0
      %2097 = vmatpush1.bf16.msra.mxu0 0
      %2098 = vmatprep.subr.bf16.mxu0 0
      %2099 = vmatpush1.bf16.msra.mxu0 0
      %2100 = vmatprep.subr.bf16.mxu0 0
      %2101 = vmatpush1.bf16.msra.mxu0 0
      %2102 = vmatprep.subr.bf16.mxu0 0
      %2103 = vmatpush1.bf16.msra.mxu0 0
      %2104 = vmatprep.subr.bf16.mxu0 0
      %2105 = vmatpush1.bf16.msra.mxu0 0
      %2106 = vmatprep.subr.bf16.mxu0 0
      %2107 = vmatpush1.bf16.msra.mxu0 0
      %2108 = vmatprep.mubr.bf16.mxu0 0
      %2109 = vmatmul.mubr.bf16.gmra.mrb[0].mxu0 %v1432
      %v2110 = vpop.f32.mrb[0].mxu0
      %v2111 = vadd.f32 %v2067, %v2110
      %v2112 = vpop.f32.mrb[0].mxu0
      %v2113 = vpop.f32.mrb[0].mxu0
      %v2114 = vadd.f32 %v2070, %v2113
      %v2115 = vpop.f32.mrb[0].mxu0
      %2116 = vdwg.mxu0
      %v2118 = vunpack.c.l.b16 %v2022
      %v2119 = vpack.c.b16 %v2118, %v2118
      %2120 = vrot.lane.b32.xlu0 %v2119, 127
      %v2121 = vpop.permute.xlu0 %2120
      %v2123 = vsel %vm1381, %v2121, 0
      %2125 = vmatprep.subr.bf16.mxu0 0
      %2126 = vmatpush1.bf16.msra.mxu0 %v2123
      %2127 = vmatprep.subr.bf16.mxu0 0
      %2128 = vmatpush1.bf16.msra.mxu0 0
      %2129 = vmatprep.subr.bf16.mxu0 0
      %2130 = vmatpush1.bf16.msra.mxu0 0
      %2131 = vmatprep.subr.bf16.mxu0 0
      %2132 = vmatpush1.bf16.msra.mxu0 0
      %2133 = vmatprep.subr.bf16.mxu0 0
      %2134 = vmatpush1.bf16.msra.mxu0 0
      %2135 = vmatprep.subr.bf16.mxu0 0
      %2136 = vmatpush1.bf16.msra.mxu0 0
      %2137 = vmatprep.subr.bf16.mxu0 0
      %2138 = vmatpush1.bf16.msra.mxu0 0
      %2139 = vmatprep.subr.bf16.mxu0 0
      %2140 = vmatpush1.bf16.msra.mxu0 0
      %2141 = vmatprep.subr.bf16.mxu0 0
      %2142 = vmatpush1.bf16.msra.mxu0 0
      %2143 = vmatprep.subr.bf16.mxu0 0
      %2144 = vmatpush1.bf16.msra.mxu0 0
      %2145 = vmatprep.subr.bf16.mxu0 0
      %2146 = vmatpush1.bf16.msra.mxu0 0
      %2147 = vmatprep.subr.bf16.mxu0 0
      %2148 = vmatpush1.bf16.msra.mxu0 0
      %2149 = vmatprep.subr.bf16.mxu0 0
      %2150 = vmatpush1.bf16.msra.mxu0 0
      %2151 = vmatprep.subr.bf16.mxu0 0
      %2152 = vmatpush1.bf16.msra.mxu0 0
      %2153 = vmatprep.subr.bf16.mxu0 0
      %2154 = vmatpush1.bf16.msra.mxu0 0
      %2155 = vmatprep.subr.bf16.mxu0 0
      %2156 = vmatpush1.bf16.msra.mxu0 0
      %2157 = vmatprep.mubr.bf16.mxu0 0
      %2158 = vmatmul.mubr.bf16.gmra.mrb[0].mxu0 %v1489
      %v2159 = vpop.f32.mrb[0].mxu0
      %v2160 = vadd.f32 0.0, %v2159
      %v2161 = vpop.f32.mrb[0].mxu0
      %v2162 = vpop.f32.mrb[0].mxu0
      %v2163 = vadd.f32 0.0, %v2162
      %v2164 = vpop.f32.mrb[0].mxu0
      %2165 = vdwg.mxu0
      %v2166 = vadd.f32 %v2111, %v2160
      %v2167 = vadd.f32 %v2114, %v2163
      %s2168 = scalar_lea.vmem [#allocation2], 44
      %v2169 = vld [vmem:[%s2168] sm:$0xf]
      %v2171 = vsel %vm1381, %v2169, 0
      %2173 = vmatprep.subr.bf16.mxu0 0
      %2174 = vmatpush1.bf16.msra.mxu0 %v2171
      %2175 = vmatprep.subr.bf16.mxu0 0
      %2176 = vmatpush1.bf16.msra.mxu0 0
      %2177 = vmatprep.subr.bf16.mxu0 0
      %2178 = vmatpush1.bf16.msra.mxu0 0
      %2179 = vmatprep.subr.bf16.mxu0 0
      %2180 = vmatpush1.bf16.msra.mxu0 0
      %2181 = vmatprep.subr.bf16.mxu0 0
      %2182 = vmatpush1.bf16.msra.mxu0 0
      %2183 = vmatprep.subr.bf16.mxu0 0
      %2184 = vmatpush1.bf16.msra.mxu0 0
      %2185 = vmatprep.subr.bf16.mxu0 0
      %2186 = vmatpush1.bf16.msra.mxu0 0
      %2187 = vmatprep.subr.bf16.mxu0 0
      %2188 = vmatpush1.bf16.msra.mxu0 0
      %2189 = vmatprep.subr.bf16.mxu0 0
      %2190 = vmatpush1.bf16.msra.mxu0 0
      %2191 = vmatprep.subr.bf16.mxu0 0
      %2192 = vmatpush1.bf16.msra.mxu0 0
      %2193 = vmatprep.subr.bf16.mxu0 0
      %2194 = vmatpush1.bf16.msra.mxu0 0
      %2195 = vmatprep.subr.bf16.mxu0 0
      %2196 = vmatpush1.bf16.msra.mxu0 0
      %2197 = vmatprep.subr.bf16.mxu0 0
      %2198 = vmatpush1.bf16.msra.mxu0 0
      %2199 = vmatprep.subr.bf16.mxu0 0
      %2200 = vmatpush1.bf16.msra.mxu0 0
      %2201 = vmatprep.subr.bf16.mxu0 0
      %2202 = vmatpush1.bf16.msra.mxu0 0
      %2203 = vmatprep.subr.bf16.mxu0 0
      %2204 = vmatpush1.bf16.msra.mxu0 0
      %2205 = vmatprep.mubr.bf16.mxu0 0
      %2206 = vmatmul.mubr.bf16.gmra.mrb[0].mxu0 %v1545
      %v2207 = vpop.f32.mrb[0].mxu0
      %v2208 = vadd.f32 0.0, %v2207
      %v2209 = vpop.f32.mrb[0].mxu0
      %v2210 = vpop.f32.mrb[0].mxu0
      %v2211 = vadd.f32 0.0, %v2210
      %v2212 = vpop.f32.mrb[0].mxu0
      %2213 = vdwg.mxu0
      %v2214 = vadd.f32 %v2166, %v2208
      %v2215 = vadd.f32 %v2167, %v2211
      %s2216 = scalar_lea.vmem [#allocation2], 8
      %v2217 = vld [vmem:[%s2216] sm:$0xf]
      %v2219 = vunpack.c.l.b16 %v2217
      %v2220 = vpack.c.b16 %v2219, %v2219
      %2221 = vrot.lane.b32.xlu0 %v2220, 127
      %v2222 = vpop.permute.xlu0 %2221
      %v2224 = vsel %vm1381, %v2222, 0
      %2226 = vmatprep.subr.bf16.mxu0 0
      %2227 = vmatpush1.bf16.msra.mxu0 %v2224
      %2228 = vmatprep.subr.bf16.mxu0 0
      %2229 = vmatpush1.bf16.msra.mxu0 0
      %2230 = vmatprep.subr.bf16.mxu0 0
      %2231 = vmatpush1.bf16.msra.mxu0 0
      %2232 = vmatprep.subr.bf16.mxu0 0
      %2233 = vmatpush1.bf16.msra.mxu0 0
      %2234 = vmatprep.subr.bf16.mxu0 0
      %2235 = vmatpush1.bf16.msra.mxu0 0
      %2236 = vmatprep.subr.bf16.mxu0 0
      %2237 = vmatpush1.bf16.msra.mxu0 0
      %2238 = vmatprep.subr.bf16.mxu0 0
      %2239 = vmatpush1.bf16.msra.mxu0 0
      %2240 = vmatprep.subr.bf16.mxu0 0
      %2241 = vmatpush1.bf16.msra.mxu0 0
      %2242 = vmatprep.subr.bf16.mxu0 0
      %2243 = vmatpush1.bf16.msra.mxu0 0
      %2244 = vmatprep.subr.bf16.mxu0 0
      %2245 = vmatpush1.bf16.msra.mxu0 0
      %2246 = vmatprep.subr.bf16.mxu0 0
      %2247 = vmatpush1.bf16.msra.mxu0 0
      %2248 = vmatprep.subr.bf16.mxu0 0
      %2249 = vmatpush1.bf16.msra.mxu0 0
      %2250 = vmatprep.subr.bf16.mxu0 0
      %2251 = vmatpush1.bf16.msra.mxu0 0
      %2252 = vmatprep.subr.bf16.mxu0 0
      %2253 = vmatpush1.bf16.msra.mxu0 0
      %2254 = vmatprep.subr.bf16.mxu0 0
      %2255 = vmatpush1.bf16.msra.mxu0 0
      %2256 = vmatprep.subr.bf16.mxu0 0
      %2257 = vmatpush1.bf16.msra.mxu0 0
      %2258 = vmatprep.mubr.bf16.mxu0 0
      %2259 = vmatmul.mubr.bf16.gmra.mrb[0].mxu0 %v1606
      %v2260 = vpop.f32.mrb[0].mxu0
      %v2261 = vadd.f32 0.0, %v2260
      %v2262 = vpop.f32.mrb[0].mxu0
      %v2263 = vpop.f32.mrb[0].mxu0
      %v2264 = vadd.f32 0.0, %v2263
      %v2265 = vpop.f32.mrb[0].mxu0
      %2266 = vdwg.mxu0
      %v2267 = vadd.f32 %v2214, %v2261
      %v2268 = vadd.f32 %v2215, %v2264
      %v2270 = vunpack.c.l.b16 %v2169
      %v2271 = vpack.c.b16 %v2270, %v2270
      %2272 = vrot.lane.b32.xlu0 %v2271, 127
      %v2273 = vpop.permute.xlu0 %2272
      %v2275 = vsel %vm1381, %v2273, 0
      %2277 = vmatprep.subr.bf16.mxu0 0
      %2278 = vmatpush1.bf16.msra.mxu0 %v2275
      %2279 = vmatprep.subr.bf16.mxu0 0
      %2280 = vmatpush1.bf16.msra.mxu0 0
      %2281 = vmatprep.subr.bf16.mxu0 0
      %2282 = vmatpush1.bf16.msra.mxu0 0
      %2283 = vmatprep.subr.bf16.mxu0 0
      %2284 = vmatpush1.bf16.msra.mxu0 0
      %2285 = vmatprep.subr.bf16.mxu0 0
      %2286 = vmatpush1.bf16.msra.mxu0 0
      %2287 = vmatprep.subr.bf16.mxu0 0
      %2288 = vmatpush1.bf16.msra.mxu0 0
      %2289 = vmatprep.subr.bf16.mxu0 0
      %2290 = vmatpush1.bf16.msra.mxu0 0
      %2291 = vmatprep.subr.bf16.mxu0 0
      %2292 = vmatpush1.bf16.msra.mxu0 0
      %2293 = vmatprep.subr.bf16.mxu0 0
      %2294 = vmatpush1.bf16.msra.mxu0 0
      %2295 = vmatprep.subr.bf16.mxu0 0
      %2296 = vmatpush1.bf16.msra.mxu0 0
      %2297 = vmatprep.subr.bf16.mxu0 0
      %2298 = vmatpush1.bf16.msra.mxu0 0
      %2299 = vmatprep.subr.bf16.mxu0 0
      %2300 = vmatpush1.bf16.msra.mxu0 0
      %2301 = vmatprep.subr.bf16.mxu0 0
      %2302 = vmatpush1.bf16.msra.mxu0 0
      %2303 = vmatprep.subr.bf16.mxu0 0
      %2304 = vmatpush1.bf16.msra.mxu0 0
      %2305 = vmatprep.subr.bf16.mxu0 0
      %2306 = vmatpush1.bf16.msra.mxu0 0
      %2307 = vmatprep.subr.bf16.mxu0 0
      %2308 = vmatpush1.bf16.msra.mxu0 0
      %2309 = vmatprep.mubr.bf16.mxu0 0
      %2310 = vmatmul.mubr.bf16.gmra.mrb[0].mxu0 %v1665
      %v2311 = vpop.f32.mrb[0].mxu0
      %v2312 = vadd.f32 0.0, %v2311
      %v2313 = vpop.f32.mrb[0].mxu0
      %v2314 = vpop.f32.mrb[0].mxu0
      %v2315 = vadd.f32 0.0, %v2314
      %v2316 = vpop.f32.mrb[0].mxu0
      %2317 = vdwg.mxu0
      %v2318 = vadd.f32 %v2267, %v2312
      %v2319 = vadd.f32 %v2268, %v2315
      %s2320 = scalar_lea.vmem [#allocation2], 116
      %v2321 = vld [vmem:[%s2320] sm:$0xf]
      %v2323 = vsel %vm1381, %v2321, 0
      %2325 = vmatprep.subr.bf16.mxu0 0
      %2326 = vmatpush1.bf16.msra.mxu0 %v2323
      %2327 = vmatprep.subr.bf16.mxu0 0
      %2328 = vmatpush1.bf16.msra.mxu0 0
      %2329 = vmatprep.subr.bf16.mxu0 0
      %2330 = vmatpush1.bf16.msra.mxu0 0
      %2331 = vmatprep.subr.bf16.mxu0 0
      %2332 = vmatpush1.bf16.msra.mxu0 0
      %2333 = vmatprep.subr.bf16.mxu0 0
      %2334 = vmatpush1.bf16.msra.mxu0 0
      %2335 = vmatprep.subr.bf16.mxu0 0
      %2336 = vmatpush1.bf16.msra.mxu0 0
      %2337 = vmatprep.subr.bf16.mxu0 0
      %2338 = vmatpush1.bf16.msra.mxu0 0
      %2339 = vmatprep.subr.bf16.mxu0 0
      %2340 = vmatpush1.bf16.msra.mxu0 0
      %2341 = vmatprep.subr.bf16.mxu0 0
      %2342 = vmatpush1.bf16.msra.mxu0 0
      %2343 = vmatprep.subr.bf16.mxu0 0
      %2344 = vmatpush1.bf16.msra.mxu0 0
      %2345 = vmatprep.subr.bf16.mxu0 0
      %2346 = vmatpush1.bf16.msra.mxu0 0
      %2347 = vmatprep.subr.bf16.mxu0 0
      %2348 = vmatpush1.bf16.msra.mxu0 0
      %2349 = vmatprep.subr.bf16.mxu0 0
      %2350 = vmatpush1.bf16.msra.mxu0 0
      %2351 = vmatprep.subr.bf16.mxu0 0
      %2352 = vmatpush1.bf16.msra.mxu0 0
      %2353 = vmatprep.subr.bf16.mxu0 0
      %2354 = vmatpush1.bf16.msra.mxu0 0
      %2355 = vmatprep.subr.bf16.mxu0 0
      %2356 = vmatpush1.bf16.msra.mxu0 0
      %2357 = vmatprep.mubr.bf16.mxu0 0
      %2358 = vmatmul.mubr.bf16.gmra.mrb[0].mxu0 %v1721
      %v2359 = vpop.f32.mrb[0].mxu0
      %v2360 = vadd.f32 0.0, %v2359
      %v2361 = vpop.f32.mrb[0].mxu0
      %v2362 = vpop.f32.mrb[0].mxu0
      %v2363 = vadd.f32 0.0, %v2362
      %v2364 = vpop.f32.mrb[0].mxu0
      %2365 = vdwg.mxu0
      %v2366 = vadd.f32 %v2318, %v2360
      %v2367 = vadd.f32 %v2319, %v2363
      %s2368 = scalar_lea.vmem [#allocation2], 80
      %v2369 = vld [vmem:[%s2368] sm:$0xf]
      %v2371 = vunpack.c.l.b16 %v2369
      %v2372 = vpack.c.b16 %v2371, %v2371
      %2373 = vrot.lane.b32.xlu0 %v2372, 127
      %v2374 = vpop.permute.xlu0 %2373
      %v2376 = vsel %vm1381, %v2374, 0
      %2378 = vmatprep.subr.bf16.mxu0 0
      %2379 = vmatpush1.bf16.msra.mxu0 %v2376
      %2380 = vmatprep.subr.bf16.mxu0 0
      %2381 = vmatpush1.bf16.msra.mxu0 0
      %2382 = vmatprep.subr.bf16.mxu0 0
      %2383 = vmatpush1.bf16.msra.mxu0 0
      %2384 = vmatprep.subr.bf16.mxu0 0
      %2385 = vmatpush1.bf16.msra.mxu0 0
      %2386 = vmatprep.subr.bf16.mxu0 0
      %2387 = vmatpush1.bf16.msra.mxu0 0
      %2388 = vmatprep.subr.bf16.mxu0 0
      %2389 = vmatpush1.bf16.msra.mxu0 0
      %2390 = vmatprep.subr.bf16.mxu0 0
      %2391 = vmatpush1.bf16.msra.mxu0 0
      %2392 = vmatprep.subr.bf16.mxu0 0
      %2393 = vmatpush1.bf16.msra.mxu0 0
      %2394 = vmatprep.subr.bf16.mxu0 0
      %2395 = vmatpush1.bf16.msra.mxu0 0
      %2396 = vmatprep.subr.bf16.mxu0 0
      %2397 = vmatpush1.bf16.msra.mxu0 0
      %2398 = vmatprep.subr.bf16.mxu0 0
      %2399 = vmatpush1.bf16.msra.mxu0 0
      %2400 = vmatprep.subr.bf16.mxu0 0
      %2401 = vmatpush1.bf16.msra.mxu0 0
      %2402 = vmatprep.subr.bf16.mxu0 0
      %2403 = vmatpush1.bf16.msra.mxu0 0
      %2404 = vmatprep.subr.bf16.mxu0 0
      %2405 = vmatpush1.bf16.msra.mxu0 0
      %2406 = vmatprep.subr.bf16.mxu0 0
      %2407 = vmatpush1.bf16.msra.mxu0 0
      %2408 = vmatprep.subr.bf16.mxu0 0
      %2409 = vmatpush1.bf16.msra.mxu0 0
      %2410 = vmatprep.mubr.bf16.mxu0 0
      %2411 = vmatmul.mubr.bf16.gmra.mrb[0].mxu0 %v1782
      %v2412 = vpop.f32.mrb[0].mxu0
      %v2413 = vadd.f32 0.0, %v2412
      %v2414 = vpop.f32.mrb[0].mxu0
      %v2415 = vpop.f32.mrb[0].mxu0
      %v2416 = vadd.f32 0.0, %v2415
      %v2417 = vpop.f32.mrb[0].mxu0
      %2418 = vdwg.mxu0
      %v2419 = vadd.f32 %v2366, %v2413
      %v2420 = vadd.f32 %v2367, %v2416
      %v2422 = vunpack.c.l.b16 %v2321
      %v2423 = vpack.c.b16 %v2422, %v2422
      %2424 = vrot.lane.b32.xlu0 %v2423, 127
      %v2425 = vpop.permute.xlu0 %2424
      %v2427 = vsel %vm1381, %v2425, 0
      %2429 = vmatprep.subr.bf16.mxu0 0
      %2430 = vmatpush1.bf16.msra.mxu0 %v2427
      %2431 = vmatprep.subr.bf16.mxu0 0
      %2432 = vmatpush1.bf16.msra.mxu0 0
      %2433 = vmatprep.subr.bf16.mxu0 0
      %2434 = vmatpush1.bf16.msra.mxu0 0
      %2435 = vmatprep.subr.bf16.mxu0 0
      %2436 = vmatpush1.bf16.msra.mxu0 0
      %2437 = vmatprep.subr.bf16.mxu0 0
      %2438 = vmatpush1.bf16.msra.mxu0 0
      %2439 = vmatprep.subr.bf16.mxu0 0
      %2440 = vmatpush1.bf16.msra.mxu0 0
      %2441 = vmatprep.subr.bf16.mxu0 0
      %2442 = vmatpush1.bf16.msra.mxu0 0
      %2443 = vmatprep.subr.bf16.mxu0 0
      %2444 = vmatpush1.bf16.msra.mxu0 0
      %2445 = vmatprep.subr.bf16.mxu0 0
      %2446 = vmatpush1.bf16.msra.mxu0 0
      %2447 = vmatprep.subr.bf16.mxu0 0
      %2448 = vmatpush1.bf16.msra.mxu0 0
      %2449 = vmatprep.subr.bf16.mxu0 0
      %2450 = vmatpush1.bf16.msra.mxu0 0
      %2451 = vmatprep.subr.bf16.mxu0 0
      %2452 = vmatpush1.bf16.msra.mxu0 0
      %2453 = vmatprep.subr.bf16.mxu0 0
      %2454 = vmatpush1.bf16.msra.mxu0 0
      %2455 = vmatprep.subr.bf16.mxu0 0
      %2456 = vmatpush1.bf16.msra.mxu0 0
      %2457 = vmatprep.subr.bf16.mxu0 0
      %2458 = vmatpush1.bf16.msra.mxu0 0
      %2459 = vmatprep.subr.bf16.mxu0 0
      %2460 = vmatpush1.bf16.msra.mxu0 0
      %2461 = vmatprep.mubr.bf16.mxu0 0
      %2462 = vmatmul.mubr.bf16.gmra.mrb[0].mxu0 %v1841
      %v2463 = vpop.f32.mrb[0].mxu0
      %v2464 = vadd.f32 0.0, %v2463
      %v2465 = vpop.f32.mrb[0].mxu0
      %v2466 = vpop.f32.mrb[0].mxu0
      %v2467 = vadd.f32 0.0, %v2466
      %v2468 = vpop.f32.mrb[0].mxu0
      %2469 = vdwg.mxu0
      %v2470 = vadd.f32 %v2419, %v2464
      %v2471 = vadd.f32 %v2420, %v2467
      %v2474 = vcombine.high %v2470, %v2470
      %v2476 = vunpack.c.l.s4 1966171168
      %v2477 = vunpack.c.0.s8 %v2476
      %v2478 = vlaneseq
      %v2479 = vshrl.u32 %v2478, 7
      %v2480 = vsub.s32 %v2477, %v2479
      %v2481 = vrot.slane %v2470, %v2480
      %v2483 = vunpack.c.l.s4 1966171168
      %v2484 = vunpack.c.0.s8 %v2483
      %v2485 = vlaneseq
      %v2486 = vshrl.u32 %v2485, 7
      %v2487 = vsub.s32 %v2484, %v2486
      %v2488 = vrot.slane %v2474, %v2487
      %v2489 = vcombine.high %v2481, %v2481
      %v2490 = vcombine.high %v2488, %v2488
      %v2492 = vunpack.c.l.s4 1966171168
      %v2493 = vunpack.c.0.s8 %v2492
      %v2494 = vlaneseq
      %v2495 = vshrl.u32 %v2494, 7
      %v2496 = vsub.s32 %v2493, %v2495
      %v2497 = vrot.slane %v2481, %v2496
      %v2499 = vunpack.c.l.s4 1966171168
      %v2500 = vunpack.c.0.s8 %v2499
      %v2501 = vlaneseq
      %v2502 = vshrl.u32 %v2501, 7
      %v2503 = vsub.s32 %v2500, %v2502
      %v2504 = vrot.slane %v2488, %v2503
      %v2506 = vunpack.c.l.s4 1966171168
      %v2507 = vunpack.c.0.s8 %v2506
      %v2508 = vlaneseq
      %v2509 = vshrl.u32 %v2508, 7
      %v2510 = vsub.s32 %v2507, %v2509
      %v2511 = vrot.slane %v2489, %v2510
      %v2513 = vunpack.c.l.s4 1966171168
      %v2514 = vunpack.c.0.s8 %v2513
      %v2515 = vlaneseq
      %v2516 = vshrl.u32 %v2515, 7
      %v2517 = vsub.s32 %v2514, %v2516
      %v2518 = vrot.slane %v2490, %v2517
      %v2519 = vcombine.high %v2497, %v2497
      %v2520 = vcombine.high %v2504, %v2504
      %v2521 = vcombine.high %v2511, %v2511
      %v2522 = vcombine.high %v2518, %v2518
      %v2523 = vcombine.high %v2471, %v2471
      %v2525 = vunpack.c.l.s4 1966171168
      %v2526 = vunpack.c.0.s8 %v2525
      %v2527 = vlaneseq
      %v2528 = vshrl.u32 %v2527, 7
      %v2529 = vsub.s32 %v2526, %v2528
      %v2530 = vrot.slane %v2471, %v2529
      %v2532 = vunpack.c.l.s4 1966171168
      %v2533 = vunpack.c.0.s8 %v2532
      %v2534 = vlaneseq
      %v2535 = vshrl.u32 %v2534, 7
      %v2536 = vsub.s32 %v2533, %v2535
      %v2537 = vrot.slane %v2523, %v2536
      %v2538 = vcombine.high %v2530, %v2530
      %v2539 = vcombine.high %v2537, %v2537
      %v2541 = vunpack.c.l.s4 1966171168
      %v2542 = vunpack.c.0.s8 %v2541
      %v2543 = vlaneseq
      %v2544 = vshrl.u32 %v2543, 7
      %v2545 = vsub.s32 %v2542, %v2544
      %v2546 = vrot.slane %v2530, %v2545
      %v2548 = vunpack.c.l.s4 1966171168
      %v2549 = vunpack.c.0.s8 %v2548
      %v2550 = vlaneseq
      %v2551 = vshrl.u32 %v2550, 7
      %v2552 = vsub.s32 %v2549, %v2551
      %v2553 = vrot.slane %v2537, %v2552
      %v2555 = vunpack.c.l.s4 1966171168
      %v2556 = vunpack.c.0.s8 %v2555
      %v2557 = vlaneseq
      %v2558 = vshrl.u32 %v2557, 7
      %v2559 = vsub.s32 %v2556, %v2558
      %v2560 = vrot.slane %v2538, %v2559
      %v2562 = vunpack.c.l.s4 1966171168
      %v2563 = vunpack.c.0.s8 %v2562
      %v2564 = vlaneseq
      %v2565 = vshrl.u32 %v2564, 7
      %v2566 = vsub.s32 %v2563, %v2565
      %v2567 = vrot.slane %v2539, %v2566
      %v2568 = vcombine.high %v2546, %v2546
      %v2569 = vcombine.high %v2553, %v2553
      %v2570 = vcombine.high %v2560, %v2560
      %v2571 = vcombine.high %v2567, %v2567
      %2588 = vst.msk [vmem:[%s231 + $0x1] sm:$0x1] %vm2005, %v2497
      %2589 = vst.msk [vmem:[%s231 + $0x9] sm:$0x1] %vm2005, %v2511
      %2590 = vst.msk [vmem:[%s231 + $0x11] sm:$0x1] %vm2005, %v2519
      %2591 = vst.msk [vmem:[%s231 + $0x19] sm:$0x1] %vm2005, %v2521
      %2592 = vst.msk [vmem:[%s231 + $0x21] sm:$0x1] %vm2005, %v2504
      %2593 = vst.msk [vmem:[%s231 + $0x29] sm:$0x1] %vm2005, %v2518
      %2594 = vst.msk [vmem:[%s231 + $0x31] sm:$0x1] %vm2005, %v2520
      %2595 = vst.msk [vmem:[%s231 + $0x39] sm:$0x1] %vm2005, %v2522
      %2596 = vst.msk [vmem:[%s231 + $0x41] sm:$0x1] %vm2005, %v2546
      %2597 = vst.msk [vmem:[%s231 + $0x49] sm:$0x1] %vm2005, %v2560
      %2598 = vst.msk [vmem:[%s231 + $0x51] sm:$0x1] %vm2005, %v2568
      %2599 = vst.msk [vmem:[%s231 + $0x59] sm:$0x1] %vm2005, %v2570
      %2600 = vst.msk [vmem:[%s231 + $0x61] sm:$0x1] %vm2005, %v2553
      %2601 = vst.msk [vmem:[%s231 + $0x69] sm:$0x1] %vm2005, %v2567
      %2602 = vst.msk [vmem:[%s231 + $0x71] sm:$0x1] %vm2005, %v2569
      %2603 = vst.msk [vmem:[%s231 + $0x79] sm:$0x1] %vm2005, %v2571
      %v2604 = vld [vmem:[%s2320] sm:$0xf]
      %v2605 = vld [vmem:[%s2368] sm:$0xf]
      %v2607 = vunpack.c.l.b16 %v2605
      %v2608 = vpack.c.b16 %v2607, %v2607
      %2609 = vrot.lane.b32.xlu0 %v2608, 127
      %v2610 = vpop.permute.xlu0 %2609
      %v2612 = vsel %vm1381, %v2610, 0
      %2614 = vmatprep.subr.bf16.mxu0 0
      %2615 = vmatpush1.bf16.msra.mxu0 %v2612
      %2616 = vmatprep.subr.bf16.mxu0 0
      %2617 = vmatpush1.bf16.msra.mxu0 0
      %2618 = vmatprep.subr.bf16.mxu0 0
      %2619 = vmatpush1.bf16.msra.mxu0 0
      %2620 = vmatprep.subr.bf16.mxu0 0
      %2621 = vmatpush1.bf16.msra.mxu0 0
      %2622 = vmatprep.subr.bf16.mxu0 0
      %2623 = vmatpush1.bf16.msra.mxu0 0
      %2624 = vmatprep.subr.bf16.mxu0 0
      %2625 = vmatpush1.bf16.msra.mxu0 0
      %2626 = vmatprep.subr.bf16.mxu0 0
      %2627 = vmatpush1.bf16.msra.mxu0 0
      %2628 = vmatprep.subr.bf16.mxu0 0
      %2629 = vmatpush1.bf16.msra.mxu0 0
      %2630 = vmatprep.subr.bf16.mxu0 0
      %2631 = vmatpush1.bf16.msra.mxu0 0
      %2632 = vmatprep.subr.bf16.mxu0 0
      %2633 = vmatpush1.bf16.msra.mxu0 0
      %2634 = vmatprep.subr.bf16.mxu0 0
      %2635 = vmatpush1.bf16.msra.mxu0 0
      %2636 = vmatprep.subr.bf16.mxu0 0
      %2637 = vmatpush1.bf16.msra.mxu0 0
      %2638 = vmatprep.subr.bf16.mxu0 0
      %2639 = vmatpush1.bf16.msra.mxu0 0
      %2640 = vmatprep.subr.bf16.mxu0 0
      %2641 = vmatpush1.bf16.msra.mxu0 0
      %2642 = vmatprep.subr.bf16.mxu0 0
      %2643 = vmatpush1.bf16.msra.mxu0 0
      %2644 = vmatprep.subr.bf16.mxu0 0
      %2645 = vmatpush1.bf16.msra.mxu0 0
      %2646 = vmatprep.mubr.bf16.mxu0 0
      %2647 = vmatmul.mubr.bf16.gmra.mrb[0].mxu0 %v1379
      %v2648 = vpop.f32.mrb[0].mxu0
      %v2649 = vadd.f32 0.0, %v2648
      %v2650 = vpop.f32.mrb[0].mxu0
      %v2651 = vpop.f32.mrb[0].mxu0
      %v2652 = vadd.f32 0.0, %v2651
      %v2653 = vpop.f32.mrb[0].mxu0
      %2654 = vdwg.mxu0
      %v2656 = vsel %vm1381, %v2604, 0
      %2658 = vmatprep.subr.bf16.mxu0 0
      %2659 = vmatpush1.bf16.msra.mxu0 %v2656
      %2660 = vmatprep.subr.bf16.mxu0 0
      %2661 = vmatpush1.bf16.msra.mxu0 0
      %2662 = vmatprep.subr.bf16.mxu0 0
      %2663 = vmatpush1.bf16.msra.mxu0 0
      %2664 = vmatprep.subr.bf16.mxu0 0
      %2665 = vmatpush1.bf16.msra.mxu0 0
      %2666 = vmatprep.subr.bf16.mxu0 0
      %2667 = vmatpush1.bf16.msra.mxu0 0
      %2668 = vmatprep.subr.bf16.mxu0 0
      %2669 = vmatpush1.bf16.msra.mxu0 0
      %2670 = vmatprep.subr.bf16.mxu0 0
      %2671 = vmatpush1.bf16.msra.mxu0 0
      %2672 = vmatprep.subr.bf16.mxu0 0
      %2673 = vmatpush1.bf16.msra.mxu0 0
      %2674 = vmatprep.subr.bf16.mxu0 0
      %2675 = vmatpush1.bf16.msra.mxu0 0
      %2676 = vmatprep.subr.bf16.mxu0 0
      %2677 = vmatpush1.bf16.msra.mxu0 0
      %2678 = vmatprep.subr.bf16.mxu0 0
      %2679 = vmatpush1.bf16.msra.mxu0 0
      %2680 = vmatprep.subr.bf16.mxu0 0
      %2681 = vmatpush1.bf16.msra.mxu0 0
      %2682 = vmatprep.subr.bf16.mxu0 0
      %2683 = vmatpush1.bf16.msra.mxu0 0
      %2684 = vmatprep.subr.bf16.mxu0 0
      %2685 = vmatpush1.bf16.msra.mxu0 0
      %2686 = vmatprep.subr.bf16.mxu0 0
      %2687 = vmatpush1.bf16.msra.mxu0 0
      %2688 = vmatprep.subr.bf16.mxu0 0
      %2689 = vmatpush1.bf16.msra.mxu0 0
      %2690 = vmatprep.mubr.bf16.mxu0 0
      %2691 = vmatmul.mubr.bf16.gmra.mrb[0].mxu0 %v1432
      %v2692 = vpop.f32.mrb[0].mxu0
      %v2693 = vadd.f32 %v2649, %v2692
      %v2694 = vpop.f32.mrb[0].mxu0
      %v2695 = vpop.f32.mrb[0].mxu0
      %v2696 = vadd.f32 %v2652, %v2695
      %v2697 = vpop.f32.mrb[0].mxu0
      %2698 = vdwg.mxu0
      %v2700 = vunpack.c.l.b16 %v2604
      %v2701 = vpack.c.b16 %v2700, %v2700
      %2702 = vrot.lane.b32.xlu0 %v2701, 127
      %v2703 = vpop.permute.xlu0 %2702
      %v2705 = vsel %vm1381, %v2703, 0
      %2707 = vmatprep.subr.bf16.mxu0 0
      %2708 = vmatpush1.bf16.msra.mxu0 %v2705
      %2709 = vmatprep.subr.bf16.mxu0 0
      %2710 = vmatpush1.bf16.msra.mxu0 0
      %2711 = vmatprep.subr.bf16.mxu0 0
      %2712 = vmatpush1.bf16.msra.mxu0 0
      %2713 = vmatprep.subr.bf16.mxu0 0
      %2714 = vmatpush1.bf16.msra.mxu0 0
      %2715 = vmatprep.subr.bf16.mxu0 0
      %2716 = vmatpush1.bf16.msra.mxu0 0
      %2717 = vmatprep.subr.bf16.mxu0 0
      %2718 = vmatpush1.bf16.msra.mxu0 0
      %2719 = vmatprep.subr.bf16.mxu0 0
      %2720 = vmatpush1.bf16.msra.mxu0 0
      %2721 = vmatprep.subr.bf16.mxu0 0
      %2722 = vmatpush1.bf16.msra.mxu0 0
      %2723 = vmatprep.subr.bf16.mxu0 0
      %2724 = vmatpush1.bf16.msra.mxu0 0
      %2725 = vmatprep.subr.bf16.mxu0 0
      %2726 = vmatpush1.bf16.msra.mxu0 0
      %2727 = vmatprep.subr.bf16.mxu0 0
      %2728 = vmatpush1.bf16.msra.mxu0 0
      %2729 = vmatprep.subr.bf16.mxu0 0
      %2730 = vmatpush1.bf16.msra.mxu0 0
      %2731 = vmatprep.subr.bf16.mxu0 0
      %2732 = vmatpush1.bf16.msra.mxu0 0
      %2733 = vmatprep.subr.bf16.mxu0 0
      %2734 = vmatpush1.bf16.msra.mxu0 0
      %2735 = vmatprep.subr.bf16.mxu0 0
      %2736 = vmatpush1.bf16.msra.mxu0 0
      %2737 = vmatprep.subr.bf16.mxu0 0
      %2738 = vmatpush1.bf16.msra.mxu0 0
      %2739 = vmatprep.mubr.bf16.mxu0 0
      %2740 = vmatmul.mubr.bf16.gmra.mrb[0].mxu0 %v1489
      %v2741 = vpop.f32.mrb[0].mxu0
      %v2742 = vadd.f32 0.0, %v2741
      %v2743 = vpop.f32.mrb[0].mxu0
      %v2744 = vpop.f32.mrb[0].mxu0
      %v2745 = vadd.f32 0.0, %v2744
      %v2746 = vpop.f32.mrb[0].mxu0
      %2747 = vdwg.mxu0
      %v2748 = vadd.f32 %v2693, %v2742
      %v2749 = vadd.f32 %v2696, %v2745
      %s2750 = scalar_lea.vmem [#allocation2], 48
      %v2751 = vld [vmem:[%s2750] sm:$0xf]
      %v2753 = vsel %vm1381, %v2751, 0
      %2755 = vmatprep.subr.bf16.mxu0 0
      %2756 = vmatpush1.bf16.msra.mxu0 %v2753
      %2757 = vmatprep.subr.bf16.mxu0 0
      %2758 = vmatpush1.bf16.msra.mxu0 0
      %2759 = vmatprep.subr.bf16.mxu0 0
      %2760 = vmatpush1.bf16.msra.mxu0 0
      %2761 = vmatprep.subr.bf16.mxu0 0
      %2762 = vmatpush1.bf16.msra.mxu0 0
      %2763 = vmatprep.subr.bf16.mxu0 0
      %2764 = vmatpush1.bf16.msra.mxu0 0
      %2765 = vmatprep.subr.bf16.mxu0 0
      %2766 = vmatpush1.bf16.msra.mxu0 0
      %2767 = vmatprep.subr.bf16.mxu0 0
      %2768 = vmatpush1.bf16.msra.mxu0 0
      %2769 = vmatprep.subr.bf16.mxu0 0
      %2770 = vmatpush1.bf16.msra.mxu0 0
      %2771 = vmatprep.subr.bf16.mxu0 0
      %2772 = vmatpush1.bf16.msra.mxu0 0
      %2773 = vmatprep.subr.bf16.mxu0 0
      %2774 = vmatpush1.bf16.msra.mxu0 0
      %2775 = vmatprep.subr.bf16.mxu0 0
      %2776 = vmatpush1.bf16.msra.mxu0 0
      %2777 = vmatprep.subr.bf16.mxu0 0
      %2778 = vmatpush1.bf16.msra.mxu0 0
      %2779 = vmatprep.subr.bf16.mxu0 0
      %2780 = vmatpush1.bf16.msra.mxu0 0
      %2781 = vmatprep.subr.bf16.mxu0 0
      %2782 = vmatpush1.bf16.msra.mxu0 0
      %2783 = vmatprep.subr.bf16.mxu0 0
      %2784 = vmatpush1.bf16.msra.mxu0 0
      %2785 = vmatprep.subr.bf16.mxu0 0
      %2786 = vmatpush1.bf16.msra.mxu0 0
      %2787 = vmatprep.mubr.bf16.mxu0 0
      %2788 = vmatmul.mubr.bf16.gmra.mrb[0].mxu0 %v1545
      %v2789 = vpop.f32.mrb[0].mxu0
      %v2790 = vadd.f32 0.0, %v2789
      %v2791 = vpop.f32.mrb[0].mxu0
      %v2792 = vpop.f32.mrb[0].mxu0
      %v2793 = vadd.f32 0.0, %v2792
      %v2794 = vpop.f32.mrb[0].mxu0
      %2795 = vdwg.mxu0
      %v2796 = vadd.f32 %v2748, %v2790
      %v2797 = vadd.f32 %v2749, %v2793
      %s2798 = scalar_lea.vmem [#allocation2], 12
      %v2799 = vld [vmem:[%s2798] sm:$0xf]
      %v2801 = vunpack.c.l.b16 %v2799
      %v2802 = vpack.c.b16 %v2801, %v2801
      %2803 = vrot.lane.b32.xlu0 %v2802, 127
      %v2804 = vpop.permute.xlu0 %2803
      %v2806 = vsel %vm1381, %v2804, 0
      %2808 = vmatprep.subr.bf16.mxu0 0
      %2809 = vmatpush1.bf16.msra.mxu0 %v2806
      %2810 = vmatprep.subr.bf16.mxu0 0
      %2811 = vmatpush1.bf16.msra.mxu0 0
      %2812 = vmatprep.subr.bf16.mxu0 0
      %2813 = vmatpush1.bf16.msra.mxu0 0
      %2814 = vmatprep.subr.bf16.mxu0 0
      %2815 = vmatpush1.bf16.msra.mxu0 0
      %2816 = vmatprep.subr.bf16.mxu0 0
      %2817 = vmatpush1.bf16.msra.mxu0 0
      %2818 = vmatprep.subr.bf16.mxu0 0
      %2819 = vmatpush1.bf16.msra.mxu0 0
      %2820 = vmatprep.subr.bf16.mxu0 0
      %2821 = vmatpush1.bf16.msra.mxu0 0
      %2822 = vmatprep.subr.bf16.mxu0 0
      %2823 = vmatpush1.bf16.msra.mxu0 0
      %2824 = vmatprep.subr.bf16.mxu0 0
      %2825 = vmatpush1.bf16.msra.mxu0 0
      %2826 = vmatprep.subr.bf16.mxu0 0
      %2827 = vmatpush1.bf16.msra.mxu0 0
      %2828 = vmatprep.subr.bf16.mxu0 0
      %2829 = vmatpush1.bf16.msra.mxu0 0
      %2830 = vmatprep.subr.bf16.mxu0 0
      %2831 = vmatpush1.bf16.msra.mxu0 0
      %2832 = vmatprep.subr.bf16.mxu0 0
      %2833 = vmatpush1.bf16.msra.mxu0 0
      %2834 = vmatprep.subr.bf16.mxu0 0
      %2835 = vmatpush1.bf16.msra.mxu0 0
      %2836 = vmatprep.subr.bf16.mxu0 0
      %2837 = vmatpush1.bf16.msra.mxu0 0
      %2838 = vmatprep.subr.bf16.mxu0 0
      %2839 = vmatpush1.bf16.msra.mxu0 0
      %2840 = vmatprep.mubr.bf16.mxu0 0
      %2841 = vmatmul.mubr.bf16.gmra.mrb[0].mxu0 %v1606
      %v2842 = vpop.f32.mrb[0].mxu0
      %v2843 = vadd.f32 0.0, %v2842
      %v2844 = vpop.f32.mrb[0].mxu0
      %v2845 = vpop.f32.mrb[0].mxu0
      %v2846 = vadd.f32 0.0, %v2845
      %v2847 = vpop.f32.mrb[0].mxu0
      %2848 = vdwg.mxu0
      %v2849 = vadd.f32 %v2796, %v2843
      %v2850 = vadd.f32 %v2797, %v2846
      %v2852 = vunpack.c.l.b16 %v2751
      %v2853 = vpack.c.b16 %v2852, %v2852
      %2854 = vrot.lane.b32.xlu0 %v2853, 127
      %v2855 = vpop.permute.xlu0 %2854
      %v2857 = vsel %vm1381, %v2855, 0
      %2859 = vmatprep.subr.bf16.mxu0 0
      %2860 = vmatpush1.bf16.msra.mxu0 %v2857
      %2861 = vmatprep.subr.bf16.mxu0 0
      %2862 = vmatpush1.bf16.msra.mxu0 0
      %2863 = vmatprep.subr.bf16.mxu0 0
      %2864 = vmatpush1.bf16.msra.mxu0 0
      %2865 = vmatprep.subr.bf16.mxu0 0
      %2866 = vmatpush1.bf16.msra.mxu0 0
      %2867 = vmatprep.subr.bf16.mxu0 0
      %2868 = vmatpush1.bf16.msra.mxu0 0
      %2869 = vmatprep.subr.bf16.mxu0 0
      %2870 = vmatpush1.bf16.msra.mxu0 0
      %2871 = vmatprep.subr.bf16.mxu0 0
      %2872 = vmatpush1.bf16.msra.mxu0 0
      %2873 = vmatprep.subr.bf16.mxu0 0
      %2874 = vmatpush1.bf16.msra.mxu0 0
      %2875 = vmatprep.subr.bf16.mxu0 0
      %2876 = vmatpush1.bf16.msra.mxu0 0
      %2877 = vmatprep.subr.bf16.mxu0 0
      %2878 = vmatpush1.bf16.msra.mxu0 0
      %2879 = vmatprep.subr.bf16.mxu0 0
      %2880 = vmatpush1.bf16.msra.mxu0 0
      %2881 = vmatprep.subr.bf16.mxu0 0
      %2882 = vmatpush1.bf16.msra.mxu0 0
      %2883 = vmatprep.subr.bf16.mxu0 0
      %2884 = vmatpush1.bf16.msra.mxu0 0
      %2885 = vmatprep.subr.bf16.mxu0 0
      %2886 = vmatpush1.bf16.msra.mxu0 0
      %2887 = vmatprep.subr.bf16.mxu0 0
      %2888 = vmatpush1.bf16.msra.mxu0 0
      %2889 = vmatprep.subr.bf16.mxu0 0
      %2890 = vmatpush1.bf16.msra.mxu0 0
      %2891 = vmatprep.mubr.bf16.mxu0 0
      %2892 = vmatmul.mubr.bf16.gmra.mrb[0].mxu0 %v1665
      %v2893 = vpop.f32.mrb[0].mxu0
      %v2894 = vadd.f32 0.0, %v2893
      %v2895 = vpop.f32.mrb[0].mxu0
      %v2896 = vpop.f32.mrb[0].mxu0
      %v2897 = vadd.f32 0.0, %v2896
      %v2898 = vpop.f32.mrb[0].mxu0
      %2899 = vdwg.mxu0
      %v2900 = vadd.f32 %v2849, %v2894
      %v2901 = vadd.f32 %v2850, %v2897
      %s2902 = scalar_lea.vmem [#allocation2], 120
      %v2903 = vld [vmem:[%s2902] sm:$0xf]
      %v2905 = vsel %vm1381, %v2903, 0
      %2907 = vmatprep.subr.bf16.mxu0 0
      %2908 = vmatpush1.bf16.msra.mxu0 %v2905
      %2909 = vmatprep.subr.bf16.mxu0 0
      %2910 = vmatpush1.bf16.msra.mxu0 0
      %2911 = vmatprep.subr.bf16.mxu0 0
      %2912 = vmatpush1.bf16.msra.mxu0 0
      %2913 = vmatprep.subr.bf16.mxu0 0
      %2914 = vmatpush1.bf16.msra.mxu0 0
      %2915 = vmatprep.subr.bf16.mxu0 0
      %2916 = vmatpush1.bf16.msra.mxu0 0
      %2917 = vmatprep.subr.bf16.mxu0 0
      %2918 = vmatpush1.bf16.msra.mxu0 0
      %2919 = vmatprep.subr.bf16.mxu0 0
      %2920 = vmatpush1.bf16.msra.mxu0 0
      %2921 = vmatprep.subr.bf16.mxu0 0
      %2922 = vmatpush1.bf16.msra.mxu0 0
      %2923 = vmatprep.subr.bf16.mxu0 0
      %2924 = vmatpush1.bf16.msra.mxu0 0
      %2925 = vmatprep.subr.bf16.mxu0 0
      %2926 = vmatpush1.bf16.msra.mxu0 0
      %2927 = vmatprep.subr.bf16.mxu0 0
      %2928 = vmatpush1.bf16.msra.mxu0 0
      %2929 = vmatprep.subr.bf16.mxu0 0
      %2930 = vmatpush1.bf16.msra.mxu0 0
      %2931 = vmatprep.subr.bf16.mxu0 0
      %2932 = vmatpush1.bf16.msra.mxu0 0
      %2933 = vmatprep.subr.bf16.mxu0 0
      %2934 = vmatpush1.bf16.msra.mxu0 0
      %2935 = vmatprep.subr.bf16.mxu0 0
      %2936 = vmatpush1.bf16.msra.mxu0 0
      %2937 = vmatprep.subr.bf16.mxu0 0
      %2938 = vmatpush1.bf16.msra.mxu0 0
      %2939 = vmatprep.mubr.bf16.mxu0 0
      %2940 = vmatmul.mubr.bf16.gmra.mrb[0].mxu0 %v1721
      %v2941 = vpop.f32.mrb[0].mxu0
      %v2942 = vadd.f32 0.0, %v2941
      %v2943 = vpop.f32.mrb[0].mxu0
      %v2944 = vpop.f32.mrb[0].mxu0
      %v2945 = vadd.f32 0.0, %v2944
      %v2946 = vpop.f32.mrb[0].mxu0
      %2947 = vdwg.mxu0
      %v2948 = vadd.f32 %v2900, %v2942
      %v2949 = vadd.f32 %v2901, %v2945
      %s2950 = scalar_lea.vmem [#allocation2], 84
      %v2951 = vld [vmem:[%s2950] sm:$0xf]
      %v2953 = vunpack.c.l.b16 %v2951
      %v2954 = vpack.c.b16 %v2953, %v2953
      %2955 = vrot.lane.b32.xlu0 %v2954, 127
      %v2956 = vpop.permute.xlu0 %2955
      %v2958 = vsel %vm1381, %v2956, 0
      %2960 = vmatprep.subr.bf16.mxu0 0
      %2961 = vmatpush1.bf16.msra.mxu0 %v2958
      %2962 = vmatprep.subr.bf16.mxu0 0
      %2963 = vmatpush1.bf16.msra.mxu0 0
      %2964 = vmatprep.subr.bf16.mxu0 0
      %2965 = vmatpush1.bf16.msra.mxu0 0
      %2966 = vmatprep.subr.bf16.mxu0 0
      %2967 = vmatpush1.bf16.msra.mxu0 0
      %2968 = vmatprep.subr.bf16.mxu0 0
      %2969 = vmatpush1.bf16.msra.mxu0 0
      %2970 = vmatprep.subr.bf16.mxu0 0
      %2971 = vmatpush1.bf16.msra.mxu0 0
      %2972 = vmatprep.subr.bf16.mxu0 0
      %2973 = vmatpush1.bf16.msra.mxu0 0
      %2974 = vmatprep.subr.bf16.mxu0 0
      %2975 = vmatpush1.bf16.msra.mxu0 0
      %2976 = vmatprep.subr.bf16.mxu0 0
      %2977 = vmatpush1.bf16.msra.mxu0 0
      %2978 = vmatprep.subr.bf16.mxu0 0
      %2979 = vmatpush1.bf16.msra.mxu0 0
      %2980 = vmatprep.subr.bf16.mxu0 0
      %2981 = vmatpush1.bf16.msra.mxu0 0
      %2982 = vmatprep.subr.bf16.mxu0 0
      %2983 = vmatpush1.bf16.msra.mxu0 0
      %2984 = vmatprep.subr.bf16.mxu0 0
      %2985 = vmatpush1.bf16.msra.mxu0 0
      %2986 = vmatprep.subr.bf16.mxu0 0
      %2987 = vmatpush1.bf16.msra.mxu0 0
      %2988 = vmatprep.subr.bf16.mxu0 0
      %2989 = vmatpush1.bf16.msra.mxu0 0
      %2990 = vmatprep.subr.bf16.mxu0 0
      %2991 = vmatpush1.bf16.msra.mxu0 0
      %2992 = vmatprep.mubr.bf16.mxu0 0
      %2993 = vmatmul.mubr.bf16.gmra.mrb[0].mxu0 %v1782
      %v2994 = vpop.f32.mrb[0].mxu0
      %v2995 = vadd.f32 0.0, %v2994
      %v2996 = vpop.f32.mrb[0].mxu0
      %v2997 = vpop.f32.mrb[0].mxu0
      %v2998 = vadd.f32 0.0, %v2997
      %v2999 = vpop.f32.mrb[0].mxu0
      %3000 = vdwg.mxu0
      %v3001 = vadd.f32 %v2948, %v2995
      %v3002 = vadd.f32 %v2949, %v2998
      %v3004 = vunpack.c.l.b16 %v2903
      %v3005 = vpack.c.b16 %v3004, %v3004
      %3006 = vrot.lane.b32.xlu0 %v3005, 127
      %v3007 = vpop.permute.xlu0 %3006
      %v3009 = vsel %vm1381, %v3007, 0
      %3011 = vmatprep.subr.bf16.mxu0 0
      %3012 = vmatpush1.bf16.msra.mxu0 %v3009
      %3013 = vmatprep.subr.bf16.mxu0 0
      %3014 = vmatpush1.bf16.msra.mxu0 0
      %3015 = vmatprep.subr.bf16.mxu0 0
      %3016 = vmatpush1.bf16.msra.mxu0 0
      %3017 = vmatprep.subr.bf16.mxu0 0
      %3018 = vmatpush1.bf16.msra.mxu0 0
      %3019 = vmatprep.subr.bf16.mxu0 0
      %3020 = vmatpush1.bf16.msra.mxu0 0
      %3021 = vmatprep.subr.bf16.mxu0 0
      %3022 = vmatpush1.bf16.msra.mxu0 0
      %3023 = vmatprep.subr.bf16.mxu0 0
      %3024 = vmatpush1.bf16.msra.mxu0 0
      %3025 = vmatprep.subr.bf16.mxu0 0
      %3026 = vmatpush1.bf16.msra.mxu0 0
      %3027 = vmatprep.subr.bf16.mxu0 0
      %3028 = vmatpush1.bf16.msra.mxu0 0
      %3029 = vmatprep.subr.bf16.mxu0 0
      %3030 = vmatpush1.bf16.msra.mxu0 0
      %3031 = vmatprep.subr.bf16.mxu0 0
      %3032 = vmatpush1.bf16.msra.mxu0 0
      %3033 = vmatprep.subr.bf16.mxu0 0
      %3034 = vmatpush1.bf16.msra.mxu0 0
      %3035 = vmatprep.subr.bf16.mxu0 0
      %3036 = vmatpush1.bf16.msra.mxu0 0
      %3037 = vmatprep.subr.bf16.mxu0 0
      %3038 = vmatpush1.bf16.msra.mxu0 0
      %3039 = vmatprep.subr.bf16.mxu0 0
      %3040 = vmatpush1.bf16.msra.mxu0 0
      %3041 = vmatprep.subr.bf16.mxu0 0
      %3042 = vmatpush1.bf16.msra.mxu0 0
      %3043 = vmatprep.mubr.bf16.mxu0 0
      %3044 = vmatmul.mubr.bf16.gmra.mrb[0].mxu0 %v1841
      %v3045 = vpop.f32.mrb[0].mxu0
      %v3046 = vadd.f32 0.0, %v3045
      %v3047 = vpop.f32.mrb[0].mxu0
      %v3048 = vpop.f32.mrb[0].mxu0
      %v3049 = vadd.f32 0.0, %v3048
      %v3050 = vpop.f32.mrb[0].mxu0
      %3051 = vdwg.mxu0
      %v3052 = vadd.f32 %v3001, %v3046
      %v3053 = vadd.f32 %v3002, %v3049
      %v3056 = vcombine.high %v3052, %v3052
      %v3058 = vunpack.c.l.s4 1966171168
      %v3059 = vunpack.c.0.s8 %v3058
      %v3060 = vlaneseq
      %v3061 = vshrl.u32 %v3060, 7
      %v3062 = vsub.s32 %v3059, %v3061
      %v3063 = vrot.slane %v3052, %v3062
      %v3065 = vunpack.c.l.s4 1966171168
      %v3066 = vunpack.c.0.s8 %v3065
      %v3067 = vlaneseq
      %v3068 = vshrl.u32 %v3067, 7
      %v3069 = vsub.s32 %v3066, %v3068
      %v3070 = vrot.slane %v3056, %v3069
      %v3071 = vcombine.high %v3063, %v3063
      %v3072 = vcombine.high %v3070, %v3070
      %v3074 = vunpack.c.l.s4 1966171168
      %v3075 = vunpack.c.0.s8 %v3074
      %v3076 = vlaneseq
      %v3077 = vshrl.u32 %v3076, 7
      %v3078 = vsub.s32 %v3075, %v3077
      %v3079 = vrot.slane %v3063, %v3078
      %v3081 = vunpack.c.l.s4 1966171168
      %v3082 = vunpack.c.0.s8 %v3081
      %v3083 = vlaneseq
      %v3084 = vshrl.u32 %v3083, 7
      %v3085 = vsub.s32 %v3082, %v3084
      %v3086 = vrot.slane %v3070, %v3085
      %v3088 = vunpack.c.l.s4 1966171168
      %v3089 = vunpack.c.0.s8 %v3088
      %v3090 = vlaneseq
      %v3091 = vshrl.u32 %v3090, 7
      %v3092 = vsub.s32 %v3089, %v3091
      %v3093 = vrot.slane %v3071, %v3092
      %v3095 = vunpack.c.l.s4 1966171168
      %v3096 = vunpack.c.0.s8 %v3095
      %v3097 = vlaneseq
      %v3098 = vshrl.u32 %v3097, 7
      %v3099 = vsub.s32 %v3096, %v3098
      %v3100 = vrot.slane %v3072, %v3099
      %v3101 = vcombine.high %v3079, %v3079
      %v3102 = vcombine.high %v3086, %v3086
      %v3103 = vcombine.high %v3093, %v3093
      %v3104 = vcombine.high %v3100, %v3100
      %v3105 = vcombine.high %v3053, %v3053
      %v3107 = vunpack.c.l.s4 1966171168
      %v3108 = vunpack.c.0.s8 %v3107
      %v3109 = vlaneseq
      %v3110 = vshrl.u32 %v3109, 7
      %v3111 = vsub.s32 %v3108, %v3110
      %v3112 = vrot.slane %v3053, %v3111
      %v3114 = vunpack.c.l.s4 1966171168
      %v3115 = vunpack.c.0.s8 %v3114
      %v3116 = vlaneseq
      %v3117 = vshrl.u32 %v3116, 7
      %v3118 = vsub.s32 %v3115, %v3117
      %v3119 = vrot.slane %v3105, %v3118
      %v3120 = vcombine.high %v3112, %v3112
      %v3121 = vcombine.high %v3119, %v3119
      %v3123 = vunpack.c.l.s4 1966171168
      %v3124 = vunpack.c.0.s8 %v3123
      %v3125 = vlaneseq
      %v3126 = vshrl.u32 %v3125, 7
      %v3127 = vsub.s32 %v3124, %v3126
      %v3128 = vrot.slane %v3112, %v3127
      %v3130 = vunpack.c.l.s4 1966171168
      %v3131 = vunpack.c.0.s8 %v3130
      %v3132 = vlaneseq
      %v3133 = vshrl.u32 %v3132, 7
      %v3134 = vsub.s32 %v3131, %v3133
      %v3135 = vrot.slane %v3119, %v3134
      %v3137 = vunpack.c.l.s4 1966171168
      %v3138 = vunpack.c.0.s8 %v3137
      %v3139 = vlaneseq
      %v3140 = vshrl.u32 %v3139, 7
      %v3141 = vsub.s32 %v3138, %v3140
      %v3142 = vrot.slane %v3120, %v3141
      %v3144 = vunpack.c.l.s4 1966171168
      %v3145 = vunpack.c.0.s8 %v3144
      %v3146 = vlaneseq
      %v3147 = vshrl.u32 %v3146, 7
      %v3148 = vsub.s32 %v3145, %v3147
      %v3149 = vrot.slane %v3121, %v3148
      %v3150 = vcombine.high %v3128, %v3128
      %v3151 = vcombine.high %v3135, %v3135
      %v3152 = vcombine.high %v3142, %v3142
      %v3153 = vcombine.high %v3149, %v3149
      %3170 = vst.msk [vmem:[%s231 + $0x2] sm:$0x1] %vm2005, %v3079
      %3171 = vst.msk [vmem:[%s231 + $0xa] sm:$0x1] %vm2005, %v3093
      %3172 = vst.msk [vmem:[%s231 + $0x12] sm:$0x1] %vm2005, %v3101
      %3173 = vst.msk [vmem:[%s231 + $0x1a] sm:$0x1] %vm2005, %v3103
      %3174 = vst.msk [vmem:[%s231 + $0x22] sm:$0x1] %vm2005, %v3086
      %3175 = vst.msk [vmem:[%s231 + $0x2a] sm:$0x1] %vm2005, %v3100
      %3176 = vst.msk [vmem:[%s231 + $0x32] sm:$0x1] %vm2005, %v3102
      %3177 = vst.msk [vmem:[%s231 + $0x3a] sm:$0x1] %vm2005, %v3104
      %3178 = vst.msk [vmem:[%s231 + $0x42] sm:$0x1] %vm2005, %v3128
      %3179 = vst.msk [vmem:[%s231 + $0x4a] sm:$0x1] %vm2005, %v3142
      %3180 = vst.msk [vmem:[%s231 + $0x52] sm:$0x1] %vm2005, %v3150
      %3181 = vst.msk [vmem:[%s231 + $0x5a] sm:$0x1] %vm2005, %v3152
      %3182 = vst.msk [vmem:[%s231 + $0x62] sm:$0x1] %vm2005, %v3135
      %3183 = vst.msk [vmem:[%s231 + $0x6a] sm:$0x1] %vm2005, %v3149
      %3184 = vst.msk [vmem:[%s231 + $0x72] sm:$0x1] %vm2005, %v3151
      %3185 = vst.msk [vmem:[%s231 + $0x7a] sm:$0x1] %vm2005, %v3153
      %v3186 = vld [vmem:[%s2902] sm:$0xf]
      %v3187 = vld [vmem:[%s2950] sm:$0xf]
      %v3189 = vunpack.c.l.b16 %v3187
      %v3190 = vpack.c.b16 %v3189, %v3189
      %3191 = vrot.lane.b32.xlu0 %v3190, 127
      %v3192 = vpop.permute.xlu0 %3191
      %v3194 = vsel %vm1381, %v3192, 0
      %3196 = vmatprep.subr.bf16.mxu0 0
      %3197 = vmatpush1.bf16.msra.mxu0 %v3194
      %3198 = vmatprep.subr.bf16.mxu0 0
      %3199 = vmatpush1.bf16.msra.mxu0 0
      %3200 = vmatprep.subr.bf16.mxu0 0
      %3201 = vmatpush1.bf16.msra.mxu0 0
      %3202 = vmatprep.subr.bf16.mxu0 0
      %3203 = vmatpush1.bf16.msra.mxu0 0
      %3204 = vmatprep.subr.bf16.mxu0 0
      %3205 = vmatpush1.bf16.msra.mxu0 0
      %3206 = vmatprep.subr.bf16.mxu0 0
      %3207 = vmatpush1.bf16.msra.mxu0 0
      %3208 = vmatprep.subr.bf16.mxu0 0
      %3209 = vmatpush1.bf16.msra.mxu0 0
      %3210 = vmatprep.subr.bf16.mxu0 0
      %3211 = vmatpush1.bf16.msra.mxu0 0
      %3212 = vmatprep.subr.bf16.mxu0 0
      %3213 = vmatpush1.bf16.msra.mxu0 0
      %3214 = vmatprep.subr.bf16.mxu0 0
      %3215 = vmatpush1.bf16.msra.mxu0 0
      %3216 = vmatprep.subr.bf16.mxu0 0
      %3217 = vmatpush1.bf16.msra.mxu0 0
      %3218 = vmatprep.subr.bf16.mxu0 0
      %3219 = vmatpush1.bf16.msra.mxu0 0
      %3220 = vmatprep.subr.bf16.mxu0 0
      %3221 = vmatpush1.bf16.msra.mxu0 0
      %3222 = vmatprep.subr.bf16.mxu0 0
      %3223 = vmatpush1.bf16.msra.mxu0 0
      %3224 = vmatprep.subr.bf16.mxu0 0
      %3225 = vmatpush1.bf16.msra.mxu0 0
      %3226 = vmatprep.subr.bf16.mxu0 0
      %3227 = vmatpush1.bf16.msra.mxu0 0
      %3228 = vmatprep.mubr.bf16.mxu0 0
      %3229 = vmatmul.mubr.bf16.gmra.mrb[0].mxu0 %v1379
      %v3230 = vpop.f32.mrb[0].mxu0
      %v3231 = vadd.f32 0.0, %v3230
      %v3232 = vpop.f32.mrb[0].mxu0
      %v3233 = vpop.f32.mrb[0].mxu0
      %v3234 = vadd.f32 0.0, %v3233
      %v3235 = vpop.f32.mrb[0].mxu0
      %3236 = vdwg.mxu0
      %v3238 = vsel %vm1381, %v3186, 0
      %3240 = vmatprep.subr.bf16.mxu0 0
      %3241 = vmatpush1.bf16.msra.mxu0 %v3238
      %3242 = vmatprep.subr.bf16.mxu0 0
      %3243 = vmatpush1.bf16.msra.mxu0 0
      %3244 = vmatprep.subr.bf16.mxu0 0
      %3245 = vmatpush1.bf16.msra.mxu0 0
      %3246 = vmatprep.subr.bf16.mxu0 0
      %3247 = vmatpush1.bf16.msra.mxu0 0
      %3248 = vmatprep.subr.bf16.mxu0 0
      %3249 = vmatpush1.bf16.msra.mxu0 0
      %3250 = vmatprep.subr.bf16.mxu0 0
      %3251 = vmatpush1.bf16.msra.mxu0 0
      %3252 = vmatprep.subr.bf16.mxu0 0
      %3253 = vmatpush1.bf16.msra.mxu0 0
      %3254 = vmatprep.subr.bf16.mxu0 0
      %3255 = vmatpush1.bf16.msra.mxu0 0
      %3256 = vmatprep.subr.bf16.mxu0 0
      %3257 = vmatpush1.bf16.msra.mxu0 0
      %3258 = vmatprep.subr.bf16.mxu0 0
      %3259 = vmatpush1.bf16.msra.mxu0 0
      %3260 = vmatprep.subr.bf16.mxu0 0
      %3261 = vmatpush1.bf16.msra.mxu0 0
      %3262 = vmatprep.subr.bf16.mxu0 0
      %3263 = vmatpush1.bf16.msra.mxu0 0
      %3264 = vmatprep.subr.bf16.mxu0 0
      %3265 = vmatpush1.bf16.msra.mxu0 0
      %3266 = vmatprep.subr.bf16.mxu0 0
      %3267 = vmatpush1.bf16.msra.mxu0 0
      %3268 = vmatprep.subr.bf16.mxu0 0
      %3269 = vmatpush1.bf16.msra.mxu0 0
      %3270 = vmatprep.subr.bf16.mxu0 0
      %3271 = vmatpush1.bf16.msra.mxu0 0
      %3272 = vmatprep.mubr.bf16.mxu0 0
      %3273 = vmatmul.mubr.bf16.gmra.mrb[0].mxu0 %v1432
      %v3274 = vpop.f32.mrb[0].mxu0
      %v3275 = vadd.f32 %v3231, %v3274
      %v3276 = vpop.f32.mrb[0].mxu0
      %v3277 = vpop.f32.mrb[0].mxu0
      %v3278 = vadd.f32 %v3234, %v3277
      %v3279 = vpop.f32.mrb[0].mxu0
      %3280 = vdwg.mxu0
      %v3282 = vunpack.c.l.b16 %v3186
      %v3283 = vpack.c.b16 %v3282, %v3282
      %3284 = vrot.lane.b32.xlu0 %v3283, 127
      %v3285 = vpop.permute.xlu0 %3284
      %v3287 = vsel %vm1381, %v3285, 0
      %3289 = vmatprep.subr.bf16.mxu0 0
      %3290 = vmatpush1.bf16.msra.mxu0 %v3287
      %3291 = vmatprep.subr.bf16.mxu0 0
      %3292 = vmatpush1.bf16.msra.mxu0 0
      %3293 = vmatprep.subr.bf16.mxu0 0
      %3294 = vmatpush1.bf16.msra.mxu0 0
      %3295 = vmatprep.subr.bf16.mxu0 0
      %3296 = vmatpush1.bf16.msra.mxu0 0
      %3297 = vmatprep.subr.bf16.mxu0 0
      %3298 = vmatpush1.bf16.msra.mxu0 0
      %3299 = vmatprep.subr.bf16.mxu0 0
      %3300 = vmatpush1.bf16.msra.mxu0 0
      %3301 = vmatprep.subr.bf16.mxu0 0
      %3302 = vmatpush1.bf16.msra.mxu0 0
      %3303 = vmatprep.subr.bf16.mxu0 0
      %3304 = vmatpush1.bf16.msra.mxu0 0
      %3305 = vmatprep.subr.bf16.mxu0 0
      %3306 = vmatpush1.bf16.msra.mxu0 0
      %3307 = vmatprep.subr.bf16.mxu0 0
      %3308 = vmatpush1.bf16.msra.mxu0 0
      %3309 = vmatprep.subr.bf16.mxu0 0
      %3310 = vmatpush1.bf16.msra.mxu0 0
      %3311 = vmatprep.subr.bf16.mxu0 0
      %3312 = vmatpush1.bf16.msra.mxu0 0
      %3313 = vmatprep.subr.bf16.mxu0 0
      %3314 = vmatpush1.bf16.msra.mxu0 0
      %3315 = vmatprep.subr.bf16.mxu0 0
      %3316 = vmatpush1.bf16.msra.mxu0 0
      %3317 = vmatprep.subr.bf16.mxu0 0
      %3318 = vmatpush1.bf16.msra.mxu0 0
      %3319 = vmatprep.subr.bf16.mxu0 0
      %3320 = vmatpush1.bf16.msra.mxu0 0
      %3321 = vmatprep.mubr.bf16.mxu0 0
      %3322 = vmatmul.mubr.bf16.gmra.mrb[0].mxu0 %v1489
      %v3323 = vpop.f32.mrb[0].mxu0
      %v3324 = vadd.f32 0.0, %v3323
      %v3325 = vpop.f32.mrb[0].mxu0
      %v3326 = vpop.f32.mrb[0].mxu0
      %v3327 = vadd.f32 0.0, %v3326
      %v3328 = vpop.f32.mrb[0].mxu0
      %3329 = vdwg.mxu0
      %v3330 = vadd.f32 %v3275, %v3324
      %v3331 = vadd.f32 %v3278, %v3327
      %s3332 = scalar_lea.vmem [#allocation2], 52
      %v3333 = vld [vmem:[%s3332] sm:$0xf]
      %v3335 = vsel %vm1381, %v3333, 0
      %3337 = vmatprep.subr.bf16.mxu0 0
      %3338 = vmatpush1.bf16.msra.mxu0 %v3335
      %3339 = vmatprep.subr.bf16.mxu0 0
      %3340 = vmatpush1.bf16.msra.mxu0 0
      %3341 = vmatprep.subr.bf16.mxu0 0
      %3342 = vmatpush1.bf16.msra.mxu0 0
      %3343 = vmatprep.subr.bf16.mxu0 0
      %3344 = vmatpush1.bf16.msra.mxu0 0
      %3345 = vmatprep.subr.bf16.mxu0 0
      %3346 = vmatpush1.bf16.msra.mxu0 0
      %3347 = vmatprep.subr.bf16.mxu0 0
      %3348 = vmatpush1.bf16.msra.mxu0 0
      %3349 = vmatprep.subr.bf16.mxu0 0
      %3350 = vmatpush1.bf16.msra.mxu0 0
      %3351 = vmatprep.subr.bf16.mxu0 0
      %3352 = vmatpush1.bf16.msra.mxu0 0
      %3353 = vmatprep.subr.bf16.mxu0 0
      %3354 = vmatpush1.bf16.msra.mxu0 0
      %3355 = vmatprep.subr.bf16.mxu0 0
      %3356 = vmatpush1.bf16.msra.mxu0 0
      %3357 = vmatprep.subr.bf16.mxu0 0
      %3358 = vmatpush1.bf16.msra.mxu0 0
      %3359 = vmatprep.subr.bf16.mxu0 0
      %3360 = vmatpush1.bf16.msra.mxu0 0
      %3361 = vmatprep.subr.bf16.mxu0 0
      %3362 = vmatpush1.bf16.msra.mxu0 0
      %3363 = vmatprep.subr.bf16.mxu0 0
      %3364 = vmatpush1.bf16.msra.mxu0 0
      %3365 = vmatprep.subr.bf16.mxu0 0
      %3366 = vmatpush1.bf16.msra.mxu0 0
      %3367 = vmatprep.subr.bf16.mxu0 0
      %3368 = vmatpush1.bf16.msra.mxu0 0
      %3369 = vmatprep.mubr.bf16.mxu0 0
      %3370 = vmatmul.mubr.bf16.gmra.mrb[0].mxu0 %v1545
      %v3371 = vpop.f32.mrb[0].mxu0
      %v3372 = vadd.f32 0.0, %v3371
      %v3373 = vpop.f32.mrb[0].mxu0
      %v3374 = vpop.f32.mrb[0].mxu0
      %v3375 = vadd.f32 0.0, %v3374
      %v3376 = vpop.f32.mrb[0].mxu0
      %3377 = vdwg.mxu0
      %v3378 = vadd.f32 %v3330, %v3372
      %v3379 = vadd.f32 %v3331, %v3375
      %s3380 = scalar_lea.vmem [#allocation2], 16
      %v3381 = vld [vmem:[%s3380] sm:$0xf]
      %v3383 = vunpack.c.l.b16 %v3381
      %v3384 = vpack.c.b16 %v3383, %v3383
      %3385 = vrot.lane.b32.xlu0 %v3384, 127
      %v3386 = vpop.permute.xlu0 %3385
      %v3388 = vsel %vm1381, %v3386, 0
      %3390 = vmatprep.subr.bf16.mxu0 0
      %3391 = vmatpush1.bf16.msra.mxu0 %v3388
      %3392 = vmatprep.subr.bf16.mxu0 0
      %3393 = vmatpush1.bf16.msra.mxu0 0
      %3394 = vmatprep.subr.bf16.mxu0 0
      %3395 = vmatpush1.bf16.msra.mxu0 0
      %3396 = vmatprep.subr.bf16.mxu0 0
      %3397 = vmatpush1.bf16.msra.mxu0 0
      %3398 = vmatprep.subr.bf16.mxu0 0
      %3399 = vmatpush1.bf16.msra.mxu0 0
      %3400 = vmatprep.subr.bf16.mxu0 0
      %3401 = vmatpush1.bf16.msra.mxu0 0
      %3402 = vmatprep.subr.bf16.mxu0 0
      %3403 = vmatpush1.bf16.msra.mxu0 0
      %3404 = vmatprep.subr.bf16.mxu0 0
      %3405 = vmatpush1.bf16.msra.mxu0 0
      %3406 = vmatprep.subr.bf16.mxu0 0
      %3407 = vmatpush1.bf16.msra.mxu0 0
      %3408 = vmatprep.subr.bf16.mxu0 0
      %3409 = vmatpush1.bf16.msra.mxu0 0
      %3410 = vmatprep.subr.bf16.mxu0 0
      %3411 = vmatpush1.bf16.msra.mxu0 0
      %3412 = vmatprep.subr.bf16.mxu0 0
      %3413 = vmatpush1.bf16.msra.mxu0 0
      %3414 = vmatprep.subr.bf16.mxu0 0
      %3415 = vmatpush1.bf16.msra.mxu0 0
      %3416 = vmatprep.subr.bf16.mxu0 0
      %3417 = vmatpush1.bf16.msra.mxu0 0
      %3418 = vmatprep.subr.bf16.mxu0 0
      %3419 = vmatpush1.bf16.msra.mxu0 0
      %3420 = vmatprep.subr.bf16.mxu0 0
      %3421 = vmatpush1.bf16.msra.mxu0 0
      %3422 = vmatprep.mubr.bf16.mxu0 0
      %3423 = vmatmul.mubr.bf16.gmra.mrb[0].mxu0 %v1606
      %v3424 = vpop.f32.mrb[0].mxu0
      %v3425 = vadd.f32 0.0, %v3424
      %v3426 = vpop.f32.mrb[0].mxu0
      %v3427 = vpop.f32.mrb[0].mxu0
      %v3428 = vadd.f32 0.0, %v3427
      %v3429 = vpop.f32.mrb[0].mxu0
      %3430 = vdwg.mxu0
      %v3431 = vadd.f32 %v3378, %v3425
      %v3432 = vadd.f32 %v3379, %v3428
      %v3434 = vunpack.c.l.b16 %v3333
      %v3435 = vpack.c.b16 %v3434, %v3434
      %3436 = vrot.lane.b32.xlu0 %v3435, 127
      %v3437 = vpop.permute.xlu0 %3436
      %v3439 = vsel %vm1381, %v3437, 0
      %3441 = vmatprep.subr.bf16.mxu0 0
      %3442 = vmatpush1.bf16.msra.mxu0 %v3439
      %3443 = vmatprep.subr.bf16.mxu0 0
      %3444 = vmatpush1.bf16.msra.mxu0 0
      %3445 = vmatprep.subr.bf16.mxu0 0
      %3446 = vmatpush1.bf16.msra.mxu0 0
      %3447 = vmatprep.subr.bf16.mxu0 0
      %3448 = vmatpush1.bf16.msra.mxu0 0
      %3449 = vmatprep.subr.bf16.mxu0 0
      %3450 = vmatpush1.bf16.msra.mxu0 0
      %3451 = vmatprep.subr.bf16.mxu0 0
      %3452 = vmatpush1.bf16.msra.mxu0 0
      %3453 = vmatprep.subr.bf16.mxu0 0
      %3454 = vmatpush1.bf16.msra.mxu0 0
      %3455 = vmatprep.subr.bf16.mxu0 0
      %3456 = vmatpush1.bf16.msra.mxu0 0
      %3457 = vmatprep.subr.bf16.mxu0 0
      %3458 = vmatpush1.bf16.msra.mxu0 0
      %3459 = vmatprep.subr.bf16.mxu0 0
      %3460 = vmatpush1.bf16.msra.mxu0 0
      %3461 = vmatprep.subr.bf16.mxu0 0
      %3462 = vmatpush1.bf16.msra.mxu0 0
      %3463 = vmatprep.subr.bf16.mxu0 0
      %3464 = vmatpush1.bf16.msra.mxu0 0
      %3465 = vmatprep.subr.bf16.mxu0 0
      %3466 = vmatpush1.bf16.msra.mxu0 0
      %3467 = vmatprep.subr.bf16.mxu0 0
      %3468 = vmatpush1.bf16.msra.mxu0 0
      %3469 = vmatprep.subr.bf16.mxu0 0
      %3470 = vmatpush1.bf16.msra.mxu0 0
      %3471 = vmatprep.subr.bf16.mxu0 0
      %3472 = vmatpush1.bf16.msra.mxu0 0
      %3473 = vmatprep.mubr.bf16.mxu0 0
      %3474 = vmatmul.mubr.bf16.gmra.mrb[0].mxu0 %v1665
      %v3475 = vpop.f32.mrb[0].mxu0
      %v3476 = vadd.f32 0.0, %v3475
      %v3477 = vpop.f32.mrb[0].mxu0
      %v3478 = vpop.f32.mrb[0].mxu0
      %v3479 = vadd.f32 0.0, %v3478
      %v3480 = vpop.f32.mrb[0].mxu0
      %3481 = vdwg.mxu0
      %v3482 = vadd.f32 %v3431, %v3476
      %v3483 = vadd.f32 %v3432, %v3479
      %s3484 = scalar_lea.vmem [#allocation2], 124
      %v3485 = vld [vmem:[%s3484] sm:$0xf]
      %v3487 = vsel %vm1381, %v3485, 0
      %3489 = vmatprep.subr.bf16.mxu0 0
      %3490 = vmatpush1.bf16.msra.mxu0 %v3487
      %3491 = vmatprep.subr.bf16.mxu0 0
      %3492 = vmatpush1.bf16.msra.mxu0 0
      %3493 = vmatprep.subr.bf16.mxu0 0
      %3494 = vmatpush1.bf16.msra.mxu0 0
      %3495 = vmatprep.subr.bf16.mxu0 0
      %3496 = vmatpush1.bf16.msra.mxu0 0
      %3497 = vmatprep.subr.bf16.mxu0 0
      %3498 = vmatpush1.bf16.msra.mxu0 0
      %3499 = vmatprep.subr.bf16.mxu0 0
      %3500 = vmatpush1.bf16.msra.mxu0 0
      %3501 = vmatprep.subr.bf16.mxu0 0
      %3502 = vmatpush1.bf16.msra.mxu0 0
      %3503 = vmatprep.subr.bf16.mxu0 0
      %3504 = vmatpush1.bf16.msra.mxu0 0
      %3505 = vmatprep.subr.bf16.mxu0 0
      %3506 = vmatpush1.bf16.msra.mxu0 0
      %3507 = vmatprep.subr.bf16.mxu0 0
      %3508 = vmatpush1.bf16.msra.mxu0 0
      %3509 = vmatprep.subr.bf16.mxu0 0
      %3510 = vmatpush1.bf16.msra.mxu0 0
      %3511 = vmatprep.subr.bf16.mxu0 0
      %3512 = vmatpush1.bf16.msra.mxu0 0
      %3513 = vmatprep.subr.bf16.mxu0 0
      %3514 = vmatpush1.bf16.msra.mxu0 0
      %3515 = vmatprep.subr.bf16.mxu0 0
      %3516 = vmatpush1.bf16.msra.mxu0 0
      %3517 = vmatprep.subr.bf16.mxu0 0
      %3518 = vmatpush1.bf16.msra.mxu0 0
      %3519 = vmatprep.subr.bf16.mxu0 0
      %3520 = vmatpush1.bf16.msra.mxu0 0
      %3521 = vmatprep.mubr.bf16.mxu0 0
      %3522 = vmatmul.mubr.bf16.gmra.mrb[0].mxu0 %v1721
      %v3523 = vpop.f32.mrb[0].mxu0
      %v3524 = vadd.f32 0.0, %v3523
      %v3525 = vpop.f32.mrb[0].mxu0
      %v3526 = vpop.f32.mrb[0].mxu0
      %v3527 = vadd.f32 0.0, %v3526
      %v3528 = vpop.f32.mrb[0].mxu0
      %3529 = vdwg.mxu0
      %v3530 = vadd.f32 %v3482, %v3524
      %v3531 = vadd.f32 %v3483, %v3527
      %s3532 = scalar_lea.vmem [#allocation2], 88
      %v3533 = vld [vmem:[%s3532] sm:$0xf]
      %v3535 = vunpack.c.l.b16 %v3533
      %v3536 = vpack.c.b16 %v3535, %v3535
      %3537 = vrot.lane.b32.xlu0 %v3536, 127
      %v3538 = vpop.permute.xlu0 %3537
      %v3540 = vsel %vm1381, %v3538, 0
      %3542 = vmatprep.subr.bf16.mxu0 0
      %3543 = vmatpush1.bf16.msra.mxu0 %v3540
      %3544 = vmatprep.subr.bf16.mxu0 0
      %3545 = vmatpush1.bf16.msra.mxu0 0
      %3546 = vmatprep.subr.bf16.mxu0 0
      %3547 = vmatpush1.bf16.msra.mxu0 0
      %3548 = vmatprep.subr.bf16.mxu0 0
      %3549 = vmatpush1.bf16.msra.mxu0 0
      %3550 = vmatprep.subr.bf16.mxu0 0
      %3551 = vmatpush1.bf16.msra.mxu0 0
      %3552 = vmatprep.subr.bf16.mxu0 0
      %3553 = vmatpush1.bf16.msra.mxu0 0
      %3554 = vmatprep.subr.bf16.mxu0 0
      %3555 = vmatpush1.bf16.msra.mxu0 0
      %3556 = vmatprep.subr.bf16.mxu0 0
      %3557 = vmatpush1.bf16.msra.mxu0 0
      %3558 = vmatprep.subr.bf16.mxu0 0
      %3559 = vmatpush1.bf16.msra.mxu0 0
      %3560 = vmatprep.subr.bf16.mxu0 0
      %3561 = vmatpush1.bf16.msra.mxu0 0
      %3562 = vmatprep.subr.bf16.mxu0 0
      %3563 = vmatpush1.bf16.msra.mxu0 0
      %3564 = vmatprep.subr.bf16.mxu0 0
      %3565 = vmatpush1.bf16.msra.mxu0 0
      %3566 = vmatprep.subr.bf16.mxu0 0
      %3567 = vmatpush1.bf16.msra.mxu0 0
      %3568 = vmatprep.subr.bf16.mxu0 0
      %3569 = vmatpush1.bf16.msra.mxu0 0
      %3570 = vmatprep.subr.bf16.mxu0 0
      %3571 = vmatpush1.bf16.msra.mxu0 0
      %3572 = vmatprep.subr.bf16.mxu0 0
      %3573 = vmatpush1.bf16.msra.mxu0 0
      %3574 = vmatprep.mubr.bf16.mxu0 0
      %3575 = vmatmul.mubr.bf16.gmra.mrb[0].mxu0 %v1782
      %v3576 = vpop.f32.mrb[0].mxu0
      %v3577 = vadd.f32 0.0, %v3576
      %v3578 = vpop.f32.mrb[0].mxu0
      %v3579 = vpop.f32.mrb[0].mxu0
      %v3580 = vadd.f32 0.0, %v3579
      %v3581 = vpop.f32.mrb[0].mxu0
      %3582 = vdwg.mxu0
      %v3583 = vadd.f32 %v3530, %v3577
      %v3584 = vadd.f32 %v3531, %v3580
      %v3586 = vunpack.c.l.b16 %v3485
      %v3587 = vpack.c.b16 %v3586, %v3586
      %3588 = vrot.lane.b32.xlu0 %v3587, 127
      %v3589 = vpop.permute.xlu0 %3588
      %v3591 = vsel %vm1381, %v3589, 0
      %3593 = vmatprep.subr.bf16.mxu0 0
      %3594 = vmatpush1.bf16.msra.mxu0 %v3591
      %3595 = vmatprep.subr.bf16.mxu0 0
      %3596 = vmatpush1.bf16.msra.mxu0 0
      %3597 = vmatprep.subr.bf16.mxu0 0
      %3598 = vmatpush1.bf16.msra.mxu0 0
      %3599 = vmatprep.subr.bf16.mxu0 0
      %3600 = vmatpush1.bf16.msra.mxu0 0
      %3601 = vmatprep.subr.bf16.mxu0 0
      %3602 = vmatpush1.bf16.msra.mxu0 0
      %3603 = vmatprep.subr.bf16.mxu0 0
      %3604 = vmatpush1.bf16.msra.mxu0 0
      %3605 = vmatprep.subr.bf16.mxu0 0
      %3606 = vmatpush1.bf16.msra.mxu0 0
      %3607 = vmatprep.subr.bf16.mxu0 0
      %3608 = vmatpush1.bf16.msra.mxu0 0
      %3609 = vmatprep.subr.bf16.mxu0 0
      %3610 = vmatpush1.bf16.msra.mxu0 0
      %3611 = vmatprep.subr.bf16.mxu0 0
      %3612 = vmatpush1.bf16.msra.mxu0 0
      %3613 = vmatprep.subr.bf16.mxu0 0
      %3614 = vmatpush1.bf16.msra.mxu0 0
      %3615 = vmatprep.subr.bf16.mxu0 0
      %3616 = vmatpush1.bf16.msra.mxu0 0
      %3617 = vmatprep.subr.bf16.mxu0 0
      %3618 = vmatpush1.bf16.msra.mxu0 0
      %3619 = vmatprep.subr.bf16.mxu0 0
      %3620 = vmatpush1.bf16.msra.mxu0 0
      %3621 = vmatprep.subr.bf16.mxu0 0
      %3622 = vmatpush1.bf16.msra.mxu0 0
      %3623 = vmatprep.subr.bf16.mxu0 0
      %3624 = vmatpush1.bf16.msra.mxu0 0
      %3625 = vmatprep.mubr.bf16.mxu0 0
      %3626 = vmatmul.mubr.bf16.gmra.mrb[0].mxu0 %v1841
      %v3627 = vpop.f32.mrb[0].mxu0
      %v3628 = vadd.f32 0.0, %v3627
      %v3629 = vpop.f32.mrb[0].mxu0
      %v3630 = vpop.f32.mrb[0].mxu0
      %v3631 = vadd.f32 0.0, %v3630
      %v3632 = vpop.f32.mrb[0].mxu0
      %3633 = vdwg.mxu0
      %v3634 = vadd.f32 %v3583, %v3628
      %v3635 = vadd.f32 %v3584, %v3631
      %v3638 = vcombine.high %v3634, %v3634
      %v3640 = vunpack.c.l.s4 1966171168
      %v3641 = vunpack.c.0.s8 %v3640
      %v3642 = vlaneseq
      %v3643 = vshrl.u32 %v3642, 7
      %v3644 = vsub.s32 %v3641, %v3643
      %v3645 = vrot.slane %v3634, %v3644
      %v3647 = vunpack.c.l.s4 1966171168
      %v3648 = vunpack.c.0.s8 %v3647
      %v3649 = vlaneseq
      %v3650 = vshrl.u32 %v3649, 7
      %v3651 = vsub.s32 %v3648, %v3650
      %v3652 = vrot.slane %v3638, %v3651
      %v3653 = vcombine.high %v3645, %v3645
      %v3654 = vcombine.high %v3652, %v3652
      %v3656 = vunpack.c.l.s4 1966171168
      %v3657 = vunpack.c.0.s8 %v3656
      %v3658 = vlaneseq
      %v3659 = vshrl.u32 %v3658, 7
      %v3660 = vsub.s32 %v3657, %v3659
      %v3661 = vrot.slane %v3645, %v3660
      %v3663 = vunpack.c.l.s4 1966171168
      %v3664 = vunpack.c.0.s8 %v3663
      %v3665 = vlaneseq
      %v3666 = vshrl.u32 %v3665, 7
      %v3667 = vsub.s32 %v3664, %v3666
      %v3668 = vrot.slane %v3652, %v3667
      %v3670 = vunpack.c.l.s4 1966171168
      %v3671 = vunpack.c.0.s8 %v3670
      %v3672 = vlaneseq
      %v3673 = vshrl.u32 %v3672, 7
      %v3674 = vsub.s32 %v3671, %v3673
      %v3675 = vrot.slane %v3653, %v3674
      %v3677 = vunpack.c.l.s4 1966171168
      %v3678 = vunpack.c.0.s8 %v3677
      %v3679 = vlaneseq
      %v3680 = vshrl.u32 %v3679, 7
      %v3681 = vsub.s32 %v3678, %v3680
      %v3682 = vrot.slane %v3654, %v3681
      %v3683 = vcombine.high %v3661, %v3661
      %v3684 = vcombine.high %v3668, %v3668
      %v3685 = vcombine.high %v3675, %v3675
      %v3686 = vcombine.high %v3682, %v3682
      %v3687 = vcombine.high %v3635, %v3635
      %v3689 = vunpack.c.l.s4 1966171168
      %v3690 = vunpack.c.0.s8 %v3689
      %v3691 = vlaneseq
      %v3692 = vshrl.u32 %v3691, 7
      %v3693 = vsub.s32 %v3690, %v3692
      %v3694 = vrot.slane %v3635, %v3693
      %v3696 = vunpack.c.l.s4 1966171168
      %v3697 = vunpack.c.0.s8 %v3696
      %v3698 = vlaneseq
      %v3699 = vshrl.u32 %v3698, 7
      %v3700 = vsub.s32 %v3697, %v3699
      %v3701 = vrot.slane %v3687, %v3700
      %v3702 = vcombine.high %v3694, %v3694
      %v3703 = vcombine.high %v3701, %v3701
      %v3705 = vunpack.c.l.s4 1966171168
      %v3706 = vunpack.c.0.s8 %v3705
      %v3707 = vlaneseq
      %v3708 = vshrl.u32 %v3707, 7
      %v3709 = vsub.s32 %v3706, %v3708
      %v3710 = vrot.slane %v3694, %v3709
      %v3712 = vunpack.c.l.s4 1966171168
      %v3713 = vunpack.c.0.s8 %v3712
      %v3714 = vlaneseq
      %v3715 = vshrl.u32 %v3714, 7
      %v3716 = vsub.s32 %v3713, %v3715
      %v3717 = vrot.slane %v3701, %v3716
      %v3719 = vunpack.c.l.s4 1966171168
      %v3720 = vunpack.c.0.s8 %v3719
      %v3721 = vlaneseq
      %v3722 = vshrl.u32 %v3721, 7
      %v3723 = vsub.s32 %v3720, %v3722
      %v3724 = vrot.slane %v3702, %v3723
      %v3726 = vunpack.c.l.s4 1966171168
      %v3727 = vunpack.c.0.s8 %v3726
      %v3728 = vlaneseq
      %v3729 = vshrl.u32 %v3728, 7
      %v3730 = vsub.s32 %v3727, %v3729
      %v3731 = vrot.slane %v3703, %v3730
      %v3732 = vcombine.high %v3710, %v3710
      %v3733 = vcombine.high %v3717, %v3717
      %v3734 = vcombine.high %v3724, %v3724
      %v3735 = vcombine.high %v3731, %v3731
      %3752 = vst.msk [vmem:[%s231 + $0x3] sm:$0x1] %vm2005, %v3661
      %3753 = vst.msk [vmem:[%s231 + $0xb] sm:$0x1] %vm2005, %v3675
      %3754 = vst.msk [vmem:[%s231 + $0x13] sm:$0x1] %vm2005, %v3683
      %3755 = vst.msk [vmem:[%s231 + $0x1b] sm:$0x1] %vm2005, %v3685
      %3756 = vst.msk [vmem:[%s231 + $0x23] sm:$0x1] %vm2005, %v3668
      %3757 = vst.msk [vmem:[%s231 + $0x2b] sm:$0x1] %vm2005, %v3682
      %3758 = vst.msk [vmem:[%s231 + $0x33] sm:$0x1] %vm2005, %v3684
      %3759 = vst.msk [vmem:[%s231 + $0x3b] sm:$0x1] %vm2005, %v3686
      %3760 = vst.msk [vmem:[%s231 + $0x43] sm:$0x1] %vm2005, %v3710
      %3761 = vst.msk [vmem:[%s231 + $0x4b] sm:$0x1] %vm2005, %v3724
      %3762 = vst.msk [vmem:[%s231 + $0x53] sm:$0x1] %vm2005, %v3732
      %3763 = vst.msk [vmem:[%s231 + $0x5b] sm:$0x1] %vm2005, %v3734
      %3764 = vst.msk [vmem:[%s231 + $0x63] sm:$0x1] %vm2005, %v3717
      %3765 = vst.msk [vmem:[%s231 + $0x6b] sm:$0x1] %vm2005, %v3731
      %3766 = vst.msk [vmem:[%s231 + $0x73] sm:$0x1] %vm2005, %v3733
      %3767 = vst.msk [vmem:[%s231 + $0x7b] sm:$0x1] %vm2005, %v3735
      %v3768 = vld [vmem:[%s3484] sm:$0xf]
      %v3769 = vld [vmem:[%s3532] sm:$0xf]
      %v3771 = vunpack.c.l.b16 %v3769
      %v3772 = vpack.c.b16 %v3771, %v3771
      %3773 = vrot.lane.b32.xlu0 %v3772, 127
      %v3774 = vpop.permute.xlu0 %3773
      %v3776 = vsel %vm1381, %v3774, 0
      %3778 = vmatprep.subr.bf16.mxu0 0
      %3779 = vmatpush1.bf16.msra.mxu0 %v3776
      %3780 = vmatprep.subr.bf16.mxu0 0
      %3781 = vmatpush1.bf16.msra.mxu0 0
      %3782 = vmatprep.subr.bf16.mxu0 0
      %3783 = vmatpush1.bf16.msra.mxu0 0
      %3784 = vmatprep.subr.bf16.mxu0 0
      %3785 = vmatpush1.bf16.msra.mxu0 0
      %3786 = vmatprep.subr.bf16.mxu0 0
      %3787 = vmatpush1.bf16.msra.mxu0 0
      %3788 = vmatprep.subr.bf16.mxu0 0
      %3789 = vmatpush1.bf16.msra.mxu0 0
      %3790 = vmatprep.subr.bf16.mxu0 0
      %3791 = vmatpush1.bf16.msra.mxu0 0
      %3792 = vmatprep.subr.bf16.mxu0 0
      %3793 = vmatpush1.bf16.msra.mxu0 0
      %3794 = vmatprep.subr.bf16.mxu0 0
      %3795 = vmatpush1.bf16.msra.mxu0 0
      %3796 = vmatprep.subr.bf16.mxu0 0
      %3797 = vmatpush1.bf16.msra.mxu0 0
      %3798 = vmatprep.subr.bf16.mxu0 0
      %3799 = vmatpush1.bf16.msra.mxu0 0
      %3800 = vmatprep.subr.bf16.mxu0 0
      %3801 = vmatpush1.bf16.msra.mxu0 0
      %3802 = vmatprep.subr.bf16.mxu0 0
      %3803 = vmatpush1.bf16.msra.mxu0 0
      %3804 = vmatprep.subr.bf16.mxu0 0
      %3805 = vmatpush1.bf16.msra.mxu0 0
      %3806 = vmatprep.subr.bf16.mxu0 0
      %3807 = vmatpush1.bf16.msra.mxu0 0
      %3808 = vmatprep.subr.bf16.mxu0 0
      %3809 = vmatpush1.bf16.msra.mxu0 0
      %3810 = vmatprep.mubr.bf16.mxu0 0
      %3811 = vmatmul.mubr.bf16.gmra.mrb[0].mxu0 %v1379
      %v3812 = vpop.f32.mrb[0].mxu0
      %v3813 = vadd.f32 0.0, %v3812
      %v3814 = vpop.f32.mrb[0].mxu0
      %v3815 = vpop.f32.mrb[0].mxu0
      %v3816 = vadd.f32 0.0, %v3815
      %v3817 = vpop.f32.mrb[0].mxu0
      %3818 = vdwg.mxu0
      %v3820 = vsel %vm1381, %v3768, 0
      %3822 = vmatprep.subr.bf16.mxu0 0
      %3823 = vmatpush1.bf16.msra.mxu0 %v3820
      %3824 = vmatprep.subr.bf16.mxu0 0
      %3825 = vmatpush1.bf16.msra.mxu0 0
      %3826 = vmatprep.subr.bf16.mxu0 0
      %3827 = vmatpush1.bf16.msra.mxu0 0
      %3828 = vmatprep.subr.bf16.mxu0 0
      %3829 = vmatpush1.bf16.msra.mxu0 0
      %3830 = vmatprep.subr.bf16.mxu0 0
      %3831 = vmatpush1.bf16.msra.mxu0 0
      %3832 = vmatprep.subr.bf16.mxu0 0
      %3833 = vmatpush1.bf16.msra.mxu0 0
      %3834 = vmatprep.subr.bf16.mxu0 0
      %3835 = vmatpush1.bf16.msra.mxu0 0
      %3836 = vmatprep.subr.bf16.mxu0 0
      %3837 = vmatpush1.bf16.msra.mxu0 0
      %3838 = vmatprep.subr.bf16.mxu0 0
      %3839 = vmatpush1.bf16.msra.mxu0 0
      %3840 = vmatprep.subr.bf16.mxu0 0
      %3841 = vmatpush1.bf16.msra.mxu0 0
      %3842 = vmatprep.subr.bf16.mxu0 0
      %3843 = vmatpush1.bf16.msra.mxu0 0
      %3844 = vmatprep.subr.bf16.mxu0 0
      %3845 = vmatpush1.bf16.msra.mxu0 0
      %3846 = vmatprep.subr.bf16.mxu0 0
      %3847 = vmatpush1.bf16.msra.mxu0 0
      %3848 = vmatprep.subr.bf16.mxu0 0
      %3849 = vmatpush1.bf16.msra.mxu0 0
      %3850 = vmatprep.subr.bf16.mxu0 0
      %3851 = vmatpush1.bf16.msra.mxu0 0
      %3852 = vmatprep.subr.bf16.mxu0 0
      %3853 = vmatpush1.bf16.msra.mxu0 0
      %3854 = vmatprep.mubr.bf16.mxu0 0
      %3855 = vmatmul.mubr.bf16.gmra.mrb[0].mxu0 %v1432
      %v3856 = vpop.f32.mrb[0].mxu0
      %v3857 = vadd.f32 %v3813, %v3856
      %v3858 = vpop.f32.mrb[0].mxu0
      %v3859 = vpop.f32.mrb[0].mxu0
      %v3860 = vadd.f32 %v3816, %v3859
      %v3861 = vpop.f32.mrb[0].mxu0
      %3862 = vdwg.mxu0
      %v3864 = vunpack.c.l.b16 %v3768
      %v3865 = vpack.c.b16 %v3864, %v3864
      %3866 = vrot.lane.b32.xlu0 %v3865, 127
      %v3867 = vpop.permute.xlu0 %3866
      %v3869 = vsel %vm1381, %v3867, 0
      %3871 = vmatprep.subr.bf16.mxu0 0
      %3872 = vmatpush1.bf16.msra.mxu0 %v3869
      %3873 = vmatprep.subr.bf16.mxu0 0
      %3874 = vmatpush1.bf16.msra.mxu0 0
      %3875 = vmatprep.subr.bf16.mxu0 0
      %3876 = vmatpush1.bf16.msra.mxu0 0
      %3877 = vmatprep.subr.bf16.mxu0 0
      %3878 = vmatpush1.bf16.msra.mxu0 0
      %3879 = vmatprep.subr.bf16.mxu0 0
      %3880 = vmatpush1.bf16.msra.mxu0 0
      %3881 = vmatprep.subr.bf16.mxu0 0
      %3882 = vmatpush1.bf16.msra.mxu0 0
      %3883 = vmatprep.subr.bf16.mxu0 0
      %3884 = vmatpush1.bf16.msra.mxu0 0
      %3885 = vmatprep.subr.bf16.mxu0 0
      %3886 = vmatpush1.bf16.msra.mxu0 0
      %3887 = vmatprep.subr.bf16.mxu0 0
      %3888 = vmatpush1.bf16.msra.mxu0 0
      %3889 = vmatprep.subr.bf16.mxu0 0
      %3890 = vmatpush1.bf16.msra.mxu0 0
      %3891 = vmatprep.subr.bf16.mxu0 0
      %3892 = vmatpush1.bf16.msra.mxu0 0
      %3893 = vmatprep.subr.bf16.mxu0 0
      %3894 = vmatpush1.bf16.msra.mxu0 0
      %3895 = vmatprep.subr.bf16.mxu0 0
      %3896 = vmatpush1.bf16.msra.mxu0 0
      %3897 = vmatprep.subr.bf16.mxu0 0
      %3898 = vmatpush1.bf16.msra.mxu0 0
      %3899 = vmatprep.subr.bf16.mxu0 0
      %3900 = vmatpush1.bf16.msra.mxu0 0
      %3901 = vmatprep.subr.bf16.mxu0 0
      %3902 = vmatpush1.bf16.msra.mxu0 0
      %3903 = vmatprep.mubr.bf16.mxu0 0
      %3904 = vmatmul.mubr.bf16.gmra.mrb[0].mxu0 %v1489
      %v3905 = vpop.f32.mrb[0].mxu0
      %v3906 = vadd.f32 0.0, %v3905
      %v3907 = vpop.f32.mrb[0].mxu0
      %v3908 = vpop.f32.mrb[0].mxu0
      %v3909 = vadd.f32 0.0, %v3908
      %v3910 = vpop.f32.mrb[0].mxu0
      %3911 = vdwg.mxu0
      %v3912 = vadd.f32 %v3857, %v3906
      %v3913 = vadd.f32 %v3860, %v3909
      %s3914 = scalar_lea.vmem [#allocation2], 56
      %v3915 = vld [vmem:[%s3914] sm:$0xf]
      %v3917 = vsel %vm1381, %v3915, 0
      %3919 = vmatprep.subr.bf16.mxu0 0
      %3920 = vmatpush1.bf16.msra.mxu0 %v3917
      %3921 = vmatprep.subr.bf16.mxu0 0
      %3922 = vmatpush1.bf16.msra.mxu0 0
      %3923 = vmatprep.subr.bf16.mxu0 0
      %3924 = vmatpush1.bf16.msra.mxu0 0
      %3925 = vmatprep.subr.bf16.mxu0 0
      %3926 = vmatpush1.bf16.msra.mxu0 0
      %3927 = vmatprep.subr.bf16.mxu0 0
      %3928 = vmatpush1.bf16.msra.mxu0 0
      %3929 = vmatprep.subr.bf16.mxu0 0
      %3930 = vmatpush1.bf16.msra.mxu0 0
      %3931 = vmatprep.subr.bf16.mxu0 0
      %3932 = vmatpush1.bf16.msra.mxu0 0
      %3933 = vmatprep.subr.bf16.mxu0 0
      %3934 = vmatpush1.bf16.msra.mxu0 0
      %3935 = vmatprep.subr.bf16.mxu0 0
      %3936 = vmatpush1.bf16.msra.mxu0 0
      %3937 = vmatprep.subr.bf16.mxu0 0
      %3938 = vmatpush1.bf16.msra.mxu0 0
      %3939 = vmatprep.subr.bf16.mxu0 0
      %3940 = vmatpush1.bf16.msra.mxu0 0
      %3941 = vmatprep.subr.bf16.mxu0 0
      %3942 = vmatpush1.bf16.msra.mxu0 0
      %3943 = vmatprep.subr.bf16.mxu0 0
      %3944 = vmatpush1.bf16.msra.mxu0 0
      %3945 = vmatprep.subr.bf16.mxu0 0
      %3946 = vmatpush1.bf16.msra.mxu0 0
      %3947 = vmatprep.subr.bf16.mxu0 0
      %3948 = vmatpush1.bf16.msra.mxu0 0
      %3949 = vmatprep.subr.bf16.mxu0 0
      %3950 = vmatpush1.bf16.msra.mxu0 0
      %3951 = vmatprep.mubr.bf16.mxu0 0
      %3952 = vmatmul.mubr.bf16.gmra.mrb[0].mxu0 %v1545
      %v3953 = vpop.f32.mrb[0].mxu0
      %v3954 = vadd.f32 0.0, %v3953
      %v3955 = vpop.f32.mrb[0].mxu0
      %v3956 = vpop.f32.mrb[0].mxu0
      %v3957 = vadd.f32 0.0, %v3956
      %v3958 = vpop.f32.mrb[0].mxu0
      %3959 = vdwg.mxu0
      %v3960 = vadd.f32 %v3912, %v3954
      %v3961 = vadd.f32 %v3913, %v3957
      %s3962 = scalar_lea.vmem [#allocation2], 20
      %v3963 = vld [vmem:[%s3962] sm:$0xf]
      %v3965 = vunpack.c.l.b16 %v3963
      %v3966 = vpack.c.b16 %v3965, %v3965
      %3967 = vrot.lane.b32.xlu0 %v3966, 127
      %v3968 = vpop.permute.xlu0 %3967
      %v3970 = vsel %vm1381, %v3968, 0
      %3972 = vmatprep.subr.bf16.mxu0 0
      %3973 = vmatpush1.bf16.msra.mxu0 %v3970
      %3974 = vmatprep.subr.bf16.mxu0 0
      %3975 = vmatpush1.bf16.msra.mxu0 0
      %3976 = vmatprep.subr.bf16.mxu0 0
      %3977 = vmatpush1.bf16.msra.mxu0 0
      %3978 = vmatprep.subr.bf16.mxu0 0
      %3979 = vmatpush1.bf16.msra.mxu0 0
      %3980 = vmatprep.subr.bf16.mxu0 0
      %3981 = vmatpush1.bf16.msra.mxu0 0
      %3982 = vmatprep.subr.bf16.mxu0 0
      %3983 = vmatpush1.bf16.msra.mxu0 0
      %3984 = vmatprep.subr.bf16.mxu0 0
      %3985 = vmatpush1.bf16.msra.mxu0 0
      %3986 = vmatprep.subr.bf16.mxu0 0
      %3987 = vmatpush1.bf16.msra.mxu0 0
      %3988 = vmatprep.subr.bf16.mxu0 0
      %3989 = vmatpush1.bf16.msra.mxu0 0
      %3990 = vmatprep.subr.bf16.mxu0 0
      %3991 = vmatpush1.bf16.msra.mxu0 0
      %3992 = vmatprep.subr.bf16.mxu0 0
      %3993 = vmatpush1.bf16.msra.mxu0 0
      %3994 = vmatprep.subr.bf16.mxu0 0
      %3995 = vmatpush1.bf16.msra.mxu0 0
      %3996 = vmatprep.subr.bf16.mxu0 0
      %3997 = vmatpush1.bf16.msra.mxu0 0
      %3998 = vmatprep.subr.bf16.mxu0 0
      %3999 = vmatpush1.bf16.msra.mxu0 0
      %4000 = vmatprep.subr.bf16.mxu0 0
      %4001 = vmatpush1.bf16.msra.mxu0 0
      %4002 = vmatprep.subr.bf16.mxu0 0
      %4003 = vmatpush1.bf16.msra.mxu0 0
      %4004 = vmatprep.mubr.bf16.mxu0 0
      %4005 = vmatmul.mubr.bf16.gmra.mrb[0].mxu0 %v1606
      %v4006 = vpop.f32.mrb[0].mxu0
      %v4007 = vadd.f32 0.0, %v4006
      %v4008 = vpop.f32.mrb[0].mxu0
      %v4009 = vpop.f32.mrb[0].mxu0
      %v4010 = vadd.f32 0.0, %v4009
      %v4011 = vpop.f32.mrb[0].mxu0
      %4012 = vdwg.mxu0
      %v4013 = vadd.f32 %v3960, %v4007
      %v4014 = vadd.f32 %v3961, %v4010
      %v4016 = vunpack.c.l.b16 %v3915
      %v4017 = vpack.c.b16 %v4016, %v4016
      %4018 = vrot.lane.b32.xlu0 %v4017, 127
      %v4019 = vpop.permute.xlu0 %4018
      %v4021 = vsel %vm1381, %v4019, 0
      %4023 = vmatprep.subr.bf16.mxu0 0
      %4024 = vmatpush1.bf16.msra.mxu0 %v4021
      %4025 = vmatprep.subr.bf16.mxu0 0
      %4026 = vmatpush1.bf16.msra.mxu0 0
      %4027 = vmatprep.subr.bf16.mxu0 0
      %4028 = vmatpush1.bf16.msra.mxu0 0
      %4029 = vmatprep.subr.bf16.mxu0 0
      %4030 = vmatpush1.bf16.msra.mxu0 0
      %4031 = vmatprep.subr.bf16.mxu0 0
      %4032 = vmatpush1.bf16.msra.mxu0 0
      %4033 = vmatprep.subr.bf16.mxu0 0
      %4034 = vmatpush1.bf16.msra.mxu0 0
      %4035 = vmatprep.subr.bf16.mxu0 0
      %4036 = vmatpush1.bf16.msra.mxu0 0
      %4037 = vmatprep.subr.bf16.mxu0 0
      %4038 = vmatpush1.bf16.msra.mxu0 0
      %4039 = vmatprep.subr.bf16.mxu0 0
      %4040 = vmatpush1.bf16.msra.mxu0 0
      %4041 = vmatprep.subr.bf16.mxu0 0
      %4042 = vmatpush1.bf16.msra.mxu0 0
      %4043 = vmatprep.subr.bf16.mxu0 0
      %4044 = vmatpush1.bf16.msra.mxu0 0
      %4045 = vmatprep.subr.bf16.mxu0 0
      %4046 = vmatpush1.bf16.msra.mxu0 0
      %4047 = vmatprep.subr.bf16.mxu0 0
      %4048 = vmatpush1.bf16.msra.mxu0 0
      %4049 = vmatprep.subr.bf16.mxu0 0
      %4050 = vmatpush1.bf16.msra.mxu0 0
      %4051 = vmatprep.subr.bf16.mxu0 0
      %4052 = vmatpush1.bf16.msra.mxu0 0
      %4053 = vmatprep.subr.bf16.mxu0 0
      %4054 = vmatpush1.bf16.msra.mxu0 0
      %4055 = vmatprep.mubr.bf16.mxu0 0
      %4056 = vmatmul.mubr.bf16.gmra.mrb[0].mxu0 %v1665
      %v4057 = vpop.f32.mrb[0].mxu0
      %v4058 = vadd.f32 0.0, %v4057
      %v4059 = vpop.f32.mrb[0].mxu0
      %v4060 = vpop.f32.mrb[0].mxu0
      %v4061 = vadd.f32 0.0, %v4060
      %v4062 = vpop.f32.mrb[0].mxu0
      %4063 = vdwg.mxu0
      %v4064 = vadd.f32 %v4013, %v4058
      %v4065 = vadd.f32 %v4014, %v4061
      %s4066 = scalar_lea.vmem [#allocation2], 128
      %v4067 = vld [vmem:[%s4066] sm:$0xf]
      %v4069 = vsel %vm1381, %v4067, 0
      %4071 = vmatprep.subr.bf16.mxu0 0
      %4072 = vmatpush1.bf16.msra.mxu0 %v4069
      %4073 = vmatprep.subr.bf16.mxu0 0
      %4074 = vmatpush1.bf16.msra.mxu0 0
      %4075 = vmatprep.subr.bf16.mxu0 0
      %4076 = vmatpush1.bf16.msra.mxu0 0
      %4077 = vmatprep.subr.bf16.mxu0 0
      %4078 = vmatpush1.bf16.msra.mxu0 0
      %4079 = vmatprep.subr.bf16.mxu0 0
      %4080 = vmatpush1.bf16.msra.mxu0 0
      %4081 = vmatprep.subr.bf16.mxu0 0
      %4082 = vmatpush1.bf16.msra.mxu0 0
      %4083 = vmatprep.subr.bf16.mxu0 0
      %4084 = vmatpush1.bf16.msra.mxu0 0
      %4085 = vmatprep.subr.bf16.mxu0 0
      %4086 = vmatpush1.bf16.msra.mxu0 0
      %4087 = vmatprep.subr.bf16.mxu0 0
      %4088 = vmatpush1.bf16.msra.mxu0 0
      %4089 = vmatprep.subr.bf16.mxu0 0
      %4090 = vmatpush1.bf16.msra.mxu0 0
      %4091 = vmatprep.subr.bf16.mxu0 0
      %4092 = vmatpush1.bf16.msra.mxu0 0
      %4093 = vmatprep.subr.bf16.mxu0 0
      %4094 = vmatpush1.bf16.msra.mxu0 0
      %4095 = vmatprep.subr.bf16.mxu0 0
      %4096 = vmatpush1.bf16.msra.mxu0 0
      %4097 = vmatprep.subr.bf16.mxu0 0
      %4098 = vmatpush1.bf16.msra.mxu0 0
      %4099 = vmatprep.subr.bf16.mxu0 0
      %4100 = vmatpush1.bf16.msra.mxu0 0
      %4101 = vmatprep.subr.bf16.mxu0 0
      %4102 = vmatpush1.bf16.msra.mxu0 0
      %4103 = vmatprep.mubr.bf16.mxu0 0
      %4104 = vmatmul.mubr.bf16.gmra.mrb[0].mxu0 %v1721
      %v4105 = vpop.f32.mrb[0].mxu0
      %v4106 = vadd.f32 0.0, %v4105
      %v4107 = vpop.f32.mrb[0].mxu0
      %v4108 = vpop.f32.mrb[0].mxu0
      %v4109 = vadd.f32 0.0, %v4108
      %v4110 = vpop.f32.mrb[0].mxu0
      %4111 = vdwg.mxu0
      %v4112 = vadd.f32 %v4064, %v4106
      %v4113 = vadd.f32 %v4065, %v4109
      %s4114 = scalar_lea.vmem [#allocation2], 92
      %v4115 = vld [vmem:[%s4114] sm:$0xf]
      %v4117 = vunpack.c.l.b16 %v4115
      %v4118 = vpack.c.b16 %v4117, %v4117
      %4119 = vrot.lane.b32.xlu0 %v4118, 127
      %v4120 = vpop.permute.xlu0 %4119
      %v4122 = vsel %vm1381, %v4120, 0
      %4124 = vmatprep.subr.bf16.mxu0 0
      %4125 = vmatpush1.bf16.msra.mxu0 %v4122
      %4126 = vmatprep.subr.bf16.mxu0 0
      %4127 = vmatpush1.bf16.msra.mxu0 0
      %4128 = vmatprep.subr.bf16.mxu0 0
      %4129 = vmatpush1.bf16.msra.mxu0 0
      %4130 = vmatprep.subr.bf16.mxu0 0
      %4131 = vmatpush1.bf16.msra.mxu0 0
      %4132 = vmatprep.subr.bf16.mxu0 0
      %4133 = vmatpush1.bf16.msra.mxu0 0
      %4134 = vmatprep.subr.bf16.mxu0 0
      %4135 = vmatpush1.bf16.msra.mxu0 0
      %4136 = vmatprep.subr.bf16.mxu0 0
      %4137 = vmatpush1.bf16.msra.mxu0 0
      %4138 = vmatprep.subr.bf16.mxu0 0
      %4139 = vmatpush1.bf16.msra.mxu0 0
      %4140 = vmatprep.subr.bf16.mxu0 0
      %4141 = vmatpush1.bf16.msra.mxu0 0
      %4142 = vmatprep.subr.bf16.mxu0 0
      %4143 = vmatpush1.bf16.msra.mxu0 0
      %4144 = vmatprep.subr.bf16.mxu0 0
      %4145 = vmatpush1.bf16.msra.mxu0 0
      %4146 = vmatprep.subr.bf16.mxu0 0
      %4147 = vmatpush1.bf16.msra.mxu0 0
      %4148 = vmatprep.subr.bf16.mxu0 0
      %4149 = vmatpush1.bf16.msra.mxu0 0
      %4150 = vmatprep.subr.bf16.mxu0 0
      %4151 = vmatpush1.bf16.msra.mxu0 0
      %4152 = vmatprep.subr.bf16.mxu0 0
      %4153 = vmatpush1.bf16.msra.mxu0 0
      %4154 = vmatprep.subr.bf16.mxu0 0
      %4155 = vmatpush1.bf16.msra.mxu0 0
      %4156 = vmatprep.mubr.bf16.mxu0 0
      %4157 = vmatmul.mubr.bf16.gmra.mrb[0].mxu0 %v1782
      %v4158 = vpop.f32.mrb[0].mxu0
      %v4159 = vadd.f32 0.0, %v4158
      %v4160 = vpop.f32.mrb[0].mxu0
      %v4161 = vpop.f32.mrb[0].mxu0
      %v4162 = vadd.f32 0.0, %v4161
      %v4163 = vpop.f32.mrb[0].mxu0
      %4164 = vdwg.mxu0
      %v4165 = vadd.f32 %v4112, %v4159
      %v4166 = vadd.f32 %v4113, %v4162
      %v4168 = vunpack.c.l.b16 %v4067
      %v4169 = vpack.c.b16 %v4168, %v4168
      %4170 = vrot.lane.b32.xlu0 %v4169, 127
      %v4171 = vpop.permute.xlu0 %4170
      %v4173 = vsel %vm1381, %v4171, 0
      %4175 = vmatprep.subr.bf16.mxu0 0
      %4176 = vmatpush1.bf16.msra.mxu0 %v4173
      %4177 = vmatprep.subr.bf16.mxu0 0
      %4178 = vmatpush1.bf16.msra.mxu0 0
      %4179 = vmatprep.subr.bf16.mxu0 0
      %4180 = vmatpush1.bf16.msra.mxu0 0
      %4181 = vmatprep.subr.bf16.mxu0 0
      %4182 = vmatpush1.bf16.msra.mxu0 0
      %4183 = vmatprep.subr.bf16.mxu0 0
      %4184 = vmatpush1.bf16.msra.mxu0 0
      %4185 = vmatprep.subr.bf16.mxu0 0
      %4186 = vmatpush1.bf16.msra.mxu0 0
      %4187 = vmatprep.subr.bf16.mxu0 0
      %4188 = vmatpush1.bf16.msra.mxu0 0
      %4189 = vmatprep.subr.bf16.mxu0 0
      %4190 = vmatpush1.bf16.msra.mxu0 0
      %4191 = vmatprep.subr.bf16.mxu0 0
      %4192 = vmatpush1.bf16.msra.mxu0 0
      %4193 = vmatprep.subr.bf16.mxu0 0
      %4194 = vmatpush1.bf16.msra.mxu0 0
      %4195 = vmatprep.subr.bf16.mxu0 0
      %4196 = vmatpush1.bf16.msra.mxu0 0
      %4197 = vmatprep.subr.bf16.mxu0 0
      %4198 = vmatpush1.bf16.msra.mxu0 0
      %4199 = vmatprep.subr.bf16.mxu0 0
      %4200 = vmatpush1.bf16.msra.mxu0 0
      %4201 = vmatprep.subr.bf16.mxu0 0
      %4202 = vmatpush1.bf16.msra.mxu0 0
      %4203 = vmatprep.subr.bf16.mxu0 0
      %4204 = vmatpush1.bf16.msra.mxu0 0
      %4205 = vmatprep.subr.bf16.mxu0 0
      %4206 = vmatpush1.bf16.msra.mxu0 0
      %4207 = vmatprep.mubr.bf16.mxu0 0
      %4208 = vmatmul.mubr.bf16.gmra.mrb[0].mxu0 %v1841
      %v4209 = vpop.f32.mrb[0].mxu0
      %v4210 = vadd.f32 0.0, %v4209
      %v4211 = vpop.f32.mrb[0].mxu0
      %v4212 = vpop.f32.mrb[0].mxu0
      %v4213 = vadd.f32 0.0, %v4212
      %v4214 = vpop.f32.mrb[0].mxu0
      %4215 = vdwg.mxu0
      %v4216 = vadd.f32 %v4165, %v4210
      %v4217 = vadd.f32 %v4166, %v4213
      %v4220 = vcombine.high %v4216, %v4216
      %v4222 = vunpack.c.l.s4 1966171168
      %v4223 = vunpack.c.0.s8 %v4222
      %v4224 = vlaneseq
      %v4225 = vshrl.u32 %v4224, 7
      %v4226 = vsub.s32 %v4223, %v4225
      %v4227 = vrot.slane %v4216, %v4226
      %v4229 = vunpack.c.l.s4 1966171168
      %v4230 = vunpack.c.0.s8 %v4229
      %v4231 = vlaneseq
      %v4232 = vshrl.u32 %v4231, 7
      %v4233 = vsub.s32 %v4230, %v4232
      %v4234 = vrot.slane %v4220, %v4233
      %v4235 = vcombine.high %v4227, %v4227
      %v4236 = vcombine.high %v4234, %v4234
      %v4238 = vunpack.c.l.s4 1966171168
      %v4239 = vunpack.c.0.s8 %v4238
      %v4240 = vlaneseq
      %v4241 = vshrl.u32 %v4240, 7
      %v4242 = vsub.s32 %v4239, %v4241
      %v4243 = vrot.slane %v4227, %v4242
      %v4245 = vunpack.c.l.s4 1966171168
      %v4246 = vunpack.c.0.s8 %v4245
      %v4247 = vlaneseq
      %v4248 = vshrl.u32 %v4247, 7
      %v4249 = vsub.s32 %v4246, %v4248
      %v4250 = vrot.slane %v4234, %v4249
      %v4252 = vunpack.c.l.s4 1966171168
      %v4253 = vunpack.c.0.s8 %v4252
      %v4254 = vlaneseq
      %v4255 = vshrl.u32 %v4254, 7
      %v4256 = vsub.s32 %v4253, %v4255
      %v4257 = vrot.slane %v4235, %v4256
      %v4259 = vunpack.c.l.s4 1966171168
      %v4260 = vunpack.c.0.s8 %v4259
      %v4261 = vlaneseq
      %v4262 = vshrl.u32 %v4261, 7
      %v4263 = vsub.s32 %v4260, %v4262
      %v4264 = vrot.slane %v4236, %v4263
      %v4265 = vcombine.high %v4243, %v4243
      %v4266 = vcombine.high %v4250, %v4250
      %v4267 = vcombine.high %v4257, %v4257
      %v4268 = vcombine.high %v4264, %v4264
      %v4269 = vcombine.high %v4217, %v4217
      %v4271 = vunpack.c.l.s4 1966171168
      %v4272 = vunpack.c.0.s8 %v4271
      %v4273 = vlaneseq
      %v4274 = vshrl.u32 %v4273, 7
      %v4275 = vsub.s32 %v4272, %v4274
      %v4276 = vrot.slane %v4217, %v4275
      %v4278 = vunpack.c.l.s4 1966171168
      %v4279 = vunpack.c.0.s8 %v4278
      %v4280 = vlaneseq
      %v4281 = vshrl.u32 %v4280, 7
      %v4282 = vsub.s32 %v4279, %v4281
      %v4283 = vrot.slane %v4269, %v4282
      %v4284 = vcombine.high %v4276, %v4276
      %v4285 = vcombine.high %v4283, %v4283
      %v4287 = vunpack.c.l.s4 1966171168
      %v4288 = vunpack.c.0.s8 %v4287
      %v4289 = vlaneseq
      %v4290 = vshrl.u32 %v4289, 7
      %v4291 = vsub.s32 %v4288, %v4290
      %v4292 = vrot.slane %v4276, %v4291
      %v4294 = vunpack.c.l.s4 1966171168
      %v4295 = vunpack.c.0.s8 %v4294
      %v4296 = vlaneseq
      %v4297 = vshrl.u32 %v4296, 7
      %v4298 = vsub.s32 %v4295, %v4297
      %v4299 = vrot.slane %v4283, %v4298
      %v4301 = vunpack.c.l.s4 1966171168
      %v4302 = vunpack.c.0.s8 %v4301
      %v4303 = vlaneseq
      %v4304 = vshrl.u32 %v4303, 7
      %v4305 = vsub.s32 %v4302, %v4304
      %v4306 = vrot.slane %v4284, %v4305
      %v4308 = vunpack.c.l.s4 1966171168
      %v4309 = vunpack.c.0.s8 %v4308
      %v4310 = vlaneseq
      %v4311 = vshrl.u32 %v4310, 7
      %v4312 = vsub.s32 %v4309, %v4311
      %v4313 = vrot.slane %v4285, %v4312
      %v4314 = vcombine.high %v4292, %v4292
      %v4315 = vcombine.high %v4299, %v4299
      %v4316 = vcombine.high %v4306, %v4306
      %v4317 = vcombine.high %v4313, %v4313
      %4334 = vst.msk [vmem:[%s231 + $0x4] sm:$0x1] %vm2005, %v4243
      %4335 = vst.msk [vmem:[%s231 + $0xc] sm:$0x1] %vm2005, %v4257
      %4336 = vst.msk [vmem:[%s231 + $0x14] sm:$0x1] %vm2005, %v4265
      %4337 = vst.msk [vmem:[%s231 + $0x1c] sm:$0x1] %vm2005, %v4267
      %4338 = vst.msk [vmem:[%s231 + $0x24] sm:$0x1] %vm2005, %v4250
      %4339 = vst.msk [vmem:[%s231 + $0x2c] sm:$0x1] %vm2005, %v4264
      %4340 = vst.msk [vmem:[%s231 + $0x34] sm:$0x1] %vm2005, %v4266
      %4341 = vst.msk [vmem:[%s231 + $0x3c] sm:$0x1] %vm2005, %v4268
      %4342 = vst.msk [vmem:[%s231 + $0x44] sm:$0x1] %vm2005, %v4292
      %4343 = vst.msk [vmem:[%s231 + $0x4c] sm:$0x1] %vm2005, %v4306
      %4344 = vst.msk [vmem:[%s231 + $0x54] sm:$0x1] %vm2005, %v4314
      %4345 = vst.msk [vmem:[%s231 + $0x5c] sm:$0x1] %vm2005, %v4316
      %4346 = vst.msk [vmem:[%s231 + $0x64] sm:$0x1] %vm2005, %v4299
      %4347 = vst.msk [vmem:[%s231 + $0x6c] sm:$0x1] %vm2005, %v4313
      %4348 = vst.msk [vmem:[%s231 + $0x74] sm:$0x1] %vm2005, %v4315
      %4349 = vst.msk [vmem:[%s231 + $0x7c] sm:$0x1] %vm2005, %v4317
      %v4350 = vld [vmem:[%s4066] sm:$0xf]
      %v4351 = vld [vmem:[%s4114] sm:$0xf]
      %v4353 = vunpack.c.l.b16 %v4351
      %v4354 = vpack.c.b16 %v4353, %v4353
      %4355 = vrot.lane.b32.xlu0 %v4354, 127
      %v4356 = vpop.permute.xlu0 %4355
      %v4358 = vsel %vm1381, %v4356, 0
      %4360 = vmatprep.subr.bf16.mxu0 0
      %4361 = vmatpush1.bf16.msra.mxu0 %v4358
      %4362 = vmatprep.subr.bf16.mxu0 0
      %4363 = vmatpush1.bf16.msra.mxu0 0
      %4364 = vmatprep.subr.bf16.mxu0 0
      %4365 = vmatpush1.bf16.msra.mxu0 0
      %4366 = vmatprep.subr.bf16.mxu0 0
      %4367 = vmatpush1.bf16.msra.mxu0 0
      %4368 = vmatprep.subr.bf16.mxu0 0
      %4369 = vmatpush1.bf16.msra.mxu0 0
      %4370 = vmatprep.subr.bf16.mxu0 0
      %4371 = vmatpush1.bf16.msra.mxu0 0
      %4372 = vmatprep.subr.bf16.mxu0 0
      %4373 = vmatpush1.bf16.msra.mxu0 0
      %4374 = vmatprep.subr.bf16.mxu0 0
      %4375 = vmatpush1.bf16.msra.mxu0 0
      %4376 = vmatprep.subr.bf16.mxu0 0
      %4377 = vmatpush1.bf16.msra.mxu0 0
      %4378 = vmatprep.subr.bf16.mxu0 0
      %4379 = vmatpush1.bf16.msra.mxu0 0
      %4380 = vmatprep.subr.bf16.mxu0 0
      %4381 = vmatpush1.bf16.msra.mxu0 0
      %4382 = vmatprep.subr.bf16.mxu0 0
      %4383 = vmatpush1.bf16.msra.mxu0 0
      %4384 = vmatprep.subr.bf16.mxu0 0
      %4385 = vmatpush1.bf16.msra.mxu0 0
      %4386 = vmatprep.subr.bf16.mxu0 0
      %4387 = vmatpush1.bf16.msra.mxu0 0
      %4388 = vmatprep.subr.bf16.mxu0 0
      %4389 = vmatpush1.bf16.msra.mxu0 0
      %4390 = vmatprep.subr.bf16.mxu0 0
      %4391 = vmatpush1.bf16.msra.mxu0 0
      %4392 = vmatprep.mubr.bf16.mxu0 0
      %4393 = vmatmul.mubr.bf16.gmra.mrb[0].mxu0 %v1379
      %v4394 = vpop.f32.mrb[0].mxu0
      %v4395 = vadd.f32 0.0, %v4394
      %v4396 = vpop.f32.mrb[0].mxu0
      %v4397 = vpop.f32.mrb[0].mxu0
      %v4398 = vadd.f32 0.0, %v4397
      %v4399 = vpop.f32.mrb[0].mxu0
      %4400 = vdwg.mxu0
      %v4402 = vsel %vm1381, %v4350, 0
      %4404 = vmatprep.subr.bf16.mxu0 0
      %4405 = vmatpush1.bf16.msra.mxu0 %v4402
      %4406 = vmatprep.subr.bf16.mxu0 0
      %4407 = vmatpush1.bf16.msra.mxu0 0
      %4408 = vmatprep.subr.bf16.mxu0 0
      %4409 = vmatpush1.bf16.msra.mxu0 0
      %4410 = vmatprep.subr.bf16.mxu0 0
      %4411 = vmatpush1.bf16.msra.mxu0 0
      %4412 = vmatprep.subr.bf16.mxu0 0
      %4413 = vmatpush1.bf16.msra.mxu0 0
      %4414 = vmatprep.subr.bf16.mxu0 0
      %4415 = vmatpush1.bf16.msra.mxu0 0
      %4416 = vmatprep.subr.bf16.mxu0 0
      %4417 = vmatpush1.bf16.msra.mxu0 0
      %4418 = vmatprep.subr.bf16.mxu0 0
      %4419 = vmatpush1.bf16.msra.mxu0 0
      %4420 = vmatprep.subr.bf16.mxu0 0
      %4421 = vmatpush1.bf16.msra.mxu0 0
      %4422 = vmatprep.subr.bf16.mxu0 0
      %4423 = vmatpush1.bf16.msra.mxu0 0
      %4424 = vmatprep.subr.bf16.mxu0 0
      %4425 = vmatpush1.bf16.msra.mxu0 0
      %4426 = vmatprep.subr.bf16.mxu0 0
      %4427 = vmatpush1.bf16.msra.mxu0 0
      %4428 = vmatprep.subr.bf16.mxu0 0
      %4429 = vmatpush1.bf16.msra.mxu0 0
      %4430 = vmatprep.subr.bf16.mxu0 0
      %4431 = vmatpush1.bf16.msra.mxu0 0
      %4432 = vmatprep.subr.bf16.mxu0 0
      %4433 = vmatpush1.bf16.msra.mxu0 0
      %4434 = vmatprep.subr.bf16.mxu0 0
      %4435 = vmatpush1.bf16.msra.mxu0 0
      %4436 = vmatprep.mubr.bf16.mxu0 0
      %4437 = vmatmul.mubr.bf16.gmra.mrb[0].mxu0 %v1432
      %v4438 = vpop.f32.mrb[0].mxu0
      %v4439 = vadd.f32 %v4395, %v4438
      %v4440 = vpop.f32.mrb[0].mxu0
      %v4441 = vpop.f32.mrb[0].mxu0
      %v4442 = vadd.f32 %v4398, %v4441
      %v4443 = vpop.f32.mrb[0].mxu0
      %4444 = vdwg.mxu0
      %v4446 = vunpack.c.l.b16 %v4350
      %v4447 = vpack.c.b16 %v4446, %v4446
      %4448 = vrot.lane.b32.xlu0 %v4447, 127
      %v4449 = vpop.permute.xlu0 %4448
      %v4451 = vsel %vm1381, %v4449, 0
      %4453 = vmatprep.subr.bf16.mxu0 0
      %4454 = vmatpush1.bf16.msra.mxu0 %v4451
      %4455 = vmatprep.subr.bf16.mxu0 0
      %4456 = vmatpush1.bf16.msra.mxu0 0
      %4457 = vmatprep.subr.bf16.mxu0 0
      %4458 = vmatpush1.bf16.msra.mxu0 0
      %4459 = vmatprep.subr.bf16.mxu0 0
      %4460 = vmatpush1.bf16.msra.mxu0 0
      %4461 = vmatprep.subr.bf16.mxu0 0
      %4462 = vmatpush1.bf16.msra.mxu0 0
      %4463 = vmatprep.subr.bf16.mxu0 0
      %4464 = vmatpush1.bf16.msra.mxu0 0
      %4465 = vmatprep.subr.bf16.mxu0 0
      %4466 = vmatpush1.bf16.msra.mxu0 0
      %4467 = vmatprep.subr.bf16.mxu0 0
      %4468 = vmatpush1.bf16.msra.mxu0 0
      %4469 = vmatprep.subr.bf16.mxu0 0
      %4470 = vmatpush1.bf16.msra.mxu0 0
      %4471 = vmatprep.subr.bf16.mxu0 0
      %4472 = vmatpush1.bf16.msra.mxu0 0
      %4473 = vmatprep.subr.bf16.mxu0 0
      %4474 = vmatpush1.bf16.msra.mxu0 0
      %4475 = vmatprep.subr.bf16.mxu0 0
      %4476 = vmatpush1.bf16.msra.mxu0 0
      %4477 = vmatprep.subr.bf16.mxu0 0
      %4478 = vmatpush1.bf16.msra.mxu0 0
      %4479 = vmatprep.subr.bf16.mxu0 0
      %4480 = vmatpush1.bf16.msra.mxu0 0
      %4481 = vmatprep.subr.bf16.mxu0 0
      %4482 = vmatpush1.bf16.msra.mxu0 0
      %4483 = vmatprep.subr.bf16.mxu0 0
      %4484 = vmatpush1.bf16.msra.mxu0 0
      %4485 = vmatprep.mubr.bf16.mxu0 0
      %4486 = vmatmul.mubr.bf16.gmra.mrb[0].mxu0 %v1489
      %v4487 = vpop.f32.mrb[0].mxu0
      %v4488 = vadd.f32 0.0, %v4487
      %v4489 = vpop.f32.mrb[0].mxu0
      %v4490 = vpop.f32.mrb[0].mxu0
      %v4491 = vadd.f32 0.0, %v4490
      %v4492 = vpop.f32.mrb[0].mxu0
      %4493 = vdwg.mxu0
      %v4494 = vadd.f32 %v4439, %v4488
      %v4495 = vadd.f32 %v4442, %v4491
      %s4496 = scalar_lea.vmem [#allocation2], 60
      %v4497 = vld [vmem:[%s4496] sm:$0xf]
      %v4499 = vsel %vm1381, %v4497, 0
      %4501 = vmatprep.subr.bf16.mxu0 0
      %4502 = vmatpush1.bf16.msra.mxu0 %v4499
      %4503 = vmatprep.subr.bf16.mxu0 0
      %4504 = vmatpush1.bf16.msra.mxu0 0
      %4505 = vmatprep.subr.bf16.mxu0 0
      %4506 = vmatpush1.bf16.msra.mxu0 0
      %4507 = vmatprep.subr.bf16.mxu0 0
      %4508 = vmatpush1.bf16.msra.mxu0 0
      %4509 = vmatprep.subr.bf16.mxu0 0
      %4510 = vmatpush1.bf16.msra.mxu0 0
      %4511 = vmatprep.subr.bf16.mxu0 0
      %4512 = vmatpush1.bf16.msra.mxu0 0
      %4513 = vmatprep.subr.bf16.mxu0 0
      %4514 = vmatpush1.bf16.msra.mxu0 0
      %4515 = vmatprep.subr.bf16.mxu0 0
      %4516 = vmatpush1.bf16.msra.mxu0 0
      %4517 = vmatprep.subr.bf16.mxu0 0
      %4518 = vmatpush1.bf16.msra.mxu0 0
      %4519 = vmatprep.subr.bf16.mxu0 0
      %4520 = vmatpush1.bf16.msra.mxu0 0
      %4521 = vmatprep.subr.bf16.mxu0 0
      %4522 = vmatpush1.bf16.msra.mxu0 0
      %4523 = vmatprep.subr.bf16.mxu0 0
      %4524 = vmatpush1.bf16.msra.mxu0 0
      %4525 = vmatprep.subr.bf16.mxu0 0
      %4526 = vmatpush1.bf16.msra.mxu0 0
      %4527 = vmatprep.subr.bf16.mxu0 0
      %4528 = vmatpush1.bf16.msra.mxu0 0
      %4529 = vmatprep.subr.bf16.mxu0 0
      %4530 = vmatpush1.bf16.msra.mxu0 0
      %4531 = vmatprep.subr.bf16.mxu0 0
      %4532 = vmatpush1.bf16.msra.mxu0 0
      %4533 = vmatprep.mubr.bf16.mxu0 0
      %4534 = vmatmul.mubr.bf16.gmra.mrb[0].mxu0 %v1545
      %v4535 = vpop.f32.mrb[0].mxu0
      %v4536 = vadd.f32 0.0, %v4535
      %v4537 = vpop.f32.mrb[0].mxu0
      %v4538 = vpop.f32.mrb[0].mxu0
      %v4539 = vadd.f32 0.0, %v4538
      %v4540 = vpop.f32.mrb[0].mxu0
      %4541 = vdwg.mxu0
      %v4542 = vadd.f32 %v4494, %v4536
      %v4543 = vadd.f32 %v4495, %v4539
      %s4544 = scalar_lea.vmem [#allocation2], 24
      %v4545 = vld [vmem:[%s4544] sm:$0xf]
      %v4547 = vunpack.c.l.b16 %v4545
      %v4548 = vpack.c.b16 %v4547, %v4547
      %4549 = vrot.lane.b32.xlu0 %v4548, 127
      %v4550 = vpop.permute.xlu0 %4549
      %v4552 = vsel %vm1381, %v4550, 0
      %4554 = vmatprep.subr.bf16.mxu0 0
      %4555 = vmatpush1.bf16.msra.mxu0 %v4552
      %4556 = vmatprep.subr.bf16.mxu0 0
      %4557 = vmatpush1.bf16.msra.mxu0 0
      %4558 = vmatprep.subr.bf16.mxu0 0
      %4559 = vmatpush1.bf16.msra.mxu0 0
      %4560 = vmatprep.subr.bf16.mxu0 0
      %4561 = vmatpush1.bf16.msra.mxu0 0
      %4562 = vmatprep.subr.bf16.mxu0 0
      %4563 = vmatpush1.bf16.msra.mxu0 0
      %4564 = vmatprep.subr.bf16.mxu0 0
      %4565 = vmatpush1.bf16.msra.mxu0 0
      %4566 = vmatprep.subr.bf16.mxu0 0
      %4567 = vmatpush1.bf16.msra.mxu0 0
      %4568 = vmatprep.subr.bf16.mxu0 0
      %4569 = vmatpush1.bf16.msra.mxu0 0
      %4570 = vmatprep.subr.bf16.mxu0 0
      %4571 = vmatpush1.bf16.msra.mxu0 0
      %4572 = vmatprep.subr.bf16.mxu0 0
      %4573 = vmatpush1.bf16.msra.mxu0 0
      %4574 = vmatprep.subr.bf16.mxu0 0
      %4575 = vmatpush1.bf16.msra.mxu0 0
      %4576 = vmatprep.subr.bf16.mxu0 0
      %4577 = vmatpush1.bf16.msra.mxu0 0
      %4578 = vmatprep.subr.bf16.mxu0 0
      %4579 = vmatpush1.bf16.msra.mxu0 0
      %4580 = vmatprep.subr.bf16.mxu0 0
      %4581 = vmatpush1.bf16.msra.mxu0 0
      %4582 = vmatprep.subr.bf16.mxu0 0
      %4583 = vmatpush1.bf16.msra.mxu0 0
      %4584 = vmatprep.subr.bf16.mxu0 0
      %4585 = vmatpush1.bf16.msra.mxu0 0
      %4586 = vmatprep.mubr.bf16.mxu0 0
      %4587 = vmatmul.mubr.bf16.gmra.mrb[0].mxu0 %v1606
      %v4588 = vpop.f32.mrb[0].mxu0
      %v4589 = vadd.f32 0.0, %v4588
      %v4590 = vpop.f32.mrb[0].mxu0
      %v4591 = vpop.f32.mrb[0].mxu0
      %v4592 = vadd.f32 0.0, %v4591
      %v4593 = vpop.f32.mrb[0].mxu0
      %4594 = vdwg.mxu0
      %v4595 = vadd.f32 %v4542, %v4589
      %v4596 = vadd.f32 %v4543, %v4592
      %v4598 = vunpack.c.l.b16 %v4497
      %v4599 = vpack.c.b16 %v4598, %v4598
      %4600 = vrot.lane.b32.xlu0 %v4599, 127
      %v4601 = vpop.permute.xlu0 %4600
      %v4603 = vsel %vm1381, %v4601, 0
      %4605 = vmatprep.subr.bf16.mxu0 0
      %4606 = vmatpush1.bf16.msra.mxu0 %v4603
      %4607 = vmatprep.subr.bf16.mxu0 0
      %4608 = vmatpush1.bf16.msra.mxu0 0
      %4609 = vmatprep.subr.bf16.mxu0 0
      %4610 = vmatpush1.bf16.msra.mxu0 0
      %4611 = vmatprep.subr.bf16.mxu0 0
      %4612 = vmatpush1.bf16.msra.mxu0 0
      %4613 = vmatprep.subr.bf16.mxu0 0
      %4614 = vmatpush1.bf16.msra.mxu0 0
      %4615 = vmatprep.subr.bf16.mxu0 0
      %4616 = vmatpush1.bf16.msra.mxu0 0
      %4617 = vmatprep.subr.bf16.mxu0 0
      %4618 = vmatpush1.bf16.msra.mxu0 0
      %4619 = vmatprep.subr.bf16.mxu0 0
      %4620 = vmatpush1.bf16.msra.mxu0 0
      %4621 = vmatprep.subr.bf16.mxu0 0
      %4622 = vmatpush1.bf16.msra.mxu0 0
      %4623 = vmatprep.subr.bf16.mxu0 0
      %4624 = vmatpush1.bf16.msra.mxu0 0
      %4625 = vmatprep.subr.bf16.mxu0 0
      %4626 = vmatpush1.bf16.msra.mxu0 0
      %4627 = vmatprep.subr.bf16.mxu0 0
      %4628 = vmatpush1.bf16.msra.mxu0 0
      %4629 = vmatprep.subr.bf16.mxu0 0
      %4630 = vmatpush1.bf16.msra.mxu0 0
      %4631 = vmatprep.subr.bf16.mxu0 0
      %4632 = vmatpush1.bf16.msra.mxu0 0
      %4633 = vmatprep.subr.bf16.mxu0 0
      %4634 = vmatpush1.bf16.msra.mxu0 0
      %4635 = vmatprep.subr.bf16.mxu0 0
      %4636 = vmatpush1.bf16.msra.mxu0 0
      %4637 = vmatprep.mubr.bf16.mxu0 0
      %4638 = vmatmul.mubr.bf16.gmra.mrb[0].mxu0 %v1665
      %v4639 = vpop.f32.mrb[0].mxu0
      %v4640 = vadd.f32 0.0, %v4639
      %v4641 = vpop.f32.mrb[0].mxu0
      %v4642 = vpop.f32.mrb[0].mxu0
      %v4643 = vadd.f32 0.0, %v4642
      %v4644 = vpop.f32.mrb[0].mxu0
      %4645 = vdwg.mxu0
      %v4646 = vadd.f32 %v4595, %v4640
      %v4647 = vadd.f32 %v4596, %v4643
      %s4648 = scalar_lea.vmem [#allocation2], 132
      %v4649 = vld [vmem:[%s4648] sm:$0xf]
      %v4651 = vsel %vm1381, %v4649, 0
      %4653 = vmatprep.subr.bf16.mxu0 0
      %4654 = vmatpush1.bf16.msra.mxu0 %v4651
      %4655 = vmatprep.subr.bf16.mxu0 0
      %4656 = vmatpush1.bf16.msra.mxu0 0
      %4657 = vmatprep.subr.bf16.mxu0 0
      %4658 = vmatpush1.bf16.msra.mxu0 0
      %4659 = vmatprep.subr.bf16.mxu0 0
      %4660 = vmatpush1.bf16.msra.mxu0 0
      %4661 = vmatprep.subr.bf16.mxu0 0
      %4662 = vmatpush1.bf16.msra.mxu0 0
      %4663 = vmatprep.subr.bf16.mxu0 0
      %4664 = vmatpush1.bf16.msra.mxu0 0
      %4665 = vmatprep.subr.bf16.mxu0 0
      %4666 = vmatpush1.bf16.msra.mxu0 0
      %4667 = vmatprep.subr.bf16.mxu0 0
      %4668 = vmatpush1.bf16.msra.mxu0 0
      %4669 = vmatprep.subr.bf16.mxu0 0
      %4670 = vmatpush1.bf16.msra.mxu0 0
      %4671 = vmatprep.subr.bf16.mxu0 0
      %4672 = vmatpush1.bf16.msra.mxu0 0
      %4673 = vmatprep.subr.bf16.mxu0 0
      %4674 = vmatpush1.bf16.msra.mxu0 0
      %4675 = vmatprep.subr.bf16.mxu0 0
      %4676 = vmatpush1.bf16.msra.mxu0 0
      %4677 = vmatprep.subr.bf16.mxu0 0
      %4678 = vmatpush1.bf16.msra.mxu0 0
      %4679 = vmatprep.subr.bf16.mxu0 0
      %4680 = vmatpush1.bf16.msra.mxu0 0
      %4681 = vmatprep.subr.bf16.mxu0 0
      %4682 = vmatpush1.bf16.msra.mxu0 0
      %4683 = vmatprep.subr.bf16.mxu0 0
      %4684 = vmatpush1.bf16.msra.mxu0 0
      %4685 = vmatprep.mubr.bf16.mxu0 0
      %4686 = vmatmul.mubr.bf16.gmra.mrb[0].mxu0 %v1721
      %v4687 = vpop.f32.mrb[0].mxu0
      %v4688 = vadd.f32 0.0, %v4687
      %v4689 = vpop.f32.mrb[0].mxu0
      %v4690 = vpop.f32.mrb[0].mxu0
      %v4691 = vadd.f32 0.0, %v4690
      %v4692 = vpop.f32.mrb[0].mxu0
      %4693 = vdwg.mxu0
      %v4694 = vadd.f32 %v4646, %v4688
      %v4695 = vadd.f32 %v4647, %v4691
      %s4696 = scalar_lea.vmem [#allocation2], 96
      %v4697 = vld [vmem:[%s4696] sm:$0xf]
      %v4699 = vunpack.c.l.b16 %v4697
      %v4700 = vpack.c.b16 %v4699, %v4699
      %4701 = vrot.lane.b32.xlu0 %v4700, 127
      %v4702 = vpop.permute.xlu0 %4701
      %v4704 = vsel %vm1381, %v4702, 0
      %4706 = vmatprep.subr.bf16.mxu0 0
      %4707 = vmatpush1.bf16.msra.mxu0 %v4704
      %4708 = vmatprep.subr.bf16.mxu0 0
      %4709 = vmatpush1.bf16.msra.mxu0 0
      %4710 = vmatprep.subr.bf16.mxu0 0
      %4711 = vmatpush1.bf16.msra.mxu0 0
      %4712 = vmatprep.subr.bf16.mxu0 0
      %4713 = vmatpush1.bf16.msra.mxu0 0
      %4714 = vmatprep.subr.bf16.mxu0 0
      %4715 = vmatpush1.bf16.msra.mxu0 0
      %4716 = vmatprep.subr.bf16.mxu0 0
      %4717 = vmatpush1.bf16.msra.mxu0 0
      %4718 = vmatprep.subr.bf16.mxu0 0
      %4719 = vmatpush1.bf16.msra.mxu0 0
      %4720 = vmatprep.subr.bf16.mxu0 0
      %4721 = vmatpush1.bf16.msra.mxu0 0
      %4722 = vmatprep.subr.bf16.mxu0 0
      %4723 = vmatpush1.bf16.msra.mxu0 0
      %4724 = vmatprep.subr.bf16.mxu0 0
      %4725 = vmatpush1.bf16.msra.mxu0 0
      %4726 = vmatprep.subr.bf16.mxu0 0
      %4727 = vmatpush1.bf16.msra.mxu0 0
      %4728 = vmatprep.subr.bf16.mxu0 0
      %4729 = vmatpush1.bf16.msra.mxu0 0
      %4730 = vmatprep.subr.bf16.mxu0 0
      %4731 = vmatpush1.bf16.msra.mxu0 0
      %4732 = vmatprep.subr.bf16.mxu0 0
      %4733 = vmatpush1.bf16.msra.mxu0 0
      %4734 = vmatprep.subr.bf16.mxu0 0
      %4735 = vmatpush1.bf16.msra.mxu0 0
      %4736 = vmatprep.subr.bf16.mxu0 0
      %4737 = vmatpush1.bf16.msra.mxu0 0
      %4738 = vmatprep.mubr.bf16.mxu0 0
      %4739 = vmatmul.mubr.bf16.gmra.mrb[0].mxu0 %v1782
      %v4740 = vpop.f32.mrb[0].mxu0
      %v4741 = vadd.f32 0.0, %v4740
      %v4742 = vpop.f32.mrb[0].mxu0
      %v4743 = vpop.f32.mrb[0].mxu0
      %v4744 = vadd.f32 0.0, %v4743
      %v4745 = vpop.f32.mrb[0].mxu0
      %4746 = vdwg.mxu0
      %v4747 = vadd.f32 %v4694, %v4741
      %v4748 = vadd.f32 %v4695, %v4744
      %v4750 = vunpack.c.l.b16 %v4649
      %v4751 = vpack.c.b16 %v4750, %v4750
      %4752 = vrot.lane.b32.xlu0 %v4751, 127
      %v4753 = vpop.permute.xlu0 %4752
      %v4755 = vsel %vm1381, %v4753, 0
      %4757 = vmatprep.subr.bf16.mxu0 0
      %4758 = vmatpush1.bf16.msra.mxu0 %v4755
      %4759 = vmatprep.subr.bf16.mxu0 0
      %4760 = vmatpush1.bf16.msra.mxu0 0
      %4761 = vmatprep.subr.bf16.mxu0 0
      %4762 = vmatpush1.bf16.msra.mxu0 0
      %4763 = vmatprep.subr.bf16.mxu0 0
      %4764 = vmatpush1.bf16.msra.mxu0 0
      %4765 = vmatprep.subr.bf16.mxu0 0
      %4766 = vmatpush1.bf16.msra.mxu0 0
      %4767 = vmatprep.subr.bf16.mxu0 0
      %4768 = vmatpush1.bf16.msra.mxu0 0
      %4769 = vmatprep.subr.bf16.mxu0 0
      %4770 = vmatpush1.bf16.msra.mxu0 0
      %4771 = vmatprep.subr.bf16.mxu0 0
      %4772 = vmatpush1.bf16.msra.mxu0 0
      %4773 = vmatprep.subr.bf16.mxu0 0
      %4774 = vmatpush1.bf16.msra.mxu0 0
      %4775 = vmatprep.subr.bf16.mxu0 0
      %4776 = vmatpush1.bf16.msra.mxu0 0
      %4777 = vmatprep.subr.bf16.mxu0 0
      %4778 = vmatpush1.bf16.msra.mxu0 0
      %4779 = vmatprep.subr.bf16.mxu0 0
      %4780 = vmatpush1.bf16.msra.mxu0 0
      %4781 = vmatprep.subr.bf16.mxu0 0
      %4782 = vmatpush1.bf16.msra.mxu0 0
      %4783 = vmatprep.subr.bf16.mxu0 0
      %4784 = vmatpush1.bf16.msra.mxu0 0
      %4785 = vmatprep.subr.bf16.mxu0 0
      %4786 = vmatpush1.bf16.msra.mxu0 0
      %4787 = vmatprep.subr.bf16.mxu0 0
      %4788 = vmatpush1.bf16.msra.mxu0 0
      %4789 = vmatprep.mubr.bf16.mxu0 0
      %4790 = vmatmul.mubr.bf16.gmra.mrb[0].mxu0 %v1841
      %v4791 = vpop.f32.mrb[0].mxu0
      %v4792 = vadd.f32 0.0, %v4791
      %v4793 = vpop.f32.mrb[0].mxu0
      %v4794 = vpop.f32.mrb[0].mxu0
      %v4795 = vadd.f32 0.0, %v4794
      %v4796 = vpop.f32.mrb[0].mxu0
      %4797 = vdwg.mxu0
      %v4798 = vadd.f32 %v4747, %v4792
      %v4799 = vadd.f32 %v4748, %v4795
      %v4802 = vcombine.high %v4798, %v4798
      %v4804 = vunpack.c.l.s4 1966171168
      %v4805 = vunpack.c.0.s8 %v4804
      %v4806 = vlaneseq
      %v4807 = vshrl.u32 %v4806, 7
      %v4808 = vsub.s32 %v4805, %v4807
      %v4809 = vrot.slane %v4798, %v4808
      %v4811 = vunpack.c.l.s4 1966171168
      %v4812 = vunpack.c.0.s8 %v4811
      %v4813 = vlaneseq
      %v4814 = vshrl.u32 %v4813, 7
      %v4815 = vsub.s32 %v4812, %v4814
      %v4816 = vrot.slane %v4802, %v4815
      %v4817 = vcombine.high %v4809, %v4809
      %v4818 = vcombine.high %v4816, %v4816
      %v4820 = vunpack.c.l.s4 1966171168
      %v4821 = vunpack.c.0.s8 %v4820
      %v4822 = vlaneseq
      %v4823 = vshrl.u32 %v4822, 7
      %v4824 = vsub.s32 %v4821, %v4823
      %v4825 = vrot.slane %v4809, %v4824
      %v4827 = vunpack.c.l.s4 1966171168
      %v4828 = vunpack.c.0.s8 %v4827
      %v4829 = vlaneseq
      %v4830 = vshrl.u32 %v4829, 7
      %v4831 = vsub.s32 %v4828, %v4830
      %v4832 = vrot.slane %v4816, %v4831
      %v4834 = vunpack.c.l.s4 1966171168
      %v4835 = vunpack.c.0.s8 %v4834
      %v4836 = vlaneseq
      %v4837 = vshrl.u32 %v4836, 7
      %v4838 = vsub.s32 %v4835, %v4837
      %v4839 = vrot.slane %v4817, %v4838
      %v4841 = vunpack.c.l.s4 1966171168
      %v4842 = vunpack.c.0.s8 %v4841
      %v4843 = vlaneseq
      %v4844 = vshrl.u32 %v4843, 7
      %v4845 = vsub.s32 %v4842, %v4844
      %v4846 = vrot.slane %v4818, %v4845
      %v4847 = vcombine.high %v4825, %v4825
      %v4848 = vcombine.high %v4832, %v4832
      %v4849 = vcombine.high %v4839, %v4839
      %v4850 = vcombine.high %v4846, %v4846
      %v4851 = vcombine.high %v4799, %v4799
      %v4853 = vunpack.c.l.s4 1966171168
      %v4854 = vunpack.c.0.s8 %v4853
      %v4855 = vlaneseq
      %v4856 = vshrl.u32 %v4855, 7
      %v4857 = vsub.s32 %v4854, %v4856
      %v4858 = vrot.slane %v4799, %v4857
      %v4860 = vunpack.c.l.s4 1966171168
      %v4861 = vunpack.c.0.s8 %v4860
      %v4862 = vlaneseq
      %v4863 = vshrl.u32 %v4862, 7
      %v4864 = vsub.s32 %v4861, %v4863
      %v4865 = vrot.slane %v4851, %v4864
      %v4866 = vcombine.high %v4858, %v4858
      %v4867 = vcombine.high %v4865, %v4865
      %v4869 = vunpack.c.l.s4 1966171168
      %v4870 = vunpack.c.0.s8 %v4869
      %v4871 = vlaneseq
      %v4872 = vshrl.u32 %v4871, 7
      %v4873 = vsub.s32 %v4870, %v4872
      %v4874 = vrot.slane %v4858, %v4873
      %v4876 = vunpack.c.l.s4 1966171168
      %v4877 = vunpack.c.0.s8 %v4876
      %v4878 = vlaneseq
      %v4879 = vshrl.u32 %v4878, 7
      %v4880 = vsub.s32 %v4877, %v4879
      %v4881 = vrot.slane %v4865, %v4880
      %v4883 = vunpack.c.l.s4 1966171168
      %v4884 = vunpack.c.0.s8 %v4883
      %v4885 = vlaneseq
      %v4886 = vshrl.u32 %v4885, 7
      %v4887 = vsub.s32 %v4884, %v4886
      %v4888 = vrot.slane %v4866, %v4887
      %v4890 = vunpack.c.l.s4 1966171168
      %v4891 = vunpack.c.0.s8 %v4890
      %v4892 = vlaneseq
      %v4893 = vshrl.u32 %v4892, 7
      %v4894 = vsub.s32 %v4891, %v4893
      %v4895 = vrot.slane %v4867, %v4894
      %v4896 = vcombine.high %v4874, %v4874
      %v4897 = vcombine.high %v4881, %v4881
      %v4898 = vcombine.high %v4888, %v4888
      %v4899 = vcombine.high %v4895, %v4895
      %4916 = vst.msk [vmem:[%s231 + $0x5] sm:$0x1] %vm2005, %v4825
      %4917 = vst.msk [vmem:[%s231 + $0xd] sm:$0x1] %vm2005, %v4839
      %4918 = vst.msk [vmem:[%s231 + $0x15] sm:$0x1] %vm2005, %v4847
      %4919 = vst.msk [vmem:[%s231 + $0x1d] sm:$0x1] %vm2005, %v4849
      %4920 = vst.msk [vmem:[%s231 + $0x25] sm:$0x1] %vm2005, %v4832
      %4921 = vst.msk [vmem:[%s231 + $0x2d] sm:$0x1] %vm2005, %v4846
      %4922 = vst.msk [vmem:[%s231 + $0x35] sm:$0x1] %vm2005, %v4848
      %4923 = vst.msk [vmem:[%s231 + $0x3d] sm:$0x1] %vm2005, %v4850
      %4924 = vst.msk [vmem:[%s231 + $0x45] sm:$0x1] %vm2005, %v4874
      %4925 = vst.msk [vmem:[%s231 + $0x4d] sm:$0x1] %vm2005, %v4888
      %4926 = vst.msk [vmem:[%s231 + $0x55] sm:$0x1] %vm2005, %v4896
      %4927 = vst.msk [vmem:[%s231 + $0x5d] sm:$0x1] %vm2005, %v4898
      %4928 = vst.msk [vmem:[%s231 + $0x65] sm:$0x1] %vm2005, %v4881
      %4929 = vst.msk [vmem:[%s231 + $0x6d] sm:$0x1] %vm2005, %v4895
      %4930 = vst.msk [vmem:[%s231 + $0x75] sm:$0x1] %vm2005, %v4897
      %4931 = vst.msk [vmem:[%s231 + $0x7d] sm:$0x1] %vm2005, %v4899
      %v4932 = vld [vmem:[%s4648] sm:$0xf]
      %v4933 = vld [vmem:[%s4696] sm:$0xf]
      %v4935 = vunpack.c.l.b16 %v4933
      %v4936 = vpack.c.b16 %v4935, %v4935
      %4937 = vrot.lane.b32.xlu0 %v4936, 127
      %v4938 = vpop.permute.xlu0 %4937
      %v4940 = vsel %vm1381, %v4938, 0
      %4942 = vmatprep.subr.bf16.mxu0 0
      %4943 = vmatpush1.bf16.msra.mxu0 %v4940
      %4944 = vmatprep.subr.bf16.mxu0 0
      %4945 = vmatpush1.bf16.msra.mxu0 0
      %4946 = vmatprep.subr.bf16.mxu0 0
      %4947 = vmatpush1.bf16.msra.mxu0 0
      %4948 = vmatprep.subr.bf16.mxu0 0
      %4949 = vmatpush1.bf16.msra.mxu0 0
      %4950 = vmatprep.subr.bf16.mxu0 0
      %4951 = vmatpush1.bf16.msra.mxu0 0
      %4952 = vmatprep.subr.bf16.mxu0 0
      %4953 = vmatpush1.bf16.msra.mxu0 0
      %4954 = vmatprep.subr.bf16.mxu0 0
      %4955 = vmatpush1.bf16.msra.mxu0 0
      %4956 = vmatprep.subr.bf16.mxu0 0
      %4957 = vmatpush1.bf16.msra.mxu0 0
      %4958 = vmatprep.subr.bf16.mxu0 0
      %4959 = vmatpush1.bf16.msra.mxu0 0
      %4960 = vmatprep.subr.bf16.mxu0 0
      %4961 = vmatpush1.bf16.msra.mxu0 0
      %4962 = vmatprep.subr.bf16.mxu0 0
      %4963 = vmatpush1.bf16.msra.mxu0 0
      %4964 = vmatprep.subr.bf16.mxu0 0
      %4965 = vmatpush1.bf16.msra.mxu0 0
      %4966 = vmatprep.subr.bf16.mxu0 0
      %4967 = vmatpush1.bf16.msra.mxu0 0
      %4968 = vmatprep.subr.bf16.mxu0 0
      %4969 = vmatpush1.bf16.msra.mxu0 0
      %4970 = vmatprep.subr.bf16.mxu0 0
      %4971 = vmatpush1.bf16.msra.mxu0 0
      %4972 = vmatprep.subr.bf16.mxu0 0
      %4973 = vmatpush1.bf16.msra.mxu0 0
      %4974 = vmatprep.mubr.bf16.mxu0 0
      %4975 = vmatmul.mubr.bf16.gmra.mrb[0].mxu0 %v1379
      %v4976 = vpop.f32.mrb[0].mxu0
      %v4977 = vadd.f32 0.0, %v4976
      %v4978 = vpop.f32.mrb[0].mxu0
      %v4979 = vpop.f32.mrb[0].mxu0
      %v4980 = vadd.f32 0.0, %v4979
      %v4981 = vpop.f32.mrb[0].mxu0
      %4982 = vdwg.mxu0
      %v4984 = vsel %vm1381, %v4932, 0
      %4986 = vmatprep.subr.bf16.mxu0 0
      %4987 = vmatpush1.bf16.msra.mxu0 %v4984
      %4988 = vmatprep.subr.bf16.mxu0 0
      %4989 = vmatpush1.bf16.msra.mxu0 0
      %4990 = vmatprep.subr.bf16.mxu0 0
      %4991 = vmatpush1.bf16.msra.mxu0 0
      %4992 = vmatprep.subr.bf16.mxu0 0
      %4993 = vmatpush1.bf16.msra.mxu0 0
      %4994 = vmatprep.subr.bf16.mxu0 0
      %4995 = vmatpush1.bf16.msra.mxu0 0
      %4996 = vmatprep.subr.bf16.mxu0 0
      %4997 = vmatpush1.bf16.msra.mxu0 0
      %4998 = vmatprep.subr.bf16.mxu0 0
      %4999 = vmatpush1.bf16.msra.mxu0 0
      %5000 = vmatprep.subr.bf16.mxu0 0
      %5001 = vmatpush1.bf16.msra.mxu0 0
      %5002 = vmatprep.subr.bf16.mxu0 0
      %5003 = vmatpush1.bf16.msra.mxu0 0
      %5004 = vmatprep.subr.bf16.mxu0 0
      %5005 = vmatpush1.bf16.msra.mxu0 0
      %5006 = vmatprep.subr.bf16.mxu0 0
      %5007 = vmatpush1.bf16.msra.mxu0 0
      %5008 = vmatprep.subr.bf16.mxu0 0
      %5009 = vmatpush1.bf16.msra.mxu0 0
      %5010 = vmatprep.subr.bf16.mxu0 0
      %5011 = vmatpush1.bf16.msra.mxu0 0
      %5012 = vmatprep.subr.bf16.mxu0 0
      %5013 = vmatpush1.bf16.msra.mxu0 0
      %5014 = vmatprep.subr.bf16.mxu0 0
      %5015 = vmatpush1.bf16.msra.mxu0 0
      %5016 = vmatprep.subr.bf16.mxu0 0
      %5017 = vmatpush1.bf16.msra.mxu0 0
      %5018 = vmatprep.mubr.bf16.mxu0 0
      %5019 = vmatmul.mubr.bf16.gmra.mrb[0].mxu0 %v1432
      %v5020 = vpop.f32.mrb[0].mxu0
      %v5021 = vadd.f32 %v4977, %v5020
      %v5022 = vpop.f32.mrb[0].mxu0
      %v5023 = vpop.f32.mrb[0].mxu0
      %v5024 = vadd.f32 %v4980, %v5023
      %v5025 = vpop.f32.mrb[0].mxu0
      %5026 = vdwg.mxu0
      %v5028 = vunpack.c.l.b16 %v4932
      %v5029 = vpack.c.b16 %v5028, %v5028
      %5030 = vrot.lane.b32.xlu0 %v5029, 127
      %v5031 = vpop.permute.xlu0 %5030
      %v5033 = vsel %vm1381, %v5031, 0
      %5035 = vmatprep.subr.bf16.mxu0 0
      %5036 = vmatpush1.bf16.msra.mxu0 %v5033
      %5037 = vmatprep.subr.bf16.mxu0 0
      %5038 = vmatpush1.bf16.msra.mxu0 0
      %5039 = vmatprep.subr.bf16.mxu0 0
      %5040 = vmatpush1.bf16.msra.mxu0 0
      %5041 = vmatprep.subr.bf16.mxu0 0
      %5042 = vmatpush1.bf16.msra.mxu0 0
      %5043 = vmatprep.subr.bf16.mxu0 0
      %5044 = vmatpush1.bf16.msra.mxu0 0
      %5045 = vmatprep.subr.bf16.mxu0 0
      %5046 = vmatpush1.bf16.msra.mxu0 0
      %5047 = vmatprep.subr.bf16.mxu0 0
      %5048 = vmatpush1.bf16.msra.mxu0 0
      %5049 = vmatprep.subr.bf16.mxu0 0
      %5050 = vmatpush1.bf16.msra.mxu0 0
      %5051 = vmatprep.subr.bf16.mxu0 0
      %5052 = vmatpush1.bf16.msra.mxu0 0
      %5053 = vmatprep.subr.bf16.mxu0 0
      %5054 = vmatpush1.bf16.msra.mxu0 0
      %5055 = vmatprep.subr.bf16.mxu0 0
      %5056 = vmatpush1.bf16.msra.mxu0 0
      %5057 = vmatprep.subr.bf16.mxu0 0
      %5058 = vmatpush1.bf16.msra.mxu0 0
      %5059 = vmatprep.subr.bf16.mxu0 0
      %5060 = vmatpush1.bf16.msra.mxu0 0
      %5061 = vmatprep.subr.bf16.mxu0 0
      %5062 = vmatpush1.bf16.msra.mxu0 0
      %5063 = vmatprep.subr.bf16.mxu0 0
      %5064 = vmatpush1.bf16.msra.mxu0 0
      %5065 = vmatprep.subr.bf16.mxu0 0
      %5066 = vmatpush1.bf16.msra.mxu0 0
      %5067 = vmatprep.mubr.bf16.mxu0 0
      %5068 = vmatmul.mubr.bf16.gmra.mrb[0].mxu0 %v1489
      %v5069 = vpop.f32.mrb[0].mxu0
      %v5070 = vadd.f32 0.0, %v5069
      %v5071 = vpop.f32.mrb[0].mxu0
      %v5072 = vpop.f32.mrb[0].mxu0
      %v5073 = vadd.f32 0.0, %v5072
      %v5074 = vpop.f32.mrb[0].mxu0
      %5075 = vdwg.mxu0
      %v5076 = vadd.f32 %v5021, %v5070
      %v5077 = vadd.f32 %v5024, %v5073
      %s5078 = scalar_lea.vmem [#allocation2], 64
      %v5079 = vld [vmem:[%s5078] sm:$0xf]
      %v5081 = vsel %vm1381, %v5079, 0
      %5083 = vmatprep.subr.bf16.mxu0 0
      %5084 = vmatpush1.bf16.msra.mxu0 %v5081
      %5085 = vmatprep.subr.bf16.mxu0 0
      %5086 = vmatpush1.bf16.msra.mxu0 0
      %5087 = vmatprep.subr.bf16.mxu0 0
      %5088 = vmatpush1.bf16.msra.mxu0 0
      %5089 = vmatprep.subr.bf16.mxu0 0
      %5090 = vmatpush1.bf16.msra.mxu0 0
      %5091 = vmatprep.subr.bf16.mxu0 0
      %5092 = vmatpush1.bf16.msra.mxu0 0
      %5093 = vmatprep.subr.bf16.mxu0 0
      %5094 = vmatpush1.bf16.msra.mxu0 0
      %5095 = vmatprep.subr.bf16.mxu0 0
      %5096 = vmatpush1.bf16.msra.mxu0 0
      %5097 = vmatprep.subr.bf16.mxu0 0
      %5098 = vmatpush1.bf16.msra.mxu0 0
      %5099 = vmatprep.subr.bf16.mxu0 0
      %5100 = vmatpush1.bf16.msra.mxu0 0
      %5101 = vmatprep.subr.bf16.mxu0 0
      %5102 = vmatpush1.bf16.msra.mxu0 0
      %5103 = vmatprep.subr.bf16.mxu0 0
      %5104 = vmatpush1.bf16.msra.mxu0 0
      %5105 = vmatprep.subr.bf16.mxu0 0
      %5106 = vmatpush1.bf16.msra.mxu0 0
      %5107 = vmatprep.subr.bf16.mxu0 0
      %5108 = vmatpush1.bf16.msra.mxu0 0
      %5109 = vmatprep.subr.bf16.mxu0 0
      %5110 = vmatpush1.bf16.msra.mxu0 0
      %5111 = vmatprep.subr.bf16.mxu0 0
      %5112 = vmatpush1.bf16.msra.mxu0 0
      %5113 = vmatprep.subr.bf16.mxu0 0
      %5114 = vmatpush1.bf16.msra.mxu0 0
      %5115 = vmatprep.mubr.bf16.mxu0 0
      %5116 = vmatmul.mubr.bf16.gmra.mrb[0].mxu0 %v1545
      %v5117 = vpop.f32.mrb[0].mxu0
      %v5118 = vadd.f32 0.0, %v5117
      %v5119 = vpop.f32.mrb[0].mxu0
      %v5120 = vpop.f32.mrb[0].mxu0
      %v5121 = vadd.f32 0.0, %v5120
      %v5122 = vpop.f32.mrb[0].mxu0
      %5123 = vdwg.mxu0
      %v5124 = vadd.f32 %v5076, %v5118
      %v5125 = vadd.f32 %v5077, %v5121
      %s5126 = scalar_lea.vmem [#allocation2], 28
      %v5127 = vld [vmem:[%s5126] sm:$0xf]
      %v5129 = vunpack.c.l.b16 %v5127
      %v5130 = vpack.c.b16 %v5129, %v5129
      %5131 = vrot.lane.b32.xlu0 %v5130, 127
      %v5132 = vpop.permute.xlu0 %5131
      %v5134 = vsel %vm1381, %v5132, 0
      %5136 = vmatprep.subr.bf16.mxu0 0
      %5137 = vmatpush1.bf16.msra.mxu0 %v5134
      %5138 = vmatprep.subr.bf16.mxu0 0
      %5139 = vmatpush1.bf16.msra.mxu0 0
      %5140 = vmatprep.subr.bf16.mxu0 0
      %5141 = vmatpush1.bf16.msra.mxu0 0
      %5142 = vmatprep.subr.bf16.mxu0 0
      %5143 = vmatpush1.bf16.msra.mxu0 0
      %5144 = vmatprep.subr.bf16.mxu0 0
      %5145 = vmatpush1.bf16.msra.mxu0 0
      %5146 = vmatprep.subr.bf16.mxu0 0
      %5147 = vmatpush1.bf16.msra.mxu0 0
      %5148 = vmatprep.subr.bf16.mxu0 0
      %5149 = vmatpush1.bf16.msra.mxu0 0
      %5150 = vmatprep.subr.bf16.mxu0 0
      %5151 = vmatpush1.bf16.msra.mxu0 0
      %5152 = vmatprep.subr.bf16.mxu0 0
      %5153 = vmatpush1.bf16.msra.mxu0 0
      %5154 = vmatprep.subr.bf16.mxu0 0
      %5155 = vmatpush1.bf16.msra.mxu0 0
      %5156 = vmatprep.subr.bf16.mxu0 0
      %5157 = vmatpush1.bf16.msra.mxu0 0
      %5158 = vmatprep.subr.bf16.mxu0 0
      %5159 = vmatpush1.bf16.msra.mxu0 0
      %5160 = vmatprep.subr.bf16.mxu0 0
      %5161 = vmatpush1.bf16.msra.mxu0 0
      %5162 = vmatprep.subr.bf16.mxu0 0
      %5163 = vmatpush1.bf16.msra.mxu0 0
      %5164 = vmatprep.subr.bf16.mxu0 0
      %5165 = vmatpush1.bf16.msra.mxu0 0
      %5166 = vmatprep.subr.bf16.mxu0 0
      %5167 = vmatpush1.bf16.msra.mxu0 0
      %5168 = vmatprep.mubr.bf16.mxu0 0
      %5169 = vmatmul.mubr.bf16.gmra.mrb[0].mxu0 %v1606
      %v5170 = vpop.f32.mrb[0].mxu0
      %v5171 = vadd.f32 0.0, %v5170
      %v5172 = vpop.f32.mrb[0].mxu0
      %v5173 = vpop.f32.mrb[0].mxu0
      %v5174 = vadd.f32 0.0, %v5173
      %v5175 = vpop.f32.mrb[0].mxu0
      %5176 = vdwg.mxu0
      %v5177 = vadd.f32 %v5124, %v5171
      %v5178 = vadd.f32 %v5125, %v5174
      %v5180 = vunpack.c.l.b16 %v5079
      %v5181 = vpack.c.b16 %v5180, %v5180
      %5182 = vrot.lane.b32.xlu0 %v5181, 127
      %v5183 = vpop.permute.xlu0 %5182
      %v5185 = vsel %vm1381, %v5183, 0
      %5187 = vmatprep.subr.bf16.mxu0 0
      %5188 = vmatpush1.bf16.msra.mxu0 %v5185
      %5189 = vmatprep.subr.bf16.mxu0 0
      %5190 = vmatpush1.bf16.msra.mxu0 0
      %5191 = vmatprep.subr.bf16.mxu0 0
      %5192 = vmatpush1.bf16.msra.mxu0 0
      %5193 = vmatprep.subr.bf16.mxu0 0
      %5194 = vmatpush1.bf16.msra.mxu0 0
      %5195 = vmatprep.subr.bf16.mxu0 0
      %5196 = vmatpush1.bf16.msra.mxu0 0
      %5197 = vmatprep.subr.bf16.mxu0 0
      %5198 = vmatpush1.bf16.msra.mxu0 0
      %5199 = vmatprep.subr.bf16.mxu0 0
      %5200 = vmatpush1.bf16.msra.mxu0 0
      %5201 = vmatprep.subr.bf16.mxu0 0
      %5202 = vmatpush1.bf16.msra.mxu0 0
      %5203 = vmatprep.subr.bf16.mxu0 0
      %5204 = vmatpush1.bf16.msra.mxu0 0
      %5205 = vmatprep.subr.bf16.mxu0 0
      %5206 = vmatpush1.bf16.msra.mxu0 0
      %5207 = vmatprep.subr.bf16.mxu0 0
      %5208 = vmatpush1.bf16.msra.mxu0 0
      %5209 = vmatprep.subr.bf16.mxu0 0
      %5210 = vmatpush1.bf16.msra.mxu0 0
      %5211 = vmatprep.subr.bf16.mxu0 0
      %5212 = vmatpush1.bf16.msra.mxu0 0
      %5213 = vmatprep.subr.bf16.mxu0 0
      %5214 = vmatpush1.bf16.msra.mxu0 0
      %5215 = vmatprep.subr.bf16.mxu0 0
      %5216 = vmatpush1.bf16.msra.mxu0 0
      %5217 = vmatprep.subr.bf16.mxu0 0
      %5218 = vmatpush1.bf16.msra.mxu0 0
      %5219 = vmatprep.mubr.bf16.mxu0 0
      %5220 = vmatmul.mubr.bf16.gmra.mrb[0].mxu0 %v1665
      %v5221 = vpop.f32.mrb[0].mxu0
      %v5222 = vadd.f32 0.0, %v5221
      %v5223 = vpop.f32.mrb[0].mxu0
      %v5224 = vpop.f32.mrb[0].mxu0
      %v5225 = vadd.f32 0.0, %v5224
      %v5226 = vpop.f32.mrb[0].mxu0
      %5227 = vdwg.mxu0
      %v5228 = vadd.f32 %v5177, %v5222
      %v5229 = vadd.f32 %v5178, %v5225
      %s5230 = scalar_lea.vmem [#allocation2], 136
      %v5231 = vld [vmem:[%s5230] sm:$0xf]
      %v5233 = vsel %vm1381, %v5231, 0
      %5235 = vmatprep.subr.bf16.mxu0 0
      %5236 = vmatpush1.bf16.msra.mxu0 %v5233
      %5237 = vmatprep.subr.bf16.mxu0 0
      %5238 = vmatpush1.bf16.msra.mxu0 0
      %5239 = vmatprep.subr.bf16.mxu0 0
      %5240 = vmatpush1.bf16.msra.mxu0 0
      %5241 = vmatprep.subr.bf16.mxu0 0
      %5242 = vmatpush1.bf16.msra.mxu0 0
      %5243 = vmatprep.subr.bf16.mxu0 0
      %5244 = vmatpush1.bf16.msra.mxu0 0
      %5245 = vmatprep.subr.bf16.mxu0 0
      %5246 = vmatpush1.bf16.msra.mxu0 0
      %5247 = vmatprep.subr.bf16.mxu0 0
      %5248 = vmatpush1.bf16.msra.mxu0 0
      %5249 = vmatprep.subr.bf16.mxu0 0
      %5250 = vmatpush1.bf16.msra.mxu0 0
      %5251 = vmatprep.subr.bf16.mxu0 0
      %5252 = vmatpush1.bf16.msra.mxu0 0
      %5253 = vmatprep.subr.bf16.mxu0 0
      %5254 = vmatpush1.bf16.msra.mxu0 0
      %5255 = vmatprep.subr.bf16.mxu0 0
      %5256 = vmatpush1.bf16.msra.mxu0 0
      %5257 = vmatprep.subr.bf16.mxu0 0
      %5258 = vmatpush1.bf16.msra.mxu0 0
      %5259 = vmatprep.subr.bf16.mxu0 0
      %5260 = vmatpush1.bf16.msra.mxu0 0
      %5261 = vmatprep.subr.bf16.mxu0 0
      %5262 = vmatpush1.bf16.msra.mxu0 0
      %5263 = vmatprep.subr.bf16.mxu0 0
      %5264 = vmatpush1.bf16.msra.mxu0 0
      %5265 = vmatprep.subr.bf16.mxu0 0
      %5266 = vmatpush1.bf16.msra.mxu0 0
      %5267 = vmatprep.mubr.bf16.mxu0 0
      %5268 = vmatmul.mubr.bf16.gmra.mrb[0].mxu0 %v1721
      %v5269 = vpop.f32.mrb[0].mxu0
      %v5270 = vadd.f32 0.0, %v5269
      %v5271 = vpop.f32.mrb[0].mxu0
      %v5272 = vpop.f32.mrb[0].mxu0
      %v5273 = vadd.f32 0.0, %v5272
      %v5274 = vpop.f32.mrb[0].mxu0
      %5275 = vdwg.mxu0
      %v5276 = vadd.f32 %v5228, %v5270
      %v5277 = vadd.f32 %v5229, %v5273
      %s5278 = scalar_lea.vmem [#allocation2], 100
      %v5279 = vld [vmem:[%s5278] sm:$0xf]
      %v5281 = vunpack.c.l.b16 %v5279
      %v5282 = vpack.c.b16 %v5281, %v5281
      %5283 = vrot.lane.b32.xlu0 %v5282, 127
      %v5284 = vpop.permute.xlu0 %5283
      %v5286 = vsel %vm1381, %v5284, 0
      %5288 = vmatprep.subr.bf16.mxu0 0
      %5289 = vmatpush1.bf16.msra.mxu0 %v5286
      %5290 = vmatprep.subr.bf16.mxu0 0
      %5291 = vmatpush1.bf16.msra.mxu0 0
      %5292 = vmatprep.subr.bf16.mxu0 0
      %5293 = vmatpush1.bf16.msra.mxu0 0
      %5294 = vmatprep.subr.bf16.mxu0 0
      %5295 = vmatpush1.bf16.msra.mxu0 0
      %5296 = vmatprep.subr.bf16.mxu0 0
      %5297 = vmatpush1.bf16.msra.mxu0 0
      %5298 = vmatprep.subr.bf16.mxu0 0
      %5299 = vmatpush1.bf16.msra.mxu0 0
      %5300 = vmatprep.subr.bf16.mxu0 0
      %5301 = vmatpush1.bf16.msra.mxu0 0
      %5302 = vmatprep.subr.bf16.mxu0 0
      %5303 = vmatpush1.bf16.msra.mxu0 0
      %5304 = vmatprep.subr.bf16.mxu0 0
      %5305 = vmatpush1.bf16.msra.mxu0 0
      %5306 = vmatprep.subr.bf16.mxu0 0
      %5307 = vmatpush1.bf16.msra.mxu0 0
      %5308 = vmatprep.subr.bf16.mxu0 0
      %5309 = vmatpush1.bf16.msra.mxu0 0
      %5310 = vmatprep.subr.bf16.mxu0 0
      %5311 = vmatpush1.bf16.msra.mxu0 0
      %5312 = vmatprep.subr.bf16.mxu0 0
      %5313 = vmatpush1.bf16.msra.mxu0 0
      %5314 = vmatprep.subr.bf16.mxu0 0
      %5315 = vmatpush1.bf16.msra.mxu0 0
      %5316 = vmatprep.subr.bf16.mxu0 0
      %5317 = vmatpush1.bf16.msra.mxu0 0
      %5318 = vmatprep.subr.bf16.mxu0 0
      %5319 = vmatpush1.bf16.msra.mxu0 0
      %5320 = vmatprep.mubr.bf16.mxu0 0
      %5321 = vmatmul.mubr.bf16.gmra.mrb[0].mxu0 %v1782
      %v5322 = vpop.f32.mrb[0].mxu0
      %v5323 = vadd.f32 0.0, %v5322
      %v5324 = vpop.f32.mrb[0].mxu0
      %v5325 = vpop.f32.mrb[0].mxu0
      %v5326 = vadd.f32 0.0, %v5325
      %v5327 = vpop.f32.mrb[0].mxu0
      %5328 = vdwg.mxu0
      %v5329 = vadd.f32 %v5276, %v5323
      %v5330 = vadd.f32 %v5277, %v5326
      %v5332 = vunpack.c.l.b16 %v5231
      %v5333 = vpack.c.b16 %v5332, %v5332
      %5334 = vrot.lane.b32.xlu0 %v5333, 127
      %v5335 = vpop.permute.xlu0 %5334
      %v5337 = vsel %vm1381, %v5335, 0
      %5339 = vmatprep.subr.bf16.mxu0 0
      %5340 = vmatpush1.bf16.msra.mxu0 %v5337
      %5341 = vmatprep.subr.bf16.mxu0 0
      %5342 = vmatpush1.bf16.msra.mxu0 0
      %5343 = vmatprep.subr.bf16.mxu0 0
      %5344 = vmatpush1.bf16.msra.mxu0 0
      %5345 = vmatprep.subr.bf16.mxu0 0
      %5346 = vmatpush1.bf16.msra.mxu0 0
      %5347 = vmatprep.subr.bf16.mxu0 0
      %5348 = vmatpush1.bf16.msra.mxu0 0
      %5349 = vmatprep.subr.bf16.mxu0 0
      %5350 = vmatpush1.bf16.msra.mxu0 0
      %5351 = vmatprep.subr.bf16.mxu0 0
      %5352 = vmatpush1.bf16.msra.mxu0 0
      %5353 = vmatprep.subr.bf16.mxu0 0
      %5354 = vmatpush1.bf16.msra.mxu0 0
      %5355 = vmatprep.subr.bf16.mxu0 0
      %5356 = vmatpush1.bf16.msra.mxu0 0
      %5357 = vmatprep.subr.bf16.mxu0 0
      %5358 = vmatpush1.bf16.msra.mxu0 0
      %5359 = vmatprep.subr.bf16.mxu0 0
      %5360 = vmatpush1.bf16.msra.mxu0 0
      %5361 = vmatprep.subr.bf16.mxu0 0
      %5362 = vmatpush1.bf16.msra.mxu0 0
      %5363 = vmatprep.subr.bf16.mxu0 0
      %5364 = vmatpush1.bf16.msra.mxu0 0
      %5365 = vmatprep.subr.bf16.mxu0 0
      %5366 = vmatpush1.bf16.msra.mxu0 0
      %5367 = vmatprep.subr.bf16.mxu0 0
      %5368 = vmatpush1.bf16.msra.mxu0 0
      %5369 = vmatprep.subr.bf16.mxu0 0
      %5370 = vmatpush1.bf16.msra.mxu0 0
      %5371 = vmatprep.mubr.bf16.mxu0 0
      %5372 = vmatmul.mubr.bf16.gmra.mrb[0].mxu0 %v1841
      %v5373 = vpop.f32.mrb[0].mxu0
      %v5374 = vadd.f32 0.0, %v5373
      %v5375 = vpop.f32.mrb[0].mxu0
      %v5376 = vpop.f32.mrb[0].mxu0
      %v5377 = vadd.f32 0.0, %v5376
      %v5378 = vpop.f32.mrb[0].mxu0
      %5379 = vdwg.mxu0
      %v5380 = vadd.f32 %v5329, %v5374
      %v5381 = vadd.f32 %v5330, %v5377
      %v5384 = vcombine.high %v5380, %v5380
      %v5386 = vunpack.c.l.s4 1966171168
      %v5387 = vunpack.c.0.s8 %v5386
      %v5388 = vlaneseq
      %v5389 = vshrl.u32 %v5388, 7
      %v5390 = vsub.s32 %v5387, %v5389
      %v5391 = vrot.slane %v5380, %v5390
      %v5393 = vunpack.c.l.s4 1966171168
      %v5394 = vunpack.c.0.s8 %v5393
      %v5395 = vlaneseq
      %v5396 = vshrl.u32 %v5395, 7
      %v5397 = vsub.s32 %v5394, %v5396
      %v5398 = vrot.slane %v5384, %v5397
      %v5399 = vcombine.high %v5391, %v5391
      %v5400 = vcombine.high %v5398, %v5398
      %v5402 = vunpack.c.l.s4 1966171168
      %v5403 = vunpack.c.0.s8 %v5402
      %v5404 = vlaneseq
      %v5405 = vshrl.u32 %v5404, 7
      %v5406 = vsub.s32 %v5403, %v5405
      %v5407 = vrot.slane %v5391, %v5406
      %v5409 = vunpack.c.l.s4 1966171168
      %v5410 = vunpack.c.0.s8 %v5409
      %v5411 = vlaneseq
      %v5412 = vshrl.u32 %v5411, 7
      %v5413 = vsub.s32 %v5410, %v5412
      %v5414 = vrot.slane %v5398, %v5413
      %v5416 = vunpack.c.l.s4 1966171168
      %v5417 = vunpack.c.0.s8 %v5416
      %v5418 = vlaneseq
      %v5419 = vshrl.u32 %v5418, 7
      %v5420 = vsub.s32 %v5417, %v5419
      %v5421 = vrot.slane %v5399, %v5420
      %v5423 = vunpack.c.l.s4 1966171168
      %v5424 = vunpack.c.0.s8 %v5423
      %v5425 = vlaneseq
      %v5426 = vshrl.u32 %v5425, 7
      %v5427 = vsub.s32 %v5424, %v5426
      %v5428 = vrot.slane %v5400, %v5427
      %v5429 = vcombine.high %v5407, %v5407
      %v5430 = vcombine.high %v5414, %v5414
      %v5431 = vcombine.high %v5421, %v5421
      %v5432 = vcombine.high %v5428, %v5428
      %v5433 = vcombine.high %v5381, %v5381
      %v5435 = vunpack.c.l.s4 1966171168
      %v5436 = vunpack.c.0.s8 %v5435
      %v5437 = vlaneseq
      %v5438 = vshrl.u32 %v5437, 7
      %v5439 = vsub.s32 %v5436, %v5438
      %v5440 = vrot.slane %v5381, %v5439
      %v5442 = vunpack.c.l.s4 1966171168
      %v5443 = vunpack.c.0.s8 %v5442
      %v5444 = vlaneseq
      %v5445 = vshrl.u32 %v5444, 7
      %v5446 = vsub.s32 %v5443, %v5445
      %v5447 = vrot.slane %v5433, %v5446
      %v5448 = vcombine.high %v5440, %v5440
      %v5449 = vcombine.high %v5447, %v5447
      %v5451 = vunpack.c.l.s4 1966171168
      %v5452 = vunpack.c.0.s8 %v5451
      %v5453 = vlaneseq
      %v5454 = vshrl.u32 %v5453, 7
      %v5455 = vsub.s32 %v5452, %v5454
      %v5456 = vrot.slane %v5440, %v5455
      %v5458 = vunpack.c.l.s4 1966171168
      %v5459 = vunpack.c.0.s8 %v5458
      %v5460 = vlaneseq
      %v5461 = vshrl.u32 %v5460, 7
      %v5462 = vsub.s32 %v5459, %v5461
      %v5463 = vrot.slane %v5447, %v5462
      %v5465 = vunpack.c.l.s4 1966171168
      %v5466 = vunpack.c.0.s8 %v5465
      %v5467 = vlaneseq
      %v5468 = vshrl.u32 %v5467, 7
      %v5469 = vsub.s32 %v5466, %v5468
      %v5470 = vrot.slane %v5448, %v5469
      %v5472 = vunpack.c.l.s4 1966171168
      %v5473 = vunpack.c.0.s8 %v5472
      %v5474 = vlaneseq
      %v5475 = vshrl.u32 %v5474, 7
      %v5476 = vsub.s32 %v5473, %v5475
      %v5477 = vrot.slane %v5449, %v5476
      %v5478 = vcombine.high %v5456, %v5456
      %v5479 = vcombine.high %v5463, %v5463
      %v5480 = vcombine.high %v5470, %v5470
      %v5481 = vcombine.high %v5477, %v5477
      %5498 = vst.msk [vmem:[%s231 + $0x6] sm:$0x1] %vm2005, %v5407
      %5499 = vst.msk [vmem:[%s231 + $0xe] sm:$0x1] %vm2005, %v5421
      %5500 = vst.msk [vmem:[%s231 + $0x16] sm:$0x1] %vm2005, %v5429
      %5501 = vst.msk [vmem:[%s231 + $0x1e] sm:$0x1] %vm2005, %v5431
      %5502 = vst.msk [vmem:[%s231 + $0x26] sm:$0x1] %vm2005, %v5414
      %5503 = vst.msk [vmem:[%s231 + $0x2e] sm:$0x1] %vm2005, %v5428
      %5504 = vst.msk [vmem:[%s231 + $0x36] sm:$0x1] %vm2005, %v5430
      %5505 = vst.msk [vmem:[%s231 + $0x3e] sm:$0x1] %vm2005, %v5432
      %5506 = vst.msk [vmem:[%s231 + $0x46] sm:$0x1] %vm2005, %v5456
      %5507 = vst.msk [vmem:[%s231 + $0x4e] sm:$0x1] %vm2005, %v5470
      %5508 = vst.msk [vmem:[%s231 + $0x56] sm:$0x1] %vm2005, %v5478
      %5509 = vst.msk [vmem:[%s231 + $0x5e] sm:$0x1] %vm2005, %v5480
      %5510 = vst.msk [vmem:[%s231 + $0x66] sm:$0x1] %vm2005, %v5463
      %5511 = vst.msk [vmem:[%s231 + $0x6e] sm:$0x1] %vm2005, %v5477
      %5512 = vst.msk [vmem:[%s231 + $0x76] sm:$0x1] %vm2005, %v5479
      %5513 = vst.msk [vmem:[%s231 + $0x7e] sm:$0x1] %vm2005, %v5481
      %v5514 = vld [vmem:[%s5230] sm:$0xf]
      %v5515 = vld [vmem:[%s5278] sm:$0xf]
      %v5517 = vunpack.c.l.b16 %v5515
      %v5518 = vpack.c.b16 %v5517, %v5517
      %5519 = vrot.lane.b32.xlu0 %v5518, 127
      %v5520 = vpop.permute.xlu0 %5519
      %v5522 = vsel %vm1381, %v5520, 0
      %5524 = vmatprep.subr.bf16.mxu0 0
      %5525 = vmatpush1.bf16.msra.mxu0 %v5522
      %5526 = vmatprep.subr.bf16.mxu0 0
      %5527 = vmatpush1.bf16.msra.mxu0 0
      %5528 = vmatprep.subr.bf16.mxu0 0
      %5529 = vmatpush1.bf16.msra.mxu0 0
      %5530 = vmatprep.subr.bf16.mxu0 0
      %5531 = vmatpush1.bf16.msra.mxu0 0
      %5532 = vmatprep.subr.bf16.mxu0 0
      %5533 = vmatpush1.bf16.msra.mxu0 0
      %5534 = vmatprep.subr.bf16.mxu0 0
      %5535 = vmatpush1.bf16.msra.mxu0 0
      %5536 = vmatprep.subr.bf16.mxu0 0
      %5537 = vmatpush1.bf16.msra.mxu0 0
      %5538 = vmatprep.subr.bf16.mxu0 0
      %5539 = vmatpush1.bf16.msra.mxu0 0
      %5540 = vmatprep.subr.bf16.mxu0 0
      %5541 = vmatpush1.bf16.msra.mxu0 0
      %5542 = vmatprep.subr.bf16.mxu0 0
      %5543 = vmatpush1.bf16.msra.mxu0 0
      %5544 = vmatprep.subr.bf16.mxu0 0
      %5545 = vmatpush1.bf16.msra.mxu0 0
      %5546 = vmatprep.subr.bf16.mxu0 0
      %5547 = vmatpush1.bf16.msra.mxu0 0
      %5548 = vmatprep.subr.bf16.mxu0 0
      %5549 = vmatpush1.bf16.msra.mxu0 0
      %5550 = vmatprep.subr.bf16.mxu0 0
      %5551 = vmatpush1.bf16.msra.mxu0 0
      %5552 = vmatprep.subr.bf16.mxu0 0
      %5553 = vmatpush1.bf16.msra.mxu0 0
      %5554 = vmatprep.subr.bf16.mxu0 0
      %5555 = vmatpush1.bf16.msra.mxu0 0
      %5556 = vmatprep.mubr.bf16.mxu0 0
      %5557 = vmatmul.mubr.bf16.gmra.mrb[0].mxu0 %v1379
      %v5558 = vpop.f32.mrb[0].mxu0
      %v5559 = vadd.f32 0.0, %v5558
      %v5560 = vpop.f32.mrb[0].mxu0
      %v5561 = vpop.f32.mrb[0].mxu0
      %v5562 = vadd.f32 0.0, %v5561
      %v5563 = vpop.f32.mrb[0].mxu0
      %5564 = vdwg.mxu0
      %v5566 = vsel %vm1381, %v5514, 0
      %5568 = vmatprep.subr.bf16.mxu0 0
      %5569 = vmatpush1.bf16.msra.mxu0 %v5566
      %5570 = vmatprep.subr.bf16.mxu0 0
      %5571 = vmatpush1.bf16.msra.mxu0 0
      %5572 = vmatprep.subr.bf16.mxu0 0
      %5573 = vmatpush1.bf16.msra.mxu0 0
      %5574 = vmatprep.subr.bf16.mxu0 0
      %5575 = vmatpush1.bf16.msra.mxu0 0
      %5576 = vmatprep.subr.bf16.mxu0 0
      %5577 = vmatpush1.bf16.msra.mxu0 0
      %5578 = vmatprep.subr.bf16.mxu0 0
      %5579 = vmatpush1.bf16.msra.mxu0 0
      %5580 = vmatprep.subr.bf16.mxu0 0
      %5581 = vmatpush1.bf16.msra.mxu0 0
      %5582 = vmatprep.subr.bf16.mxu0 0
      %5583 = vmatpush1.bf16.msra.mxu0 0
      %5584 = vmatprep.subr.bf16.mxu0 0
      %5585 = vmatpush1.bf16.msra.mxu0 0
      %5586 = vmatprep.subr.bf16.mxu0 0
      %5587 = vmatpush1.bf16.msra.mxu0 0
      %5588 = vmatprep.subr.bf16.mxu0 0
      %5589 = vmatpush1.bf16.msra.mxu0 0
      %5590 = vmatprep.subr.bf16.mxu0 0
      %5591 = vmatpush1.bf16.msra.mxu0 0
      %5592 = vmatprep.subr.bf16.mxu0 0
      %5593 = vmatpush1.bf16.msra.mxu0 0
      %5594 = vmatprep.subr.bf16.mxu0 0
      %5595 = vmatpush1.bf16.msra.mxu0 0
      %5596 = vmatprep.subr.bf16.mxu0 0
      %5597 = vmatpush1.bf16.msra.mxu0 0
      %5598 = vmatprep.subr.bf16.mxu0 0
      %5599 = vmatpush1.bf16.msra.mxu0 0
      %5600 = vmatprep.mubr.bf16.mxu0 0
      %5601 = vmatmul.mubr.bf16.gmra.mrb[0].mxu0 %v1432
      %v5602 = vpop.f32.mrb[0].mxu0
      %v5603 = vadd.f32 %v5559, %v5602
      %v5604 = vpop.f32.mrb[0].mxu0
      %v5605 = vpop.f32.mrb[0].mxu0
      %v5606 = vadd.f32 %v5562, %v5605
      %v5607 = vpop.f32.mrb[0].mxu0
      %5608 = vdwg.mxu0
      %v5610 = vunpack.c.l.b16 %v5514
      %v5611 = vpack.c.b16 %v5610, %v5610
      %5612 = vrot.lane.b32.xlu0 %v5611, 127
      %v5613 = vpop.permute.xlu0 %5612
      %v5615 = vsel %vm1381, %v5613, 0
      %5617 = vmatprep.subr.bf16.mxu0 0
      %5618 = vmatpush1.bf16.msra.mxu0 %v5615
      %5619 = vmatprep.subr.bf16.mxu0 0
      %5620 = vmatpush1.bf16.msra.mxu0 0
      %5621 = vmatprep.subr.bf16.mxu0 0
      %5622 = vmatpush1.bf16.msra.mxu0 0
      %5623 = vmatprep.subr.bf16.mxu0 0
      %5624 = vmatpush1.bf16.msra.mxu0 0
      %5625 = vmatprep.subr.bf16.mxu0 0
      %5626 = vmatpush1.bf16.msra.mxu0 0
      %5627 = vmatprep.subr.bf16.mxu0 0
      %5628 = vmatpush1.bf16.msra.mxu0 0
      %5629 = vmatprep.subr.bf16.mxu0 0
      %5630 = vmatpush1.bf16.msra.mxu0 0
      %5631 = vmatprep.subr.bf16.mxu0 0
      %5632 = vmatpush1.bf16.msra.mxu0 0
      %5633 = vmatprep.subr.bf16.mxu0 0
      %5634 = vmatpush1.bf16.msra.mxu0 0
      %5635 = vmatprep.subr.bf16.mxu0 0
      %5636 = vmatpush1.bf16.msra.mxu0 0
      %5637 = vmatprep.subr.bf16.mxu0 0
      %5638 = vmatpush1.bf16.msra.mxu0 0
      %5639 = vmatprep.subr.bf16.mxu0 0
      %5640 = vmatpush1.bf16.msra.mxu0 0
      %5641 = vmatprep.subr.bf16.mxu0 0
      %5642 = vmatpush1.bf16.msra.mxu0 0
      %5643 = vmatprep.subr.bf16.mxu0 0
      %5644 = vmatpush1.bf16.msra.mxu0 0
      %5645 = vmatprep.subr.bf16.mxu0 0
      %5646 = vmatpush1.bf16.msra.mxu0 0
      %5647 = vmatprep.subr.bf16.mxu0 0
      %5648 = vmatpush1.bf16.msra.mxu0 0
      %5649 = vmatprep.mubr.bf16.mxu0 0
      %5650 = vmatmul.mubr.bf16.gmra.mrb[0].mxu0 %v1489
      %v5651 = vpop.f32.mrb[0].mxu0
      %v5652 = vadd.f32 0.0, %v5651
      %v5653 = vpop.f32.mrb[0].mxu0
      %v5654 = vpop.f32.mrb[0].mxu0
      %v5655 = vadd.f32 0.0, %v5654
      %v5656 = vpop.f32.mrb[0].mxu0
      %5657 = vdwg.mxu0
      %v5658 = vadd.f32 %v5603, %v5652
      %v5659 = vadd.f32 %v5606, %v5655
      %s5660 = scalar_lea.vmem [#allocation2], 68
      %v5661 = vld [vmem:[%s5660] sm:$0xf]
      %v5663 = vsel %vm1381, %v5661, 0
      %5665 = vmatprep.subr.bf16.mxu0 0
      %5666 = vmatpush1.bf16.msra.mxu0 %v5663
      %5667 = vmatprep.subr.bf16.mxu0 0
      %5668 = vmatpush1.bf16.msra.mxu0 0
      %5669 = vmatprep.subr.bf16.mxu0 0
      %5670 = vmatpush1.bf16.msra.mxu0 0
      %5671 = vmatprep.subr.bf16.mxu0 0
      %5672 = vmatpush1.bf16.msra.mxu0 0
      %5673 = vmatprep.subr.bf16.mxu0 0
      %5674 = vmatpush1.bf16.msra.mxu0 0
      %5675 = vmatprep.subr.bf16.mxu0 0
      %5676 = vmatpush1.bf16.msra.mxu0 0
      %5677 = vmatprep.subr.bf16.mxu0 0
      %5678 = vmatpush1.bf16.msra.mxu0 0
      %5679 = vmatprep.subr.bf16.mxu0 0
      %5680 = vmatpush1.bf16.msra.mxu0 0
      %5681 = vmatprep.subr.bf16.mxu0 0
      %5682 = vmatpush1.bf16.msra.mxu0 0
      %5683 = vmatprep.subr.bf16.mxu0 0
      %5684 = vmatpush1.bf16.msra.mxu0 0
      %5685 = vmatprep.subr.bf16.mxu0 0
      %5686 = vmatpush1.bf16.msra.mxu0 0
      %5687 = vmatprep.subr.bf16.mxu0 0
      %5688 = vmatpush1.bf16.msra.mxu0 0
      %5689 = vmatprep.subr.bf16.mxu0 0
      %5690 = vmatpush1.bf16.msra.mxu0 0
      %5691 = vmatprep.subr.bf16.mxu0 0
      %5692 = vmatpush1.bf16.msra.mxu0 0
      %5693 = vmatprep.subr.bf16.mxu0 0
      %5694 = vmatpush1.bf16.msra.mxu0 0
      %5695 = vmatprep.subr.bf16.mxu0 0
      %5696 = vmatpush1.bf16.msra.mxu0 0
      %5697 = vmatprep.mubr.bf16.mxu0 0
      %5698 = vmatmul.mubr.bf16.gmra.mrb[0].mxu0 %v1545
      %v5699 = vpop.f32.mrb[0].mxu0
      %v5700 = vadd.f32 0.0, %v5699
      %v5701 = vpop.f32.mrb[0].mxu0
      %v5702 = vpop.f32.mrb[0].mxu0
      %v5703 = vadd.f32 0.0, %v5702
      %v5704 = vpop.f32.mrb[0].mxu0
      %5705 = vdwg.mxu0
      %v5706 = vadd.f32 %v5658, %v5700
      %v5707 = vadd.f32 %v5659, %v5703
      %s5708 = scalar_lea.vmem [#allocation2], 32
      %v5709 = vld [vmem:[%s5708] sm:$0xf]
      %v5711 = vunpack.c.l.b16 %v5709
      %v5712 = vpack.c.b16 %v5711, %v5711
      %5713 = vrot.lane.b32.xlu0 %v5712, 127
      %v5714 = vpop.permute.xlu0 %5713
      %v5716 = vsel %vm1381, %v5714, 0
      %5718 = vmatprep.subr.bf16.mxu0 0
      %5719 = vmatpush1.bf16.msra.mxu0 %v5716
      %5720 = vmatprep.subr.bf16.mxu0 0
      %5721 = vmatpush1.bf16.msra.mxu0 0
      %5722 = vmatprep.subr.bf16.mxu0 0
      %5723 = vmatpush1.bf16.msra.mxu0 0
      %5724 = vmatprep.subr.bf16.mxu0 0
      %5725 = vmatpush1.bf16.msra.mxu0 0
      %5726 = vmatprep.subr.bf16.mxu0 0
      %5727 = vmatpush1.bf16.msra.mxu0 0
      %5728 = vmatprep.subr.bf16.mxu0 0
      %5729 = vmatpush1.bf16.msra.mxu0 0
      %5730 = vmatprep.subr.bf16.mxu0 0
      %5731 = vmatpush1.bf16.msra.mxu0 0
      %5732 = vmatprep.subr.bf16.mxu0 0
      %5733 = vmatpush1.bf16.msra.mxu0 0
      %5734 = vmatprep.subr.bf16.mxu0 0
      %5735 = vmatpush1.bf16.msra.mxu0 0
      %5736 = vmatprep.subr.bf16.mxu0 0
      %5737 = vmatpush1.bf16.msra.mxu0 0
      %5738 = vmatprep.subr.bf16.mxu0 0
      %5739 = vmatpush1.bf16.msra.mxu0 0
      %5740 = vmatprep.subr.bf16.mxu0 0
      %5741 = vmatpush1.bf16.msra.mxu0 0
      %5742 = vmatprep.subr.bf16.mxu0 0
      %5743 = vmatpush1.bf16.msra.mxu0 0
      %5744 = vmatprep.subr.bf16.mxu0 0
      %5745 = vmatpush1.bf16.msra.mxu0 0
      %5746 = vmatprep.subr.bf16.mxu0 0
      %5747 = vmatpush1.bf16.msra.mxu0 0
      %5748 = vmatprep.subr.bf16.mxu0 0
      %5749 = vmatpush1.bf16.msra.mxu0 0
      %5750 = vmatprep.mubr.bf16.mxu0 0
      %5751 = vmatmul.mubr.bf16.gmra.mrb[0].mxu0 %v1606
      %v5752 = vpop.f32.mrb[0].mxu0
      %v5753 = vadd.f32 0.0, %v5752
      %v5754 = vpop.f32.mrb[0].mxu0
      %v5755 = vpop.f32.mrb[0].mxu0
      %v5756 = vadd.f32 0.0, %v5755
      %v5757 = vpop.f32.mrb[0].mxu0
      %5758 = vdwg.mxu0
      %v5759 = vadd.f32 %v5706, %v5753
      %v5760 = vadd.f32 %v5707, %v5756
      %v5762 = vunpack.c.l.b16 %v5661
      %v5763 = vpack.c.b16 %v5762, %v5762
      %5764 = vrot.lane.b32.xlu0 %v5763, 127
      %v5765 = vpop.permute.xlu0 %5764
      %v5767 = vsel %vm1381, %v5765, 0
      %5769 = vmatprep.subr.bf16.mxu0 0
      %5770 = vmatpush1.bf16.msra.mxu0 %v5767
      %5771 = vmatprep.subr.bf16.mxu0 0
      %5772 = vmatpush1.bf16.msra.mxu0 0
      %5773 = vmatprep.subr.bf16.mxu0 0
      %5774 = vmatpush1.bf16.msra.mxu0 0
      %5775 = vmatprep.subr.bf16.mxu0 0
      %5776 = vmatpush1.bf16.msra.mxu0 0
      %5777 = vmatprep.subr.bf16.mxu0 0
      %5778 = vmatpush1.bf16.msra.mxu0 0
      %5779 = vmatprep.subr.bf16.mxu0 0
      %5780 = vmatpush1.bf16.msra.mxu0 0
      %5781 = vmatprep.subr.bf16.mxu0 0
      %5782 = vmatpush1.bf16.msra.mxu0 0
      %5783 = vmatprep.subr.bf16.mxu0 0
      %5784 = vmatpush1.bf16.msra.mxu0 0
      %5785 = vmatprep.subr.bf16.mxu0 0
      %5786 = vmatpush1.bf16.msra.mxu0 0
      %5787 = vmatprep.subr.bf16.mxu0 0
      %5788 = vmatpush1.bf16.msra.mxu0 0
      %5789 = vmatprep.subr.bf16.mxu0 0
      %5790 = vmatpush1.bf16.msra.mxu0 0
      %5791 = vmatprep.subr.bf16.mxu0 0
      %5792 = vmatpush1.bf16.msra.mxu0 0
      %5793 = vmatprep.subr.bf16.mxu0 0
      %5794 = vmatpush1.bf16.msra.mxu0 0
      %5795 = vmatprep.subr.bf16.mxu0 0
      %5796 = vmatpush1.bf16.msra.mxu0 0
      %5797 = vmatprep.subr.bf16.mxu0 0
      %5798 = vmatpush1.bf16.msra.mxu0 0
      %5799 = vmatprep.subr.bf16.mxu0 0
      %5800 = vmatpush1.bf16.msra.mxu0 0
      %5801 = vmatprep.mubr.bf16.mxu0 0
      %5802 = vmatmul.mubr.bf16.gmra.mrb[0].mxu0 %v1665
      %v5803 = vpop.f32.mrb[0].mxu0
      %v5804 = vadd.f32 0.0, %v5803
      %v5805 = vpop.f32.mrb[0].mxu0
      %v5806 = vpop.f32.mrb[0].mxu0
      %v5807 = vadd.f32 0.0, %v5806
      %v5808 = vpop.f32.mrb[0].mxu0
      %5809 = vdwg.mxu0
      %v5810 = vadd.f32 %v5759, %v5804
      %v5811 = vadd.f32 %v5760, %v5807
      %s5812 = scalar_lea.vmem [#allocation2], 140
      %v5813 = vld [vmem:[%s5812] sm:$0xf]
      %v5815 = vsel %vm1381, %v5813, 0
      %5817 = vmatprep.subr.bf16.mxu0 0
      %5818 = vmatpush1.bf16.msra.mxu0 %v5815
      %5819 = vmatprep.subr.bf16.mxu0 0
      %5820 = vmatpush1.bf16.msra.mxu0 0
      %5821 = vmatprep.subr.bf16.mxu0 0
      %5822 = vmatpush1.bf16.msra.mxu0 0
      %5823 = vmatprep.subr.bf16.mxu0 0
      %5824 = vmatpush1.bf16.msra.mxu0 0
      %5825 = vmatprep.subr.bf16.mxu0 0
      %5826 = vmatpush1.bf16.msra.mxu0 0
      %5827 = vmatprep.subr.bf16.mxu0 0
      %5828 = vmatpush1.bf16.msra.mxu0 0
      %5829 = vmatprep.subr.bf16.mxu0 0
      %5830 = vmatpush1.bf16.msra.mxu0 0
      %5831 = vmatprep.subr.bf16.mxu0 0
      %5832 = vmatpush1.bf16.msra.mxu0 0
      %5833 = vmatprep.subr.bf16.mxu0 0
      %5834 = vmatpush1.bf16.msra.mxu0 0
      %5835 = vmatprep.subr.bf16.mxu0 0
      %5836 = vmatpush1.bf16.msra.mxu0 0
      %5837 = vmatprep.subr.bf16.mxu0 0
      %5838 = vmatpush1.bf16.msra.mxu0 0
      %5839 = vmatprep.subr.bf16.mxu0 0
      %5840 = vmatpush1.bf16.msra.mxu0 0
      %5841 = vmatprep.subr.bf16.mxu0 0
      %5842 = vmatpush1.bf16.msra.mxu0 0
      %5843 = vmatprep.subr.bf16.mxu0 0
      %5844 = vmatpush1.bf16.msra.mxu0 0
      %5845 = vmatprep.subr.bf16.mxu0 0
      %5846 = vmatpush1.bf16.msra.mxu0 0
      %5847 = vmatprep.subr.bf16.mxu0 0
      %5848 = vmatpush1.bf16.msra.mxu0 0
      %5849 = vmatprep.mubr.bf16.mxu0 0
      %5850 = vmatmul.mubr.bf16.gmra.mrb[0].mxu0 %v1721
      %v5851 = vpop.f32.mrb[0].mxu0
      %v5852 = vadd.f32 0.0, %v5851
      %v5853 = vpop.f32.mrb[0].mxu0
      %v5854 = vpop.f32.mrb[0].mxu0
      %v5855 = vadd.f32 0.0, %v5854
      %v5856 = vpop.f32.mrb[0].mxu0
      %5857 = vdwg.mxu0
      %v5858 = vadd.f32 %v5810, %v5852
      %v5859 = vadd.f32 %v5811, %v5855
      %s5860 = scalar_lea.vmem [#allocation2], 104
      %v5861 = vld [vmem:[%s5860] sm:$0xf]
      %v5863 = vunpack.c.l.b16 %v5861
      %v5864 = vpack.c.b16 %v5863, %v5863
      %5865 = vrot.lane.b32.xlu0 %v5864, 127
      %v5866 = vpop.permute.xlu0 %5865
      %v5868 = vsel %vm1381, %v5866, 0
      %5870 = vmatprep.subr.bf16.mxu0 0
      %5871 = vmatpush1.bf16.msra.mxu0 %v5868
      %5872 = vmatprep.subr.bf16.mxu0 0
      %5873 = vmatpush1.bf16.msra.mxu0 0
      %5874 = vmatprep.subr.bf16.mxu0 0
      %5875 = vmatpush1.bf16.msra.mxu0 0
      %5876 = vmatprep.subr.bf16.mxu0 0
      %5877 = vmatpush1.bf16.msra.mxu0 0
      %5878 = vmatprep.subr.bf16.mxu0 0
      %5879 = vmatpush1.bf16.msra.mxu0 0
      %5880 = vmatprep.subr.bf16.mxu0 0
      %5881 = vmatpush1.bf16.msra.mxu0 0
      %5882 = vmatprep.subr.bf16.mxu0 0
      %5883 = vmatpush1.bf16.msra.mxu0 0
      %5884 = vmatprep.subr.bf16.mxu0 0
      %5885 = vmatpush1.bf16.msra.mxu0 0
      %5886 = vmatprep.subr.bf16.mxu0 0
      %5887 = vmatpush1.bf16.msra.mxu0 0
      %5888 = vmatprep.subr.bf16.mxu0 0
      %5889 = vmatpush1.bf16.msra.mxu0 0
      %5890 = vmatprep.subr.bf16.mxu0 0
      %5891 = vmatpush1.bf16.msra.mxu0 0
      %5892 = vmatprep.subr.bf16.mxu0 0
      %5893 = vmatpush1.bf16.msra.mxu0 0
      %5894 = vmatprep.subr.bf16.mxu0 0
      %5895 = vmatpush1.bf16.msra.mxu0 0
      %5896 = vmatprep.subr.bf16.mxu0 0
      %5897 = vmatpush1.bf16.msra.mxu0 0
      %5898 = vmatprep.subr.bf16.mxu0 0
      %5899 = vmatpush1.bf16.msra.mxu0 0
      %5900 = vmatprep.subr.bf16.mxu0 0
      %5901 = vmatpush1.bf16.msra.mxu0 0
      %5902 = vmatprep.mubr.bf16.mxu0 0
      %5903 = vmatmul.mubr.bf16.gmra.mrb[0].mxu0 %v1782
      %v5904 = vpop.f32.mrb[0].mxu0
      %v5905 = vadd.f32 0.0, %v5904
      %v5906 = vpop.f32.mrb[0].mxu0
      %v5907 = vpop.f32.mrb[0].mxu0
      %v5908 = vadd.f32 0.0, %v5907
      %v5909 = vpop.f32.mrb[0].mxu0
      %5910 = vdwg.mxu0
      %v5911 = vadd.f32 %v5858, %v5905
      %v5912 = vadd.f32 %v5859, %v5908
      %v5914 = vunpack.c.l.b16 %v5813
      %v5915 = vpack.c.b16 %v5914, %v5914
      %5916 = vrot.lane.b32.xlu0 %v5915, 127
      %v5917 = vpop.permute.xlu0 %5916
      %v5919 = vsel %vm1381, %v5917, 0
      %5921 = vmatprep.subr.bf16.mxu0 0
      %5922 = vmatpush1.bf16.msra.mxu0 %v5919
      %5923 = vmatprep.subr.bf16.mxu0 0
      %5924 = vmatpush1.bf16.msra.mxu0 0
      %5925 = vmatprep.subr.bf16.mxu0 0
      %5926 = vmatpush1.bf16.msra.mxu0 0
      %5927 = vmatprep.subr.bf16.mxu0 0
      %5928 = vmatpush1.bf16.msra.mxu0 0
      %5929 = vmatprep.subr.bf16.mxu0 0
      %5930 = vmatpush1.bf16.msra.mxu0 0
      %5931 = vmatprep.subr.bf16.mxu0 0
      %5932 = vmatpush1.bf16.msra.mxu0 0
      %5933 = vmatprep.subr.bf16.mxu0 0
      %5934 = vmatpush1.bf16.msra.mxu0 0
      %5935 = vmatprep.subr.bf16.mxu0 0
      %5936 = vmatpush1.bf16.msra.mxu0 0
      %5937 = vmatprep.subr.bf16.mxu0 0
      %5938 = vmatpush1.bf16.msra.mxu0 0
      %5939 = vmatprep.subr.bf16.mxu0 0
      %5940 = vmatpush1.bf16.msra.mxu0 0
      %5941 = vmatprep.subr.bf16.mxu0 0
      %5942 = vmatpush1.bf16.msra.mxu0 0
      %5943 = vmatprep.subr.bf16.mxu0 0
      %5944 = vmatpush1.bf16.msra.mxu0 0
      %5945 = vmatprep.subr.bf16.mxu0 0
      %5946 = vmatpush1.bf16.msra.mxu0 0
      %5947 = vmatprep.subr.bf16.mxu0 0
      %5948 = vmatpush1.bf16.msra.mxu0 0
      %5949 = vmatprep.subr.bf16.mxu0 0
      %5950 = vmatpush1.bf16.msra.mxu0 0
      %5951 = vmatprep.subr.bf16.mxu0 0
      %5952 = vmatpush1.bf16.msra.mxu0 0
      %5953 = vmatprep.mubr.bf16.mxu0 0
      %5954 = vmatmul.mubr.bf16.gmra.mrb[0].mxu0 %v1841
      %v5955 = vpop.f32.mrb[0].mxu0
      %v5956 = vadd.f32 0.0, %v5955
      %v5957 = vpop.f32.mrb[0].mxu0
      %v5958 = vpop.f32.mrb[0].mxu0
      %v5959 = vadd.f32 0.0, %v5958
      %v5960 = vpop.f32.mrb[0].mxu0
      %5961 = vdwg.mxu0
      %v5962 = vadd.f32 %v5911, %v5956
      %v5963 = vadd.f32 %v5912, %v5959
      %v5966 = vcombine.high %v5962, %v5962
      %v5968 = vunpack.c.l.s4 1966171168
      %v5969 = vunpack.c.0.s8 %v5968
      %v5970 = vlaneseq
      %v5971 = vshrl.u32 %v5970, 7
      %v5972 = vsub.s32 %v5969, %v5971
      %v5973 = vrot.slane %v5962, %v5972
      %v5975 = vunpack.c.l.s4 1966171168
      %v5976 = vunpack.c.0.s8 %v5975
      %v5977 = vlaneseq
      %v5978 = vshrl.u32 %v5977, 7
      %v5979 = vsub.s32 %v5976, %v5978
      %v5980 = vrot.slane %v5966, %v5979
      %v5981 = vcombine.high %v5973, %v5973
      %v5982 = vcombine.high %v5980, %v5980
      %v5984 = vunpack.c.l.s4 1966171168
      %v5985 = vunpack.c.0.s8 %v5984
      %v5986 = vlaneseq
      %v5987 = vshrl.u32 %v5986, 7
      %v5988 = vsub.s32 %v5985, %v5987
      %v5989 = vrot.slane %v5973, %v5988
      %v5991 = vunpack.c.l.s4 1966171168
      %v5992 = vunpack.c.0.s8 %v5991
      %v5993 = vlaneseq
      %v5994 = vshrl.u32 %v5993, 7
      %v5995 = vsub.s32 %v5992, %v5994
      %v5996 = vrot.slane %v5980, %v5995
      %v5998 = vunpack.c.l.s4 1966171168
      %v5999 = vunpack.c.0.s8 %v5998
      %v6000 = vlaneseq
      %v6001 = vshrl.u32 %v6000, 7
      %v6002 = vsub.s32 %v5999, %v6001
      %v6003 = vrot.slane %v5981, %v6002
      %v6005 = vunpack.c.l.s4 1966171168
      %v6006 = vunpack.c.0.s8 %v6005
      %v6007 = vlaneseq
      %v6008 = vshrl.u32 %v6007, 7
      %v6009 = vsub.s32 %v6006, %v6008
      %v6010 = vrot.slane %v5982, %v6009
      %v6011 = vcombine.high %v5989, %v5989
      %v6012 = vcombine.high %v5996, %v5996
      %v6013 = vcombine.high %v6003, %v6003
      %v6014 = vcombine.high %v6010, %v6010
      %v6015 = vcombine.high %v5963, %v5963
      %v6017 = vunpack.c.l.s4 1966171168
      %v6018 = vunpack.c.0.s8 %v6017
      %v6019 = vlaneseq
      %v6020 = vshrl.u32 %v6019, 7
      %v6021 = vsub.s32 %v6018, %v6020
      %v6022 = vrot.slane %v5963, %v6021
      %v6024 = vunpack.c.l.s4 1966171168
      %v6025 = vunpack.c.0.s8 %v6024
      %v6026 = vlaneseq
      %v6027 = vshrl.u32 %v6026, 7
      %v6028 = vsub.s32 %v6025, %v6027
      %v6029 = vrot.slane %v6015, %v6028
      %v6030 = vcombine.high %v6022, %v6022
      %v6031 = vcombine.high %v6029, %v6029
      %v6033 = vunpack.c.l.s4 1966171168
      %v6034 = vunpack.c.0.s8 %v6033
      %v6035 = vlaneseq
      %v6036 = vshrl.u32 %v6035, 7
      %v6037 = vsub.s32 %v6034, %v6036
      %v6038 = vrot.slane %v6022, %v6037
      %v6040 = vunpack.c.l.s4 1966171168
      %v6041 = vunpack.c.0.s8 %v6040
      %v6042 = vlaneseq
      %v6043 = vshrl.u32 %v6042, 7
      %v6044 = vsub.s32 %v6041, %v6043
      %v6045 = vrot.slane %v6029, %v6044
      %v6047 = vunpack.c.l.s4 1966171168
      %v6048 = vunpack.c.0.s8 %v6047
      %v6049 = vlaneseq
      %v6050 = vshrl.u32 %v6049, 7
      %v6051 = vsub.s32 %v6048, %v6050
      %v6052 = vrot.slane %v6030, %v6051
      %v6054 = vunpack.c.l.s4 1966171168
      %v6055 = vunpack.c.0.s8 %v6054
      %v6056 = vlaneseq
      %v6057 = vshrl.u32 %v6056, 7
      %v6058 = vsub.s32 %v6055, %v6057
      %v6059 = vrot.slane %v6031, %v6058
      %v6060 = vcombine.high %v6038, %v6038
      %v6061 = vcombine.high %v6045, %v6045
      %v6062 = vcombine.high %v6052, %v6052
      %v6063 = vcombine.high %v6059, %v6059
      %6080 = vst.msk [vmem:[%s231 + $0x7] sm:$0x1] %vm2005, %v5989
      %6081 = vst.msk [vmem:[%s231 + $0xf] sm:$0x1] %vm2005, %v6003
      %6082 = vst.msk [vmem:[%s231 + $0x17] sm:$0x1] %vm2005, %v6011
      %6083 = vst.msk [vmem:[%s231 + $0x1f] sm:$0x1] %vm2005, %v6013
      %6084 = vst.msk [vmem:[%s231 + $0x27] sm:$0x1] %vm2005, %v5996
      %6085 = vst.msk [vmem:[%s231 + $0x2f] sm:$0x1] %vm2005, %v6010
      %6086 = vst.msk [vmem:[%s231 + $0x37] sm:$0x1] %vm2005, %v6012
      %6087 = vst.msk [vmem:[%s231 + $0x3f] sm:$0x1] %vm2005, %v6014
      %6088 = vst.msk [vmem:[%s231 + $0x47] sm:$0x1] %vm2005, %v6038
      %6089 = vst.msk [vmem:[%s231 + $0x4f] sm:$0x1] %vm2005, %v6052
      %6090 = vst.msk [vmem:[%s231 + $0x57] sm:$0x1] %vm2005, %v6060
      %6091 = vst.msk [vmem:[%s231 + $0x5f] sm:$0x1] %vm2005, %v6062
      %6092 = vst.msk [vmem:[%s231 + $0x67] sm:$0x1] %vm2005, %v6045
      %6093 = vst.msk [vmem:[%s231 + $0x6f] sm:$0x1] %vm2005, %v6059
      %6094 = vst.msk [vmem:[%s231 + $0x77] sm:$0x1] %vm2005, %v6061
      %6095 = vst.msk [vmem:[%s231 + $0x7f] sm:$0x1] %vm2005, %v6063
      %p6096 = scmp.lt.s32.totalorder %s19, 1
      %s6097 = scalar_select %p6096, %s19, 1
      %p6098 = scmp.lt.s32.totalorder %s20, 0
      %s6099 = scalar_select %p6098, %s20, 0
      %s6100 = smul.addr %s6097, 16
      %s6101 = sadd.s32 %s6099, %s6100
      %s6102 = smul.addr %s6101, 8
      %s6103 = scalar_lea.vmem %s4, %s6102
      // Predicated region
      $region37: #{early_conv_ds_forward.1} parent=35 // pred_check
        %p6104 = pneg %p138
      $region38: #{early_conv_ds_forward.1} parent=35 // pred_check_branch
        %6106 = sbr.rel (%p6104) target = $region40
      $region39: #{early_conv_ds_forward.1} parent=35 // pred_region
        _
      $region40: #{early_conv_ds_forward.1} parent=35 // pred_fallthru
        _
    $region36: #{early_conv_ds_forward.1} parent=5 // pred_fallthru
      _
    %p6107 = scmp.le.s32.totalorder 2, %s10
    // Predicated region
    $region41: #{early_conv_ds_forward.1} parent=5 // pred_check
      %p6108 = pneg %p6107
    $region42: #{early_conv_ds_forward.1} parent=5 // pred_check_branch
      %6110 = sbr.rel (%p6108) target = $region44
    $region43: #{early_conv_ds_forward.1} parent=5 // pred_region
      %s6111 = ssub.s32 %s10, 2
      // Predicated region
      $region45: #{early_conv_ds_forward.1} parent=43 // pred_check
        %p6112 = pneg %p144
      $region46: #{early_conv_ds_forward.1} parent=43 // pred_check_branch
        %6114 = sbr.rel (%p6112) target = $region48
      $region47: #{early_conv_ds_forward.1} parent=43 // pred_region
        %p6115 = scmp.lt.s32.totalorder %s21, 1
        %s6116 = scalar_select %p6115, %s21, 1
        %p6117 = scmp.lt.s32.totalorder %s22, 0
        %s6118 = scalar_select %p6117, %s22, 0
        %s6119 = smul.addr %s6116, 16
        %s6120 = sadd.s32 %s6118, %s6119
        %s6121 = smul.addr %s6120, 8
        %s6122 = scalar_lea.vmem %s4, %s6121
      $region48: #{early_conv_ds_forward.1} parent=43 // pred_fallthru
        _
    $region44: #{early_conv_ds_forward.1} parent=5 // pred_fallthru
      _
  $region6: #{early_conv_ds_forward.1} parent=0 // loop_footer
    %s14 = sadd.s32 1, %s10
  $region7: #{early_conv_ds_forward.1} parent=0 // loop_footer_branch
    %9 = sbr.rel target = $region3
  $region8: #{early_conv_ds_forward.1} parent=0 // loop_exit
    _

</llo_original>
